<compile_context>
chip_gen: v5e
topology: v5e:2x2
jax: 0.10.0
libtpu: 0.0.40
codegen_flags: <defaults>
</compile_context>

<pallas_src>
import jax
import jax.numpy as jnp
from jax.experimental import pallas as pl
from jax.experimental.pallas import tpu as pltpu

IN_DIM = 768
HID_DIM = 1024
OUT_DIM = 1024


def _mlp_kernel(x_ref, w1_ref, b1_ref, w2_ref, b2_ref, o_ref):
    # Layer 1: (bm, 768) @ (768, 1024) on the MXU, f32 accumulate, bias + ReLU on VPU.
    x = x_ref[...].astype(jnp.bfloat16)
    h = jnp.dot(x, w1_ref[...], preferred_element_type=jnp.float32)
    h = jnp.maximum(h + b1_ref[...], 0.0)
    # Layer 2: (bm, 1024) @ (1024, 1024), bf16 inputs, f32 accumulate.
    y = jnp.dot(h.astype(jnp.bfloat16), w2_ref[...],
                preferred_element_type=jnp.float32)
    o_ref[...] = (y + b2_ref[...]).astype(o_ref.dtype)


def mapping_network(x, w1, b1, w2, b2, *, block_m=128):
    """x: [B, 768] float32 -> [B, 1024] float32.

    w1: [768, 1024], b1: [1, 1024], w2: [1024, 1024], b2: [1, 1024].
    Weights may be f32 (as in the PyTorch module); they are cast to bf16 here.
    """
    B = x.shape[0]

    # Cast weights to bf16 (halves weight DMA, MXU-native). Biases stay f32.
    w1 = w1.astype(jnp.bfloat16)
    w2 = w2.astype(jnp.bfloat16)
    b1 = b1.astype(jnp.float32)
    b2 = b2.astype(jnp.float32)

    # Pad batch to a multiple of the row tile so the grid is exact.
    grid_m = pl.cdiv(B, block_m)
    padded_b = grid_m * block_m
    if padded_b != B:
        x = jnp.pad(x, ((0, padded_b - B), (0, 0)))

    flops = 2 * padded_b * (IN_DIM * HID_DIM + HID_DIM * OUT_DIM)
    bytes_accessed = (
        2 * (IN_DIM * HID_DIM + HID_DIM * OUT_DIM)   # bf16 weights
        + 4 * (HID_DIM + OUT_DIM)                    # f32 biases
        + 4 * padded_b * (IN_DIM + OUT_DIM)          # f32 x + output
    )

    out = pl.pallas_call(
        _mlp_kernel,
        out_shape=jax.ShapeDtypeStruct((padded_b, OUT_DIM), jnp.float32),
        grid=(grid_m,),
        in_specs=[
            # Activations stream per grid step.
            pl.BlockSpec((block_m, IN_DIM), lambda i: (i, 0)),
            # Weights/biases: constant index map -> DMA'd once, resident in VMEM.
            pl.BlockSpec((IN_DIM, HID_DIM), lambda i: (0, 0)),
            pl.BlockSpec((1, HID_DIM), lambda i: (0, 0)),
            pl.BlockSpec((HID_DIM, OUT_DIM), lambda i: (0, 0)),
            pl.BlockSpec((1, OUT_DIM), lambda i: (0, 0)),
        ],
        out_specs=pl.BlockSpec((block_m, OUT_DIM), lambda i: (i, 0)),
        compiler_params=pltpu.CompilerParams(
            # Batch grid steps are independent -> shard across both TCs on v7x.
            dimension_semantics=("parallel",),
            vmem_limit_bytes=32 << 20,
        ),
        cost_estimate=pl.CostEstimate(
            flops=flops, transcendentals=0, bytes_accessed=bytes_accessed),
    )(x, w1, b1, w2, b2)

    return out[:B]


if __name__ == "__main__":
    key = jax.random.PRNGKey(0)
    kx, kw1, kb1, kw2, kb2 = jax.random.split(key, 5)

    # Batch large enough to exercise the batched grid (2 steps of 128 rows) and
    # amortize the resident-weight load; feature dims fixed by the module.
    B = 256
    x = jax.random.normal(kx, (B, IN_DIM), dtype=jnp.float32)

    # Deterministic synthetic parameters (Linear shapes stored as [in, out]).
    w1 = jax.random.normal(kw1, (IN_DIM, HID_DIM), dtype=jnp.float32) * 0.02
    b1 = jax.random.normal(kb1, (1, HID_DIM), dtype=jnp.float32) * 0.01
    w2 = jax.random.normal(kw2, (HID_DIM, OUT_DIM), dtype=jnp.float32) * 0.02
    b2 = jax.random.normal(kb2, (1, OUT_DIM), dtype=jnp.float32) * 0.01

    out = mapping_network(x, w1, b1, w2, b2)
    out = jax.block_until_ready(out)

    # Pure-JAX reference using the same bf16-rounded operands the kernel sees.
    xb = x.astype(jnp.bfloat16).astype(jnp.float32)
    w1b = w1.astype(jnp.bfloat16).astype(jnp.float32)
    w2b = w2.astype(jnp.bfloat16).astype(jnp.float32)
    h_ref = jnp.maximum(xb @ w1b + b1, 0.0)
    ref = h_ref.astype(jnp.bfloat16).astype(jnp.float32) @ w2b + b2

    assert out.shape == (B, OUT_DIM)
    assert jnp.allclose(out, ref, atol=2e-2, rtol=2e-2), "mismatch vs reference"

    print("KERNEL_OK")
</pallas_src>

<mosaic_0001>
module attributes {stable_mosaic.version = 11 : i64} {
  func.func @_mlp_kernel(%arg0: i32, %arg1: memref<128x768xf32, #tpu.memory_space<vmem>>, %arg2: memref<768x1024xbf16, #tpu.memory_space<vmem>>, %arg3: memref<1x1024xf32, #tpu.memory_space<vmem>>, %arg4: memref<1024x1024xbf16, #tpu.memory_space<vmem>>, %arg5: memref<1x1024xf32, #tpu.memory_space<vmem>>, %arg6: memref<128x1024xf32, #tpu.memory_space<vmem>>) attributes {dimension_semantics = [#tpu.dimension_semantics<parallel>], iteration_bounds = array<i64: 2>, scalar_prefetch = 0 : i64, scratch_operands = 0 : i64, tpu.core_type = #tpu.core_type<tc>, window_params = [{transform_indices = @transform_0, window_bounds = array<i64: 128, 768>}, {pipeline_mode = #tpu.pipeline_mode<synchronous>, transform_indices = @transform_1, window_bounds = array<i64: 768, 1024>}, {pipeline_mode = #tpu.pipeline_mode<synchronous>, transform_indices = @transform_2, window_bounds = array<i64: 1, 1024>}, {pipeline_mode = #tpu.pipeline_mode<synchronous>, transform_indices = @transform_3, window_bounds = array<i64: 1024, 1024>}, {pipeline_mode = #tpu.pipeline_mode<synchronous>, transform_indices = @transform_4, window_bounds = array<i64: 1, 1024>}, {transform_indices = @transform_5, window_bounds = array<i64: 128, 1024>}]} {
    %c0 = arith.constant 0 : index
    %c0_0 = arith.constant 0 : index
    %0 = vector.load %arg1[%c0, %c0_0] : memref<128x768xf32, #tpu.memory_space<vmem>>, vector<128x768xf32>
    %1 = arith.truncf %0 : vector<128x768xf32> to vector<128x768xbf16>
    %c0_1 = arith.constant 0 : index
    %c0_2 = arith.constant 0 : index
    %2 = vector.load %arg2[%c0_1, %c0_2] : memref<768x1024xbf16, #tpu.memory_space<vmem>>, vector<768x1024xbf16>
    %cst = arith.constant dense<0.000000e+00> : vector<128x1024xf32>
    %3 = tpu.matmul %1, %2, %cst {dimension_numbers = #tpu.dot_dimension_numbers<[1], [0], [0], [1], [0, 0, 1, 1], [], []>} : vector<128x768xbf16>, vector<768x1024xbf16>, vector<128x1024xf32> -> vector<128x1024xf32>
    %c0_3 = arith.constant 0 : index
    %c0_4 = arith.constant 0 : index
    %4 = vector.load %arg3[%c0_3, %c0_4] : memref<1x1024xf32, #tpu.memory_space<vmem>>, vector<1x1024xf32>
    %5 = vector.broadcast %4 : vector<1x1024xf32> to vector<128x1024xf32>
    %6 = arith.addf %3, %5 : vector<128x1024xf32>
    %cst_5 = arith.constant 0.000000e+00 : f32
    %7 = vector.broadcast %cst_5 : f32 to vector<128x1024xf32>
    %8 = arith.maximumf %6, %7 : vector<128x1024xf32>
    %9 = arith.truncf %8 : vector<128x1024xf32> to vector<128x1024xbf16>
    %c0_6 = arith.constant 0 : index
    %c0_7 = arith.constant 0 : index
    %10 = vector.load %arg4[%c0_6, %c0_7] : memref<1024x1024xbf16, #tpu.memory_space<vmem>>, vector<1024x1024xbf16>
    %cst_8 = arith.constant dense<0.000000e+00> : vector<128x1024xf32>
    %11 = tpu.matmul %9, %10, %cst_8 {dimension_numbers = #tpu.dot_dimension_numbers<[1], [0], [0], [1], [0, 0, 1, 1], [], []>} : vector<128x1024xbf16>, vector<1024x1024xbf16>, vector<128x1024xf32> -> vector<128x1024xf32>
    %c0_9 = arith.constant 0 : index
    %c0_10 = arith.constant 0 : index
    %12 = vector.load %arg5[%c0_9, %c0_10] : memref<1x1024xf32, #tpu.memory_space<vmem>>, vector<1x1024xf32>
    %13 = vector.broadcast %12 : vector<1x1024xf32> to vector<128x1024xf32>
    %14 = arith.addf %11, %13 : vector<128x1024xf32>
    %c0_11 = arith.constant 0 : index
    %c0_12 = arith.constant 0 : index
    %15 = vector.load %arg6[%c0_11, %c0_12] : memref<128x1024xf32, #tpu.memory_space<vmem>>, vector<128x1024xf32>
    tpu.vector_store %arg6[%c0_11, %c0_12], %14 {strides = array<i32>} : memref<128x1024xf32, #tpu.memory_space<vmem>>, vector<128x1024xf32>,
    return
  }
  func.func @transform_0(%arg0: i32) -> (i32, i32) {
    %c0_i32 = arith.constant 0 : i32
    %c0_i32_0 = arith.constant 0 : i32
    return %arg0, %c0_i32 : i32, i32
  }
  func.func @transform_1(%arg0: i32) -> (i32, i32) {
    %c0_i32 = arith.constant 0 : i32
    %c0_i32_0 = arith.constant 0 : i32
    %c0_i32_1 = arith.constant 0 : i32
    return %c0_i32, %c0_i32_0 : i32, i32
  }
  func.func @transform_2(%arg0: i32) -> (i32, i32) {
    %c0_i32 = arith.constant 0 : i32
    %c0_i32_0 = arith.constant 0 : i32
    %c0_i32_1 = arith.constant 0 : i32
    return %c0_i32, %c0_i32_0 : i32, i32
  }
  func.func @transform_3(%arg0: i32) -> (i32, i32) {
    %c0_i32 = arith.constant 0 : i32
    %c0_i32_0 = arith.constant 0 : i32
    %c0_i32_1 = arith.constant 0 : i32
    return %c0_i32, %c0_i32_0 : i32, i32
  }
  func.func @transform_4(%arg0: i32) -> (i32, i32) {
    %c0_i32 = arith.constant 0 : i32
    %c0_i32_0 = arith.constant 0 : i32
    %c0_i32_1 = arith.constant 0 : i32
    return %c0_i32, %c0_i32_0 : i32, i32
  }
  func.func @transform_5(%arg0: i32) -> (i32, i32) {
    %c0_i32 = arith.constant 0 : i32
    %c0_i32_0 = arith.constant 0 : i32
    return %arg0, %c0_i32 : i32, i32
  }
}

</mosaic_0001>

<llo_original>
// kernel: tpu_custom_call.1
$region0: #{tpu_custom_call.1}
  #allocation0 [shape = 'u32[]', space=smem, size = 0x4, offset = 0x4, fixed_abs, tag = 'smem constant byte address 0x4 - core index']
  #allocation1 [shape = 'u32[72,128]{1,0:T(1,128)}', space=vmem, size = 0x9000, scoped, tag = 'internal scratch']
  %s0 = inlined_call_operand.hbm [shape: f32[256,768], index: 0, kind: input, shape index: {}]
  %s1 = inlined_call_operand.hbm [shape: bf16[768,1024], index: 1, kind: input, shape index: {}]
  %s2 = inlined_call_operand.hbm [shape: f32[1,1024], index: 2, kind: input, shape index: {}]
  %s3 = inlined_call_operand.hbm [shape: bf16[1024,1024], index: 3, kind: input, shape index: {}]
  %s4 = inlined_call_operand.hbm [shape: f32[1,1024], index: 4, kind: input, shape index: {}]
  %s5 = inlined_call_operand.hbm [shape: f32[256,1024], index: 5, kind: output, shape index: {}]
  %s6 = sld [smem:[#allocation0]]
  $region73: #{tpu_custom_call.1} parent=0
    _
  %s8 = ssub.s32 1, %s6
  %s9 = scalar_select 0, %s8, %s6
  $region1: #{tpu_custom_call.1} parent=0
    #allocation2 [shape = 'u8[786432]{0}', space=vmem, size = 0xc0000, scoped, tag = 'input window, operand 0']
    #allocation3 [shape = 's32[2]{0}', space=sflag, size = 0x8, scoped, tag = 'scoped memory for tpu_custom_call.1']
    #allocation4 [shape = 's32[2]{0}', space=sflag, size = 0x8, scoped, tag = 'scoped memory for tpu_custom_call.1']
    #allocation5 [shape = 'u8[1572864]{0}', space=vmem, size = 0x180000, scoped, tag = 'input window, operand 1, single buffered']
    #allocation6 [shape = 's32[1]{0}', space=sflag, size = 0x4, scoped, tag = 'scoped memory for tpu_custom_call.1']
    #allocation7 [shape = 'u8[4096]{0}', space=vmem, size = 0x1000, scoped, tag = 'input window, operand 2, single buffered']
    #allocation8 [shape = 'u8[2097152]{0}', space=vmem, size = 0x200000, scoped, tag = 'input window, operand 3, single buffered']
    #allocation9 [shape = 's32[1]{0}', space=sflag, size = 0x4, scoped, tag = 'scoped memory for tpu_custom_call.1']
    #allocation10 [shape = 'u8[4096]{0}', space=vmem, size = 0x1000, scoped, tag = 'input window, operand 4, single buffered']
    #allocation11 [shape = 'u8[1048576]{0}', space=vmem, size = 0x100000, scoped, tag = 'output window, operand 0']
    %10 = vsyncpa [#allocation3], 0
    %s11 = scalar_lea.sflag [#allocation3], 1
    %12 = vsyncpa %s11, 0
    %13 = vsyncpa [#allocation6], 0
    %14 = vsyncpa [#allocation9], 0
    %15 = vsyncpa [#allocation4], 0
    %s16 = scalar_lea.sflag [#allocation4], 1
    %17 = vsyncpa %s16, 0
    loop: start=0, step=1, limit=4
    $region2: #{tpu_custom_call.1} parent=1 // loop_pre_header
      _
    $region3: #{tpu_custom_call.1} parent=1 // loop_header
      %s19 = sphi 0, %s23
      %p20 = scmp.ge.s32.totalorder %s19, 4
      %s29 = sphi 0, %s31
      %s32 = sphi 0, %s29
      %s33 = sphi 0, %s32
      %s49 = sphi 0, %s33
      %s53 = sphi 0, %s53
      %s55 = sphi 0, %s53
      %s56 = sphi 0, %s55
      %s70 = sphi 0, %s56
      %s74 = sphi 0, %s74
      %s76 = sphi 0, %s74
      %s77 = sphi 0, %s76
      %s91 = sphi 0, %s77
      %s95 = sphi 0, %s95
      %s97 = sphi 0, %s95
      %s98 = sphi 0, %s97
      %s112 = sphi 0, %s98
      %s116 = sphi 0, %s116
      %s118 = sphi 0, %s116
      %s119 = sphi 0, %s118
      %s133 = sphi 0, %s119
      %s139 = sphi 0, %s141
      %s142 = sphi 0, %s139
      %s143 = sphi 0, %s142
      %s159 = sphi 0, %s143
    $region4: #{tpu_custom_call.1} parent=1 // loop_header_branch
      %22 = sbr.rel (%p20) target = $region8
    $region5: #{tpu_custom_call.1} parent=1 // loop_body
      %s24 = ssub.s32 %s19, 1
      %s25 = ssub.s32 %s19, 2
      %s26 = sadd.s32 %s19, 1
      %s27 = ssub.s32 %s19, %s26
      %p28 = scmp.eq.s32.totalorder %s27, 0
      %s30 = sadd.s32 %s29, 1
      %s31 = scalar_select %p28, %s29, %s30
      %p34 = pneg %p28
      %p35 = scmp.eq.s32.totalorder %s19, 1
      %p36 = por %p34, %p35
      %p37 = scmp.ne.s32.totalorder %s29, %s32
      %p38 = scmp.eq.s32.totalorder %s19, 0
      %p39 = por %p37, %p38
      %p40 = scmp.ne.s32.totalorder %s29, %s32
      %p41 = scmp.eq.s32.totalorder %s24, 1
      %p42 = por %p40, %p41
      %p43 = scmp.ne.s32.totalorder %s32, %s33
      %p44 = scmp.eq.s32.totalorder %s24, 0
      %p45 = por %p43, %p44
      %p46 = scmp.ne.s32.totalorder %s32, %s33
      %p47 = scmp.eq.s32.totalorder %s25, 1
      %p48 = por %p46, %p47
      %p50 = scmp.ne.s32.totalorder %s33, %s49
      %p51 = scmp.eq.s32.totalorder %s25, 0
      %p52 = por %p50, %p51
      %s54 = sadd.s32 %s53, 1
      %p57 = scmp.eq.s32.totalorder %s19, 1
      %p58 = scmp.ne.s32.totalorder %s53, %s55
      %p59 = scmp.eq.s32.totalorder %s19, 0
      %p60 = por %p58, %p59
      %p61 = scmp.ne.s32.totalorder %s53, %s55
      %p62 = scmp.eq.s32.totalorder %s24, 1
      %p63 = por %p61, %p62
      %p64 = scmp.ne.s32.totalorder %s55, %s56
      %p65 = scmp.eq.s32.totalorder %s24, 0
      %p66 = por %p64, %p65
      %p67 = scmp.ne.s32.totalorder %s55, %s56
      %p68 = scmp.eq.s32.totalorder %s25, 1
      %p69 = por %p67, %p68
      %p71 = scmp.ne.s32.totalorder %s56, %s70
      %p72 = scmp.eq.s32.totalorder %s25, 0
      %p73 = por %p71, %p72
      %s75 = sadd.s32 %s74, 1
      %p78 = scmp.eq.s32.totalorder %s19, 1
      %p79 = scmp.ne.s32.totalorder %s74, %s76
      %p80 = scmp.eq.s32.totalorder %s19, 0
      %p81 = por %p79, %p80
      %p82 = scmp.ne.s32.totalorder %s74, %s76
      %p83 = scmp.eq.s32.totalorder %s24, 1
      %p84 = por %p82, %p83
      %p85 = scmp.ne.s32.totalorder %s76, %s77
      %p86 = scmp.eq.s32.totalorder %s24, 0
      %p87 = por %p85, %p86
      %p88 = scmp.ne.s32.totalorder %s76, %s77
      %p89 = scmp.eq.s32.totalorder %s25, 1
      %p90 = por %p88, %p89
      %p92 = scmp.ne.s32.totalorder %s77, %s91
      %p93 = scmp.eq.s32.totalorder %s25, 0
      %p94 = por %p92, %p93
      %s96 = sadd.s32 %s95, 1
      %p99 = scmp.eq.s32.totalorder %s19, 1
      %p100 = scmp.ne.s32.totalorder %s95, %s97
      %p101 = scmp.eq.s32.totalorder %s19, 0
      %p102 = por %p100, %p101
      %p103 = scmp.ne.s32.totalorder %s95, %s97
      %p104 = scmp.eq.s32.totalorder %s24, 1
      %p105 = por %p103, %p104
      %p106 = scmp.ne.s32.totalorder %s97, %s98
      %p107 = scmp.eq.s32.totalorder %s24, 0
      %p108 = por %p106, %p107
      %p109 = scmp.ne.s32.totalorder %s97, %s98
      %p110 = scmp.eq.s32.totalorder %s25, 1
      %p111 = por %p109, %p110
      %p113 = scmp.ne.s32.totalorder %s98, %s112
      %p114 = scmp.eq.s32.totalorder %s25, 0
      %p115 = por %p113, %p114
      %s117 = sadd.s32 %s116, 1
      %p120 = scmp.eq.s32.totalorder %s19, 1
      %p121 = scmp.ne.s32.totalorder %s116, %s118
      %p122 = scmp.eq.s32.totalorder %s19, 0
      %p123 = por %p121, %p122
      %p124 = scmp.ne.s32.totalorder %s116, %s118
      %p125 = scmp.eq.s32.totalorder %s24, 1
      %p126 = por %p124, %p125
      %p127 = scmp.ne.s32.totalorder %s118, %s119
      %p128 = scmp.eq.s32.totalorder %s24, 0
      %p129 = por %p127, %p128
      %p130 = scmp.ne.s32.totalorder %s118, %s119
      %p131 = scmp.eq.s32.totalorder %s25, 1
      %p132 = por %p130, %p131
      %p134 = scmp.ne.s32.totalorder %s119, %s133
      %p135 = scmp.eq.s32.totalorder %s25, 0
      %p136 = por %p134, %p135
      %s137 = ssub.s32 %s19, %s26
      %p138 = scmp.eq.s32.totalorder %s137, 0
      %s140 = sadd.s32 %s139, 1
      %s141 = scalar_select %p138, %s139, %s140
      %p144 = pneg %p138
      %p145 = scmp.eq.s32.totalorder %s19, 1
      %p146 = por %p144, %p145
      %p147 = scmp.ne.s32.totalorder %s139, %s142
      %p148 = scmp.eq.s32.totalorder %s19, 0
      %p149 = por %p147, %p148
      %p150 = scmp.ne.s32.totalorder %s139, %s142
      %p151 = scmp.eq.s32.totalorder %s24, 1
      %p152 = por %p150, %p151
      %p153 = scmp.ne.s32.totalorder %s142, %s143
      %p154 = scmp.eq.s32.totalorder %s24, 0
      %p155 = por %p153, %p154
      %p156 = scmp.ne.s32.totalorder %s142, %s143
      %p157 = scmp.eq.s32.totalorder %s25, 1
      %p158 = por %p156, %p157
      %p160 = scmp.ne.s32.totalorder %s143, %s159
      %p161 = scmp.eq.s32.totalorder %s25, 0
      %p162 = por %p160, %p161
      %p163 = scmp.le.s32.totalorder 1, %s19
      %p164 = scmp.lt.s32.totalorder %s19, 3
      %p165 = pnand %p163, %p164
      %p166 = pneg %p165
      // Predicated region
      $region9: #{tpu_custom_call.1} parent=5 // pred_check
        _
      $region10: #{tpu_custom_call.1} parent=5 // pred_check_branch
        %168 = sbr.rel (%p165) target = $region12
      $region11: #{tpu_custom_call.1} parent=5 // pred_region
        %s169 = ssub.s32 %s19, 1
        // Predicated region
        $region13: #{tpu_custom_call.1} parent=11 // pred_check
          %p170 = pneg %p66
        $region14: #{tpu_custom_call.1} parent=11 // pred_check_branch
          %172 = sbr.rel (%p170) target = $region16
        $region15: #{tpu_custom_call.1} parent=11 // pred_region
          %174 = vsyncadd [#allocation6], 0
          %s175 = sshll.u32 %s1, 4
          %s176 = int_to_ptr.hbm [resolvable:$true] %s175
          %s177 = sshll.u32 [#allocation5], 4
          %s178 = int_to_ptr.vmem [resolvable:$true] %s177
          %183 = dma.hbm_to_vmem [thread:$0]  %s176, 49152, %s178, [#allocation6], 512, 512, 32
        $region16: #{tpu_custom_call.1} parent=11 // pred_fallthru
          _
        // Predicated region
        $region17: #{tpu_custom_call.1} parent=11 // pred_check
          %p184 = pneg %p87
        $region18: #{tpu_custom_call.1} parent=11 // pred_check_branch
          %186 = sbr.rel (%p184) target = $region20
        $region19: #{tpu_custom_call.1} parent=11 // pred_region
          %188 = vsyncadd [#allocation6], 0
          %s190 = sshll.u32 %s2, 4
          %s191 = int_to_ptr.hbm [resolvable:$true] %s190
          %s192 = sshll.u32 [#allocation7], 4
          %s193 = int_to_ptr.vmem [resolvable:$true] %s192
          %195 = dma.hbm_to_vmem [thread:$0]  %s191, 128, %s193, [#allocation6]
        $region20: #{tpu_custom_call.1} parent=11 // pred_fallthru
          _
        // Predicated region
        $region21: #{tpu_custom_call.1} parent=11 // pred_check
          %p196 = pneg %p108
        $region22: #{tpu_custom_call.1} parent=11 // pred_check_branch
          %198 = sbr.rel (%p196) target = $region24
        $region23: #{tpu_custom_call.1} parent=11 // pred_region
          %200 = vsyncadd [#allocation9], 0
          %s201 = sshll.u32 %s3, 4
          %s202 = int_to_ptr.hbm [resolvable:$true] %s201
          %s203 = sshll.u32 [#allocation8], 4
          %s204 = int_to_ptr.vmem [resolvable:$true] %s203
          %209 = dma.hbm_to_vmem [thread:$0]  %s202, 65536, %s204, [#allocation9], 512, 512, 32
        $region24: #{tpu_custom_call.1} parent=11 // pred_fallthru
          _
        // Predicated region
        $region25: #{tpu_custom_call.1} parent=11 // pred_check
          %p210 = pneg %p129
        $region26: #{tpu_custom_call.1} parent=11 // pred_check_branch
          %212 = sbr.rel (%p210) target = $region28
        $region27: #{tpu_custom_call.1} parent=11 // pred_region
          %214 = vsyncadd [#allocation9], 0
          %s216 = sshll.u32 %s4, 4
          %s217 = int_to_ptr.hbm [resolvable:$true] %s216
          %s218 = sshll.u32 [#allocation10], 4
          %s219 = int_to_ptr.vmem [resolvable:$true] %s218
          %221 = dma.hbm_to_vmem [thread:$0]  %s217, 128, %s219, [#allocation9]
        $region28: #{tpu_custom_call.1} parent=11 // pred_fallthru
          _
      $region12: #{tpu_custom_call.1} parent=5 // pred_fallthru
        _
      %p222 = scmp.lt.s32.totalorder %s19, 2
      // Predicated region
      $region29: #{tpu_custom_call.1} parent=5 // pred_check
        %p223 = pneg %p222
      $region30: #{tpu_custom_call.1} parent=5 // pred_check_branch
        %225 = sbr.rel (%p223) target = $region32
      $region31: #{tpu_custom_call.1} parent=5 // pred_region
        // Predicated region
        $region33: #{tpu_custom_call.1} parent=31 // pred_check
          %p226 = pneg %p39
        $region34: #{tpu_custom_call.1} parent=31 // pred_check_branch
          %228 = sbr.rel (%p226) target = $region36
        $region35: #{tpu_custom_call.1} parent=31 // pred_region
          %s229 = sand.u32 %s29, 1
          %s230 = scalar_lea.sflag [#allocation3], %s229
          %s231 = sand.u32 %s29, 1
          %s232 = smul.addr %s231, 768
          %s233 = scalar_lea.vmem [#allocation2], %s232
          %s234 = smul.u32 16, %s19
          %236 = vsyncadd %s230, 0
          %s237 = smul.addr %s234, 6
          %s238 = smul.addr %s237, 8
          %s239 = scalar_lea.hbm %s0, %s238
          %s240 = sshll.u32 %s239, 4
          %s241 = int_to_ptr.hbm [resolvable:$true] %s240
          %s242 = sshll.u32 %s233, 4
          %s243 = int_to_ptr.vmem [resolvable:$true] %s242
          %248 = dma.hbm_to_vmem [thread:$0]  %s241, 12288, %s243, %s230, 768, 768, 48
        $region36: #{tpu_custom_call.1} parent=31 // pred_fallthru
          _
      $region32: #{tpu_custom_call.1} parent=5 // pred_fallthru
        _
      %p249 = scmp.le.s32.totalorder 1, %s19
      %p250 = scmp.lt.s32.totalorder %s19, 3
      %p251 = pnand %p249, %p250
      %p252 = pneg %p251
      // Predicated region
      $region37: #{tpu_custom_call.1} parent=5 // pred_check
        _
      $region38: #{tpu_custom_call.1} parent=5 // pred_check_branch
        %254 = sbr.rel (%p251) target = $region40
      $region39: #{tpu_custom_call.1} parent=5 // pred_region
        %s255 = ssub.s32 %s19, 1
        %s256 = sand.u32 %s32, 1
        %s257 = scalar_lea.sflag [#allocation3], %s256
        %s258 = sand.u32 %s32, 1
        %s259 = smul.addr %s258, 768
        %s260 = scalar_lea.vmem [#allocation2], %s259
        // Predicated region
        $region41: #{tpu_custom_call.1} parent=39 // pred_check
          %p261 = pneg %p45
        $region42: #{tpu_custom_call.1} parent=39 // pred_check_branch
          %263 = sbr.rel (%p261) target = $region44
        $region43: #{tpu_custom_call.1} parent=39 // pred_region
          %265 = dma.done %s257, 12288
        $region44: #{tpu_custom_call.1} parent=39 // pred_fallthru
          _
        // Predicated region
        $region45: #{tpu_custom_call.1} parent=39 // pred_check
          %p266 = pneg %p66
        $region46: #{tpu_custom_call.1} parent=39 // pred_check_branch
          %268 = sbr.rel (%p266) target = $region48
        $region47: #{tpu_custom_call.1} parent=39 // pred_region
          %270 = dma.done [#allocation6], 49152
        $region48: #{tpu_custom_call.1} parent=39 // pred_fallthru
          _
        // Predicated region
        $region49: #{tpu_custom_call.1} parent=39 // pred_check
          %p271 = pneg %p87
        $region50: #{tpu_custom_call.1} parent=39 // pred_check_branch
          %273 = sbr.rel (%p271) target = $region52
        $region51: #{tpu_custom_call.1} parent=39 // pred_region
          %275 = dma.done [#allocation6], 128
        $region52: #{tpu_custom_call.1} parent=39 // pred_fallthru
          _
        // Predicated region
        $region53: #{tpu_custom_call.1} parent=39 // pred_check
          %p276 = pneg %p108
        $region54: #{tpu_custom_call.1} parent=39 // pred_check_branch
          %278 = sbr.rel (%p276) target = $region56
        $region55: #{tpu_custom_call.1} parent=39 // pred_region
          %280 = dma.done [#allocation9], 65536
        $region56: #{tpu_custom_call.1} parent=39 // pred_fallthru
          _
        // Predicated region
        $region57: #{tpu_custom_call.1} parent=39 // pred_check
          %p281 = pneg %p129
        $region58: #{tpu_custom_call.1} parent=39 // pred_check_branch
          %283 = sbr.rel (%p281) target = $region60
        $region59: #{tpu_custom_call.1} parent=39 // pred_region
          %285 = dma.done [#allocation9], 128
        $region60: #{tpu_custom_call.1} parent=39 // pred_fallthru
          _
        %s286 = sand.u32 %s32, 1
        %s287 = scalar_lea.sflag [#allocation3], %s286
        %s288 = sand.u32 %s32, 1
        %s289 = smul.addr %s288, 768
        %s290 = scalar_lea.vmem [#allocation2], %s289
        %p291 = pneg %p45
        %p292 = pneg %p42
        %p293 = pneg %p66
        %p294 = pneg %p63
        %p295 = pneg %p87
        %p296 = pneg %p84
        %p297 = pneg %p108
        %p298 = pneg %p105
        %p299 = pneg %p129
        %p300 = pneg %p126
        %p301 = pneg %p155
        %p302 = pneg %p152
        %s303 = sand.u32 %s142, 1
        %s304 = scalar_lea.sflag [#allocation4], %s303
        %s305 = sand.u32 %s142, 1
        %s306 = smul.addr %s305, 1024
        %s307 = scalar_lea.vmem [#allocation11], %s306
        %s308 = smul.u32 16, %s24
        %s309 = smul.u32 16, %s24
        %v310 = vld [vmem:[%s260] sm:$0xff]
        %v311 = vld [vmem:[%s260 + $0x8] sm:$0xff]
        %v312 = vld [vmem:[%s260 + $0x10] sm:$0xff]
        %v313 = vld [vmem:[%s260 + $0x18] sm:$0xff]
        %v314 = vld [vmem:[%s260 + $0x20] sm:$0xff]
        %v315 = vld [vmem:[%s260 + $0x28] sm:$0xff]
        %v316 = vld [vmem:[%s260 + $0x30] sm:$0xff]
        %v317 = vld [vmem:[%s260 + $0x38] sm:$0xff]
        %v318 = vld [vmem:[%s260 + $0x40] sm:$0xff]
        %v319 = vld [vmem:[%s260 + $0x48] sm:$0xff]
        %v320 = vld [vmem:[%s260 + $0x50] sm:$0xff]
        %v321 = vld [vmem:[%s260 + $0x58] sm:$0xff]
        %v322 = vld [vmem:[%s260 + $0x60] sm:$0xff]
        %v323 = vld [vmem:[%s260 + $0x68] sm:$0xff]
        %v324 = vld [vmem:[%s260 + $0x70] sm:$0xff]
        %v325 = vld [vmem:[%s260 + $0x78] sm:$0xff]
        %v326 = vld [vmem:[%s260 + $0x80] sm:$0xff]
        %v327 = vld [vmem:[%s260 + $0x88] sm:$0xff]
        %v328 = vld [vmem:[%s260 + $0x90] sm:$0xff]
        %v329 = vld [vmem:[%s260 + $0x98] sm:$0xff]
        %v330 = vld [vmem:[%s260 + $0xa0] sm:$0xff]
        %v331 = vld [vmem:[%s260 + $0xa8] sm:$0xff]
        %v332 = vld [vmem:[%s260 + $0xb0] sm:$0xff]
        %v333 = vld [vmem:[%s260 + $0xb8] sm:$0xff]
        %v334 = vld [vmem:[%s260 + $0xc0] sm:$0xff]
        %v335 = vld [vmem:[%s260 + $0xc8] sm:$0xff]
        %v336 = vld [vmem:[%s260 + $0xd0] sm:$0xff]
        %v337 = vld [vmem:[%s260 + $0xd8] sm:$0xff]
        %v338 = vld [vmem:[%s260 + $0xe0] sm:$0xff]
        %v339 = vld [vmem:[%s260 + $0xe8] sm:$0xff]
        %v340 = vld [vmem:[%s260 + $0xf0] sm:$0xff]
        %v341 = vld [vmem:[%s260 + $0xf8] sm:$0xff]
        %v342 = vld [vmem:[%s260 + $0x100] sm:$0xff]
        %v343 = vld [vmem:[%s260 + $0x108] sm:$0xff]
        %v344 = vld [vmem:[%s260 + $0x110] sm:$0xff]
        %v345 = vld [vmem:[%s260 + $0x118] sm:$0xff]
        %v346 = vld [vmem:[%s260 + $0x120] sm:$0xff]
        %v347 = vld [vmem:[%s260 + $0x128] sm:$0xff]
        %v348 = vld [vmem:[%s260 + $0x130] sm:$0xff]
        %v349 = vld [vmem:[%s260 + $0x138] sm:$0xff]
        %v350 = vld [vmem:[%s260 + $0x140] sm:$0xff]
        %v351 = vld [vmem:[%s260 + $0x148] sm:$0xff]
        %v352 = vld [vmem:[%s260 + $0x150] sm:$0xff]
        %v353 = vld [vmem:[%s260 + $0x158] sm:$0xff]
        %v354 = vld [vmem:[%s260 + $0x160] sm:$0xff]
        %v355 = vld [vmem:[%s260 + $0x168] sm:$0xff]
        %v356 = vld [vmem:[%s260 + $0x170] sm:$0xff]
        %v357 = vld [vmem:[%s260 + $0x178] sm:$0xff]
        %v358 = vld [vmem:[%s260 + $0x180] sm:$0xff]
        %v359 = vld [vmem:[%s260 + $0x188] sm:$0xff]
        %v360 = vld [vmem:[%s260 + $0x190] sm:$0xff]
        %v361 = vld [vmem:[%s260 + $0x198] sm:$0xff]
        %v362 = vld [vmem:[%s260 + $0x1a0] sm:$0xff]
        %v363 = vld [vmem:[%s260 + $0x1a8] sm:$0xff]
        %v364 = vld [vmem:[%s260 + $0x1b0] sm:$0xff]
        %v365 = vld [vmem:[%s260 + $0x1b8] sm:$0xff]
        %v366 = vld [vmem:[%s260 + $0x1c0] sm:$0xff]
        %v367 = vld [vmem:[%s260 + $0x1c8] sm:$0xff]
        %v368 = vld [vmem:[%s260 + $0x1d0] sm:$0xff]
        %v369 = vld [vmem:[%s260 + $0x1d8] sm:$0xff]
        %v370 = vld [vmem:[%s260 + $0x1e0] sm:$0xff]
        %v371 = vld [vmem:[%s260 + $0x1e8] sm:$0xff]
        %v372 = vld [vmem:[%s260 + $0x1f0] sm:$0xff]
        %v373 = vld [vmem:[%s260 + $0x1f8] sm:$0xff]
        %v374 = vld [vmem:[%s260 + $0x200] sm:$0xff]
        %v375 = vld [vmem:[%s260 + $0x208] sm:$0xff]
        %v376 = vld [vmem:[%s260 + $0x210] sm:$0xff]
        %v377 = vld [vmem:[%s260 + $0x218] sm:$0xff]
        %v378 = vld [vmem:[%s260 + $0x220] sm:$0xff]
        %v379 = vld [vmem:[%s260 + $0x228] sm:$0xff]
        %v380 = vld [vmem:[%s260 + $0x230] sm:$0xff]
        %v381 = vld [vmem:[%s260 + $0x238] sm:$0xff]
        %v382 = vld [vmem:[%s260 + $0x240] sm:$0xff]
        %v383 = vld [vmem:[%s260 + $0x248] sm:$0xff]
        %v384 = vld [vmem:[%s260 + $0x250] sm:$0xff]
        %v385 = vld [vmem:[%s260 + $0x258] sm:$0xff]
        %v386 = vld [vmem:[%s260 + $0x260] sm:$0xff]
        %v387 = vld [vmem:[%s260 + $0x268] sm:$0xff]
        %v388 = vld [vmem:[%s260 + $0x270] sm:$0xff]
        %v389 = vld [vmem:[%s260 + $0x278] sm:$0xff]
        %v390 = vld [vmem:[%s260 + $0x280] sm:$0xff]
        %v391 = vld [vmem:[%s260 + $0x288] sm:$0xff]
        %v392 = vld [vmem:[%s260 + $0x290] sm:$0xff]
        %v393 = vld [vmem:[%s260 + $0x298] sm:$0xff]
        %v394 = vld [vmem:[%s260 + $0x2a0] sm:$0xff]
        %v395 = vld [vmem:[%s260 + $0x2a8] sm:$0xff]
        %v396 = vld [vmem:[%s260 + $0x2b0] sm:$0xff]
        %v397 = vld [vmem:[%s260 + $0x2b8] sm:$0xff]
        %v398 = vld [vmem:[%s260 + $0x2c0] sm:$0xff]
        %v399 = vld [vmem:[%s260 + $0x2c8] sm:$0xff]
        %v400 = vld [vmem:[%s260 + $0x2d0] sm:$0xff]
        %v401 = vld [vmem:[%s260 + $0x2d8] sm:$0xff]
        %v402 = vld [vmem:[%s260 + $0x2e0] sm:$0xff]
        %v403 = vld [vmem:[%s260 + $0x2e8] sm:$0xff]
        %v404 = vld [vmem:[%s260 + $0x2f0] sm:$0xff]
        %v405 = vld [vmem:[%s260 + $0x2f8] sm:$0xff]
        %v406 = vpack.c.bf16 %v316, %v310
        %v407 = vpack.c.bf16 %v317, %v311
        %v408 = vpack.c.bf16 %v318, %v312
        %v409 = vpack.c.bf16 %v319, %v313
        %v410 = vpack.c.bf16 %v320, %v314
        %v411 = vpack.c.bf16 %v321, %v315
        %v412 = vpack.c.bf16 %v328, %v322
        %v413 = vpack.c.bf16 %v329, %v323
        %v414 = vpack.c.bf16 %v330, %v324
        %v415 = vpack.c.bf16 %v331, %v325
        %v416 = vpack.c.bf16 %v332, %v326
        %v417 = vpack.c.bf16 %v333, %v327
        %v418 = vpack.c.bf16 %v340, %v334
        %v419 = vpack.c.bf16 %v341, %v335
        %v420 = vpack.c.bf16 %v342, %v336
        %v421 = vpack.c.bf16 %v343, %v337
        %v422 = vpack.c.bf16 %v344, %v338
        %v423 = vpack.c.bf16 %v345, %v339
        %v424 = vpack.c.bf16 %v352, %v346
        %v425 = vpack.c.bf16 %v353, %v347
        %v426 = vpack.c.bf16 %v354, %v348
        %v427 = vpack.c.bf16 %v355, %v349
        %v428 = vpack.c.bf16 %v356, %v350
        %v429 = vpack.c.bf16 %v357, %v351
        %v430 = vpack.c.bf16 %v364, %v358
        %v431 = vpack.c.bf16 %v365, %v359
        %v432 = vpack.c.bf16 %v366, %v360
        %v433 = vpack.c.bf16 %v367, %v361
        %v434 = vpack.c.bf16 %v368, %v362
        %v435 = vpack.c.bf16 %v369, %v363
        %v436 = vpack.c.bf16 %v376, %v370
        %v437 = vpack.c.bf16 %v377, %v371
        %v438 = vpack.c.bf16 %v378, %v372
        %v439 = vpack.c.bf16 %v379, %v373
        %v440 = vpack.c.bf16 %v380, %v374
        %v441 = vpack.c.bf16 %v381, %v375
        %v442 = vpack.c.bf16 %v388, %v382
        %v443 = vpack.c.bf16 %v389, %v383
        %v444 = vpack.c.bf16 %v390, %v384
        %v445 = vpack.c.bf16 %v391, %v385
        %v446 = vpack.c.bf16 %v392, %v386
        %v447 = vpack.c.bf16 %v393, %v387
        %v448 = vpack.c.bf16 %v400, %v394
        %v449 = vpack.c.bf16 %v401, %v395
        %v450 = vpack.c.bf16 %v402, %v396
        %v451 = vpack.c.bf16 %v403, %v397
        %v452 = vpack.c.bf16 %v404, %v398
        %v453 = vpack.c.bf16 %v405, %v399
        %v454 = vld [vmem:[#allocation5] sm:$0xff]
        %v455 = vld [vmem:[#allocation5 + $0x8] sm:$0xff]
        %v456 = vld [vmem:[#allocation5 + $0x10] sm:$0xff]
        %v457 = vld [vmem:[#allocation5 + $0x18] sm:$0xff]
        %v458 = vld [vmem:[#allocation5 + $0x20] sm:$0xff]
        %v459 = vld [vmem:[#allocation5 + $0x28] sm:$0xff]
        %v460 = vld [vmem:[#allocation5 + $0x30] sm:$0xff]
        %v461 = vld [vmem:[#allocation5 + $0x38] sm:$0xff]
        %v462 = vld [vmem:[#allocation5 + $0x40] sm:$0xff]
        %v463 = vld [vmem:[#allocation5 + $0x48] sm:$0xff]
        %v464 = vld [vmem:[#allocation5 + $0x50] sm:$0xff]
        %v465 = vld [vmem:[#allocation5 + $0x58] sm:$0xff]
        %v466 = vld [vmem:[#allocation5 + $0x60] sm:$0xff]
        %v467 = vld [vmem:[#allocation5 + $0x68] sm:$0xff]
        %v468 = vld [vmem:[#allocation5 + $0x70] sm:$0xff]
        %v469 = vld [vmem:[#allocation5 + $0x78] sm:$0xff]
        %v470 = vld [vmem:[#allocation5 + $0x80] sm:$0xff]
        %v471 = vld [vmem:[#allocation5 + $0x88] sm:$0xff]
        %v472 = vld [vmem:[#allocation5 + $0x90] sm:$0xff]
        %v473 = vld [vmem:[#allocation5 + $0x98] sm:$0xff]
        %v474 = vld [vmem:[#allocation5 + $0xa0] sm:$0xff]
        %v475 = vld [vmem:[#allocation5 + $0xa8] sm:$0xff]
        %v476 = vld [vmem:[#allocation5 + $0xb0] sm:$0xff]
        %v477 = vld [vmem:[#allocation5 + $0xb8] sm:$0xff]
        %v478 = vld [vmem:[#allocation5 + $0xc0] sm:$0xff]
        %v479 = vld [vmem:[#allocation5 + $0xc8] sm:$0xff]
        %v480 = vld [vmem:[#allocation5 + $0xd0] sm:$0xff]
        %v481 = vld [vmem:[#allocation5 + $0xd8] sm:$0xff]
        %v482 = vld [vmem:[#allocation5 + $0xe0] sm:$0xff]
        %v483 = vld [vmem:[#allocation5 + $0xe8] sm:$0xff]
        %v484 = vld [vmem:[#allocation5 + $0xf0] sm:$0xff]
        %v485 = vld [vmem:[#allocation5 + $0xf8] sm:$0xff]
        %v486 = vld [vmem:[#allocation5 + $0x100] sm:$0xff]
        %v487 = vld [vmem:[#allocation5 + $0x108] sm:$0xff]
        %v488 = vld [vmem:[#allocation5 + $0x110] sm:$0xff]
        %v489 = vld [vmem:[#allocation5 + $0x118] sm:$0xff]
        %v490 = vld [vmem:[#allocation5 + $0x120] sm:$0xff]
        %v491 = vld [vmem:[#allocation5 + $0x128] sm:$0xff]
        %v492 = vld [vmem:[#allocation5 + $0x130] sm:$0xff]
        %v493 = vld [vmem:[#allocation5 + $0x138] sm:$0xff]
        %v494 = vld [vmem:[#allocation5 + $0x140] sm:$0xff]
        %v495 = vld [vmem:[#allocation5 + $0x148] sm:$0xff]
        %v496 = vld [vmem:[#allocation5 + $0x150] sm:$0xff]
        %v497 = vld [vmem:[#allocation5 + $0x158] sm:$0xff]
        %v498 = vld [vmem:[#allocation5 + $0x160] sm:$0xff]
        %v499 = vld [vmem:[#allocation5 + $0x168] sm:$0xff]
        %v500 = vld [vmem:[#allocation5 + $0x170] sm:$0xff]
        %v501 = vld [vmem:[#allocation5 + $0x178] sm:$0xff]
        %v502 = vld [vmem:[#allocation5 + $0x180] sm:$0xff]
        %v503 = vld [vmem:[#allocation5 + $0x188] sm:$0xff]
        %v504 = vld [vmem:[#allocation5 + $0x190] sm:$0xff]
        %v505 = vld [vmem:[#allocation5 + $0x198] sm:$0xff]
        %v506 = vld [vmem:[#allocation5 + $0x1a0] sm:$0xff]
        %v507 = vld [vmem:[#allocation5 + $0x1a8] sm:$0xff]
        %v508 = vld [vmem:[#allocation5 + $0x1b0] sm:$0xff]
        %v509 = vld [vmem:[#allocation5 + $0x1b8] sm:$0xff]
        %v510 = vld [vmem:[#allocation5 + $0x1c0] sm:$0xff]
        %v511 = vld [vmem:[#allocation5 + $0x1c8] sm:$0xff]
        %v512 = vld [vmem:[#allocation5 + $0x1d0] sm:$0xff]
        %v513 = vld [vmem:[#allocation5 + $0x1d8] sm:$0xff]
        %v514 = vld [vmem:[#allocation5 + $0x1e0] sm:$0xff]
        %v515 = vld [vmem:[#allocation5 + $0x1e8] sm:$0xff]
        %v516 = vld [vmem:[#allocation5 + $0x1f0] sm:$0xff]
        %v517 = vld [vmem:[#allocation5 + $0x1f8] sm:$0xff]
        %v518 = vld [vmem:[#allocation5 + $0x200] sm:$0xff]
        %v519 = vld [vmem:[#allocation5 + $0x208] sm:$0xff]
        %v520 = vld [vmem:[#allocation5 + $0x210] sm:$0xff]
        %v521 = vld [vmem:[#allocation5 + $0x218] sm:$0xff]
        %v522 = vld [vmem:[#allocation5 + $0x220] sm:$0xff]
        %v523 = vld [vmem:[#allocation5 + $0x228] sm:$0xff]
        %v524 = vld [vmem:[#allocation5 + $0x230] sm:$0xff]
        %v525 = vld [vmem:[#allocation5 + $0x238] sm:$0xff]
        %v526 = vld [vmem:[#allocation5 + $0x240] sm:$0xff]
        %v527 = vld [vmem:[#allocation5 + $0x248] sm:$0xff]
        %v528 = vld [vmem:[#allocation5 + $0x250] sm:$0xff]
        %v529 = vld [vmem:[#allocation5 + $0x258] sm:$0xff]
        %v530 = vld [vmem:[#allocation5 + $0x260] sm:$0xff]
        %v531 = vld [vmem:[#allocation5 + $0x268] sm:$0xff]
        %v532 = vld [vmem:[#allocation5 + $0x270] sm:$0xff]
        %v533 = vld [vmem:[#allocation5 + $0x278] sm:$0xff]
        %v534 = vld [vmem:[#allocation5 + $0x280] sm:$0xff]
        %v535 = vld [vmem:[#allocation5 + $0x288] sm:$0xff]
        %v536 = vld [vmem:[#allocation5 + $0x290] sm:$0xff]
        %v537 = vld [vmem:[#allocation5 + $0x298] sm:$0xff]
        %v538 = vld [vmem:[#allocation5 + $0x2a0] sm:$0xff]
        %v539 = vld [vmem:[#allocation5 + $0x2a8] sm:$0xff]
        %v540 = vld [vmem:[#allocation5 + $0x2b0] sm:$0xff]
        %v541 = vld [vmem:[#allocation5 + $0x2b8] sm:$0xff]
        %v542 = vld [vmem:[#allocation5 + $0x2c0] sm:$0xff]
        %v543 = vld [vmem:[#allocation5 + $0x2c8] sm:$0xff]
        %v544 = vld [vmem:[#allocation5 + $0x2d0] sm:$0xff]
        %v545 = vld [vmem:[#allocation5 + $0x2d8] sm:$0xff]
        %v546 = vld [vmem:[#allocation5 + $0x2e0] sm:$0xff]
        %v547 = vld [vmem:[#allocation5 + $0x2e8] sm:$0xff]
        %v548 = vld [vmem:[#allocation5 + $0x2f0] sm:$0xff]
        %v549 = vld [vmem:[#allocation5 + $0x2f8] sm:$0xff]
        %v550 = vld [vmem:[#allocation5 + $0x300] sm:$0xff]
        %v551 = vld [vmem:[#allocation5 + $0x308] sm:$0xff]
        %v552 = vld [vmem:[#allocation5 + $0x310] sm:$0xff]
        %v553 = vld [vmem:[#allocation5 + $0x318] sm:$0xff]
        %v554 = vld [vmem:[#allocation5 + $0x320] sm:$0xff]
        %v555 = vld [vmem:[#allocation5 + $0x328] sm:$0xff]
        %v556 = vld [vmem:[#allocation5 + $0x330] sm:$0xff]
        %v557 = vld [vmem:[#allocation5 + $0x338] sm:$0xff]
        %v558 = vld [vmem:[#allocation5 + $0x340] sm:$0xff]
        %v559 = vld [vmem:[#allocation5 + $0x348] sm:$0xff]
        %v560 = vld [vmem:[#allocation5 + $0x350] sm:$0xff]
        %v561 = vld [vmem:[#allocation5 + $0x358] sm:$0xff]
        %v562 = vld [vmem:[#allocation5 + $0x360] sm:$0xff]
        %v563 = vld [vmem:[#allocation5 + $0x368] sm:$0xff]
        %v564 = vld [vmem:[#allocation5 + $0x370] sm:$0xff]
        %v565 = vld [vmem:[#allocation5 + $0x378] sm:$0xff]
        %v566 = vld [vmem:[#allocation5 + $0x380] sm:$0xff]
        %v567 = vld [vmem:[#allocation5 + $0x388] sm:$0xff]
        %v568 = vld [vmem:[#allocation5 + $0x390] sm:$0xff]
        %v569 = vld [vmem:[#allocation5 + $0x398] sm:$0xff]
        %v570 = vld [vmem:[#allocation5 + $0x3a0] sm:$0xff]
        %v571 = vld [vmem:[#allocation5 + $0x3a8] sm:$0xff]
        %v572 = vld [vmem:[#allocation5 + $0x3b0] sm:$0xff]
        %v573 = vld [vmem:[#allocation5 + $0x3b8] sm:$0xff]
        %v574 = vld [vmem:[#allocation5 + $0x3c0] sm:$0xff]
        %v575 = vld [vmem:[#allocation5 + $0x3c8] sm:$0xff]
        %v576 = vld [vmem:[#allocation5 + $0x3d0] sm:$0xff]
        %v577 = vld [vmem:[#allocation5 + $0x3d8] sm:$0xff]
        %v578 = vld [vmem:[#allocation5 + $0x3e0] sm:$0xff]
        %v579 = vld [vmem:[#allocation5 + $0x3e8] sm:$0xff]
        %v580 = vld [vmem:[#allocation5 + $0x3f0] sm:$0xff]
        %v581 = vld [vmem:[#allocation5 + $0x3f8] sm:$0xff]
        %v582 = vld [vmem:[#allocation5 + $0x400] sm:$0xff]
        %v583 = vld [vmem:[#allocation5 + $0x408] sm:$0xff]
        %v584 = vld [vmem:[#allocation5 + $0x410] sm:$0xff]
        %v585 = vld [vmem:[#allocation5 + $0x418] sm:$0xff]
        %v586 = vld [vmem:[#allocation5 + $0x420] sm:$0xff]
        %v587 = vld [vmem:[#allocation5 + $0x428] sm:$0xff]
        %v588 = vld [vmem:[#allocation5 + $0x430] sm:$0xff]
        %v589 = vld [vmem:[#allocation5 + $0x438] sm:$0xff]
        %v590 = vld [vmem:[#allocation5 + $0x440] sm:$0xff]
        %v591 = vld [vmem:[#allocation5 + $0x448] sm:$0xff]
        %v592 = vld [vmem:[#allocation5 + $0x450] sm:$0xff]
        %v593 = vld [vmem:[#allocation5 + $0x458] sm:$0xff]
        %v594 = vld [vmem:[#allocation5 + $0x460] sm:$0xff]
        %v595 = vld [vmem:[#allocation5 + $0x468] sm:$0xff]
        %v596 = vld [vmem:[#allocation5 + $0x470] sm:$0xff]
        %v597 = vld [vmem:[#allocation5 + $0x478] sm:$0xff]
        %v598 = vld [vmem:[#allocation5 + $0x480] sm:$0xff]
        %v599 = vld [vmem:[#allocation5 + $0x488] sm:$0xff]
        %v600 = vld [vmem:[#allocation5 + $0x490] sm:$0xff]
        %v601 = vld [vmem:[#allocation5 + $0x498] sm:$0xff]
        %v602 = vld [vmem:[#allocation5 + $0x4a0] sm:$0xff]
        %v603 = vld [vmem:[#allocation5 + $0x4a8] sm:$0xff]
        %v604 = vld [vmem:[#allocation5 + $0x4b0] sm:$0xff]
        %v605 = vld [vmem:[#allocation5 + $0x4b8] sm:$0xff]
        %v606 = vld [vmem:[#allocation5 + $0x4c0] sm:$0xff]
        %v607 = vld [vmem:[#allocation5 + $0x4c8] sm:$0xff]
        %v608 = vld [vmem:[#allocation5 + $0x4d0] sm:$0xff]
        %v609 = vld [vmem:[#allocation5 + $0x4d8] sm:$0xff]
        %v610 = vld [vmem:[#allocation5 + $0x4e0] sm:$0xff]
        %v611 = vld [vmem:[#allocation5 + $0x4e8] sm:$0xff]
        %v612 = vld [vmem:[#allocation5 + $0x4f0] sm:$0xff]
        %v613 = vld [vmem:[#allocation5 + $0x4f8] sm:$0xff]
        %v614 = vld [vmem:[#allocation5 + $0x500] sm:$0xff]
        %v615 = vld [vmem:[#allocation5 + $0x508] sm:$0xff]
        %v616 = vld [vmem:[#allocation5 + $0x510] sm:$0xff]
        %v617 = vld [vmem:[#allocation5 + $0x518] sm:$0xff]
        %v618 = vld [vmem:[#allocation5 + $0x520] sm:$0xff]
        %v619 = vld [vmem:[#allocation5 + $0x528] sm:$0xff]
        %v620 = vld [vmem:[#allocation5 + $0x530] sm:$0xff]
        %v621 = vld [vmem:[#allocation5 + $0x538] sm:$0xff]
        %v622 = vld [vmem:[#allocation5 + $0x540] sm:$0xff]
        %v623 = vld [vmem:[#allocation5 + $0x548] sm:$0xff]
        %v624 = vld [vmem:[#allocation5 + $0x550] sm:$0xff]
        %v625 = vld [vmem:[#allocation5 + $0x558] sm:$0xff]
        %v626 = vld [vmem:[#allocation5 + $0x560] sm:$0xff]
        %v627 = vld [vmem:[#allocation5 + $0x568] sm:$0xff]
        %v628 = vld [vmem:[#allocation5 + $0x570] sm:$0xff]
        %v629 = vld [vmem:[#allocation5 + $0x578] sm:$0xff]
        %v630 = vld [vmem:[#allocation5 + $0x580] sm:$0xff]
        %v631 = vld [vmem:[#allocation5 + $0x588] sm:$0xff]
        %v632 = vld [vmem:[#allocation5 + $0x590] sm:$0xff]
        %v633 = vld [vmem:[#allocation5 + $0x598] sm:$0xff]
        %v634 = vld [vmem:[#allocation5 + $0x5a0] sm:$0xff]
        %v635 = vld [vmem:[#allocation5 + $0x5a8] sm:$0xff]
        %v636 = vld [vmem:[#allocation5 + $0x5b0] sm:$0xff]
        %v637 = vld [vmem:[#allocation5 + $0x5b8] sm:$0xff]
        %v638 = vld [vmem:[#allocation5 + $0x5c0] sm:$0xff]
        %v639 = vld [vmem:[#allocation5 + $0x5c8] sm:$0xff]
        %v640 = vld [vmem:[#allocation5 + $0x5d0] sm:$0xff]
        %v641 = vld [vmem:[#allocation5 + $0x5d8] sm:$0xff]
        %v642 = vld [vmem:[#allocation5 + $0x5e0] sm:$0xff]
        %v643 = vld [vmem:[#allocation5 + $0x5e8] sm:$0xff]
        %v644 = vld [vmem:[#allocation5 + $0x5f0] sm:$0xff]
        %v645 = vld [vmem:[#allocation5 + $0x5f8] sm:$0xff]
        %v646 = vld [vmem:[#allocation5 + $0x600] sm:$0xff]
        %v647 = vld [vmem:[#allocation5 + $0x608] sm:$0xff]
        %v648 = vld [vmem:[#allocation5 + $0x610] sm:$0xff]
        %v649 = vld [vmem:[#allocation5 + $0x618] sm:$0xff]
        %v650 = vld [vmem:[#allocation5 + $0x620] sm:$0xff]
        %v651 = vld [vmem:[#allocation5 + $0x628] sm:$0xff]
        %v652 = vld [vmem:[#allocation5 + $0x630] sm:$0xff]
        %v653 = vld [vmem:[#allocation5 + $0x638] sm:$0xff]
        %v654 = vld [vmem:[#allocation5 + $0x640] sm:$0xff]
        %v655 = vld [vmem:[#allocation5 + $0x648] sm:$0xff]
        %v656 = vld [vmem:[#allocation5 + $0x650] sm:$0xff]
        %v657 = vld [vmem:[#allocation5 + $0x658] sm:$0xff]
        %v658 = vld [vmem:[#allocation5 + $0x660] sm:$0xff]
        %v659 = vld [vmem:[#allocation5 + $0x668] sm:$0xff]
        %v660 = vld [vmem:[#allocation5 + $0x670] sm:$0xff]
        %v661 = vld [vmem:[#allocation5 + $0x678] sm:$0xff]
        %v662 = vld [vmem:[#allocation5 + $0x680] sm:$0xff]
        %v663 = vld [vmem:[#allocation5 + $0x688] sm:$0xff]
        %v664 = vld [vmem:[#allocation5 + $0x690] sm:$0xff]
        %v665 = vld [vmem:[#allocation5 + $0x698] sm:$0xff]
        %v666 = vld [vmem:[#allocation5 + $0x6a0] sm:$0xff]
        %v667 = vld [vmem:[#allocation5 + $0x6a8] sm:$0xff]
        %v668 = vld [vmem:[#allocation5 + $0x6b0] sm:$0xff]
        %v669 = vld [vmem:[#allocation5 + $0x6b8] sm:$0xff]
        %v670 = vld [vmem:[#allocation5 + $0x6c0] sm:$0xff]
        %v671 = vld [vmem:[#allocation5 + $0x6c8] sm:$0xff]
        %v672 = vld [vmem:[#allocation5 + $0x6d0] sm:$0xff]
        %v673 = vld [vmem:[#allocation5 + $0x6d8] sm:$0xff]
        %v674 = vld [vmem:[#allocation5 + $0x6e0] sm:$0xff]
        %v675 = vld [vmem:[#allocation5 + $0x6e8] sm:$0xff]
        %v676 = vld [vmem:[#allocation5 + $0x6f0] sm:$0xff]
        %v677 = vld [vmem:[#allocation5 + $0x6f8] sm:$0xff]
        %v678 = vld [vmem:[#allocation5 + $0x700] sm:$0xff]
        %v679 = vld [vmem:[#allocation5 + $0x708] sm:$0xff]
        %v680 = vld [vmem:[#allocation5 + $0x710] sm:$0xff]
        %v681 = vld [vmem:[#allocation5 + $0x718] sm:$0xff]
        %v682 = vld [vmem:[#allocation5 + $0x720] sm:$0xff]
        %v683 = vld [vmem:[#allocation5 + $0x728] sm:$0xff]
        %v684 = vld [vmem:[#allocation5 + $0x730] sm:$0xff]
        %v685 = vld [vmem:[#allocation5 + $0x738] sm:$0xff]
        %v686 = vld [vmem:[#allocation5 + $0x740] sm:$0xff]
        %v687 = vld [vmem:[#allocation5 + $0x748] sm:$0xff]
        %v688 = vld [vmem:[#allocation5 + $0x750] sm:$0xff]
        %v689 = vld [vmem:[#allocation5 + $0x758] sm:$0xff]
        %v690 = vld [vmem:[#allocation5 + $0x760] sm:$0xff]
        %v691 = vld [vmem:[#allocation5 + $0x768] sm:$0xff]
        %v692 = vld [vmem:[#allocation5 + $0x770] sm:$0xff]
        %v693 = vld [vmem:[#allocation5 + $0x778] sm:$0xff]
        %v694 = vld [vmem:[#allocation5 + $0x780] sm:$0xff]
        %v695 = vld [vmem:[#allocation5 + $0x788] sm:$0xff]
        %v696 = vld [vmem:[#allocation5 + $0x790] sm:$0xff]
        %v697 = vld [vmem:[#allocation5 + $0x798] sm:$0xff]
        %v698 = vld [vmem:[#allocation5 + $0x7a0] sm:$0xff]
        %v699 = vld [vmem:[#allocation5 + $0x7a8] sm:$0xff]
        %v700 = vld [vmem:[#allocation5 + $0x7b0] sm:$0xff]
        %v701 = vld [vmem:[#allocation5 + $0x7b8] sm:$0xff]
        %v702 = vld [vmem:[#allocation5 + $0x7c0] sm:$0xff]
        %v703 = vld [vmem:[#allocation5 + $0x7c8] sm:$0xff]
        %v704 = vld [vmem:[#allocation5 + $0x7d0] sm:$0xff]
        %v705 = vld [vmem:[#allocation5 + $0x7d8] sm:$0xff]
        %v706 = vld [vmem:[#allocation5 + $0x7e0] sm:$0xff]
        %v707 = vld [vmem:[#allocation5 + $0x7e8] sm:$0xff]
        %v708 = vld [vmem:[#allocation5 + $0x7f0] sm:$0xff]
        %v709 = vld [vmem:[#allocation5 + $0x7f8] sm:$0xff]
        %v710 = vld [vmem:[#allocation5 + $0x800] sm:$0xff]
        %v711 = vld [vmem:[#allocation5 + $0x808] sm:$0xff]
        %v712 = vld [vmem:[#allocation5 + $0x810] sm:$0xff]
        %v713 = vld [vmem:[#allocation5 + $0x818] sm:$0xff]
        %v714 = vld [vmem:[#allocation5 + $0x820] sm:$0xff]
        %v715 = vld [vmem:[#allocation5 + $0x828] sm:$0xff]
        %v716 = vld [vmem:[#allocation5 + $0x830] sm:$0xff]
        %v717 = vld [vmem:[#allocation5 + $0x838] sm:$0xff]
        %v718 = vld [vmem:[#allocation5 + $0x840] sm:$0xff]
        %v719 = vld [vmem:[#allocation5 + $0x848] sm:$0xff]
        %v720 = vld [vmem:[#allocation5 + $0x850] sm:$0xff]
        %v721 = vld [vmem:[#allocation5 + $0x858] sm:$0xff]
        %v722 = vld [vmem:[#allocation5 + $0x860] sm:$0xff]
        %v723 = vld [vmem:[#allocation5 + $0x868] sm:$0xff]
        %v724 = vld [vmem:[#allocation5 + $0x870] sm:$0xff]
        %v725 = vld [vmem:[#allocation5 + $0x878] sm:$0xff]
        %v726 = vld [vmem:[#allocation5 + $0x880] sm:$0xff]
        %v727 = vld [vmem:[#allocation5 + $0x888] sm:$0xff]
        %v728 = vld [vmem:[#allocation5 + $0x890] sm:$0xff]
        %v729 = vld [vmem:[#allocation5 + $0x898] sm:$0xff]
        %v730 = vld [vmem:[#allocation5 + $0x8a0] sm:$0xff]
        %v731 = vld [vmem:[#allocation5 + $0x8a8] sm:$0xff]
        %v732 = vld [vmem:[#allocation5 + $0x8b0] sm:$0xff]
        %v733 = vld [vmem:[#allocation5 + $0x8b8] sm:$0xff]
        %v734 = vld [vmem:[#allocation5 + $0x8c0] sm:$0xff]
        %v735 = vld [vmem:[#allocation5 + $0x8c8] sm:$0xff]
        %v736 = vld [vmem:[#allocation5 + $0x8d0] sm:$0xff]
        %v737 = vld [vmem:[#allocation5 + $0x8d8] sm:$0xff]
        %v738 = vld [vmem:[#allocation5 + $0x8e0] sm:$0xff]
        %v739 = vld [vmem:[#allocation5 + $0x8e8] sm:$0xff]
        %v740 = vld [vmem:[#allocation5 + $0x8f0] sm:$0xff]
        %v741 = vld [vmem:[#allocation5 + $0x8f8] sm:$0xff]
        %v742 = vld [vmem:[#allocation5 + $0x900] sm:$0xff]
        %v743 = vld [vmem:[#allocation5 + $0x908] sm:$0xff]
        %v744 = vld [vmem:[#allocation5 + $0x910] sm:$0xff]
        %v745 = vld [vmem:[#allocation5 + $0x918] sm:$0xff]
        %v746 = vld [vmem:[#allocation5 + $0x920] sm:$0xff]
        %v747 = vld [vmem:[#allocation5 + $0x928] sm:$0xff]
        %v748 = vld [vmem:[#allocation5 + $0x930] sm:$0xff]
        %v749 = vld [vmem:[#allocation5 + $0x938] sm:$0xff]
        %v750 = vld [vmem:[#allocation5 + $0x940] sm:$0xff]
        %v751 = vld [vmem:[#allocation5 + $0x948] sm:$0xff]
        %v752 = vld [vmem:[#allocation5 + $0x950] sm:$0xff]
        %v753 = vld [vmem:[#allocation5 + $0x958] sm:$0xff]
        %v754 = vld [vmem:[#allocation5 + $0x960] sm:$0xff]
        %v755 = vld [vmem:[#allocation5 + $0x968] sm:$0xff]
        %v756 = vld [vmem:[#allocation5 + $0x970] sm:$0xff]
        %v757 = vld [vmem:[#allocation5 + $0x978] sm:$0xff]
        %v758 = vld [vmem:[#allocation5 + $0x980] sm:$0xff]
        %v759 = vld [vmem:[#allocation5 + $0x988] sm:$0xff]
        %v760 = vld [vmem:[#allocation5 + $0x990] sm:$0xff]
        %v761 = vld [vmem:[#allocation5 + $0x998] sm:$0xff]
        %v762 = vld [vmem:[#allocation5 + $0x9a0] sm:$0xff]
        %v763 = vld [vmem:[#allocation5 + $0x9a8] sm:$0xff]
        %v764 = vld [vmem:[#allocation5 + $0x9b0] sm:$0xff]
        %v765 = vld [vmem:[#allocation5 + $0x9b8] sm:$0xff]
        %v766 = vld [vmem:[#allocation5 + $0x9c0] sm:$0xff]
        %v767 = vld [vmem:[#allocation5 + $0x9c8] sm:$0xff]
        %v768 = vld [vmem:[#allocation5 + $0x9d0] sm:$0xff]
        %v769 = vld [vmem:[#allocation5 + $0x9d8] sm:$0xff]
        %v770 = vld [vmem:[#allocation5 + $0x9e0] sm:$0xff]
        %v771 = vld [vmem:[#allocation5 + $0x9e8] sm:$0xff]
        %v772 = vld [vmem:[#allocation5 + $0x9f0] sm:$0xff]
        %v773 = vld [vmem:[#allocation5 + $0x9f8] sm:$0xff]
        %v774 = vld [vmem:[#allocation5 + $0xa00] sm:$0xff]
        %v775 = vld [vmem:[#allocation5 + $0xa08] sm:$0xff]
        %v776 = vld [vmem:[#allocation5 + $0xa10] sm:$0xff]
        %v777 = vld [vmem:[#allocation5 + $0xa18] sm:$0xff]
        %v778 = vld [vmem:[#allocation5 + $0xa20] sm:$0xff]
        %v779 = vld [vmem:[#allocation5 + $0xa28] sm:$0xff]
        %v780 = vld [vmem:[#allocation5 + $0xa30] sm:$0xff]
        %v781 = vld [vmem:[#allocation5 + $0xa38] sm:$0xff]
        %v782 = vld [vmem:[#allocation5 + $0xa40] sm:$0xff]
        %v783 = vld [vmem:[#allocation5 + $0xa48] sm:$0xff]
        %v784 = vld [vmem:[#allocation5 + $0xa50] sm:$0xff]
        %v785 = vld [vmem:[#allocation5 + $0xa58] sm:$0xff]
        %v786 = vld [vmem:[#allocation5 + $0xa60] sm:$0xff]
        %v787 = vld [vmem:[#allocation5 + $0xa68] sm:$0xff]
        %v788 = vld [vmem:[#allocation5 + $0xa70] sm:$0xff]
        %v789 = vld [vmem:[#allocation5 + $0xa78] sm:$0xff]
        %v790 = vld [vmem:[#allocation5 + $0xa80] sm:$0xff]
        %v791 = vld [vmem:[#allocation5 + $0xa88] sm:$0xff]
        %v792 = vld [vmem:[#allocation5 + $0xa90] sm:$0xff]
        %v793 = vld [vmem:[#allocation5 + $0xa98] sm:$0xff]
        %v794 = vld [vmem:[#allocation5 + $0xaa0] sm:$0xff]
        %v795 = vld [vmem:[#allocation5 + $0xaa8] sm:$0xff]
        %v796 = vld [vmem:[#allocation5 + $0xab0] sm:$0xff]
        %v797 = vld [vmem:[#allocation5 + $0xab8] sm:$0xff]
        %v798 = vld [vmem:[#allocation5 + $0xac0] sm:$0xff]
        %v799 = vld [vmem:[#allocation5 + $0xac8] sm:$0xff]
        %v800 = vld [vmem:[#allocation5 + $0xad0] sm:$0xff]
        %v801 = vld [vmem:[#allocation5 + $0xad8] sm:$0xff]
        %v802 = vld [vmem:[#allocation5 + $0xae0] sm:$0xff]
        %v803 = vld [vmem:[#allocation5 + $0xae8] sm:$0xff]
        %v804 = vld [vmem:[#allocation5 + $0xaf0] sm:$0xff]
        %v805 = vld [vmem:[#allocation5 + $0xaf8] sm:$0xff]
        %v806 = vld [vmem:[#allocation5 + $0xb00] sm:$0xff]
        %v807 = vld [vmem:[#allocation5 + $0xb08] sm:$0xff]
        %v808 = vld [vmem:[#allocation5 + $0xb10] sm:$0xff]
        %v809 = vld [vmem:[#allocation5 + $0xb18] sm:$0xff]
        %v810 = vld [vmem:[#allocation5 + $0xb20] sm:$0xff]
        %v811 = vld [vmem:[#allocation5 + $0xb28] sm:$0xff]
        %v812 = vld [vmem:[#allocation5 + $0xb30] sm:$0xff]
        %v813 = vld [vmem:[#allocation5 + $0xb38] sm:$0xff]
        %v814 = vld [vmem:[#allocation5 + $0xb40] sm:$0xff]
        %v815 = vld [vmem:[#allocation5 + $0xb48] sm:$0xff]
        %v816 = vld [vmem:[#allocation5 + $0xb50] sm:$0xff]
        %v817 = vld [vmem:[#allocation5 + $0xb58] sm:$0xff]
        %v818 = vld [vmem:[#allocation5 + $0xb60] sm:$0xff]
        %v819 = vld [vmem:[#allocation5 + $0xb68] sm:$0xff]
        %v820 = vld [vmem:[#allocation5 + $0xb70] sm:$0xff]
        %v821 = vld [vmem:[#allocation5 + $0xb78] sm:$0xff]
        %v822 = vld [vmem:[#allocation5 + $0xb80] sm:$0xff]
        %v823 = vld [vmem:[#allocation5 + $0xb88] sm:$0xff]
        %v824 = vld [vmem:[#allocation5 + $0xb90] sm:$0xff]
        %v825 = vld [vmem:[#allocation5 + $0xb98] sm:$0xff]
        %v826 = vld [vmem:[#allocation5 + $0xba0] sm:$0xff]
        %v827 = vld [vmem:[#allocation5 + $0xba8] sm:$0xff]
        %v828 = vld [vmem:[#allocation5 + $0xbb0] sm:$0xff]
        %v829 = vld [vmem:[#allocation5 + $0xbb8] sm:$0xff]
        %v830 = vld [vmem:[#allocation5 + $0xbc0] sm:$0xff]
        %v831 = vld [vmem:[#allocation5 + $0xbc8] sm:$0xff]
        %v832 = vld [vmem:[#allocation5 + $0xbd0] sm:$0xff]
        %v833 = vld [vmem:[#allocation5 + $0xbd8] sm:$0xff]
        %v834 = vld [vmem:[#allocation5 + $0xbe0] sm:$0xff]
        %v835 = vld [vmem:[#allocation5 + $0xbe8] sm:$0xff]
        %v836 = vld [vmem:[#allocation5 + $0xbf0] sm:$0xff]
        %v837 = vld [vmem:[#allocation5 + $0xbf8] sm:$0xff]
        %v838 = vld [vmem:[#allocation7] sm:$0xff]
        %v840 = vperm.slane %v838, 0
        %v841 = vperm.slane %v838, 1
        %v842 = vperm.slane %v838, 2
        %v843 = vperm.slane %v838, 3
        %v844 = vperm.slane %v838, 4
        %v845 = vperm.slane %v838, 5
        %v846 = vperm.slane %v838, 6
        %v847 = vperm.slane %v838, 7
        %v1240 = vunpack.c.l.b16 %v454
        %v1241 = vunpack.c.h.b16 %v454
        %v1242 = vunpack.c.l.b16 %v455
        %v1243 = vunpack.c.h.b16 %v455
        %v1244 = vunpack.c.l.b16 %v456
        %v1245 = vunpack.c.h.b16 %v456
        %v1246 = vunpack.c.l.b16 %v457
        %v1247 = vunpack.c.h.b16 %v457
        %v1248 = vunpack.c.l.b16 %v458
        %v1249 = vunpack.c.h.b16 %v458
        %v1250 = vunpack.c.l.b16 %v459
        %v1251 = vunpack.c.h.b16 %v459
        %v1252 = vunpack.c.l.b16 %v460
        %v1253 = vunpack.c.h.b16 %v460
        %v1254 = vunpack.c.l.b16 %v461
        %v1255 = vunpack.c.h.b16 %v461
        %v1256 = vunpack.c.l.b16 %v462
        %v1257 = vunpack.c.h.b16 %v462
        %v1258 = vunpack.c.l.b16 %v463
        %v1259 = vunpack.c.h.b16 %v463
        %v1260 = vunpack.c.l.b16 %v464
        %v1261 = vunpack.c.h.b16 %v464
        %v1262 = vunpack.c.l.b16 %v465
        %v1263 = vunpack.c.h.b16 %v465
        %v1264 = vunpack.c.l.b16 %v466
        %v1265 = vunpack.c.h.b16 %v466
        %v1266 = vunpack.c.l.b16 %v467
        %v1267 = vunpack.c.h.b16 %v467
        %v1268 = vunpack.c.l.b16 %v468
        %v1269 = vunpack.c.h.b16 %v468
        %v1270 = vunpack.c.l.b16 %v469
        %v1271 = vunpack.c.h.b16 %v469
        %v1272 = vunpack.c.l.b16 %v470
        %v1273 = vunpack.c.h.b16 %v470
        %v1274 = vunpack.c.l.b16 %v471
        %v1275 = vunpack.c.h.b16 %v471
        %v1276 = vunpack.c.l.b16 %v472
        %v1277 = vunpack.c.h.b16 %v472
        %v1278 = vunpack.c.l.b16 %v473
        %v1279 = vunpack.c.h.b16 %v473
        %v1280 = vunpack.c.l.b16 %v474
        %v1281 = vunpack.c.h.b16 %v474
        %v1282 = vunpack.c.l.b16 %v475
        %v1283 = vunpack.c.h.b16 %v475
        %v1284 = vunpack.c.l.b16 %v476
        %v1285 = vunpack.c.h.b16 %v476
        %v1286 = vunpack.c.l.b16 %v477
        %v1287 = vunpack.c.h.b16 %v477
        %v1288 = vunpack.c.l.b16 %v478
        %v1289 = vunpack.c.h.b16 %v478
        %v1290 = vunpack.c.l.b16 %v479
        %v1291 = vunpack.c.h.b16 %v479
        %v1292 = vunpack.c.l.b16 %v480
        %v1293 = vunpack.c.h.b16 %v480
        %v1294 = vunpack.c.l.b16 %v481
        %v1295 = vunpack.c.h.b16 %v481
        %v1296 = vunpack.c.l.b16 %v482
        %v1297 = vunpack.c.h.b16 %v482
        %v1298 = vunpack.c.l.b16 %v483
        %v1299 = vunpack.c.h.b16 %v483
        %v1300 = vunpack.c.l.b16 %v484
        %v1301 = vunpack.c.h.b16 %v484
        %v1302 = vunpack.c.l.b16 %v485
        %v1303 = vunpack.c.h.b16 %v485
        %v1304 = vunpack.c.l.b16 %v486
        %v1305 = vunpack.c.h.b16 %v486
        %v1306 = vunpack.c.l.b16 %v487
        %v1307 = vunpack.c.h.b16 %v487
        %v1308 = vunpack.c.l.b16 %v488
        %v1309 = vunpack.c.h.b16 %v488
        %v1310 = vunpack.c.l.b16 %v489
        %v1311 = vunpack.c.h.b16 %v489
        %v1312 = vunpack.c.l.b16 %v490
        %v1313 = vunpack.c.h.b16 %v490
        %v1314 = vunpack.c.l.b16 %v491
        %v1315 = vunpack.c.h.b16 %v491
        %v1316 = vunpack.c.l.b16 %v492
        %v1317 = vunpack.c.h.b16 %v492
        %v1318 = vunpack.c.l.b16 %v493
        %v1319 = vunpack.c.h.b16 %v493
        %v1320 = vunpack.c.l.b16 %v494
        %v1321 = vunpack.c.h.b16 %v494
        %v1322 = vunpack.c.l.b16 %v495
        %v1323 = vunpack.c.h.b16 %v495
        %v1324 = vunpack.c.l.b16 %v496
        %v1325 = vunpack.c.h.b16 %v496
        %v1326 = vunpack.c.l.b16 %v497
        %v1327 = vunpack.c.h.b16 %v497
        %v1328 = vunpack.c.l.b16 %v498
        %v1329 = vunpack.c.h.b16 %v498
        %v1330 = vunpack.c.l.b16 %v499
        %v1331 = vunpack.c.h.b16 %v499
        %v1332 = vunpack.c.l.b16 %v500
        %v1333 = vunpack.c.h.b16 %v500
        %v1334 = vunpack.c.l.b16 %v501
        %v1335 = vunpack.c.h.b16 %v501
        %v1336 = vunpack.c.l.b16 %v502
        %v1337 = vunpack.c.h.b16 %v502
        %v1338 = vunpack.c.l.b16 %v503
        %v1339 = vunpack.c.h.b16 %v503
        %v1340 = vunpack.c.l.b16 %v504
        %v1341 = vunpack.c.h.b16 %v504
        %v1342 = vunpack.c.l.b16 %v505
        %v1343 = vunpack.c.h.b16 %v505
        %v1344 = vunpack.c.l.b16 %v506
        %v1345 = vunpack.c.h.b16 %v506
        %v1346 = vunpack.c.l.b16 %v507
        %v1347 = vunpack.c.h.b16 %v507
        %v1348 = vunpack.c.l.b16 %v508
        %v1349 = vunpack.c.h.b16 %v508
        %v1350 = vunpack.c.l.b16 %v509
        %v1351 = vunpack.c.h.b16 %v509
        %v1352 = vunpack.c.l.b16 %v510
        %v1353 = vunpack.c.h.b16 %v510
        %v1354 = vunpack.c.l.b16 %v511
        %v1355 = vunpack.c.h.b16 %v511
        %v1356 = vunpack.c.l.b16 %v512
        %v1357 = vunpack.c.h.b16 %v512
        %v1358 = vunpack.c.l.b16 %v513
        %v1359 = vunpack.c.h.b16 %v513
        %v1360 = vunpack.c.l.b16 %v514
        %v1361 = vunpack.c.h.b16 %v514
        %v1362 = vunpack.c.l.b16 %v515
        %v1363 = vunpack.c.h.b16 %v515
        %v1364 = vunpack.c.l.b16 %v516
        %v1365 = vunpack.c.h.b16 %v516
        %v1366 = vunpack.c.l.b16 %v517
        %v1367 = vunpack.c.h.b16 %v517
        %v1368 = vunpack.c.l.b16 %v518
        %v1369 = vunpack.c.h.b16 %v518
        %v1370 = vunpack.c.l.b16 %v519
        %v1371 = vunpack.c.h.b16 %v519
        %v1372 = vunpack.c.l.b16 %v520
        %v1373 = vunpack.c.h.b16 %v520
        %v1374 = vunpack.c.l.b16 %v521
        %v1375 = vunpack.c.h.b16 %v521
        %v1376 = vunpack.c.l.b16 %v522
        %v1377 = vunpack.c.h.b16 %v522
        %v1378 = vunpack.c.l.b16 %v523
        %v1379 = vunpack.c.h.b16 %v523
        %v1380 = vunpack.c.l.b16 %v524
        %v1381 = vunpack.c.h.b16 %v524
        %v1382 = vunpack.c.l.b16 %v525
        %v1383 = vunpack.c.h.b16 %v525
        %v1384 = vunpack.c.l.b16 %v526
        %v1385 = vunpack.c.h.b16 %v526
        %v1386 = vunpack.c.l.b16 %v527
        %v1387 = vunpack.c.h.b16 %v527
        %v1388 = vunpack.c.l.b16 %v528
        %v1389 = vunpack.c.h.b16 %v528
        %v1390 = vunpack.c.l.b16 %v529
        %v1391 = vunpack.c.h.b16 %v529
        %v1392 = vunpack.c.l.b16 %v530
        %v1393 = vunpack.c.h.b16 %v530
        %v1394 = vunpack.c.l.b16 %v531
        %v1395 = vunpack.c.h.b16 %v531
        %v1396 = vunpack.c.l.b16 %v532
        %v1397 = vunpack.c.h.b16 %v532
        %v1398 = vunpack.c.l.b16 %v533
        %v1399 = vunpack.c.h.b16 %v533
        %v1400 = vunpack.c.l.b16 %v534
        %v1401 = vunpack.c.h.b16 %v534
        %v1402 = vunpack.c.l.b16 %v535
        %v1403 = vunpack.c.h.b16 %v535
        %v1404 = vunpack.c.l.b16 %v536
        %v1405 = vunpack.c.h.b16 %v536
        %v1406 = vunpack.c.l.b16 %v537
        %v1407 = vunpack.c.h.b16 %v537
        %v1408 = vunpack.c.l.b16 %v538
        %v1409 = vunpack.c.h.b16 %v538
        %v1410 = vunpack.c.l.b16 %v539
        %v1411 = vunpack.c.h.b16 %v539
        %v1412 = vunpack.c.l.b16 %v540
        %v1413 = vunpack.c.h.b16 %v540
        %v1414 = vunpack.c.l.b16 %v541
        %v1415 = vunpack.c.h.b16 %v541
        %v1416 = vunpack.c.l.b16 %v542
        %v1417 = vunpack.c.h.b16 %v542
        %v1418 = vunpack.c.l.b16 %v543
        %v1419 = vunpack.c.h.b16 %v543
        %v1420 = vunpack.c.l.b16 %v544
        %v1421 = vunpack.c.h.b16 %v544
        %v1422 = vunpack.c.l.b16 %v545
        %v1423 = vunpack.c.h.b16 %v545
        %v1424 = vunpack.c.l.b16 %v546
        %v1425 = vunpack.c.h.b16 %v546
        %v1426 = vunpack.c.l.b16 %v547
        %v1427 = vunpack.c.h.b16 %v547
        %v1428 = vunpack.c.l.b16 %v548
        %v1429 = vunpack.c.h.b16 %v548
        %v1430 = vunpack.c.l.b16 %v549
        %v1431 = vunpack.c.h.b16 %v549
        %v1432 = vunpack.c.l.b16 %v550
        %v1433 = vunpack.c.h.b16 %v550
        %v1434 = vunpack.c.l.b16 %v551
        %v1435 = vunpack.c.h.b16 %v551
        %v1436 = vunpack.c.l.b16 %v552
        %v1437 = vunpack.c.h.b16 %v552
        %v1438 = vunpack.c.l.b16 %v553
        %v1439 = vunpack.c.h.b16 %v553
        %v1440 = vunpack.c.l.b16 %v554
        %v1441 = vunpack.c.h.b16 %v554
        %v1442 = vunpack.c.l.b16 %v555
        %v1443 = vunpack.c.h.b16 %v555
        %v1444 = vunpack.c.l.b16 %v556
        %v1445 = vunpack.c.h.b16 %v556
        %v1446 = vunpack.c.l.b16 %v557
        %v1447 = vunpack.c.h.b16 %v557
        %v1448 = vunpack.c.l.b16 %v558
        %v1449 = vunpack.c.h.b16 %v558
        %v1450 = vunpack.c.l.b16 %v559
        %v1451 = vunpack.c.h.b16 %v559
        %v1452 = vunpack.c.l.b16 %v560
        %v1453 = vunpack.c.h.b16 %v560
        %v1454 = vunpack.c.l.b16 %v561
        %v1455 = vunpack.c.h.b16 %v561
        %v1456 = vunpack.c.l.b16 %v562
        %v1457 = vunpack.c.h.b16 %v562
        %v1458 = vunpack.c.l.b16 %v563
        %v1459 = vunpack.c.h.b16 %v563
        %v1460 = vunpack.c.l.b16 %v564
        %v1461 = vunpack.c.h.b16 %v564
        %v1462 = vunpack.c.l.b16 %v565
        %v1463 = vunpack.c.h.b16 %v565
        %v1464 = vunpack.c.l.b16 %v566
        %v1465 = vunpack.c.h.b16 %v566
        %v1466 = vunpack.c.l.b16 %v567
        %v1467 = vunpack.c.h.b16 %v567
        %v1468 = vunpack.c.l.b16 %v568
        %v1469 = vunpack.c.h.b16 %v568
        %v1470 = vunpack.c.l.b16 %v569
        %v1471 = vunpack.c.h.b16 %v569
        %v1472 = vunpack.c.l.b16 %v570
        %v1473 = vunpack.c.h.b16 %v570
        %v1474 = vunpack.c.l.b16 %v571
        %v1475 = vunpack.c.h.b16 %v571
        %v1476 = vunpack.c.l.b16 %v572
        %v1477 = vunpack.c.h.b16 %v572
        %v1478 = vunpack.c.l.b16 %v573
        %v1479 = vunpack.c.h.b16 %v573
        %v1480 = vunpack.c.l.b16 %v574
        %v1481 = vunpack.c.h.b16 %v574
        %v1482 = vunpack.c.l.b16 %v575
        %v1483 = vunpack.c.h.b16 %v575
        %v1484 = vunpack.c.l.b16 %v576
        %v1485 = vunpack.c.h.b16 %v576
        %v1486 = vunpack.c.l.b16 %v577
        %v1487 = vunpack.c.h.b16 %v577
        %v1488 = vunpack.c.l.b16 %v578
        %v1489 = vunpack.c.h.b16 %v578
        %v1490 = vunpack.c.l.b16 %v579
        %v1491 = vunpack.c.h.b16 %v579
        %v1492 = vunpack.c.l.b16 %v580
        %v1493 = vunpack.c.h.b16 %v580
        %v1494 = vunpack.c.l.b16 %v581
        %v1495 = vunpack.c.h.b16 %v581
        %v1496 = vunpack.c.l.b16 %v582
        %v1497 = vunpack.c.h.b16 %v582
        %v1498 = vunpack.c.l.b16 %v583
        %v1499 = vunpack.c.h.b16 %v583
        %v1500 = vunpack.c.l.b16 %v584
        %v1501 = vunpack.c.h.b16 %v584
        %v1502 = vunpack.c.l.b16 %v585
        %v1503 = vunpack.c.h.b16 %v585
        %v1504 = vunpack.c.l.b16 %v586
        %v1505 = vunpack.c.h.b16 %v586
        %v1506 = vunpack.c.l.b16 %v587
        %v1507 = vunpack.c.h.b16 %v587
        %v1508 = vunpack.c.l.b16 %v588
        %v1509 = vunpack.c.h.b16 %v588
        %v1510 = vunpack.c.l.b16 %v589
        %v1511 = vunpack.c.h.b16 %v589
        %v1512 = vunpack.c.l.b16 %v590
        %v1513 = vunpack.c.h.b16 %v590
        %v1514 = vunpack.c.l.b16 %v591
        %v1515 = vunpack.c.h.b16 %v591
        %v1516 = vunpack.c.l.b16 %v592
        %v1517 = vunpack.c.h.b16 %v592
        %v1518 = vunpack.c.l.b16 %v593
        %v1519 = vunpack.c.h.b16 %v593
        %v1520 = vunpack.c.l.b16 %v594
        %v1521 = vunpack.c.h.b16 %v594
        %v1522 = vunpack.c.l.b16 %v595
        %v1523 = vunpack.c.h.b16 %v595
        %v1524 = vunpack.c.l.b16 %v596
        %v1525 = vunpack.c.h.b16 %v596
        %v1526 = vunpack.c.l.b16 %v597
        %v1527 = vunpack.c.h.b16 %v597
        %v1528 = vunpack.c.l.b16 %v598
        %v1529 = vunpack.c.h.b16 %v598
        %v1530 = vunpack.c.l.b16 %v599
        %v1531 = vunpack.c.h.b16 %v599
        %v1532 = vunpack.c.l.b16 %v600
        %v1533 = vunpack.c.h.b16 %v600
        %v1534 = vunpack.c.l.b16 %v601
        %v1535 = vunpack.c.h.b16 %v601
        %v1536 = vunpack.c.l.b16 %v602
        %v1537 = vunpack.c.h.b16 %v602
        %v1538 = vunpack.c.l.b16 %v603
        %v1539 = vunpack.c.h.b16 %v603
        %v1540 = vunpack.c.l.b16 %v604
        %v1541 = vunpack.c.h.b16 %v604
        %v1542 = vunpack.c.l.b16 %v605
        %v1543 = vunpack.c.h.b16 %v605
        %v1544 = vunpack.c.l.b16 %v606
        %v1545 = vunpack.c.h.b16 %v606
        %v1546 = vunpack.c.l.b16 %v607
        %v1547 = vunpack.c.h.b16 %v607
        %v1548 = vunpack.c.l.b16 %v608
        %v1549 = vunpack.c.h.b16 %v608
        %v1550 = vunpack.c.l.b16 %v609
        %v1551 = vunpack.c.h.b16 %v609
        %v1552 = vunpack.c.l.b16 %v610
        %v1553 = vunpack.c.h.b16 %v610
        %v1554 = vunpack.c.l.b16 %v611
        %v1555 = vunpack.c.h.b16 %v611
        %v1556 = vunpack.c.l.b16 %v612
        %v1557 = vunpack.c.h.b16 %v612
        %v1558 = vunpack.c.l.b16 %v613
        %v1559 = vunpack.c.h.b16 %v613
        %v1560 = vunpack.c.l.b16 %v614
        %v1561 = vunpack.c.h.b16 %v614
        %v1562 = vunpack.c.l.b16 %v615
        %v1563 = vunpack.c.h.b16 %v615
        %v1564 = vunpack.c.l.b16 %v616
        %v1565 = vunpack.c.h.b16 %v616
        %v1566 = vunpack.c.l.b16 %v617
        %v1567 = vunpack.c.h.b16 %v617
        %v1568 = vunpack.c.l.b16 %v618
        %v1569 = vunpack.c.h.b16 %v618
        %v1570 = vunpack.c.l.b16 %v619
        %v1571 = vunpack.c.h.b16 %v619
        %v1572 = vunpack.c.l.b16 %v620
        %v1573 = vunpack.c.h.b16 %v620
        %v1574 = vunpack.c.l.b16 %v621
        %v1575 = vunpack.c.h.b16 %v621
        %v1576 = vunpack.c.l.b16 %v622
        %v1577 = vunpack.c.h.b16 %v622
        %v1578 = vunpack.c.l.b16 %v623
        %v1579 = vunpack.c.h.b16 %v623
        %v1580 = vunpack.c.l.b16 %v624
        %v1581 = vunpack.c.h.b16 %v624
        %v1582 = vunpack.c.l.b16 %v625
        %v1583 = vunpack.c.h.b16 %v625
        %v1584 = vunpack.c.l.b16 %v626
        %v1585 = vunpack.c.h.b16 %v626
        %v1586 = vunpack.c.l.b16 %v627
        %v1587 = vunpack.c.h.b16 %v627
        %v1588 = vunpack.c.l.b16 %v628
        %v1589 = vunpack.c.h.b16 %v628
        %v1590 = vunpack.c.l.b16 %v629
        %v1591 = vunpack.c.h.b16 %v629
        %v1592 = vunpack.c.l.b16 %v630
        %v1593 = vunpack.c.h.b16 %v630
        %v1594 = vunpack.c.l.b16 %v631
        %v1595 = vunpack.c.h.b16 %v631
        %v1596 = vunpack.c.l.b16 %v632
        %v1597 = vunpack.c.h.b16 %v632
        %v1598 = vunpack.c.l.b16 %v633
        %v1599 = vunpack.c.h.b16 %v633
        %v1600 = vunpack.c.l.b16 %v634
        %v1601 = vunpack.c.h.b16 %v634
        %v1602 = vunpack.c.l.b16 %v635
        %v1603 = vunpack.c.h.b16 %v635
        %v1604 = vunpack.c.l.b16 %v636
        %v1605 = vunpack.c.h.b16 %v636
        %v1606 = vunpack.c.l.b16 %v637
        %v1607 = vunpack.c.h.b16 %v637
        %v1608 = vunpack.c.l.b16 %v638
        %v1609 = vunpack.c.h.b16 %v638
        %v1610 = vunpack.c.l.b16 %v639
        %v1611 = vunpack.c.h.b16 %v639
        %v1612 = vunpack.c.l.b16 %v640
        %v1613 = vunpack.c.h.b16 %v640
        %v1614 = vunpack.c.l.b16 %v641
        %v1615 = vunpack.c.h.b16 %v641
        %v1616 = vunpack.c.l.b16 %v642
        %v1617 = vunpack.c.h.b16 %v642
        %v1618 = vunpack.c.l.b16 %v643
        %v1619 = vunpack.c.h.b16 %v643
        %v1620 = vunpack.c.l.b16 %v644
        %v1621 = vunpack.c.h.b16 %v644
        %v1622 = vunpack.c.l.b16 %v645
        %v1623 = vunpack.c.h.b16 %v645
        %v1624 = vunpack.c.l.b16 %v646
        %v1625 = vunpack.c.h.b16 %v646
        %v1626 = vunpack.c.l.b16 %v647
        %v1627 = vunpack.c.h.b16 %v647
        %v1628 = vunpack.c.l.b16 %v648
        %v1629 = vunpack.c.h.b16 %v648
        %v1630 = vunpack.c.l.b16 %v649
        %v1631 = vunpack.c.h.b16 %v649
        %v1632 = vunpack.c.l.b16 %v650
        %v1633 = vunpack.c.h.b16 %v650
        %v1634 = vunpack.c.l.b16 %v651
        %v1635 = vunpack.c.h.b16 %v651
        %v1636 = vunpack.c.l.b16 %v652
        %v1637 = vunpack.c.h.b16 %v652
        %v1638 = vunpack.c.l.b16 %v653
        %v1639 = vunpack.c.h.b16 %v653
        %v1640 = vunpack.c.l.b16 %v654
        %v1641 = vunpack.c.h.b16 %v654
        %v1642 = vunpack.c.l.b16 %v655
        %v1643 = vunpack.c.h.b16 %v655
        %v1644 = vunpack.c.l.b16 %v656
        %v1645 = vunpack.c.h.b16 %v656
        %v1646 = vunpack.c.l.b16 %v657
        %v1647 = vunpack.c.h.b16 %v657
        %v1648 = vunpack.c.l.b16 %v658
        %v1649 = vunpack.c.h.b16 %v658
        %v1650 = vunpack.c.l.b16 %v659
        %v1651 = vunpack.c.h.b16 %v659
        %v1652 = vunpack.c.l.b16 %v660
        %v1653 = vunpack.c.h.b16 %v660
        %v1654 = vunpack.c.l.b16 %v661
        %v1655 = vunpack.c.h.b16 %v661
        %v1656 = vunpack.c.l.b16 %v662
        %v1657 = vunpack.c.h.b16 %v662
        %v1658 = vunpack.c.l.b16 %v663
        %v1659 = vunpack.c.h.b16 %v663
        %v1660 = vunpack.c.l.b16 %v664
        %v1661 = vunpack.c.h.b16 %v664
        %v1662 = vunpack.c.l.b16 %v665
        %v1663 = vunpack.c.h.b16 %v665
        %v1664 = vunpack.c.l.b16 %v666
        %v1665 = vunpack.c.h.b16 %v666
        %v1666 = vunpack.c.l.b16 %v667
        %v1667 = vunpack.c.h.b16 %v667
        %v1668 = vunpack.c.l.b16 %v668
        %v1669 = vunpack.c.h.b16 %v668
        %v1670 = vunpack.c.l.b16 %v669
        %v1671 = vunpack.c.h.b16 %v669
        %v1672 = vunpack.c.l.b16 %v670
        %v1673 = vunpack.c.h.b16 %v670
        %v1674 = vunpack.c.l.b16 %v671
        %v1675 = vunpack.c.h.b16 %v671
        %v1676 = vunpack.c.l.b16 %v672
        %v1677 = vunpack.c.h.b16 %v672
        %v1678 = vunpack.c.l.b16 %v673
        %v1679 = vunpack.c.h.b16 %v673
        %v1680 = vunpack.c.l.b16 %v674
        %v1681 = vunpack.c.h.b16 %v674
        %v1682 = vunpack.c.l.b16 %v675
        %v1683 = vunpack.c.h.b16 %v675
        %v1684 = vunpack.c.l.b16 %v676
        %v1685 = vunpack.c.h.b16 %v676
        %v1686 = vunpack.c.l.b16 %v677
        %v1687 = vunpack.c.h.b16 %v677
        %v1688 = vunpack.c.l.b16 %v678
        %v1689 = vunpack.c.h.b16 %v678
        %v1690 = vunpack.c.l.b16 %v679
        %v1691 = vunpack.c.h.b16 %v679
        %v1692 = vunpack.c.l.b16 %v680
        %v1693 = vunpack.c.h.b16 %v680
        %v1694 = vunpack.c.l.b16 %v681
        %v1695 = vunpack.c.h.b16 %v681
        %v1696 = vunpack.c.l.b16 %v682
        %v1697 = vunpack.c.h.b16 %v682
        %v1698 = vunpack.c.l.b16 %v683
        %v1699 = vunpack.c.h.b16 %v683
        %v1700 = vunpack.c.l.b16 %v684
        %v1701 = vunpack.c.h.b16 %v684
        %v1702 = vunpack.c.l.b16 %v685
        %v1703 = vunpack.c.h.b16 %v685
        %v1704 = vunpack.c.l.b16 %v686
        %v1705 = vunpack.c.h.b16 %v686
        %v1706 = vunpack.c.l.b16 %v687
        %v1707 = vunpack.c.h.b16 %v687
        %v1708 = vunpack.c.l.b16 %v688
        %v1709 = vunpack.c.h.b16 %v688
        %v1710 = vunpack.c.l.b16 %v689
        %v1711 = vunpack.c.h.b16 %v689
        %v1712 = vunpack.c.l.b16 %v690
        %v1713 = vunpack.c.h.b16 %v690
        %v1714 = vunpack.c.l.b16 %v691
        %v1715 = vunpack.c.h.b16 %v691
        %v1716 = vunpack.c.l.b16 %v692
        %v1717 = vunpack.c.h.b16 %v692
        %v1718 = vunpack.c.l.b16 %v693
        %v1719 = vunpack.c.h.b16 %v693
        %v1720 = vunpack.c.l.b16 %v694
        %v1721 = vunpack.c.h.b16 %v694
        %v1722 = vunpack.c.l.b16 %v695
        %v1723 = vunpack.c.h.b16 %v695
        %v1724 = vunpack.c.l.b16 %v696
        %v1725 = vunpack.c.h.b16 %v696
        %v1726 = vunpack.c.l.b16 %v697
        %v1727 = vunpack.c.h.b16 %v697
        %v1728 = vunpack.c.l.b16 %v698
        %v1729 = vunpack.c.h.b16 %v698
        %v1730 = vunpack.c.l.b16 %v699
        %v1731 = vunpack.c.h.b16 %v699
        %v1732 = vunpack.c.l.b16 %v700
        %v1733 = vunpack.c.h.b16 %v700
        %v1734 = vunpack.c.l.b16 %v701
        %v1735 = vunpack.c.h.b16 %v701
        %v1736 = vunpack.c.l.b16 %v702
        %v1737 = vunpack.c.h.b16 %v702
        %v1738 = vunpack.c.l.b16 %v703
        %v1739 = vunpack.c.h.b16 %v703
        %v1740 = vunpack.c.l.b16 %v704
        %v1741 = vunpack.c.h.b16 %v704
        %v1742 = vunpack.c.l.b16 %v705
        %v1743 = vunpack.c.h.b16 %v705
        %v1744 = vunpack.c.l.b16 %v706
        %v1745 = vunpack.c.h.b16 %v706
        %v1746 = vunpack.c.l.b16 %v707
        %v1747 = vunpack.c.h.b16 %v707
        %v1748 = vunpack.c.l.b16 %v708
        %v1749 = vunpack.c.h.b16 %v708
        %v1750 = vunpack.c.l.b16 %v709
        %v1751 = vunpack.c.h.b16 %v709
        %v1752 = vunpack.c.l.b16 %v710
        %v1753 = vunpack.c.h.b16 %v710
        %v1754 = vunpack.c.l.b16 %v711
        %v1755 = vunpack.c.h.b16 %v711
        %v1756 = vunpack.c.l.b16 %v712
        %v1757 = vunpack.c.h.b16 %v712
        %v1758 = vunpack.c.l.b16 %v713
        %v1759 = vunpack.c.h.b16 %v713
        %v1760 = vunpack.c.l.b16 %v714
        %v1761 = vunpack.c.h.b16 %v714
        %v1762 = vunpack.c.l.b16 %v715
        %v1763 = vunpack.c.h.b16 %v715
        %v1764 = vunpack.c.l.b16 %v716
        %v1765 = vunpack.c.h.b16 %v716
        %v1766 = vunpack.c.l.b16 %v717
        %v1767 = vunpack.c.h.b16 %v717
        %v1768 = vunpack.c.l.b16 %v718
        %v1769 = vunpack.c.h.b16 %v718
        %v1770 = vunpack.c.l.b16 %v719
        %v1771 = vunpack.c.h.b16 %v719
        %v1772 = vunpack.c.l.b16 %v720
        %v1773 = vunpack.c.h.b16 %v720
        %v1774 = vunpack.c.l.b16 %v721
        %v1775 = vunpack.c.h.b16 %v721
        %v1776 = vunpack.c.l.b16 %v722
        %v1777 = vunpack.c.h.b16 %v722
        %v1778 = vunpack.c.l.b16 %v723
        %v1779 = vunpack.c.h.b16 %v723
        %v1780 = vunpack.c.l.b16 %v724
        %v1781 = vunpack.c.h.b16 %v724
        %v1782 = vunpack.c.l.b16 %v725
        %v1783 = vunpack.c.h.b16 %v725
        %v1784 = vunpack.c.l.b16 %v726
        %v1785 = vunpack.c.h.b16 %v726
        %v1786 = vunpack.c.l.b16 %v727
        %v1787 = vunpack.c.h.b16 %v727
        %v1788 = vunpack.c.l.b16 %v728
        %v1789 = vunpack.c.h.b16 %v728
        %v1790 = vunpack.c.l.b16 %v729
        %v1791 = vunpack.c.h.b16 %v729
        %v1792 = vunpack.c.l.b16 %v730
        %v1793 = vunpack.c.h.b16 %v730
        %v1794 = vunpack.c.l.b16 %v731
        %v1795 = vunpack.c.h.b16 %v731
        %v1796 = vunpack.c.l.b16 %v732
        %v1797 = vunpack.c.h.b16 %v732
        %v1798 = vunpack.c.l.b16 %v733
        %v1799 = vunpack.c.h.b16 %v733
        %v1800 = vunpack.c.l.b16 %v734
        %v1801 = vunpack.c.h.b16 %v734
        %v1802 = vunpack.c.l.b16 %v735
        %v1803 = vunpack.c.h.b16 %v735
        %v1804 = vunpack.c.l.b16 %v736
        %v1805 = vunpack.c.h.b16 %v736
        %v1806 = vunpack.c.l.b16 %v737
        %v1807 = vunpack.c.h.b16 %v737
        %v1808 = vunpack.c.l.b16 %v738
        %v1809 = vunpack.c.h.b16 %v738
        %v1810 = vunpack.c.l.b16 %v739
        %v1811 = vunpack.c.h.b16 %v739
        %v1812 = vunpack.c.l.b16 %v740
        %v1813 = vunpack.c.h.b16 %v740
        %v1814 = vunpack.c.l.b16 %v741
        %v1815 = vunpack.c.h.b16 %v741
        %v1816 = vunpack.c.l.b16 %v742
        %v1817 = vunpack.c.h.b16 %v742
        %v1818 = vunpack.c.l.b16 %v743
        %v1819 = vunpack.c.h.b16 %v743
        %v1820 = vunpack.c.l.b16 %v744
        %v1821 = vunpack.c.h.b16 %v744
        %v1822 = vunpack.c.l.b16 %v745
        %v1823 = vunpack.c.h.b16 %v745
        %v1824 = vunpack.c.l.b16 %v746
        %v1825 = vunpack.c.h.b16 %v746
        %v1826 = vunpack.c.l.b16 %v747
        %v1827 = vunpack.c.h.b16 %v747
        %v1828 = vunpack.c.l.b16 %v748
        %v1829 = vunpack.c.h.b16 %v748
        %v1830 = vunpack.c.l.b16 %v749
        %v1831 = vunpack.c.h.b16 %v749
        %v1832 = vunpack.c.l.b16 %v750
        %v1833 = vunpack.c.h.b16 %v750
        %v1834 = vunpack.c.l.b16 %v751
        %v1835 = vunpack.c.h.b16 %v751
        %v1836 = vunpack.c.l.b16 %v752
        %v1837 = vunpack.c.h.b16 %v752
        %v1838 = vunpack.c.l.b16 %v753
        %v1839 = vunpack.c.h.b16 %v753
        %v1840 = vunpack.c.l.b16 %v754
        %v1841 = vunpack.c.h.b16 %v754
        %v1842 = vunpack.c.l.b16 %v755
        %v1843 = vunpack.c.h.b16 %v755
        %v1844 = vunpack.c.l.b16 %v756
        %v1845 = vunpack.c.h.b16 %v756
        %v1846 = vunpack.c.l.b16 %v757
        %v1847 = vunpack.c.h.b16 %v757
        %v1848 = vunpack.c.l.b16 %v758
        %v1849 = vunpack.c.h.b16 %v758
        %v1850 = vunpack.c.l.b16 %v759
        %v1851 = vunpack.c.h.b16 %v759
        %v1852 = vunpack.c.l.b16 %v760
        %v1853 = vunpack.c.h.b16 %v760
        %v1854 = vunpack.c.l.b16 %v761
        %v1855 = vunpack.c.h.b16 %v761
        %v1856 = vunpack.c.l.b16 %v762
        %v1857 = vunpack.c.h.b16 %v762
        %v1858 = vunpack.c.l.b16 %v763
        %v1859 = vunpack.c.h.b16 %v763
        %v1860 = vunpack.c.l.b16 %v764
        %v1861 = vunpack.c.h.b16 %v764
        %v1862 = vunpack.c.l.b16 %v765
        %v1863 = vunpack.c.h.b16 %v765
        %v1864 = vunpack.c.l.b16 %v766
        %v1865 = vunpack.c.h.b16 %v766
        %v1866 = vunpack.c.l.b16 %v767
        %v1867 = vunpack.c.h.b16 %v767
        %v1868 = vunpack.c.l.b16 %v768
        %v1869 = vunpack.c.h.b16 %v768
        %v1870 = vunpack.c.l.b16 %v769
        %v1871 = vunpack.c.h.b16 %v769
        %v1872 = vunpack.c.l.b16 %v770
        %v1873 = vunpack.c.h.b16 %v770
        %v1874 = vunpack.c.l.b16 %v771
        %v1875 = vunpack.c.h.b16 %v771
        %v1876 = vunpack.c.l.b16 %v772
        %v1877 = vunpack.c.h.b16 %v772
        %v1878 = vunpack.c.l.b16 %v773
        %v1879 = vunpack.c.h.b16 %v773
        %v1880 = vunpack.c.l.b16 %v774
        %v1881 = vunpack.c.h.b16 %v774
        %v1882 = vunpack.c.l.b16 %v775
        %v1883 = vunpack.c.h.b16 %v775
        %v1884 = vunpack.c.l.b16 %v776
        %v1885 = vunpack.c.h.b16 %v776
        %v1886 = vunpack.c.l.b16 %v777
        %v1887 = vunpack.c.h.b16 %v777
        %v1888 = vunpack.c.l.b16 %v778
        %v1889 = vunpack.c.h.b16 %v778
        %v1890 = vunpack.c.l.b16 %v779
        %v1891 = vunpack.c.h.b16 %v779
        %v1892 = vunpack.c.l.b16 %v780
        %v1893 = vunpack.c.h.b16 %v780
        %v1894 = vunpack.c.l.b16 %v781
        %v1895 = vunpack.c.h.b16 %v781
        %v1896 = vunpack.c.l.b16 %v782
        %v1897 = vunpack.c.h.b16 %v782
        %v1898 = vunpack.c.l.b16 %v783
        %v1899 = vunpack.c.h.b16 %v783
        %v1900 = vunpack.c.l.b16 %v784
        %v1901 = vunpack.c.h.b16 %v784
        %v1902 = vunpack.c.l.b16 %v785
        %v1903 = vunpack.c.h.b16 %v785
        %v1904 = vunpack.c.l.b16 %v786
        %v1905 = vunpack.c.h.b16 %v786
        %v1906 = vunpack.c.l.b16 %v787
        %v1907 = vunpack.c.h.b16 %v787
        %v1908 = vunpack.c.l.b16 %v788
        %v1909 = vunpack.c.h.b16 %v788
        %v1910 = vunpack.c.l.b16 %v789
        %v1911 = vunpack.c.h.b16 %v789
        %v1912 = vunpack.c.l.b16 %v790
        %v1913 = vunpack.c.h.b16 %v790
        %v1914 = vunpack.c.l.b16 %v791
        %v1915 = vunpack.c.h.b16 %v791
        %v1916 = vunpack.c.l.b16 %v792
        %v1917 = vunpack.c.h.b16 %v792
        %v1918 = vunpack.c.l.b16 %v793
        %v1919 = vunpack.c.h.b16 %v793
        %v1920 = vunpack.c.l.b16 %v794
        %v1921 = vunpack.c.h.b16 %v794
        %v1922 = vunpack.c.l.b16 %v795
        %v1923 = vunpack.c.h.b16 %v795
        %v1924 = vunpack.c.l.b16 %v796
        %v1925 = vunpack.c.h.b16 %v796
        %v1926 = vunpack.c.l.b16 %v797
        %v1927 = vunpack.c.h.b16 %v797
        %v1928 = vunpack.c.l.b16 %v798
        %v1929 = vunpack.c.h.b16 %v798
        %v1930 = vunpack.c.l.b16 %v799
        %v1931 = vunpack.c.h.b16 %v799
        %v1932 = vunpack.c.l.b16 %v800
        %v1933 = vunpack.c.h.b16 %v800
        %v1934 = vunpack.c.l.b16 %v801
        %v1935 = vunpack.c.h.b16 %v801
        %v1936 = vunpack.c.l.b16 %v802
        %v1937 = vunpack.c.h.b16 %v802
        %v1938 = vunpack.c.l.b16 %v803
        %v1939 = vunpack.c.h.b16 %v803
        %v1940 = vunpack.c.l.b16 %v804
        %v1941 = vunpack.c.h.b16 %v804
        %v1942 = vunpack.c.l.b16 %v805
        %v1943 = vunpack.c.h.b16 %v805
        %v1944 = vunpack.c.l.b16 %v806
        %v1945 = vunpack.c.h.b16 %v806
        %v1946 = vunpack.c.l.b16 %v807
        %v1947 = vunpack.c.h.b16 %v807
        %v1948 = vunpack.c.l.b16 %v808
        %v1949 = vunpack.c.h.b16 %v808
        %v1950 = vunpack.c.l.b16 %v809
        %v1951 = vunpack.c.h.b16 %v809
        %v1952 = vunpack.c.l.b16 %v810
        %v1953 = vunpack.c.h.b16 %v810
        %v1954 = vunpack.c.l.b16 %v811
        %v1955 = vunpack.c.h.b16 %v811
        %v1956 = vunpack.c.l.b16 %v812
        %v1957 = vunpack.c.h.b16 %v812
        %v1958 = vunpack.c.l.b16 %v813
        %v1959 = vunpack.c.h.b16 %v813
        %v1960 = vunpack.c.l.b16 %v814
        %v1961 = vunpack.c.h.b16 %v814
        %v1962 = vunpack.c.l.b16 %v815
        %v1963 = vunpack.c.h.b16 %v815
        %v1964 = vunpack.c.l.b16 %v816
        %v1965 = vunpack.c.h.b16 %v816
        %v1966 = vunpack.c.l.b16 %v817
        %v1967 = vunpack.c.h.b16 %v817
        %v1968 = vunpack.c.l.b16 %v818
        %v1969 = vunpack.c.h.b16 %v818
        %v1970 = vunpack.c.l.b16 %v819
        %v1971 = vunpack.c.h.b16 %v819
        %v1972 = vunpack.c.l.b16 %v820
        %v1973 = vunpack.c.h.b16 %v820
        %v1974 = vunpack.c.l.b16 %v821
        %v1975 = vunpack.c.h.b16 %v821
        %v1976 = vunpack.c.l.b16 %v822
        %v1977 = vunpack.c.h.b16 %v822
        %v1978 = vunpack.c.l.b16 %v823
        %v1979 = vunpack.c.h.b16 %v823
        %v1980 = vunpack.c.l.b16 %v824
        %v1981 = vunpack.c.h.b16 %v824
        %v1982 = vunpack.c.l.b16 %v825
        %v1983 = vunpack.c.h.b16 %v825
        %v1984 = vunpack.c.l.b16 %v826
        %v1985 = vunpack.c.h.b16 %v826
        %v1986 = vunpack.c.l.b16 %v827
        %v1987 = vunpack.c.h.b16 %v827
        %v1988 = vunpack.c.l.b16 %v828
        %v1989 = vunpack.c.h.b16 %v828
        %v1990 = vunpack.c.l.b16 %v829
        %v1991 = vunpack.c.h.b16 %v829
        %v1992 = vunpack.c.l.b16 %v830
        %v1993 = vunpack.c.h.b16 %v830
        %v1994 = vunpack.c.l.b16 %v831
        %v1995 = vunpack.c.h.b16 %v831
        %v1996 = vunpack.c.l.b16 %v832
        %v1997 = vunpack.c.h.b16 %v832
        %v1998 = vunpack.c.l.b16 %v833
        %v1999 = vunpack.c.h.b16 %v833
        %v2000 = vunpack.c.l.b16 %v834
        %v2001 = vunpack.c.h.b16 %v834
        %v2002 = vunpack.c.l.b16 %v835
        %v2003 = vunpack.c.h.b16 %v835
        %v2004 = vunpack.c.l.b16 %v836
        %v2005 = vunpack.c.h.b16 %v836
        %v2006 = vunpack.c.l.b16 %v837
        %v2007 = vunpack.c.h.b16 %v837
        %v2008 = vpack.c.b16 %v1248, %v1240
        %v2009 = vpack.c.b16 %v1249, %v1241
        %v2010 = vpack.c.b16 %v1250, %v1242
        %v2011 = vpack.c.b16 %v1251, %v1243
        %v2012 = vpack.c.b16 %v1252, %v1244
        %v2013 = vpack.c.b16 %v1253, %v1245
        %v2014 = vpack.c.b16 %v1254, %v1246
        %v2015 = vpack.c.b16 %v1255, %v1247
        %v2016 = vpack.c.b16 %v1264, %v1256
        %v2017 = vpack.c.b16 %v1265, %v1257
        %v2018 = vpack.c.b16 %v1266, %v1258
        %v2019 = vpack.c.b16 %v1267, %v1259
        %v2020 = vpack.c.b16 %v1268, %v1260
        %v2021 = vpack.c.b16 %v1269, %v1261
        %v2022 = vpack.c.b16 %v1270, %v1262
        %v2023 = vpack.c.b16 %v1271, %v1263
        %v2024 = vpack.c.b16 %v1280, %v1272
        %v2025 = vpack.c.b16 %v1281, %v1273
        %v2026 = vpack.c.b16 %v1282, %v1274
        %v2027 = vpack.c.b16 %v1283, %v1275
        %v2028 = vpack.c.b16 %v1284, %v1276
        %v2029 = vpack.c.b16 %v1285, %v1277
        %v2030 = vpack.c.b16 %v1286, %v1278
        %v2031 = vpack.c.b16 %v1287, %v1279
        %v2032 = vpack.c.b16 %v1296, %v1288
        %v2033 = vpack.c.b16 %v1297, %v1289
        %v2034 = vpack.c.b16 %v1298, %v1290
        %v2035 = vpack.c.b16 %v1299, %v1291
        %v2036 = vpack.c.b16 %v1300, %v1292
        %v2037 = vpack.c.b16 %v1301, %v1293
        %v2038 = vpack.c.b16 %v1302, %v1294
        %v2039 = vpack.c.b16 %v1303, %v1295
        %v2040 = vpack.c.b16 %v1312, %v1304
        %v2041 = vpack.c.b16 %v1313, %v1305
        %v2042 = vpack.c.b16 %v1314, %v1306
        %v2043 = vpack.c.b16 %v1315, %v1307
        %v2044 = vpack.c.b16 %v1316, %v1308
        %v2045 = vpack.c.b16 %v1317, %v1309
        %v2046 = vpack.c.b16 %v1318, %v1310
        %v2047 = vpack.c.b16 %v1319, %v1311
        %v2048 = vpack.c.b16 %v1328, %v1320
        %v2049 = vpack.c.b16 %v1329, %v1321
        %v2050 = vpack.c.b16 %v1330, %v1322
        %v2051 = vpack.c.b16 %v1331, %v1323
        %v2052 = vpack.c.b16 %v1332, %v1324
        %v2053 = vpack.c.b16 %v1333, %v1325
        %v2054 = vpack.c.b16 %v1334, %v1326
        %v2055 = vpack.c.b16 %v1335, %v1327
        %v2056 = vpack.c.b16 %v1344, %v1336
        %v2057 = vpack.c.b16 %v1345, %v1337
        %v2058 = vpack.c.b16 %v1346, %v1338
        %v2059 = vpack.c.b16 %v1347, %v1339
        %v2060 = vpack.c.b16 %v1348, %v1340
        %v2061 = vpack.c.b16 %v1349, %v1341
        %v2062 = vpack.c.b16 %v1350, %v1342
        %v2063 = vpack.c.b16 %v1351, %v1343
        %v2064 = vpack.c.b16 %v1360, %v1352
        %v2065 = vpack.c.b16 %v1361, %v1353
        %v2066 = vpack.c.b16 %v1362, %v1354
        %v2067 = vpack.c.b16 %v1363, %v1355
        %v2068 = vpack.c.b16 %v1364, %v1356
        %v2069 = vpack.c.b16 %v1365, %v1357
        %v2070 = vpack.c.b16 %v1366, %v1358
        %v2071 = vpack.c.b16 %v1367, %v1359
        %v2072 = vpack.c.b16 %v1376, %v1368
        %v2073 = vpack.c.b16 %v1377, %v1369
        %v2074 = vpack.c.b16 %v1378, %v1370
        %v2075 = vpack.c.b16 %v1379, %v1371
        %v2076 = vpack.c.b16 %v1380, %v1372
        %v2077 = vpack.c.b16 %v1381, %v1373
        %v2078 = vpack.c.b16 %v1382, %v1374
        %v2079 = vpack.c.b16 %v1383, %v1375
        %v2080 = vpack.c.b16 %v1392, %v1384
        %v2081 = vpack.c.b16 %v1393, %v1385
        %v2082 = vpack.c.b16 %v1394, %v1386
        %v2083 = vpack.c.b16 %v1395, %v1387
        %v2084 = vpack.c.b16 %v1396, %v1388
        %v2085 = vpack.c.b16 %v1397, %v1389
        %v2086 = vpack.c.b16 %v1398, %v1390
        %v2087 = vpack.c.b16 %v1399, %v1391
        %v2088 = vpack.c.b16 %v1408, %v1400
        %v2089 = vpack.c.b16 %v1409, %v1401
        %v2090 = vpack.c.b16 %v1410, %v1402
        %v2091 = vpack.c.b16 %v1411, %v1403
        %v2092 = vpack.c.b16 %v1412, %v1404
        %v2093 = vpack.c.b16 %v1413, %v1405
        %v2094 = vpack.c.b16 %v1414, %v1406
        %v2095 = vpack.c.b16 %v1415, %v1407
        %v2096 = vpack.c.b16 %v1424, %v1416
        %v2097 = vpack.c.b16 %v1425, %v1417
        %v2098 = vpack.c.b16 %v1426, %v1418
        %v2099 = vpack.c.b16 %v1427, %v1419
        %v2100 = vpack.c.b16 %v1428, %v1420
        %v2101 = vpack.c.b16 %v1429, %v1421
        %v2102 = vpack.c.b16 %v1430, %v1422
        %v2103 = vpack.c.b16 %v1431, %v1423
        %v2104 = vpack.c.b16 %v1440, %v1432
        %v2105 = vpack.c.b16 %v1441, %v1433
        %v2106 = vpack.c.b16 %v1442, %v1434
        %v2107 = vpack.c.b16 %v1443, %v1435
        %v2108 = vpack.c.b16 %v1444, %v1436
        %v2109 = vpack.c.b16 %v1445, %v1437
        %v2110 = vpack.c.b16 %v1446, %v1438
        %v2111 = vpack.c.b16 %v1447, %v1439
        %v2112 = vpack.c.b16 %v1456, %v1448
        %v2113 = vpack.c.b16 %v1457, %v1449
        %v2114 = vpack.c.b16 %v1458, %v1450
        %v2115 = vpack.c.b16 %v1459, %v1451
        %v2116 = vpack.c.b16 %v1460, %v1452
        %v2117 = vpack.c.b16 %v1461, %v1453
        %v2118 = vpack.c.b16 %v1462, %v1454
        %v2119 = vpack.c.b16 %v1463, %v1455
        %v2120 = vpack.c.b16 %v1472, %v1464
        %v2121 = vpack.c.b16 %v1473, %v1465
        %v2122 = vpack.c.b16 %v1474, %v1466
        %v2123 = vpack.c.b16 %v1475, %v1467
        %v2124 = vpack.c.b16 %v1476, %v1468
        %v2125 = vpack.c.b16 %v1477, %v1469
        %v2126 = vpack.c.b16 %v1478, %v1470
        %v2127 = vpack.c.b16 %v1479, %v1471
        %v2128 = vpack.c.b16 %v1488, %v1480
        %v2129 = vpack.c.b16 %v1489, %v1481
        %v2130 = vpack.c.b16 %v1490, %v1482
        %v2131 = vpack.c.b16 %v1491, %v1483
        %v2132 = vpack.c.b16 %v1492, %v1484
        %v2133 = vpack.c.b16 %v1493, %v1485
        %v2134 = vpack.c.b16 %v1494, %v1486
        %v2135 = vpack.c.b16 %v1495, %v1487
        %v2136 = vpack.c.b16 %v1504, %v1496
        %v2137 = vpack.c.b16 %v1505, %v1497
        %v2138 = vpack.c.b16 %v1506, %v1498
        %v2139 = vpack.c.b16 %v1507, %v1499
        %v2140 = vpack.c.b16 %v1508, %v1500
        %v2141 = vpack.c.b16 %v1509, %v1501
        %v2142 = vpack.c.b16 %v1510, %v1502
        %v2143 = vpack.c.b16 %v1511, %v1503
        %v2144 = vpack.c.b16 %v1520, %v1512
        %v2145 = vpack.c.b16 %v1521, %v1513
        %v2146 = vpack.c.b16 %v1522, %v1514
        %v2147 = vpack.c.b16 %v1523, %v1515
        %v2148 = vpack.c.b16 %v1524, %v1516
        %v2149 = vpack.c.b16 %v1525, %v1517
        %v2150 = vpack.c.b16 %v1526, %v1518
        %v2151 = vpack.c.b16 %v1527, %v1519
        %v2152 = vpack.c.b16 %v1536, %v1528
        %v2153 = vpack.c.b16 %v1537, %v1529
        %v2154 = vpack.c.b16 %v1538, %v1530
        %v2155 = vpack.c.b16 %v1539, %v1531
        %v2156 = vpack.c.b16 %v1540, %v1532
        %v2157 = vpack.c.b16 %v1541, %v1533
        %v2158 = vpack.c.b16 %v1542, %v1534
        %v2159 = vpack.c.b16 %v1543, %v1535
        %v2160 = vpack.c.b16 %v1552, %v1544
        %v2161 = vpack.c.b16 %v1553, %v1545
        %v2162 = vpack.c.b16 %v1554, %v1546
        %v2163 = vpack.c.b16 %v1555, %v1547
        %v2164 = vpack.c.b16 %v1556, %v1548
        %v2165 = vpack.c.b16 %v1557, %v1549
        %v2166 = vpack.c.b16 %v1558, %v1550
        %v2167 = vpack.c.b16 %v1559, %v1551
        %v2168 = vpack.c.b16 %v1568, %v1560
        %v2169 = vpack.c.b16 %v1569, %v1561
        %v2170 = vpack.c.b16 %v1570, %v1562
        %v2171 = vpack.c.b16 %v1571, %v1563
        %v2172 = vpack.c.b16 %v1572, %v1564
        %v2173 = vpack.c.b16 %v1573, %v1565
        %v2174 = vpack.c.b16 %v1574, %v1566
        %v2175 = vpack.c.b16 %v1575, %v1567
        %v2176 = vpack.c.b16 %v1584, %v1576
        %v2177 = vpack.c.b16 %v1585, %v1577
        %v2178 = vpack.c.b16 %v1586, %v1578
        %v2179 = vpack.c.b16 %v1587, %v1579
        %v2180 = vpack.c.b16 %v1588, %v1580
        %v2181 = vpack.c.b16 %v1589, %v1581
        %v2182 = vpack.c.b16 %v1590, %v1582
        %v2183 = vpack.c.b16 %v1591, %v1583
        %v2184 = vpack.c.b16 %v1600, %v1592
        %v2185 = vpack.c.b16 %v1601, %v1593
        %v2186 = vpack.c.b16 %v1602, %v1594
        %v2187 = vpack.c.b16 %v1603, %v1595
        %v2188 = vpack.c.b16 %v1604, %v1596
        %v2189 = vpack.c.b16 %v1605, %v1597
        %v2190 = vpack.c.b16 %v1606, %v1598
        %v2191 = vpack.c.b16 %v1607, %v1599
        %v2192 = vpack.c.b16 %v1616, %v1608
        %v2193 = vpack.c.b16 %v1617, %v1609
        %v2194 = vpack.c.b16 %v1618, %v1610
        %v2195 = vpack.c.b16 %v1619, %v1611
        %v2196 = vpack.c.b16 %v1620, %v1612
        %v2197 = vpack.c.b16 %v1621, %v1613
        %v2198 = vpack.c.b16 %v1622, %v1614
        %v2199 = vpack.c.b16 %v1623, %v1615
        %v2200 = vpack.c.b16 %v1632, %v1624
        %v2201 = vpack.c.b16 %v1633, %v1625
        %v2202 = vpack.c.b16 %v1634, %v1626
        %v2203 = vpack.c.b16 %v1635, %v1627
        %v2204 = vpack.c.b16 %v1636, %v1628
        %v2205 = vpack.c.b16 %v1637, %v1629
        %v2206 = vpack.c.b16 %v1638, %v1630
        %v2207 = vpack.c.b16 %v1639, %v1631
        %v2208 = vpack.c.b16 %v1648, %v1640
        %v2209 = vpack.c.b16 %v1649, %v1641
        %v2210 = vpack.c.b16 %v1650, %v1642
        %v2211 = vpack.c.b16 %v1651, %v1643
        %v2212 = vpack.c.b16 %v1652, %v1644
        %v2213 = vpack.c.b16 %v1653, %v1645
        %v2214 = vpack.c.b16 %v1654, %v1646
        %v2215 = vpack.c.b16 %v1655, %v1647
        %v2216 = vpack.c.b16 %v1664, %v1656
        %v2217 = vpack.c.b16 %v1665, %v1657
        %v2218 = vpack.c.b16 %v1666, %v1658
        %v2219 = vpack.c.b16 %v1667, %v1659
        %v2220 = vpack.c.b16 %v1668, %v1660
        %v2221 = vpack.c.b16 %v1669, %v1661
        %v2222 = vpack.c.b16 %v1670, %v1662
        %v2223 = vpack.c.b16 %v1671, %v1663
        %v2224 = vpack.c.b16 %v1680, %v1672
        %v2225 = vpack.c.b16 %v1681, %v1673
        %v2226 = vpack.c.b16 %v1682, %v1674
        %v2227 = vpack.c.b16 %v1683, %v1675
        %v2228 = vpack.c.b16 %v1684, %v1676
        %v2229 = vpack.c.b16 %v1685, %v1677
        %v2230 = vpack.c.b16 %v1686, %v1678
        %v2231 = vpack.c.b16 %v1687, %v1679
        %v2232 = vpack.c.b16 %v1696, %v1688
        %v2233 = vpack.c.b16 %v1697, %v1689
        %v2234 = vpack.c.b16 %v1698, %v1690
        %v2235 = vpack.c.b16 %v1699, %v1691
        %v2236 = vpack.c.b16 %v1700, %v1692
        %v2237 = vpack.c.b16 %v1701, %v1693
        %v2238 = vpack.c.b16 %v1702, %v1694
        %v2239 = vpack.c.b16 %v1703, %v1695
        %v2240 = vpack.c.b16 %v1712, %v1704
        %v2241 = vpack.c.b16 %v1713, %v1705
        %v2242 = vpack.c.b16 %v1714, %v1706
        %v2243 = vpack.c.b16 %v1715, %v1707
        %v2244 = vpack.c.b16 %v1716, %v1708
        %v2245 = vpack.c.b16 %v1717, %v1709
        %v2246 = vpack.c.b16 %v1718, %v1710
        %v2247 = vpack.c.b16 %v1719, %v1711
        %v2248 = vpack.c.b16 %v1728, %v1720
        %v2249 = vpack.c.b16 %v1729, %v1721
        %v2250 = vpack.c.b16 %v1730, %v1722
        %v2251 = vpack.c.b16 %v1731, %v1723
        %v2252 = vpack.c.b16 %v1732, %v1724
        %v2253 = vpack.c.b16 %v1733, %v1725
        %v2254 = vpack.c.b16 %v1734, %v1726
        %v2255 = vpack.c.b16 %v1735, %v1727
        %v2256 = vpack.c.b16 %v1744, %v1736
        %v2257 = vpack.c.b16 %v1745, %v1737
        %v2258 = vpack.c.b16 %v1746, %v1738
        %v2259 = vpack.c.b16 %v1747, %v1739
        %v2260 = vpack.c.b16 %v1748, %v1740
        %v2261 = vpack.c.b16 %v1749, %v1741
        %v2262 = vpack.c.b16 %v1750, %v1742
        %v2263 = vpack.c.b16 %v1751, %v1743
        %v2264 = vpack.c.b16 %v1760, %v1752
        %v2265 = vpack.c.b16 %v1761, %v1753
        %v2266 = vpack.c.b16 %v1762, %v1754
        %v2267 = vpack.c.b16 %v1763, %v1755
        %v2268 = vpack.c.b16 %v1764, %v1756
        %v2269 = vpack.c.b16 %v1765, %v1757
        %v2270 = vpack.c.b16 %v1766, %v1758
        %v2271 = vpack.c.b16 %v1767, %v1759
        %v2272 = vpack.c.b16 %v1776, %v1768
        %v2273 = vpack.c.b16 %v1777, %v1769
        %v2274 = vpack.c.b16 %v1778, %v1770
        %v2275 = vpack.c.b16 %v1779, %v1771
        %v2276 = vpack.c.b16 %v1780, %v1772
        %v2277 = vpack.c.b16 %v1781, %v1773
        %v2278 = vpack.c.b16 %v1782, %v1774
        %v2279 = vpack.c.b16 %v1783, %v1775
        %v2280 = vpack.c.b16 %v1792, %v1784
        %v2281 = vpack.c.b16 %v1793, %v1785
        %v2282 = vpack.c.b16 %v1794, %v1786
        %v2283 = vpack.c.b16 %v1795, %v1787
        %v2284 = vpack.c.b16 %v1796, %v1788
        %v2285 = vpack.c.b16 %v1797, %v1789
        %v2286 = vpack.c.b16 %v1798, %v1790
        %v2287 = vpack.c.b16 %v1799, %v1791
        %v2288 = vpack.c.b16 %v1808, %v1800
        %v2289 = vpack.c.b16 %v1809, %v1801
        %v2290 = vpack.c.b16 %v1810, %v1802
        %v2291 = vpack.c.b16 %v1811, %v1803
        %v2292 = vpack.c.b16 %v1812, %v1804
        %v2293 = vpack.c.b16 %v1813, %v1805
        %v2294 = vpack.c.b16 %v1814, %v1806
        %v2295 = vpack.c.b16 %v1815, %v1807
        %v2296 = vpack.c.b16 %v1824, %v1816
        %v2297 = vpack.c.b16 %v1825, %v1817
        %v2298 = vpack.c.b16 %v1826, %v1818
        %v2299 = vpack.c.b16 %v1827, %v1819
        %v2300 = vpack.c.b16 %v1828, %v1820
        %v2301 = vpack.c.b16 %v1829, %v1821
        %v2302 = vpack.c.b16 %v1830, %v1822
        %v2303 = vpack.c.b16 %v1831, %v1823
        %v2304 = vpack.c.b16 %v1840, %v1832
        %v2305 = vpack.c.b16 %v1841, %v1833
        %v2306 = vpack.c.b16 %v1842, %v1834
        %v2307 = vpack.c.b16 %v1843, %v1835
        %v2308 = vpack.c.b16 %v1844, %v1836
        %v2309 = vpack.c.b16 %v1845, %v1837
        %v2310 = vpack.c.b16 %v1846, %v1838
        %v2311 = vpack.c.b16 %v1847, %v1839
        %v2312 = vpack.c.b16 %v1856, %v1848
        %v2313 = vpack.c.b16 %v1857, %v1849
        %v2314 = vpack.c.b16 %v1858, %v1850
        %v2315 = vpack.c.b16 %v1859, %v1851
        %v2316 = vpack.c.b16 %v1860, %v1852
        %v2317 = vpack.c.b16 %v1861, %v1853
        %v2318 = vpack.c.b16 %v1862, %v1854
        %v2319 = vpack.c.b16 %v1863, %v1855
        %v2320 = vpack.c.b16 %v1872, %v1864
        %v2321 = vpack.c.b16 %v1873, %v1865
        %v2322 = vpack.c.b16 %v1874, %v1866
        %v2323 = vpack.c.b16 %v1875, %v1867
        %v2324 = vpack.c.b16 %v1876, %v1868
        %v2325 = vpack.c.b16 %v1877, %v1869
        %v2326 = vpack.c.b16 %v1878, %v1870
        %v2327 = vpack.c.b16 %v1879, %v1871
        %v2328 = vpack.c.b16 %v1888, %v1880
        %v2329 = vpack.c.b16 %v1889, %v1881
        %v2330 = vpack.c.b16 %v1890, %v1882
        %v2331 = vpack.c.b16 %v1891, %v1883
        %v2332 = vpack.c.b16 %v1892, %v1884
        %v2333 = vpack.c.b16 %v1893, %v1885
        %v2334 = vpack.c.b16 %v1894, %v1886
        %v2335 = vpack.c.b16 %v1895, %v1887
        %v2336 = vpack.c.b16 %v1904, %v1896
        %v2337 = vpack.c.b16 %v1905, %v1897
        %v2338 = vpack.c.b16 %v1906, %v1898
        %v2339 = vpack.c.b16 %v1907, %v1899
        %v2340 = vpack.c.b16 %v1908, %v1900
        %v2341 = vpack.c.b16 %v1909, %v1901
        %v2342 = vpack.c.b16 %v1910, %v1902
        %v2343 = vpack.c.b16 %v1911, %v1903
        %v2344 = vpack.c.b16 %v1920, %v1912
        %v2345 = vpack.c.b16 %v1921, %v1913
        %v2346 = vpack.c.b16 %v1922, %v1914
        %v2347 = vpack.c.b16 %v1923, %v1915
        %v2348 = vpack.c.b16 %v1924, %v1916
        %v2349 = vpack.c.b16 %v1925, %v1917
        %v2350 = vpack.c.b16 %v1926, %v1918
        %v2351 = vpack.c.b16 %v1927, %v1919
        %v2352 = vpack.c.b16 %v1936, %v1928
        %v2353 = vpack.c.b16 %v1937, %v1929
        %v2354 = vpack.c.b16 %v1938, %v1930
        %v2355 = vpack.c.b16 %v1939, %v1931
        %v2356 = vpack.c.b16 %v1940, %v1932
        %v2357 = vpack.c.b16 %v1941, %v1933
        %v2358 = vpack.c.b16 %v1942, %v1934
        %v2359 = vpack.c.b16 %v1943, %v1935
        %v2360 = vpack.c.b16 %v1952, %v1944
        %v2361 = vpack.c.b16 %v1953, %v1945
        %v2362 = vpack.c.b16 %v1954, %v1946
        %v2363 = vpack.c.b16 %v1955, %v1947
        %v2364 = vpack.c.b16 %v1956, %v1948
        %v2365 = vpack.c.b16 %v1957, %v1949
        %v2366 = vpack.c.b16 %v1958, %v1950
        %v2367 = vpack.c.b16 %v1959, %v1951
        %v2368 = vpack.c.b16 %v1968, %v1960
        %v2369 = vpack.c.b16 %v1969, %v1961
        %v2370 = vpack.c.b16 %v1970, %v1962
        %v2371 = vpack.c.b16 %v1971, %v1963
        %v2372 = vpack.c.b16 %v1972, %v1964
        %v2373 = vpack.c.b16 %v1973, %v1965
        %v2374 = vpack.c.b16 %v1974, %v1966
        %v2375 = vpack.c.b16 %v1975, %v1967
        %v2376 = vpack.c.b16 %v1984, %v1976
        %v2377 = vpack.c.b16 %v1985, %v1977
        %v2378 = vpack.c.b16 %v1986, %v1978
        %v2379 = vpack.c.b16 %v1987, %v1979
        %v2380 = vpack.c.b16 %v1988, %v1980
        %v2381 = vpack.c.b16 %v1989, %v1981
        %v2382 = vpack.c.b16 %v1990, %v1982
        %v2383 = vpack.c.b16 %v1991, %v1983
        %v2384 = vpack.c.b16 %v2000, %v1992
        %v2385 = vpack.c.b16 %v2001, %v1993
        %v2386 = vpack.c.b16 %v2002, %v1994
        %v2387 = vpack.c.b16 %v2003, %v1995
        %v2388 = vpack.c.b16 %v2004, %v1996
        %v2389 = vpack.c.b16 %v2005, %v1997
        %v2390 = vpack.c.b16 %v2006, %v1998
        %v2391 = vpack.c.b16 %v2007, %v1999
        %2776 = vmatpush.bf16.msra.mxu0 %v2064
        %2777 = vmatpush.bf16.msra.mxu0 %v2056
        %2778 = vmatpush.bf16.msra.mxu0 %v2048
        %2779 = vmatpush.bf16.msra.mxu0 %v2040
        %2780 = vmatpush.bf16.msra.mxu0 %v2032
        %2781 = vmatpush.bf16.msra.mxu0 %v2024
        %2782 = vmatpush.bf16.msra.mxu0 %v2016
        %2783 = vmatpush.bf16.msra.mxu0 %v2008
        %2784 = vmatmul.bf16.gmra.mxu0 %v406
        %v2785 = vpop.f32.mrf.mxu0
        %v2786 = vadd.f32 %v840, %v2785
        %v2787 = vpop.f32.mrf.mxu0
        %v2788 = vadd.f32 %v840, %v2787
        %2789 = vmatmul.bf16.gmra.mxu0 %v412
        %v2790 = vpop.f32.mrf.mxu0
        %v2791 = vadd.f32 %v840, %v2790
        %v2792 = vpop.f32.mrf.mxu0
        %v2793 = vadd.f32 %v840, %v2792
        %2794 = vmatmul.bf16.gmra.mxu0 %v418
        %v2795 = vpop.f32.mrf.mxu0
        %v2796 = vadd.f32 %v840, %v2795
        %v2797 = vpop.f32.mrf.mxu0
        %v2798 = vadd.f32 %v840, %v2797
        %2799 = vmatmul.bf16.gmra.mxu0 %v424
        %v2800 = vpop.f32.mrf.mxu0
        %v2801 = vadd.f32 %v840, %v2800
        %v2802 = vpop.f32.mrf.mxu0
        %v2803 = vadd.f32 %v840, %v2802
        %2804 = vmatmul.bf16.gmra.mxu0 %v430
        %v2805 = vpop.f32.mrf.mxu0
        %v2806 = vadd.f32 %v840, %v2805
        %v2807 = vpop.f32.mrf.mxu0
        %v2808 = vadd.f32 %v840, %v2807
        %2809 = vmatmul.bf16.gmra.mxu0 %v436
        %v2810 = vpop.f32.mrf.mxu0
        %v2811 = vadd.f32 %v840, %v2810
        %v2812 = vpop.f32.mrf.mxu0
        %v2813 = vadd.f32 %v840, %v2812
        %2814 = vmatmul.bf16.gmra.mxu0 %v442
        %v2815 = vpop.f32.mrf.mxu0
        %v2816 = vadd.f32 %v840, %v2815
        %v2817 = vpop.f32.mrf.mxu0
        %v2818 = vadd.f32 %v840, %v2817
        %2819 = vmatmul.bf16.gmra.mxu0 %v448
        %v2820 = vpop.f32.mrf.mxu0
        %v2821 = vadd.f32 %v840, %v2820
        %v2822 = vpop.f32.mrf.mxu0
        %v2823 = vadd.f32 %v840, %v2822
        %2824 = vdwg.mxu0
        %2825 = vmatpush.bf16.msra.mxu0 %v2128
        %2826 = vmatpush.bf16.msra.mxu0 %v2120
        %2827 = vmatpush.bf16.msra.mxu0 %v2112
        %2828 = vmatpush.bf16.msra.mxu0 %v2104
        %2829 = vmatpush.bf16.msra.mxu0 %v2096
        %2830 = vmatpush.bf16.msra.mxu0 %v2088
        %2831 = vmatpush.bf16.msra.mxu0 %v2080
        %2832 = vmatpush.bf16.msra.mxu0 %v2072
        %2833 = vmatmul.bf16.gmra.mxu0 %v407
        %v2834 = vpop.f32.mrf.mxu0
        %v2835 = vadd.f32 %v2786, %v2834
        %v2836 = vpop.f32.mrf.mxu0
        %v2837 = vadd.f32 %v2788, %v2836
        %2838 = vmatmul.bf16.gmra.mxu0 %v413
        %v2839 = vpop.f32.mrf.mxu0
        %v2840 = vadd.f32 %v2791, %v2839
        %v2841 = vpop.f32.mrf.mxu0
        %v2842 = vadd.f32 %v2793, %v2841
        %2843 = vmatmul.bf16.gmra.mxu0 %v419
        %v2844 = vpop.f32.mrf.mxu0
        %v2845 = vadd.f32 %v2796, %v2844
        %v2846 = vpop.f32.mrf.mxu0
        %v2847 = vadd.f32 %v2798, %v2846
        %2848 = vmatmul.bf16.gmra.mxu0 %v425
        %v2849 = vpop.f32.mrf.mxu0
        %v2850 = vadd.f32 %v2801, %v2849
        %v2851 = vpop.f32.mrf.mxu0
        %v2852 = vadd.f32 %v2803, %v2851
        %2853 = vmatmul.bf16.gmra.mxu0 %v431
        %v2854 = vpop.f32.mrf.mxu0
        %v2855 = vadd.f32 %v2806, %v2854
        %v2856 = vpop.f32.mrf.mxu0
        %v2857 = vadd.f32 %v2808, %v2856
        %2858 = vmatmul.bf16.gmra.mxu0 %v437
        %v2859 = vpop.f32.mrf.mxu0
        %v2860 = vadd.f32 %v2811, %v2859
        %v2861 = vpop.f32.mrf.mxu0
        %v2862 = vadd.f32 %v2813, %v2861
        %2863 = vmatmul.bf16.gmra.mxu0 %v443
        %v2864 = vpop.f32.mrf.mxu0
        %v2865 = vadd.f32 %v2816, %v2864
        %v2866 = vpop.f32.mrf.mxu0
        %v2867 = vadd.f32 %v2818, %v2866
        %2868 = vmatmul.bf16.gmra.mxu0 %v449
        %v2869 = vpop.f32.mrf.mxu0
        %v2870 = vadd.f32 %v2821, %v2869
        %v2871 = vpop.f32.mrf.mxu0
        %v2872 = vadd.f32 %v2823, %v2871
        %2873 = vdwg.mxu0
        %2874 = vmatpush.bf16.msra.mxu0 %v2192
        %2875 = vmatpush.bf16.msra.mxu0 %v2184
        %2876 = vmatpush.bf16.msra.mxu0 %v2176
        %2877 = vmatpush.bf16.msra.mxu0 %v2168
        %2878 = vmatpush.bf16.msra.mxu0 %v2160
        %2879 = vmatpush.bf16.msra.mxu0 %v2152
        %2880 = vmatpush.bf16.msra.mxu0 %v2144
        %2881 = vmatpush.bf16.msra.mxu0 %v2136
        %2882 = vmatmul.bf16.gmra.mxu0 %v408
        %v2883 = vpop.f32.mrf.mxu0
        %v2884 = vadd.f32 %v2835, %v2883
        %v2885 = vpop.f32.mrf.mxu0
        %v2886 = vadd.f32 %v2837, %v2885
        %2887 = vmatmul.bf16.gmra.mxu0 %v414
        %v2888 = vpop.f32.mrf.mxu0
        %v2889 = vadd.f32 %v2840, %v2888
        %v2890 = vpop.f32.mrf.mxu0
        %v2891 = vadd.f32 %v2842, %v2890
        %2892 = vmatmul.bf16.gmra.mxu0 %v420
        %v2893 = vpop.f32.mrf.mxu0
        %v2894 = vadd.f32 %v2845, %v2893
        %v2895 = vpop.f32.mrf.mxu0
        %v2896 = vadd.f32 %v2847, %v2895
        %2897 = vmatmul.bf16.gmra.mxu0 %v426
        %v2898 = vpop.f32.mrf.mxu0
        %v2899 = vadd.f32 %v2850, %v2898
        %v2900 = vpop.f32.mrf.mxu0
        %v2901 = vadd.f32 %v2852, %v2900
        %2902 = vmatmul.bf16.gmra.mxu0 %v432
        %v2903 = vpop.f32.mrf.mxu0
        %v2904 = vadd.f32 %v2855, %v2903
        %v2905 = vpop.f32.mrf.mxu0
        %v2906 = vadd.f32 %v2857, %v2905
        %2907 = vmatmul.bf16.gmra.mxu0 %v438
        %v2908 = vpop.f32.mrf.mxu0
        %v2909 = vadd.f32 %v2860, %v2908
        %v2910 = vpop.f32.mrf.mxu0
        %v2911 = vadd.f32 %v2862, %v2910
        %2912 = vmatmul.bf16.gmra.mxu0 %v444
        %v2913 = vpop.f32.mrf.mxu0
        %v2914 = vadd.f32 %v2865, %v2913
        %v2915 = vpop.f32.mrf.mxu0
        %v2916 = vadd.f32 %v2867, %v2915
        %2917 = vmatmul.bf16.gmra.mxu0 %v450
        %v2918 = vpop.f32.mrf.mxu0
        %v2919 = vadd.f32 %v2870, %v2918
        %v2920 = vpop.f32.mrf.mxu0
        %v2921 = vadd.f32 %v2872, %v2920
        %2922 = vdwg.mxu0
        %2923 = vmatpush.bf16.msra.mxu0 %v2256
        %2924 = vmatpush.bf16.msra.mxu0 %v2248
        %2925 = vmatpush.bf16.msra.mxu0 %v2240
        %2926 = vmatpush.bf16.msra.mxu0 %v2232
        %2927 = vmatpush.bf16.msra.mxu0 %v2224
        %2928 = vmatpush.bf16.msra.mxu0 %v2216
        %2929 = vmatpush.bf16.msra.mxu0 %v2208
        %2930 = vmatpush.bf16.msra.mxu0 %v2200
        %2931 = vmatmul.bf16.gmra.mxu0 %v409
        %v2932 = vpop.f32.mrf.mxu0
        %v2933 = vadd.f32 %v2884, %v2932
        %v2934 = vpop.f32.mrf.mxu0
        %v2935 = vadd.f32 %v2886, %v2934
        %2936 = vmatmul.bf16.gmra.mxu0 %v415
        %v2937 = vpop.f32.mrf.mxu0
        %v2938 = vadd.f32 %v2889, %v2937
        %v2939 = vpop.f32.mrf.mxu0
        %v2940 = vadd.f32 %v2891, %v2939
        %2941 = vmatmul.bf16.gmra.mxu0 %v421
        %v2942 = vpop.f32.mrf.mxu0
        %v2943 = vadd.f32 %v2894, %v2942
        %v2944 = vpop.f32.mrf.mxu0
        %v2945 = vadd.f32 %v2896, %v2944
        %2946 = vmatmul.bf16.gmra.mxu0 %v427
        %v2947 = vpop.f32.mrf.mxu0
        %v2948 = vadd.f32 %v2899, %v2947
        %v2949 = vpop.f32.mrf.mxu0
        %v2950 = vadd.f32 %v2901, %v2949
        %2951 = vmatmul.bf16.gmra.mxu0 %v433
        %v2952 = vpop.f32.mrf.mxu0
        %v2953 = vadd.f32 %v2904, %v2952
        %v2954 = vpop.f32.mrf.mxu0
        %v2955 = vadd.f32 %v2906, %v2954
        %2956 = vmatmul.bf16.gmra.mxu0 %v439
        %v2957 = vpop.f32.mrf.mxu0
        %v2958 = vadd.f32 %v2909, %v2957
        %v2959 = vpop.f32.mrf.mxu0
        %v2960 = vadd.f32 %v2911, %v2959
        %2961 = vmatmul.bf16.gmra.mxu0 %v445
        %v2962 = vpop.f32.mrf.mxu0
        %v2963 = vadd.f32 %v2914, %v2962
        %v2964 = vpop.f32.mrf.mxu0
        %v2965 = vadd.f32 %v2916, %v2964
        %2966 = vmatmul.bf16.gmra.mxu0 %v451
        %v2967 = vpop.f32.mrf.mxu0
        %v2968 = vadd.f32 %v2919, %v2967
        %v2969 = vpop.f32.mrf.mxu0
        %v2970 = vadd.f32 %v2921, %v2969
        %2971 = vdwg.mxu0
        %2972 = vmatpush.bf16.msra.mxu0 %v2320
        %2973 = vmatpush.bf16.msra.mxu0 %v2312
        %2974 = vmatpush.bf16.msra.mxu0 %v2304
        %2975 = vmatpush.bf16.msra.mxu0 %v2296
        %2976 = vmatpush.bf16.msra.mxu0 %v2288
        %2977 = vmatpush.bf16.msra.mxu0 %v2280
        %2978 = vmatpush.bf16.msra.mxu0 %v2272
        %2979 = vmatpush.bf16.msra.mxu0 %v2264
        %2980 = vmatmul.bf16.gmra.mxu0 %v410
        %v2981 = vpop.f32.mrf.mxu0
        %v2982 = vadd.f32 %v2933, %v2981
        %v2983 = vpop.f32.mrf.mxu0
        %v2984 = vadd.f32 %v2935, %v2983
        %2985 = vmatmul.bf16.gmra.mxu0 %v416
        %v2986 = vpop.f32.mrf.mxu0
        %v2987 = vadd.f32 %v2938, %v2986
        %v2988 = vpop.f32.mrf.mxu0
        %v2989 = vadd.f32 %v2940, %v2988
        %2990 = vmatmul.bf16.gmra.mxu0 %v422
        %v2991 = vpop.f32.mrf.mxu0
        %v2992 = vadd.f32 %v2943, %v2991
        %v2993 = vpop.f32.mrf.mxu0
        %v2994 = vadd.f32 %v2945, %v2993
        %2995 = vmatmul.bf16.gmra.mxu0 %v428
        %v2996 = vpop.f32.mrf.mxu0
        %v2997 = vadd.f32 %v2948, %v2996
        %v2998 = vpop.f32.mrf.mxu0
        %v2999 = vadd.f32 %v2950, %v2998
        %3000 = vmatmul.bf16.gmra.mxu0 %v434
        %v3001 = vpop.f32.mrf.mxu0
        %v3002 = vadd.f32 %v2953, %v3001
        %v3003 = vpop.f32.mrf.mxu0
        %v3004 = vadd.f32 %v2955, %v3003
        %3005 = vmatmul.bf16.gmra.mxu0 %v440
        %v3006 = vpop.f32.mrf.mxu0
        %v3007 = vadd.f32 %v2958, %v3006
        %v3008 = vpop.f32.mrf.mxu0
        %v3009 = vadd.f32 %v2960, %v3008
        %3010 = vmatmul.bf16.gmra.mxu0 %v446
        %v3011 = vpop.f32.mrf.mxu0
        %v3012 = vadd.f32 %v2963, %v3011
        %v3013 = vpop.f32.mrf.mxu0
        %v3014 = vadd.f32 %v2965, %v3013
        %3015 = vmatmul.bf16.gmra.mxu0 %v452
        %v3016 = vpop.f32.mrf.mxu0
        %v3017 = vadd.f32 %v2968, %v3016
        %v3018 = vpop.f32.mrf.mxu0
        %v3019 = vadd.f32 %v2970, %v3018
        %3020 = vdwg.mxu0
        %3021 = vmatpush.bf16.msra.mxu0 %v2384
        %3022 = vmatpush.bf16.msra.mxu0 %v2376
        %3023 = vmatpush.bf16.msra.mxu0 %v2368
        %3024 = vmatpush.bf16.msra.mxu0 %v2360
        %3025 = vmatpush.bf16.msra.mxu0 %v2352
        %3026 = vmatpush.bf16.msra.mxu0 %v2344
        %3027 = vmatpush.bf16.msra.mxu0 %v2336
        %3028 = vmatpush.bf16.msra.mxu0 %v2328
        %3029 = vmatmul.bf16.gmra.mxu0 %v411
        %v3030 = vpop.f32.mrf.mxu0
        %v3031 = vadd.f32 %v2982, %v3030
        %v3032 = vpop.f32.mrf.mxu0
        %v3033 = vadd.f32 %v2984, %v3032
        %3034 = vmatmul.bf16.gmra.mxu0 %v417
        %v3035 = vpop.f32.mrf.mxu0
        %v3036 = vadd.f32 %v2987, %v3035
        %v3037 = vpop.f32.mrf.mxu0
        %v3038 = vadd.f32 %v2989, %v3037
        %3039 = vmatmul.bf16.gmra.mxu0 %v423
        %v3040 = vpop.f32.mrf.mxu0
        %v3041 = vadd.f32 %v2992, %v3040
        %v3042 = vpop.f32.mrf.mxu0
        %v3043 = vadd.f32 %v2994, %v3042
        %3044 = vmatmul.bf16.gmra.mxu0 %v429
        %v3045 = vpop.f32.mrf.mxu0
        %v3046 = vadd.f32 %v2997, %v3045
        %v3047 = vpop.f32.mrf.mxu0
        %v3048 = vadd.f32 %v2999, %v3047
        %3049 = vmatmul.bf16.gmra.mxu0 %v435
        %v3050 = vpop.f32.mrf.mxu0
        %v3051 = vadd.f32 %v3002, %v3050
        %v3052 = vpop.f32.mrf.mxu0
        %v3053 = vadd.f32 %v3004, %v3052
        %3054 = vmatmul.bf16.gmra.mxu0 %v441
        %v3055 = vpop.f32.mrf.mxu0
        %v3056 = vadd.f32 %v3007, %v3055
        %v3057 = vpop.f32.mrf.mxu0
        %v3058 = vadd.f32 %v3009, %v3057
        %3059 = vmatmul.bf16.gmra.mxu0 %v447
        %v3060 = vpop.f32.mrf.mxu0
        %v3061 = vadd.f32 %v3012, %v3060
        %v3062 = vpop.f32.mrf.mxu0
        %v3063 = vadd.f32 %v3014, %v3062
        %3064 = vmatmul.bf16.gmra.mxu0 %v453
        %v3065 = vpop.f32.mrf.mxu0
        %v3066 = vadd.f32 %v3017, %v3065
        %v3067 = vpop.f32.mrf.mxu0
        %v3068 = vadd.f32 %v3019, %v3067
        %3069 = vdwg.mxu0
        %3070 = vmatpush.bf16.msra.mxu0 %v2065
        %3071 = vmatpush.bf16.msra.mxu0 %v2057
        %3072 = vmatpush.bf16.msra.mxu0 %v2049
        %3073 = vmatpush.bf16.msra.mxu0 %v2041
        %3074 = vmatpush.bf16.msra.mxu0 %v2033
        %3075 = vmatpush.bf16.msra.mxu0 %v2025
        %3076 = vmatpush.bf16.msra.mxu0 %v2017
        %3077 = vmatpush.bf16.msra.mxu0 %v2009
        %3078 = vmatmul.bf16.gmra.mxu0 %v406
        %v3079 = vpop.f32.mrf.mxu0
        %v3080 = vadd.f32 %v841, %v3079
        %v3081 = vpop.f32.mrf.mxu0
        %v3082 = vadd.f32 %v841, %v3081
        %3083 = vmatmul.bf16.gmra.mxu0 %v412
        %v3084 = vpop.f32.mrf.mxu0
        %v3085 = vadd.f32 %v841, %v3084
        %v3086 = vpop.f32.mrf.mxu0
        %v3087 = vadd.f32 %v841, %v3086
        %3088 = vmatmul.bf16.gmra.mxu0 %v418
        %v3089 = vpop.f32.mrf.mxu0
        %v3090 = vadd.f32 %v841, %v3089
        %v3091 = vpop.f32.mrf.mxu0
        %v3092 = vadd.f32 %v841, %v3091
        %3093 = vmatmul.bf16.gmra.mxu0 %v424
        %v3094 = vpop.f32.mrf.mxu0
        %v3095 = vadd.f32 %v841, %v3094
        %v3096 = vpop.f32.mrf.mxu0
        %v3097 = vadd.f32 %v841, %v3096
        %3098 = vmatmul.bf16.gmra.mxu0 %v430
        %v3099 = vpop.f32.mrf.mxu0
        %v3100 = vadd.f32 %v841, %v3099
        %v3101 = vpop.f32.mrf.mxu0
        %v3102 = vadd.f32 %v841, %v3101
        %3103 = vmatmul.bf16.gmra.mxu0 %v436
        %v3104 = vpop.f32.mrf.mxu0
        %v3105 = vadd.f32 %v841, %v3104
        %v3106 = vpop.f32.mrf.mxu0
        %v3107 = vadd.f32 %v841, %v3106
        %3108 = vmatmul.bf16.gmra.mxu0 %v442
        %v3109 = vpop.f32.mrf.mxu0
        %v3110 = vadd.f32 %v841, %v3109
        %v3111 = vpop.f32.mrf.mxu0
        %v3112 = vadd.f32 %v841, %v3111
        %3113 = vmatmul.bf16.gmra.mxu0 %v448
        %v3114 = vpop.f32.mrf.mxu0
        %v3115 = vadd.f32 %v841, %v3114
        %v3116 = vpop.f32.mrf.mxu0
        %v3117 = vadd.f32 %v841, %v3116
        %3118 = vdwg.mxu0
        %3119 = vmatpush.bf16.msra.mxu0 %v2129
        %3120 = vmatpush.bf16.msra.mxu0 %v2121
        %3121 = vmatpush.bf16.msra.mxu0 %v2113
        %3122 = vmatpush.bf16.msra.mxu0 %v2105
        %3123 = vmatpush.bf16.msra.mxu0 %v2097
        %3124 = vmatpush.bf16.msra.mxu0 %v2089
        %3125 = vmatpush.bf16.msra.mxu0 %v2081
        %3126 = vmatpush.bf16.msra.mxu0 %v2073
        %3127 = vmatmul.bf16.gmra.mxu0 %v407
        %v3128 = vpop.f32.mrf.mxu0
        %v3129 = vadd.f32 %v3080, %v3128
        %v3130 = vpop.f32.mrf.mxu0
        %v3131 = vadd.f32 %v3082, %v3130
        %3132 = vmatmul.bf16.gmra.mxu0 %v413
        %v3133 = vpop.f32.mrf.mxu0
        %v3134 = vadd.f32 %v3085, %v3133
        %v3135 = vpop.f32.mrf.mxu0
        %v3136 = vadd.f32 %v3087, %v3135
        %3137 = vmatmul.bf16.gmra.mxu0 %v419
        %v3138 = vpop.f32.mrf.mxu0
        %v3139 = vadd.f32 %v3090, %v3138
        %v3140 = vpop.f32.mrf.mxu0
        %v3141 = vadd.f32 %v3092, %v3140
        %3142 = vmatmul.bf16.gmra.mxu0 %v425
        %v3143 = vpop.f32.mrf.mxu0
        %v3144 = vadd.f32 %v3095, %v3143
        %v3145 = vpop.f32.mrf.mxu0
        %v3146 = vadd.f32 %v3097, %v3145
        %3147 = vmatmul.bf16.gmra.mxu0 %v431
        %v3148 = vpop.f32.mrf.mxu0
        %v3149 = vadd.f32 %v3100, %v3148
        %v3150 = vpop.f32.mrf.mxu0
        %v3151 = vadd.f32 %v3102, %v3150
        %3152 = vmatmul.bf16.gmra.mxu0 %v437
        %v3153 = vpop.f32.mrf.mxu0
        %v3154 = vadd.f32 %v3105, %v3153
        %v3155 = vpop.f32.mrf.mxu0
        %v3156 = vadd.f32 %v3107, %v3155
        %3157 = vmatmul.bf16.gmra.mxu0 %v443
        %v3158 = vpop.f32.mrf.mxu0
        %v3159 = vadd.f32 %v3110, %v3158
        %v3160 = vpop.f32.mrf.mxu0
        %v3161 = vadd.f32 %v3112, %v3160
        %3162 = vmatmul.bf16.gmra.mxu0 %v449
        %v3163 = vpop.f32.mrf.mxu0
        %v3164 = vadd.f32 %v3115, %v3163
        %v3165 = vpop.f32.mrf.mxu0
        %v3166 = vadd.f32 %v3117, %v3165
        %3167 = vdwg.mxu0
        %3168 = vmatpush.bf16.msra.mxu0 %v2193
        %3169 = vmatpush.bf16.msra.mxu0 %v2185
        %3170 = vmatpush.bf16.msra.mxu0 %v2177
        %3171 = vmatpush.bf16.msra.mxu0 %v2169
        %3172 = vmatpush.bf16.msra.mxu0 %v2161
        %3173 = vmatpush.bf16.msra.mxu0 %v2153
        %3174 = vmatpush.bf16.msra.mxu0 %v2145
        %3175 = vmatpush.bf16.msra.mxu0 %v2137
        %3176 = vmatmul.bf16.gmra.mxu0 %v408
        %v3177 = vpop.f32.mrf.mxu0
        %v3178 = vadd.f32 %v3129, %v3177
        %v3179 = vpop.f32.mrf.mxu0
        %v3180 = vadd.f32 %v3131, %v3179
        %3181 = vmatmul.bf16.gmra.mxu0 %v414
        %v3182 = vpop.f32.mrf.mxu0
        %v3183 = vadd.f32 %v3134, %v3182
        %v3184 = vpop.f32.mrf.mxu0
        %v3185 = vadd.f32 %v3136, %v3184
        %3186 = vmatmul.bf16.gmra.mxu0 %v420
        %v3187 = vpop.f32.mrf.mxu0
        %v3188 = vadd.f32 %v3139, %v3187
        %v3189 = vpop.f32.mrf.mxu0
        %v3190 = vadd.f32 %v3141, %v3189
        %3191 = vmatmul.bf16.gmra.mxu0 %v426
        %v3192 = vpop.f32.mrf.mxu0
        %v3193 = vadd.f32 %v3144, %v3192
        %v3194 = vpop.f32.mrf.mxu0
        %v3195 = vadd.f32 %v3146, %v3194
        %3196 = vmatmul.bf16.gmra.mxu0 %v432
        %v3197 = vpop.f32.mrf.mxu0
        %v3198 = vadd.f32 %v3149, %v3197
        %v3199 = vpop.f32.mrf.mxu0
        %v3200 = vadd.f32 %v3151, %v3199
        %3201 = vmatmul.bf16.gmra.mxu0 %v438
        %v3202 = vpop.f32.mrf.mxu0
        %v3203 = vadd.f32 %v3154, %v3202
        %v3204 = vpop.f32.mrf.mxu0
        %v3205 = vadd.f32 %v3156, %v3204
        %3206 = vmatmul.bf16.gmra.mxu0 %v444
        %v3207 = vpop.f32.mrf.mxu0
        %v3208 = vadd.f32 %v3159, %v3207
        %v3209 = vpop.f32.mrf.mxu0
        %v3210 = vadd.f32 %v3161, %v3209
        %3211 = vmatmul.bf16.gmra.mxu0 %v450
        %v3212 = vpop.f32.mrf.mxu0
        %v3213 = vadd.f32 %v3164, %v3212
        %v3214 = vpop.f32.mrf.mxu0
        %v3215 = vadd.f32 %v3166, %v3214
        %3216 = vdwg.mxu0
        %3217 = vmatpush.bf16.msra.mxu0 %v2257
        %3218 = vmatpush.bf16.msra.mxu0 %v2249
        %3219 = vmatpush.bf16.msra.mxu0 %v2241
        %3220 = vmatpush.bf16.msra.mxu0 %v2233
        %3221 = vmatpush.bf16.msra.mxu0 %v2225
        %3222 = vmatpush.bf16.msra.mxu0 %v2217
        %3223 = vmatpush.bf16.msra.mxu0 %v2209
        %3224 = vmatpush.bf16.msra.mxu0 %v2201
        %3225 = vmatmul.bf16.gmra.mxu0 %v409
        %v3226 = vpop.f32.mrf.mxu0
        %v3227 = vadd.f32 %v3178, %v3226
        %v3228 = vpop.f32.mrf.mxu0
        %v3229 = vadd.f32 %v3180, %v3228
        %3230 = vmatmul.bf16.gmra.mxu0 %v415
        %v3231 = vpop.f32.mrf.mxu0
        %v3232 = vadd.f32 %v3183, %v3231
        %v3233 = vpop.f32.mrf.mxu0
        %v3234 = vadd.f32 %v3185, %v3233
        %3235 = vmatmul.bf16.gmra.mxu0 %v421
        %v3236 = vpop.f32.mrf.mxu0
        %v3237 = vadd.f32 %v3188, %v3236
        %v3238 = vpop.f32.mrf.mxu0
        %v3239 = vadd.f32 %v3190, %v3238
        %3240 = vmatmul.bf16.gmra.mxu0 %v427
        %v3241 = vpop.f32.mrf.mxu0
        %v3242 = vadd.f32 %v3193, %v3241
        %v3243 = vpop.f32.mrf.mxu0
        %v3244 = vadd.f32 %v3195, %v3243
        %3245 = vmatmul.bf16.gmra.mxu0 %v433
        %v3246 = vpop.f32.mrf.mxu0
        %v3247 = vadd.f32 %v3198, %v3246
        %v3248 = vpop.f32.mrf.mxu0
        %v3249 = vadd.f32 %v3200, %v3248
        %3250 = vmatmul.bf16.gmra.mxu0 %v439
        %v3251 = vpop.f32.mrf.mxu0
        %v3252 = vadd.f32 %v3203, %v3251
        %v3253 = vpop.f32.mrf.mxu0
        %v3254 = vadd.f32 %v3205, %v3253
        %3255 = vmatmul.bf16.gmra.mxu0 %v445
        %v3256 = vpop.f32.mrf.mxu0
        %v3257 = vadd.f32 %v3208, %v3256
        %v3258 = vpop.f32.mrf.mxu0
        %v3259 = vadd.f32 %v3210, %v3258
        %3260 = vmatmul.bf16.gmra.mxu0 %v451
        %v3261 = vpop.f32.mrf.mxu0
        %v3262 = vadd.f32 %v3213, %v3261
        %v3263 = vpop.f32.mrf.mxu0
        %v3264 = vadd.f32 %v3215, %v3263
        %3265 = vdwg.mxu0
        %3266 = vmatpush.bf16.msra.mxu0 %v2321
        %3267 = vmatpush.bf16.msra.mxu0 %v2313
        %3268 = vmatpush.bf16.msra.mxu0 %v2305
        %3269 = vmatpush.bf16.msra.mxu0 %v2297
        %3270 = vmatpush.bf16.msra.mxu0 %v2289
        %3271 = vmatpush.bf16.msra.mxu0 %v2281
        %3272 = vmatpush.bf16.msra.mxu0 %v2273
        %3273 = vmatpush.bf16.msra.mxu0 %v2265
        %3274 = vmatmul.bf16.gmra.mxu0 %v410
        %v3275 = vpop.f32.mrf.mxu0
        %v3276 = vadd.f32 %v3227, %v3275
        %v3277 = vpop.f32.mrf.mxu0
        %v3278 = vadd.f32 %v3229, %v3277
        %3279 = vmatmul.bf16.gmra.mxu0 %v416
        %v3280 = vpop.f32.mrf.mxu0
        %v3281 = vadd.f32 %v3232, %v3280
        %v3282 = vpop.f32.mrf.mxu0
        %v3283 = vadd.f32 %v3234, %v3282
        %3284 = vmatmul.bf16.gmra.mxu0 %v422
        %v3285 = vpop.f32.mrf.mxu0
        %v3286 = vadd.f32 %v3237, %v3285
        %v3287 = vpop.f32.mrf.mxu0
        %v3288 = vadd.f32 %v3239, %v3287
        %3289 = vmatmul.bf16.gmra.mxu0 %v428
        %v3290 = vpop.f32.mrf.mxu0
        %v3291 = vadd.f32 %v3242, %v3290
        %v3292 = vpop.f32.mrf.mxu0
        %v3293 = vadd.f32 %v3244, %v3292
        %3294 = vmatmul.bf16.gmra.mxu0 %v434
        %v3295 = vpop.f32.mrf.mxu0
        %v3296 = vadd.f32 %v3247, %v3295
        %v3297 = vpop.f32.mrf.mxu0
        %v3298 = vadd.f32 %v3249, %v3297
        %3299 = vmatmul.bf16.gmra.mxu0 %v440
        %v3300 = vpop.f32.mrf.mxu0
        %v3301 = vadd.f32 %v3252, %v3300
        %v3302 = vpop.f32.mrf.mxu0
        %v3303 = vadd.f32 %v3254, %v3302
        %3304 = vmatmul.bf16.gmra.mxu0 %v446
        %v3305 = vpop.f32.mrf.mxu0
        %v3306 = vadd.f32 %v3257, %v3305
        %v3307 = vpop.f32.mrf.mxu0
        %v3308 = vadd.f32 %v3259, %v3307
        %3309 = vmatmul.bf16.gmra.mxu0 %v452
        %v3310 = vpop.f32.mrf.mxu0
        %v3311 = vadd.f32 %v3262, %v3310
        %v3312 = vpop.f32.mrf.mxu0
        %v3313 = vadd.f32 %v3264, %v3312
        %3314 = vdwg.mxu0
        %3315 = vmatpush.bf16.msra.mxu0 %v2385
        %3316 = vmatpush.bf16.msra.mxu0 %v2377
        %3317 = vmatpush.bf16.msra.mxu0 %v2369
        %3318 = vmatpush.bf16.msra.mxu0 %v2361
        %3319 = vmatpush.bf16.msra.mxu0 %v2353
        %3320 = vmatpush.bf16.msra.mxu0 %v2345
        %3321 = vmatpush.bf16.msra.mxu0 %v2337
        %3322 = vmatpush.bf16.msra.mxu0 %v2329
        %3323 = vmatmul.bf16.gmra.mxu0 %v411
        %v3324 = vpop.f32.mrf.mxu0
        %v3325 = vadd.f32 %v3276, %v3324
        %v3326 = vpop.f32.mrf.mxu0
        %v3327 = vadd.f32 %v3278, %v3326
        %3328 = vmatmul.bf16.gmra.mxu0 %v417
        %v3329 = vpop.f32.mrf.mxu0
        %v3330 = vadd.f32 %v3281, %v3329
        %v3331 = vpop.f32.mrf.mxu0
        %v3332 = vadd.f32 %v3283, %v3331
        %3333 = vmatmul.bf16.gmra.mxu0 %v423
        %v3334 = vpop.f32.mrf.mxu0
        %v3335 = vadd.f32 %v3286, %v3334
        %v3336 = vpop.f32.mrf.mxu0
        %v3337 = vadd.f32 %v3288, %v3336
        %3338 = vmatmul.bf16.gmra.mxu0 %v429
        %v3339 = vpop.f32.mrf.mxu0
        %v3340 = vadd.f32 %v3291, %v3339
        %v3341 = vpop.f32.mrf.mxu0
        %v3342 = vadd.f32 %v3293, %v3341
        %3343 = vmatmul.bf16.gmra.mxu0 %v435
        %v3344 = vpop.f32.mrf.mxu0
        %v3345 = vadd.f32 %v3296, %v3344
        %v3346 = vpop.f32.mrf.mxu0
        %v3347 = vadd.f32 %v3298, %v3346
        %3348 = vmatmul.bf16.gmra.mxu0 %v441
        %v3349 = vpop.f32.mrf.mxu0
        %v3350 = vadd.f32 %v3301, %v3349
        %v3351 = vpop.f32.mrf.mxu0
        %v3352 = vadd.f32 %v3303, %v3351
        %3353 = vmatmul.bf16.gmra.mxu0 %v447
        %v3354 = vpop.f32.mrf.mxu0
        %v3355 = vadd.f32 %v3306, %v3354
        %v3356 = vpop.f32.mrf.mxu0
        %v3357 = vadd.f32 %v3308, %v3356
        %3358 = vmatmul.bf16.gmra.mxu0 %v453
        %v3359 = vpop.f32.mrf.mxu0
        %v3360 = vadd.f32 %v3311, %v3359
        %v3361 = vpop.f32.mrf.mxu0
        %v3362 = vadd.f32 %v3313, %v3361
        %3363 = vdwg.mxu0
        %3364 = vmatpush.bf16.msra.mxu0 %v2066
        %3365 = vmatpush.bf16.msra.mxu0 %v2058
        %3366 = vmatpush.bf16.msra.mxu0 %v2050
        %3367 = vmatpush.bf16.msra.mxu0 %v2042
        %3368 = vmatpush.bf16.msra.mxu0 %v2034
        %3369 = vmatpush.bf16.msra.mxu0 %v2026
        %3370 = vmatpush.bf16.msra.mxu0 %v2018
        %3371 = vmatpush.bf16.msra.mxu0 %v2010
        %3372 = vmatmul.bf16.gmra.mxu0 %v406
        %v3373 = vpop.f32.mrf.mxu0
        %v3374 = vadd.f32 %v842, %v3373
        %v3375 = vpop.f32.mrf.mxu0
        %v3376 = vadd.f32 %v842, %v3375
        %3377 = vmatmul.bf16.gmra.mxu0 %v412
        %v3378 = vpop.f32.mrf.mxu0
        %v3379 = vadd.f32 %v842, %v3378
        %v3380 = vpop.f32.mrf.mxu0
        %v3381 = vadd.f32 %v842, %v3380
        %3382 = vmatmul.bf16.gmra.mxu0 %v418
        %v3383 = vpop.f32.mrf.mxu0
        %v3384 = vadd.f32 %v842, %v3383
        %v3385 = vpop.f32.mrf.mxu0
        %v3386 = vadd.f32 %v842, %v3385
        %3387 = vmatmul.bf16.gmra.mxu0 %v424
        %v3388 = vpop.f32.mrf.mxu0
        %v3389 = vadd.f32 %v842, %v3388
        %v3390 = vpop.f32.mrf.mxu0
        %v3391 = vadd.f32 %v842, %v3390
        %3392 = vmatmul.bf16.gmra.mxu0 %v430
        %v3393 = vpop.f32.mrf.mxu0
        %v3394 = vadd.f32 %v842, %v3393
        %v3395 = vpop.f32.mrf.mxu0
        %v3396 = vadd.f32 %v842, %v3395
        %3397 = vmatmul.bf16.gmra.mxu0 %v436
        %v3398 = vpop.f32.mrf.mxu0
        %v3399 = vadd.f32 %v842, %v3398
        %v3400 = vpop.f32.mrf.mxu0
        %v3401 = vadd.f32 %v842, %v3400
        %3402 = vmatmul.bf16.gmra.mxu0 %v442
        %v3403 = vpop.f32.mrf.mxu0
        %v3404 = vadd.f32 %v842, %v3403
        %v3405 = vpop.f32.mrf.mxu0
        %v3406 = vadd.f32 %v842, %v3405
        %3407 = vmatmul.bf16.gmra.mxu0 %v448
        %v3408 = vpop.f32.mrf.mxu0
        %v3409 = vadd.f32 %v842, %v3408
        %v3410 = vpop.f32.mrf.mxu0
        %v3411 = vadd.f32 %v842, %v3410
        %3412 = vdwg.mxu0
        %3413 = vmatpush.bf16.msra.mxu0 %v2130
        %3414 = vmatpush.bf16.msra.mxu0 %v2122
        %3415 = vmatpush.bf16.msra.mxu0 %v2114
        %3416 = vmatpush.bf16.msra.mxu0 %v2106
        %3417 = vmatpush.bf16.msra.mxu0 %v2098
        %3418 = vmatpush.bf16.msra.mxu0 %v2090
        %3419 = vmatpush.bf16.msra.mxu0 %v2082
        %3420 = vmatpush.bf16.msra.mxu0 %v2074
        %3421 = vmatmul.bf16.gmra.mxu0 %v407
        %v3422 = vpop.f32.mrf.mxu0
        %v3423 = vadd.f32 %v3374, %v3422
        %v3424 = vpop.f32.mrf.mxu0
        %v3425 = vadd.f32 %v3376, %v3424
        %3426 = vmatmul.bf16.gmra.mxu0 %v413
        %v3427 = vpop.f32.mrf.mxu0
        %v3428 = vadd.f32 %v3379, %v3427
        %v3429 = vpop.f32.mrf.mxu0
        %v3430 = vadd.f32 %v3381, %v3429
        %3431 = vmatmul.bf16.gmra.mxu0 %v419
        %v3432 = vpop.f32.mrf.mxu0
        %v3433 = vadd.f32 %v3384, %v3432
        %v3434 = vpop.f32.mrf.mxu0
        %v3435 = vadd.f32 %v3386, %v3434
        %3436 = vmatmul.bf16.gmra.mxu0 %v425
        %v3437 = vpop.f32.mrf.mxu0
        %v3438 = vadd.f32 %v3389, %v3437
        %v3439 = vpop.f32.mrf.mxu0
        %v3440 = vadd.f32 %v3391, %v3439
        %3441 = vmatmul.bf16.gmra.mxu0 %v431
        %v3442 = vpop.f32.mrf.mxu0
        %v3443 = vadd.f32 %v3394, %v3442
        %v3444 = vpop.f32.mrf.mxu0
        %v3445 = vadd.f32 %v3396, %v3444
        %3446 = vmatmul.bf16.gmra.mxu0 %v437
        %v3447 = vpop.f32.mrf.mxu0
        %v3448 = vadd.f32 %v3399, %v3447
        %v3449 = vpop.f32.mrf.mxu0
        %v3450 = vadd.f32 %v3401, %v3449
        %3451 = vmatmul.bf16.gmra.mxu0 %v443
        %v3452 = vpop.f32.mrf.mxu0
        %v3453 = vadd.f32 %v3404, %v3452
        %v3454 = vpop.f32.mrf.mxu0
        %v3455 = vadd.f32 %v3406, %v3454
        %3456 = vmatmul.bf16.gmra.mxu0 %v449
        %v3457 = vpop.f32.mrf.mxu0
        %v3458 = vadd.f32 %v3409, %v3457
        %v3459 = vpop.f32.mrf.mxu0
        %v3460 = vadd.f32 %v3411, %v3459
        %3461 = vdwg.mxu0
        %3462 = vmatpush.bf16.msra.mxu0 %v2194
        %3463 = vmatpush.bf16.msra.mxu0 %v2186
        %3464 = vmatpush.bf16.msra.mxu0 %v2178
        %3465 = vmatpush.bf16.msra.mxu0 %v2170
        %3466 = vmatpush.bf16.msra.mxu0 %v2162
        %3467 = vmatpush.bf16.msra.mxu0 %v2154
        %3468 = vmatpush.bf16.msra.mxu0 %v2146
        %3469 = vmatpush.bf16.msra.mxu0 %v2138
        %3470 = vmatmul.bf16.gmra.mxu0 %v408
        %v3471 = vpop.f32.mrf.mxu0
        %v3472 = vadd.f32 %v3423, %v3471
        %v3473 = vpop.f32.mrf.mxu0
        %v3474 = vadd.f32 %v3425, %v3473
        %3475 = vmatmul.bf16.gmra.mxu0 %v414
        %v3476 = vpop.f32.mrf.mxu0
        %v3477 = vadd.f32 %v3428, %v3476
        %v3478 = vpop.f32.mrf.mxu0
        %v3479 = vadd.f32 %v3430, %v3478
        %3480 = vmatmul.bf16.gmra.mxu0 %v420
        %v3481 = vpop.f32.mrf.mxu0
        %v3482 = vadd.f32 %v3433, %v3481
        %v3483 = vpop.f32.mrf.mxu0
        %v3484 = vadd.f32 %v3435, %v3483
        %3485 = vmatmul.bf16.gmra.mxu0 %v426
        %v3486 = vpop.f32.mrf.mxu0
        %v3487 = vadd.f32 %v3438, %v3486
        %v3488 = vpop.f32.mrf.mxu0
        %v3489 = vadd.f32 %v3440, %v3488
        %3490 = vmatmul.bf16.gmra.mxu0 %v432
        %v3491 = vpop.f32.mrf.mxu0
        %v3492 = vadd.f32 %v3443, %v3491
        %v3493 = vpop.f32.mrf.mxu0
        %v3494 = vadd.f32 %v3445, %v3493
        %3495 = vmatmul.bf16.gmra.mxu0 %v438
        %v3496 = vpop.f32.mrf.mxu0
        %v3497 = vadd.f32 %v3448, %v3496
        %v3498 = vpop.f32.mrf.mxu0
        %v3499 = vadd.f32 %v3450, %v3498
        %3500 = vmatmul.bf16.gmra.mxu0 %v444
        %v3501 = vpop.f32.mrf.mxu0
        %v3502 = vadd.f32 %v3453, %v3501
        %v3503 = vpop.f32.mrf.mxu0
        %v3504 = vadd.f32 %v3455, %v3503
        %3505 = vmatmul.bf16.gmra.mxu0 %v450
        %v3506 = vpop.f32.mrf.mxu0
        %v3507 = vadd.f32 %v3458, %v3506
        %v3508 = vpop.f32.mrf.mxu0
        %v3509 = vadd.f32 %v3460, %v3508
        %3510 = vdwg.mxu0
        %3511 = vmatpush.bf16.msra.mxu0 %v2258
        %3512 = vmatpush.bf16.msra.mxu0 %v2250
        %3513 = vmatpush.bf16.msra.mxu0 %v2242
        %3514 = vmatpush.bf16.msra.mxu0 %v2234
        %3515 = vmatpush.bf16.msra.mxu0 %v2226
        %3516 = vmatpush.bf16.msra.mxu0 %v2218
        %3517 = vmatpush.bf16.msra.mxu0 %v2210
        %3518 = vmatpush.bf16.msra.mxu0 %v2202
        %3519 = vmatmul.bf16.gmra.mxu0 %v409
        %v3520 = vpop.f32.mrf.mxu0
        %v3521 = vadd.f32 %v3472, %v3520
        %v3522 = vpop.f32.mrf.mxu0
        %v3523 = vadd.f32 %v3474, %v3522
        %3524 = vmatmul.bf16.gmra.mxu0 %v415
        %v3525 = vpop.f32.mrf.mxu0
        %v3526 = vadd.f32 %v3477, %v3525
        %v3527 = vpop.f32.mrf.mxu0
        %v3528 = vadd.f32 %v3479, %v3527
        %3529 = vmatmul.bf16.gmra.mxu0 %v421
        %v3530 = vpop.f32.mrf.mxu0
        %v3531 = vadd.f32 %v3482, %v3530
        %v3532 = vpop.f32.mrf.mxu0
        %v3533 = vadd.f32 %v3484, %v3532
        %3534 = vmatmul.bf16.gmra.mxu0 %v427
        %v3535 = vpop.f32.mrf.mxu0
        %v3536 = vadd.f32 %v3487, %v3535
        %v3537 = vpop.f32.mrf.mxu0
        %v3538 = vadd.f32 %v3489, %v3537
        %3539 = vmatmul.bf16.gmra.mxu0 %v433
        %v3540 = vpop.f32.mrf.mxu0
        %v3541 = vadd.f32 %v3492, %v3540
        %v3542 = vpop.f32.mrf.mxu0
        %v3543 = vadd.f32 %v3494, %v3542
        %3544 = vmatmul.bf16.gmra.mxu0 %v439
        %v3545 = vpop.f32.mrf.mxu0
        %v3546 = vadd.f32 %v3497, %v3545
        %v3547 = vpop.f32.mrf.mxu0
        %v3548 = vadd.f32 %v3499, %v3547
        %3549 = vmatmul.bf16.gmra.mxu0 %v445
        %v3550 = vpop.f32.mrf.mxu0
        %v3551 = vadd.f32 %v3502, %v3550
        %v3552 = vpop.f32.mrf.mxu0
        %v3553 = vadd.f32 %v3504, %v3552
        %3554 = vmatmul.bf16.gmra.mxu0 %v451
        %v3555 = vpop.f32.mrf.mxu0
        %v3556 = vadd.f32 %v3507, %v3555
        %v3557 = vpop.f32.mrf.mxu0
        %v3558 = vadd.f32 %v3509, %v3557
        %3559 = vdwg.mxu0
        %3560 = vmatpush.bf16.msra.mxu0 %v2322
        %3561 = vmatpush.bf16.msra.mxu0 %v2314
        %3562 = vmatpush.bf16.msra.mxu0 %v2306
        %3563 = vmatpush.bf16.msra.mxu0 %v2298
        %3564 = vmatpush.bf16.msra.mxu0 %v2290
        %3565 = vmatpush.bf16.msra.mxu0 %v2282
        %3566 = vmatpush.bf16.msra.mxu0 %v2274
        %3567 = vmatpush.bf16.msra.mxu0 %v2266
        %3568 = vmatmul.bf16.gmra.mxu0 %v410
        %v3569 = vpop.f32.mrf.mxu0
        %v3570 = vadd.f32 %v3521, %v3569
        %v3571 = vpop.f32.mrf.mxu0
        %v3572 = vadd.f32 %v3523, %v3571
        %3573 = vmatmul.bf16.gmra.mxu0 %v416
        %v3574 = vpop.f32.mrf.mxu0
        %v3575 = vadd.f32 %v3526, %v3574
        %v3576 = vpop.f32.mrf.mxu0
        %v3577 = vadd.f32 %v3528, %v3576
        %3578 = vmatmul.bf16.gmra.mxu0 %v422
        %v3579 = vpop.f32.mrf.mxu0
        %v3580 = vadd.f32 %v3531, %v3579
        %v3581 = vpop.f32.mrf.mxu0
        %v3582 = vadd.f32 %v3533, %v3581
        %3583 = vmatmul.bf16.gmra.mxu0 %v428
        %v3584 = vpop.f32.mrf.mxu0
        %v3585 = vadd.f32 %v3536, %v3584
        %v3586 = vpop.f32.mrf.mxu0
        %v3587 = vadd.f32 %v3538, %v3586
        %3588 = vmatmul.bf16.gmra.mxu0 %v434
        %v3589 = vpop.f32.mrf.mxu0
        %v3590 = vadd.f32 %v3541, %v3589
        %v3591 = vpop.f32.mrf.mxu0
        %v3592 = vadd.f32 %v3543, %v3591
        %3593 = vmatmul.bf16.gmra.mxu0 %v440
        %v3594 = vpop.f32.mrf.mxu0
        %v3595 = vadd.f32 %v3546, %v3594
        %v3596 = vpop.f32.mrf.mxu0
        %v3597 = vadd.f32 %v3548, %v3596
        %3598 = vmatmul.bf16.gmra.mxu0 %v446
        %v3599 = vpop.f32.mrf.mxu0
        %v3600 = vadd.f32 %v3551, %v3599
        %v3601 = vpop.f32.mrf.mxu0
        %v3602 = vadd.f32 %v3553, %v3601
        %3603 = vmatmul.bf16.gmra.mxu0 %v452
        %v3604 = vpop.f32.mrf.mxu0
        %v3605 = vadd.f32 %v3556, %v3604
        %v3606 = vpop.f32.mrf.mxu0
        %v3607 = vadd.f32 %v3558, %v3606
        %3608 = vdwg.mxu0
        %3609 = vmatpush.bf16.msra.mxu0 %v2386
        %3610 = vmatpush.bf16.msra.mxu0 %v2378
        %3611 = vmatpush.bf16.msra.mxu0 %v2370
        %3612 = vmatpush.bf16.msra.mxu0 %v2362
        %3613 = vmatpush.bf16.msra.mxu0 %v2354
        %3614 = vmatpush.bf16.msra.mxu0 %v2346
        %3615 = vmatpush.bf16.msra.mxu0 %v2338
        %3616 = vmatpush.bf16.msra.mxu0 %v2330
        %3617 = vmatmul.bf16.gmra.mxu0 %v411
        %v3618 = vpop.f32.mrf.mxu0
        %v3619 = vadd.f32 %v3570, %v3618
        %v3620 = vpop.f32.mrf.mxu0
        %v3621 = vadd.f32 %v3572, %v3620
        %3622 = vmatmul.bf16.gmra.mxu0 %v417
        %v3623 = vpop.f32.mrf.mxu0
        %v3624 = vadd.f32 %v3575, %v3623
        %v3625 = vpop.f32.mrf.mxu0
        %v3626 = vadd.f32 %v3577, %v3625
        %3627 = vmatmul.bf16.gmra.mxu0 %v423
        %v3628 = vpop.f32.mrf.mxu0
        %v3629 = vadd.f32 %v3580, %v3628
        %v3630 = vpop.f32.mrf.mxu0
        %v3631 = vadd.f32 %v3582, %v3630
        %3632 = vmatmul.bf16.gmra.mxu0 %v429
        %v3633 = vpop.f32.mrf.mxu0
        %v3634 = vadd.f32 %v3585, %v3633
        %v3635 = vpop.f32.mrf.mxu0
        %v3636 = vadd.f32 %v3587, %v3635
        %3637 = vmatmul.bf16.gmra.mxu0 %v435
        %v3638 = vpop.f32.mrf.mxu0
        %v3639 = vadd.f32 %v3590, %v3638
        %v3640 = vpop.f32.mrf.mxu0
        %v3641 = vadd.f32 %v3592, %v3640
        %3642 = vmatmul.bf16.gmra.mxu0 %v441
        %v3643 = vpop.f32.mrf.mxu0
        %v3644 = vadd.f32 %v3595, %v3643
        %v3645 = vpop.f32.mrf.mxu0
        %v3646 = vadd.f32 %v3597, %v3645
        %3647 = vmatmul.bf16.gmra.mxu0 %v447
        %v3648 = vpop.f32.mrf.mxu0
        %v3649 = vadd.f32 %v3600, %v3648
        %v3650 = vpop.f32.mrf.mxu0
        %v3651 = vadd.f32 %v3602, %v3650
        %3652 = vmatmul.bf16.gmra.mxu0 %v453
        %v3653 = vpop.f32.mrf.mxu0
        %v3654 = vadd.f32 %v3605, %v3653
        %v3655 = vpop.f32.mrf.mxu0
        %v3656 = vadd.f32 %v3607, %v3655
        %3657 = vdwg.mxu0
        %3658 = vmatpush.bf16.msra.mxu0 %v2067
        %3659 = vmatpush.bf16.msra.mxu0 %v2059
        %3660 = vmatpush.bf16.msra.mxu0 %v2051
        %3661 = vmatpush.bf16.msra.mxu0 %v2043
        %3662 = vmatpush.bf16.msra.mxu0 %v2035
        %3663 = vmatpush.bf16.msra.mxu0 %v2027
        %3664 = vmatpush.bf16.msra.mxu0 %v2019
        %3665 = vmatpush.bf16.msra.mxu0 %v2011
        %3666 = vmatmul.bf16.gmra.mxu0 %v406
        %v3667 = vpop.f32.mrf.mxu0
        %v3668 = vadd.f32 %v843, %v3667
        %v3669 = vpop.f32.mrf.mxu0
        %v3670 = vadd.f32 %v843, %v3669
        %3671 = vmatmul.bf16.gmra.mxu0 %v412
        %v3672 = vpop.f32.mrf.mxu0
        %v3673 = vadd.f32 %v843, %v3672
        %v3674 = vpop.f32.mrf.mxu0
        %v3675 = vadd.f32 %v843, %v3674
        %3676 = vmatmul.bf16.gmra.mxu0 %v418
        %v3677 = vpop.f32.mrf.mxu0
        %v3678 = vadd.f32 %v843, %v3677
        %v3679 = vpop.f32.mrf.mxu0
        %v3680 = vadd.f32 %v843, %v3679
        %3681 = vmatmul.bf16.gmra.mxu0 %v424
        %v3682 = vpop.f32.mrf.mxu0
        %v3683 = vadd.f32 %v843, %v3682
        %v3684 = vpop.f32.mrf.mxu0
        %v3685 = vadd.f32 %v843, %v3684
        %3686 = vmatmul.bf16.gmra.mxu0 %v430
        %v3687 = vpop.f32.mrf.mxu0
        %v3688 = vadd.f32 %v843, %v3687
        %v3689 = vpop.f32.mrf.mxu0
        %v3690 = vadd.f32 %v843, %v3689
        %3691 = vmatmul.bf16.gmra.mxu0 %v436
        %v3692 = vpop.f32.mrf.mxu0
        %v3693 = vadd.f32 %v843, %v3692
        %v3694 = vpop.f32.mrf.mxu0
        %v3695 = vadd.f32 %v843, %v3694
        %3696 = vmatmul.bf16.gmra.mxu0 %v442
        %v3697 = vpop.f32.mrf.mxu0
        %v3698 = vadd.f32 %v843, %v3697
        %v3699 = vpop.f32.mrf.mxu0
        %v3700 = vadd.f32 %v843, %v3699
        %3701 = vmatmul.bf16.gmra.mxu0 %v448
        %v3702 = vpop.f32.mrf.mxu0
        %v3703 = vadd.f32 %v843, %v3702
        %v3704 = vpop.f32.mrf.mxu0
        %v3705 = vadd.f32 %v843, %v3704
        %3706 = vdwg.mxu0
        %3707 = vmatpush.bf16.msra.mxu0 %v2131
        %3708 = vmatpush.bf16.msra.mxu0 %v2123
        %3709 = vmatpush.bf16.msra.mxu0 %v2115
        %3710 = vmatpush.bf16.msra.mxu0 %v2107
        %3711 = vmatpush.bf16.msra.mxu0 %v2099
        %3712 = vmatpush.bf16.msra.mxu0 %v2091
        %3713 = vmatpush.bf16.msra.mxu0 %v2083
        %3714 = vmatpush.bf16.msra.mxu0 %v2075
        %3715 = vmatmul.bf16.gmra.mxu0 %v407
        %v3716 = vpop.f32.mrf.mxu0
        %v3717 = vadd.f32 %v3668, %v3716
        %v3718 = vpop.f32.mrf.mxu0
        %v3719 = vadd.f32 %v3670, %v3718
        %3720 = vmatmul.bf16.gmra.mxu0 %v413
        %v3721 = vpop.f32.mrf.mxu0
        %v3722 = vadd.f32 %v3673, %v3721
        %v3723 = vpop.f32.mrf.mxu0
        %v3724 = vadd.f32 %v3675, %v3723
        %3725 = vmatmul.bf16.gmra.mxu0 %v419
        %v3726 = vpop.f32.mrf.mxu0
        %v3727 = vadd.f32 %v3678, %v3726
        %v3728 = vpop.f32.mrf.mxu0
        %v3729 = vadd.f32 %v3680, %v3728
        %3730 = vmatmul.bf16.gmra.mxu0 %v425
        %v3731 = vpop.f32.mrf.mxu0
        %v3732 = vadd.f32 %v3683, %v3731
        %v3733 = vpop.f32.mrf.mxu0
        %v3734 = vadd.f32 %v3685, %v3733
        %3735 = vmatmul.bf16.gmra.mxu0 %v431
        %v3736 = vpop.f32.mrf.mxu0
        %v3737 = vadd.f32 %v3688, %v3736
        %v3738 = vpop.f32.mrf.mxu0
        %v3739 = vadd.f32 %v3690, %v3738
        %3740 = vmatmul.bf16.gmra.mxu0 %v437
        %v3741 = vpop.f32.mrf.mxu0
        %v3742 = vadd.f32 %v3693, %v3741
        %v3743 = vpop.f32.mrf.mxu0
        %v3744 = vadd.f32 %v3695, %v3743
        %3745 = vmatmul.bf16.gmra.mxu0 %v443
        %v3746 = vpop.f32.mrf.mxu0
        %v3747 = vadd.f32 %v3698, %v3746
        %v3748 = vpop.f32.mrf.mxu0
        %v3749 = vadd.f32 %v3700, %v3748
        %3750 = vmatmul.bf16.gmra.mxu0 %v449
        %v3751 = vpop.f32.mrf.mxu0
        %v3752 = vadd.f32 %v3703, %v3751
        %v3753 = vpop.f32.mrf.mxu0
        %v3754 = vadd.f32 %v3705, %v3753
        %3755 = vdwg.mxu0
        %3756 = vmatpush.bf16.msra.mxu0 %v2195
        %3757 = vmatpush.bf16.msra.mxu0 %v2187
        %3758 = vmatpush.bf16.msra.mxu0 %v2179
        %3759 = vmatpush.bf16.msra.mxu0 %v2171
        %3760 = vmatpush.bf16.msra.mxu0 %v2163
        %3761 = vmatpush.bf16.msra.mxu0 %v2155
        %3762 = vmatpush.bf16.msra.mxu0 %v2147
        %3763 = vmatpush.bf16.msra.mxu0 %v2139
        %3764 = vmatmul.bf16.gmra.mxu0 %v408
        %v3765 = vpop.f32.mrf.mxu0
        %v3766 = vadd.f32 %v3717, %v3765
        %v3767 = vpop.f32.mrf.mxu0
        %v3768 = vadd.f32 %v3719, %v3767
        %3769 = vmatmul.bf16.gmra.mxu0 %v414
        %v3770 = vpop.f32.mrf.mxu0
        %v3771 = vadd.f32 %v3722, %v3770
        %v3772 = vpop.f32.mrf.mxu0
        %v3773 = vadd.f32 %v3724, %v3772
        %3774 = vmatmul.bf16.gmra.mxu0 %v420
        %v3775 = vpop.f32.mrf.mxu0
        %v3776 = vadd.f32 %v3727, %v3775
        %v3777 = vpop.f32.mrf.mxu0
        %v3778 = vadd.f32 %v3729, %v3777
        %3779 = vmatmul.bf16.gmra.mxu0 %v426
        %v3780 = vpop.f32.mrf.mxu0
        %v3781 = vadd.f32 %v3732, %v3780
        %v3782 = vpop.f32.mrf.mxu0
        %v3783 = vadd.f32 %v3734, %v3782
        %3784 = vmatmul.bf16.gmra.mxu0 %v432
        %v3785 = vpop.f32.mrf.mxu0
        %v3786 = vadd.f32 %v3737, %v3785
        %v3787 = vpop.f32.mrf.mxu0
        %v3788 = vadd.f32 %v3739, %v3787
        %3789 = vmatmul.bf16.gmra.mxu0 %v438
        %v3790 = vpop.f32.mrf.mxu0
        %v3791 = vadd.f32 %v3742, %v3790
        %v3792 = vpop.f32.mrf.mxu0
        %v3793 = vadd.f32 %v3744, %v3792
        %3794 = vmatmul.bf16.gmra.mxu0 %v444
        %v3795 = vpop.f32.mrf.mxu0
        %v3796 = vadd.f32 %v3747, %v3795
        %v3797 = vpop.f32.mrf.mxu0
        %v3798 = vadd.f32 %v3749, %v3797
        %3799 = vmatmul.bf16.gmra.mxu0 %v450
        %v3800 = vpop.f32.mrf.mxu0
        %v3801 = vadd.f32 %v3752, %v3800
        %v3802 = vpop.f32.mrf.mxu0
        %v3803 = vadd.f32 %v3754, %v3802
        %3804 = vdwg.mxu0
        %3805 = vmatpush.bf16.msra.mxu0 %v2259
        %3806 = vmatpush.bf16.msra.mxu0 %v2251
        %3807 = vmatpush.bf16.msra.mxu0 %v2243
        %3808 = vmatpush.bf16.msra.mxu0 %v2235
        %3809 = vmatpush.bf16.msra.mxu0 %v2227
        %3810 = vmatpush.bf16.msra.mxu0 %v2219
        %3811 = vmatpush.bf16.msra.mxu0 %v2211
        %3812 = vmatpush.bf16.msra.mxu0 %v2203
        %3813 = vmatmul.bf16.gmra.mxu0 %v409
        %v3814 = vpop.f32.mrf.mxu0
        %v3815 = vadd.f32 %v3766, %v3814
        %v3816 = vpop.f32.mrf.mxu0
        %v3817 = vadd.f32 %v3768, %v3816
        %3818 = vmatmul.bf16.gmra.mxu0 %v415
        %v3819 = vpop.f32.mrf.mxu0
        %v3820 = vadd.f32 %v3771, %v3819
        %v3821 = vpop.f32.mrf.mxu0
        %v3822 = vadd.f32 %v3773, %v3821
        %3823 = vmatmul.bf16.gmra.mxu0 %v421
        %v3824 = vpop.f32.mrf.mxu0
        %v3825 = vadd.f32 %v3776, %v3824
        %v3826 = vpop.f32.mrf.mxu0
        %v3827 = vadd.f32 %v3778, %v3826
        %3828 = vmatmul.bf16.gmra.mxu0 %v427
        %v3829 = vpop.f32.mrf.mxu0
        %v3830 = vadd.f32 %v3781, %v3829
        %v3831 = vpop.f32.mrf.mxu0
        %v3832 = vadd.f32 %v3783, %v3831
        %3833 = vmatmul.bf16.gmra.mxu0 %v433
        %v3834 = vpop.f32.mrf.mxu0
        %v3835 = vadd.f32 %v3786, %v3834
        %v3836 = vpop.f32.mrf.mxu0
        %v3837 = vadd.f32 %v3788, %v3836
        %3838 = vmatmul.bf16.gmra.mxu0 %v439
        %v3839 = vpop.f32.mrf.mxu0
        %v3840 = vadd.f32 %v3791, %v3839
        %v3841 = vpop.f32.mrf.mxu0
        %v3842 = vadd.f32 %v3793, %v3841
        %3843 = vmatmul.bf16.gmra.mxu0 %v445
        %v3844 = vpop.f32.mrf.mxu0
        %v3845 = vadd.f32 %v3796, %v3844
        %v3846 = vpop.f32.mrf.mxu0
        %v3847 = vadd.f32 %v3798, %v3846
        %3848 = vmatmul.bf16.gmra.mxu0 %v451
        %v3849 = vpop.f32.mrf.mxu0
        %v3850 = vadd.f32 %v3801, %v3849
        %v3851 = vpop.f32.mrf.mxu0
        %v3852 = vadd.f32 %v3803, %v3851
        %3853 = vdwg.mxu0
        %3854 = vmatpush.bf16.msra.mxu0 %v2323
        %3855 = vmatpush.bf16.msra.mxu0 %v2315
        %3856 = vmatpush.bf16.msra.mxu0 %v2307
        %3857 = vmatpush.bf16.msra.mxu0 %v2299
        %3858 = vmatpush.bf16.msra.mxu0 %v2291
        %3859 = vmatpush.bf16.msra.mxu0 %v2283
        %3860 = vmatpush.bf16.msra.mxu0 %v2275
        %3861 = vmatpush.bf16.msra.mxu0 %v2267
        %3862 = vmatmul.bf16.gmra.mxu0 %v410
        %v3863 = vpop.f32.mrf.mxu0
        %v3864 = vadd.f32 %v3815, %v3863
        %v3865 = vpop.f32.mrf.mxu0
        %v3866 = vadd.f32 %v3817, %v3865
        %3867 = vmatmul.bf16.gmra.mxu0 %v416
        %v3868 = vpop.f32.mrf.mxu0
        %v3869 = vadd.f32 %v3820, %v3868
        %v3870 = vpop.f32.mrf.mxu0
        %v3871 = vadd.f32 %v3822, %v3870
        %3872 = vmatmul.bf16.gmra.mxu0 %v422
        %v3873 = vpop.f32.mrf.mxu0
        %v3874 = vadd.f32 %v3825, %v3873
        %v3875 = vpop.f32.mrf.mxu0
        %v3876 = vadd.f32 %v3827, %v3875
        %3877 = vmatmul.bf16.gmra.mxu0 %v428
        %v3878 = vpop.f32.mrf.mxu0
        %v3879 = vadd.f32 %v3830, %v3878
        %v3880 = vpop.f32.mrf.mxu0
        %v3881 = vadd.f32 %v3832, %v3880
        %3882 = vmatmul.bf16.gmra.mxu0 %v434
        %v3883 = vpop.f32.mrf.mxu0
        %v3884 = vadd.f32 %v3835, %v3883
        %v3885 = vpop.f32.mrf.mxu0
        %v3886 = vadd.f32 %v3837, %v3885
        %3887 = vmatmul.bf16.gmra.mxu0 %v440
        %v3888 = vpop.f32.mrf.mxu0
        %v3889 = vadd.f32 %v3840, %v3888
        %v3890 = vpop.f32.mrf.mxu0
        %v3891 = vadd.f32 %v3842, %v3890
        %3892 = vmatmul.bf16.gmra.mxu0 %v446
        %v3893 = vpop.f32.mrf.mxu0
        %v3894 = vadd.f32 %v3845, %v3893
        %v3895 = vpop.f32.mrf.mxu0
        %v3896 = vadd.f32 %v3847, %v3895
        %3897 = vmatmul.bf16.gmra.mxu0 %v452
        %v3898 = vpop.f32.mrf.mxu0
        %v3899 = vadd.f32 %v3850, %v3898
        %v3900 = vpop.f32.mrf.mxu0
        %v3901 = vadd.f32 %v3852, %v3900
        %3902 = vdwg.mxu0
        %3903 = vmatpush.bf16.msra.mxu0 %v2387
        %3904 = vmatpush.bf16.msra.mxu0 %v2379
        %3905 = vmatpush.bf16.msra.mxu0 %v2371
        %3906 = vmatpush.bf16.msra.mxu0 %v2363
        %3907 = vmatpush.bf16.msra.mxu0 %v2355
        %3908 = vmatpush.bf16.msra.mxu0 %v2347
        %3909 = vmatpush.bf16.msra.mxu0 %v2339
        %3910 = vmatpush.bf16.msra.mxu0 %v2331
        %3911 = vmatmul.bf16.gmra.mxu0 %v411
        %v3912 = vpop.f32.mrf.mxu0
        %v3913 = vadd.f32 %v3864, %v3912
        %v3914 = vpop.f32.mrf.mxu0
        %v3915 = vadd.f32 %v3866, %v3914
        %3916 = vmatmul.bf16.gmra.mxu0 %v417
        %v3917 = vpop.f32.mrf.mxu0
        %v3918 = vadd.f32 %v3869, %v3917
        %v3919 = vpop.f32.mrf.mxu0
        %v3920 = vadd.f32 %v3871, %v3919
        %3921 = vmatmul.bf16.gmra.mxu0 %v423
        %v3922 = vpop.f32.mrf.mxu0
        %v3923 = vadd.f32 %v3874, %v3922
        %v3924 = vpop.f32.mrf.mxu0
        %v3925 = vadd.f32 %v3876, %v3924
        %3926 = vmatmul.bf16.gmra.mxu0 %v429
        %v3927 = vpop.f32.mrf.mxu0
        %v3928 = vadd.f32 %v3879, %v3927
        %v3929 = vpop.f32.mrf.mxu0
        %v3930 = vadd.f32 %v3881, %v3929
        %3931 = vmatmul.bf16.gmra.mxu0 %v435
        %v3932 = vpop.f32.mrf.mxu0
        %v3933 = vadd.f32 %v3884, %v3932
        %v3934 = vpop.f32.mrf.mxu0
        %v3935 = vadd.f32 %v3886, %v3934
        %3936 = vmatmul.bf16.gmra.mxu0 %v441
        %v3937 = vpop.f32.mrf.mxu0
        %v3938 = vadd.f32 %v3889, %v3937
        %v3939 = vpop.f32.mrf.mxu0
        %v3940 = vadd.f32 %v3891, %v3939
        %3941 = vmatmul.bf16.gmra.mxu0 %v447
        %v3942 = vpop.f32.mrf.mxu0
        %v3943 = vadd.f32 %v3894, %v3942
        %v3944 = vpop.f32.mrf.mxu0
        %v3945 = vadd.f32 %v3896, %v3944
        %3946 = vmatmul.bf16.gmra.mxu0 %v453
        %v3947 = vpop.f32.mrf.mxu0
        %v3948 = vadd.f32 %v3899, %v3947
        %v3949 = vpop.f32.mrf.mxu0
        %v3950 = vadd.f32 %v3901, %v3949
        %3951 = vdwg.mxu0
        %3952 = vmatpush.bf16.msra.mxu0 %v2068
        %3953 = vmatpush.bf16.msra.mxu0 %v2060
        %3954 = vmatpush.bf16.msra.mxu0 %v2052
        %3955 = vmatpush.bf16.msra.mxu0 %v2044
        %3956 = vmatpush.bf16.msra.mxu0 %v2036
        %3957 = vmatpush.bf16.msra.mxu0 %v2028
        %3958 = vmatpush.bf16.msra.mxu0 %v2020
        %3959 = vmatpush.bf16.msra.mxu0 %v2012
        %3960 = vmatmul.bf16.gmra.mxu0 %v406
        %v3961 = vpop.f32.mrf.mxu0
        %v3962 = vadd.f32 %v844, %v3961
        %v3963 = vpop.f32.mrf.mxu0
        %v3964 = vadd.f32 %v844, %v3963
        %3965 = vmatmul.bf16.gmra.mxu0 %v412
        %v3966 = vpop.f32.mrf.mxu0
        %v3967 = vadd.f32 %v844, %v3966
        %v3968 = vpop.f32.mrf.mxu0
        %v3969 = vadd.f32 %v844, %v3968
        %3970 = vmatmul.bf16.gmra.mxu0 %v418
        %v3971 = vpop.f32.mrf.mxu0
        %v3972 = vadd.f32 %v844, %v3971
        %v3973 = vpop.f32.mrf.mxu0
        %v3974 = vadd.f32 %v844, %v3973
        %3975 = vmatmul.bf16.gmra.mxu0 %v424
        %v3976 = vpop.f32.mrf.mxu0
        %v3977 = vadd.f32 %v844, %v3976
        %v3978 = vpop.f32.mrf.mxu0
        %v3979 = vadd.f32 %v844, %v3978
        %3980 = vmatmul.bf16.gmra.mxu0 %v430
        %v3981 = vpop.f32.mrf.mxu0
        %v3982 = vadd.f32 %v844, %v3981
        %v3983 = vpop.f32.mrf.mxu0
        %v3984 = vadd.f32 %v844, %v3983
        %3985 = vmatmul.bf16.gmra.mxu0 %v436
        %v3986 = vpop.f32.mrf.mxu0
        %v3987 = vadd.f32 %v844, %v3986
        %v3988 = vpop.f32.mrf.mxu0
        %v3989 = vadd.f32 %v844, %v3988
        %3990 = vmatmul.bf16.gmra.mxu0 %v442
        %v3991 = vpop.f32.mrf.mxu0
        %v3992 = vadd.f32 %v844, %v3991
        %v3993 = vpop.f32.mrf.mxu0
        %v3994 = vadd.f32 %v844, %v3993
        %3995 = vmatmul.bf16.gmra.mxu0 %v448
        %v3996 = vpop.f32.mrf.mxu0
        %v3997 = vadd.f32 %v844, %v3996
        %v3998 = vpop.f32.mrf.mxu0
        %v3999 = vadd.f32 %v844, %v3998
        %4000 = vdwg.mxu0
        %4001 = vmatpush.bf16.msra.mxu0 %v2132
        %4002 = vmatpush.bf16.msra.mxu0 %v2124
        %4003 = vmatpush.bf16.msra.mxu0 %v2116
        %4004 = vmatpush.bf16.msra.mxu0 %v2108
        %4005 = vmatpush.bf16.msra.mxu0 %v2100
        %4006 = vmatpush.bf16.msra.mxu0 %v2092
        %4007 = vmatpush.bf16.msra.mxu0 %v2084
        %4008 = vmatpush.bf16.msra.mxu0 %v2076
        %4009 = vmatmul.bf16.gmra.mxu0 %v407
        %v4010 = vpop.f32.mrf.mxu0
        %v4011 = vadd.f32 %v3962, %v4010
        %v4012 = vpop.f32.mrf.mxu0
        %v4013 = vadd.f32 %v3964, %v4012
        %4014 = vmatmul.bf16.gmra.mxu0 %v413
        %v4015 = vpop.f32.mrf.mxu0
        %v4016 = vadd.f32 %v3967, %v4015
        %v4017 = vpop.f32.mrf.mxu0
        %v4018 = vadd.f32 %v3969, %v4017
        %4019 = vmatmul.bf16.gmra.mxu0 %v419
        %v4020 = vpop.f32.mrf.mxu0
        %v4021 = vadd.f32 %v3972, %v4020
        %v4022 = vpop.f32.mrf.mxu0
        %v4023 = vadd.f32 %v3974, %v4022
        %4024 = vmatmul.bf16.gmra.mxu0 %v425
        %v4025 = vpop.f32.mrf.mxu0
        %v4026 = vadd.f32 %v3977, %v4025
        %v4027 = vpop.f32.mrf.mxu0
        %v4028 = vadd.f32 %v3979, %v4027
        %4029 = vmatmul.bf16.gmra.mxu0 %v431
        %v4030 = vpop.f32.mrf.mxu0
        %v4031 = vadd.f32 %v3982, %v4030
        %v4032 = vpop.f32.mrf.mxu0
        %v4033 = vadd.f32 %v3984, %v4032
        %4034 = vmatmul.bf16.gmra.mxu0 %v437
        %v4035 = vpop.f32.mrf.mxu0
        %v4036 = vadd.f32 %v3987, %v4035
        %v4037 = vpop.f32.mrf.mxu0
        %v4038 = vadd.f32 %v3989, %v4037
        %4039 = vmatmul.bf16.gmra.mxu0 %v443
        %v4040 = vpop.f32.mrf.mxu0
        %v4041 = vadd.f32 %v3992, %v4040
        %v4042 = vpop.f32.mrf.mxu0
        %v4043 = vadd.f32 %v3994, %v4042
        %4044 = vmatmul.bf16.gmra.mxu0 %v449
        %v4045 = vpop.f32.mrf.mxu0
        %v4046 = vadd.f32 %v3997, %v4045
        %v4047 = vpop.f32.mrf.mxu0
        %v4048 = vadd.f32 %v3999, %v4047
        %4049 = vdwg.mxu0
        %4050 = vmatpush.bf16.msra.mxu0 %v2196
        %4051 = vmatpush.bf16.msra.mxu0 %v2188
        %4052 = vmatpush.bf16.msra.mxu0 %v2180
        %4053 = vmatpush.bf16.msra.mxu0 %v2172
        %4054 = vmatpush.bf16.msra.mxu0 %v2164
        %4055 = vmatpush.bf16.msra.mxu0 %v2156
        %4056 = vmatpush.bf16.msra.mxu0 %v2148
        %4057 = vmatpush.bf16.msra.mxu0 %v2140
        %4058 = vmatmul.bf16.gmra.mxu0 %v408
        %v4059 = vpop.f32.mrf.mxu0
        %v4060 = vadd.f32 %v4011, %v4059
        %v4061 = vpop.f32.mrf.mxu0
        %v4062 = vadd.f32 %v4013, %v4061
        %4063 = vmatmul.bf16.gmra.mxu0 %v414
        %v4064 = vpop.f32.mrf.mxu0
        %v4065 = vadd.f32 %v4016, %v4064
        %v4066 = vpop.f32.mrf.mxu0
        %v4067 = vadd.f32 %v4018, %v4066
        %4068 = vmatmul.bf16.gmra.mxu0 %v420
        %v4069 = vpop.f32.mrf.mxu0
        %v4070 = vadd.f32 %v4021, %v4069
        %v4071 = vpop.f32.mrf.mxu0
        %v4072 = vadd.f32 %v4023, %v4071
        %4073 = vmatmul.bf16.gmra.mxu0 %v426
        %v4074 = vpop.f32.mrf.mxu0
        %v4075 = vadd.f32 %v4026, %v4074
        %v4076 = vpop.f32.mrf.mxu0
        %v4077 = vadd.f32 %v4028, %v4076
        %4078 = vmatmul.bf16.gmra.mxu0 %v432
        %v4079 = vpop.f32.mrf.mxu0
        %v4080 = vadd.f32 %v4031, %v4079
        %v4081 = vpop.f32.mrf.mxu0
        %v4082 = vadd.f32 %v4033, %v4081
        %4083 = vmatmul.bf16.gmra.mxu0 %v438
        %v4084 = vpop.f32.mrf.mxu0
        %v4085 = vadd.f32 %v4036, %v4084
        %v4086 = vpop.f32.mrf.mxu0
        %v4087 = vadd.f32 %v4038, %v4086
        %4088 = vmatmul.bf16.gmra.mxu0 %v444
        %v4089 = vpop.f32.mrf.mxu0
        %v4090 = vadd.f32 %v4041, %v4089
        %v4091 = vpop.f32.mrf.mxu0
        %v4092 = vadd.f32 %v4043, %v4091
        %4093 = vmatmul.bf16.gmra.mxu0 %v450
        %v4094 = vpop.f32.mrf.mxu0
        %v4095 = vadd.f32 %v4046, %v4094
        %v4096 = vpop.f32.mrf.mxu0
        %v4097 = vadd.f32 %v4048, %v4096
        %4098 = vdwg.mxu0
        %4099 = vmatpush.bf16.msra.mxu0 %v2260
        %4100 = vmatpush.bf16.msra.mxu0 %v2252
        %4101 = vmatpush.bf16.msra.mxu0 %v2244
        %4102 = vmatpush.bf16.msra.mxu0 %v2236
        %4103 = vmatpush.bf16.msra.mxu0 %v2228
        %4104 = vmatpush.bf16.msra.mxu0 %v2220
        %4105 = vmatpush.bf16.msra.mxu0 %v2212
        %4106 = vmatpush.bf16.msra.mxu0 %v2204
        %4107 = vmatmul.bf16.gmra.mxu0 %v409
        %v4108 = vpop.f32.mrf.mxu0
        %v4109 = vadd.f32 %v4060, %v4108
        %v4110 = vpop.f32.mrf.mxu0
        %v4111 = vadd.f32 %v4062, %v4110
        %4112 = vmatmul.bf16.gmra.mxu0 %v415
        %v4113 = vpop.f32.mrf.mxu0
        %v4114 = vadd.f32 %v4065, %v4113
        %v4115 = vpop.f32.mrf.mxu0
        %v4116 = vadd.f32 %v4067, %v4115
        %4117 = vmatmul.bf16.gmra.mxu0 %v421
        %v4118 = vpop.f32.mrf.mxu0
        %v4119 = vadd.f32 %v4070, %v4118
        %v4120 = vpop.f32.mrf.mxu0
        %v4121 = vadd.f32 %v4072, %v4120
        %4122 = vmatmul.bf16.gmra.mxu0 %v427
        %v4123 = vpop.f32.mrf.mxu0
        %v4124 = vadd.f32 %v4075, %v4123
        %v4125 = vpop.f32.mrf.mxu0
        %v4126 = vadd.f32 %v4077, %v4125
        %4127 = vmatmul.bf16.gmra.mxu0 %v433
        %v4128 = vpop.f32.mrf.mxu0
        %v4129 = vadd.f32 %v4080, %v4128
        %v4130 = vpop.f32.mrf.mxu0
        %v4131 = vadd.f32 %v4082, %v4130
        %4132 = vmatmul.bf16.gmra.mxu0 %v439
        %v4133 = vpop.f32.mrf.mxu0
        %v4134 = vadd.f32 %v4085, %v4133
        %v4135 = vpop.f32.mrf.mxu0
        %v4136 = vadd.f32 %v4087, %v4135
        %4137 = vmatmul.bf16.gmra.mxu0 %v445
        %v4138 = vpop.f32.mrf.mxu0
        %v4139 = vadd.f32 %v4090, %v4138
        %v4140 = vpop.f32.mrf.mxu0
        %v4141 = vadd.f32 %v4092, %v4140
        %4142 = vmatmul.bf16.gmra.mxu0 %v451
        %v4143 = vpop.f32.mrf.mxu0
        %v4144 = vadd.f32 %v4095, %v4143
        %v4145 = vpop.f32.mrf.mxu0
        %v4146 = vadd.f32 %v4097, %v4145
        %4147 = vdwg.mxu0
        %4148 = vmatpush.bf16.msra.mxu0 %v2324
        %4149 = vmatpush.bf16.msra.mxu0 %v2316
        %4150 = vmatpush.bf16.msra.mxu0 %v2308
        %4151 = vmatpush.bf16.msra.mxu0 %v2300
        %4152 = vmatpush.bf16.msra.mxu0 %v2292
        %4153 = vmatpush.bf16.msra.mxu0 %v2284
        %4154 = vmatpush.bf16.msra.mxu0 %v2276
        %4155 = vmatpush.bf16.msra.mxu0 %v2268
        %4156 = vmatmul.bf16.gmra.mxu0 %v410
        %v4157 = vpop.f32.mrf.mxu0
        %v4158 = vadd.f32 %v4109, %v4157
        %v4159 = vpop.f32.mrf.mxu0
        %v4160 = vadd.f32 %v4111, %v4159
        %4161 = vmatmul.bf16.gmra.mxu0 %v416
        %v4162 = vpop.f32.mrf.mxu0
        %v4163 = vadd.f32 %v4114, %v4162
        %v4164 = vpop.f32.mrf.mxu0
        %v4165 = vadd.f32 %v4116, %v4164
        %4166 = vmatmul.bf16.gmra.mxu0 %v422
        %v4167 = vpop.f32.mrf.mxu0
        %v4168 = vadd.f32 %v4119, %v4167
        %v4169 = vpop.f32.mrf.mxu0
        %v4170 = vadd.f32 %v4121, %v4169
        %4171 = vmatmul.bf16.gmra.mxu0 %v428
        %v4172 = vpop.f32.mrf.mxu0
        %v4173 = vadd.f32 %v4124, %v4172
        %v4174 = vpop.f32.mrf.mxu0
        %v4175 = vadd.f32 %v4126, %v4174
        %4176 = vmatmul.bf16.gmra.mxu0 %v434
        %v4177 = vpop.f32.mrf.mxu0
        %v4178 = vadd.f32 %v4129, %v4177
        %v4179 = vpop.f32.mrf.mxu0
        %v4180 = vadd.f32 %v4131, %v4179
        %4181 = vmatmul.bf16.gmra.mxu0 %v440
        %v4182 = vpop.f32.mrf.mxu0
        %v4183 = vadd.f32 %v4134, %v4182
        %v4184 = vpop.f32.mrf.mxu0
        %v4185 = vadd.f32 %v4136, %v4184
        %4186 = vmatmul.bf16.gmra.mxu0 %v446
        %v4187 = vpop.f32.mrf.mxu0
        %v4188 = vadd.f32 %v4139, %v4187
        %v4189 = vpop.f32.mrf.mxu0
        %v4190 = vadd.f32 %v4141, %v4189
        %4191 = vmatmul.bf16.gmra.mxu0 %v452
        %v4192 = vpop.f32.mrf.mxu0
        %v4193 = vadd.f32 %v4144, %v4192
        %v4194 = vpop.f32.mrf.mxu0
        %v4195 = vadd.f32 %v4146, %v4194
        %4196 = vdwg.mxu0
        %4197 = vmatpush.bf16.msra.mxu0 %v2388
        %4198 = vmatpush.bf16.msra.mxu0 %v2380
        %4199 = vmatpush.bf16.msra.mxu0 %v2372
        %4200 = vmatpush.bf16.msra.mxu0 %v2364
        %4201 = vmatpush.bf16.msra.mxu0 %v2356
        %4202 = vmatpush.bf16.msra.mxu0 %v2348
        %4203 = vmatpush.bf16.msra.mxu0 %v2340
        %4204 = vmatpush.bf16.msra.mxu0 %v2332
        %4205 = vmatmul.bf16.gmra.mxu0 %v411
        %v4206 = vpop.f32.mrf.mxu0
        %v4207 = vadd.f32 %v4158, %v4206
        %v4208 = vpop.f32.mrf.mxu0
        %v4209 = vadd.f32 %v4160, %v4208
        %4210 = vmatmul.bf16.gmra.mxu0 %v417
        %v4211 = vpop.f32.mrf.mxu0
        %v4212 = vadd.f32 %v4163, %v4211
        %v4213 = vpop.f32.mrf.mxu0
        %v4214 = vadd.f32 %v4165, %v4213
        %4215 = vmatmul.bf16.gmra.mxu0 %v423
        %v4216 = vpop.f32.mrf.mxu0
        %v4217 = vadd.f32 %v4168, %v4216
        %v4218 = vpop.f32.mrf.mxu0
        %v4219 = vadd.f32 %v4170, %v4218
        %4220 = vmatmul.bf16.gmra.mxu0 %v429
        %v4221 = vpop.f32.mrf.mxu0
        %v4222 = vadd.f32 %v4173, %v4221
        %v4223 = vpop.f32.mrf.mxu0
        %v4224 = vadd.f32 %v4175, %v4223
        %4225 = vmatmul.bf16.gmra.mxu0 %v435
        %v4226 = vpop.f32.mrf.mxu0
        %v4227 = vadd.f32 %v4178, %v4226
        %v4228 = vpop.f32.mrf.mxu0
        %v4229 = vadd.f32 %v4180, %v4228
        %4230 = vmatmul.bf16.gmra.mxu0 %v441
        %v4231 = vpop.f32.mrf.mxu0
        %v4232 = vadd.f32 %v4183, %v4231
        %v4233 = vpop.f32.mrf.mxu0
        %v4234 = vadd.f32 %v4185, %v4233
        %4235 = vmatmul.bf16.gmra.mxu0 %v447
        %v4236 = vpop.f32.mrf.mxu0
        %v4237 = vadd.f32 %v4188, %v4236
        %v4238 = vpop.f32.mrf.mxu0
        %v4239 = vadd.f32 %v4190, %v4238
        %4240 = vmatmul.bf16.gmra.mxu0 %v453
        %v4241 = vpop.f32.mrf.mxu0
        %v4242 = vadd.f32 %v4193, %v4241
        %v4243 = vpop.f32.mrf.mxu0
        %v4244 = vadd.f32 %v4195, %v4243
        %4245 = vdwg.mxu0
        %4246 = vmatpush.bf16.msra.mxu0 %v2069
        %4247 = vmatpush.bf16.msra.mxu0 %v2061
        %4248 = vmatpush.bf16.msra.mxu0 %v2053
        %4249 = vmatpush.bf16.msra.mxu0 %v2045
        %4250 = vmatpush.bf16.msra.mxu0 %v2037
        %4251 = vmatpush.bf16.msra.mxu0 %v2029
        %4252 = vmatpush.bf16.msra.mxu0 %v2021
        %4253 = vmatpush.bf16.msra.mxu0 %v2013
        %4254 = vmatmul.bf16.gmra.mxu0 %v406
        %v4255 = vpop.f32.mrf.mxu0
        %v4256 = vadd.f32 %v845, %v4255
        %v4257 = vpop.f32.mrf.mxu0
        %v4258 = vadd.f32 %v845, %v4257
        %4259 = vmatmul.bf16.gmra.mxu0 %v412
        %v4260 = vpop.f32.mrf.mxu0
        %v4261 = vadd.f32 %v845, %v4260
        %v4262 = vpop.f32.mrf.mxu0
        %v4263 = vadd.f32 %v845, %v4262
        %4264 = vmatmul.bf16.gmra.mxu0 %v418
        %v4265 = vpop.f32.mrf.mxu0
        %v4266 = vadd.f32 %v845, %v4265
        %v4267 = vpop.f32.mrf.mxu0
        %v4268 = vadd.f32 %v845, %v4267
        %4269 = vmatmul.bf16.gmra.mxu0 %v424
        %v4270 = vpop.f32.mrf.mxu0
        %v4271 = vadd.f32 %v845, %v4270
        %v4272 = vpop.f32.mrf.mxu0
        %v4273 = vadd.f32 %v845, %v4272
        %4274 = vmatmul.bf16.gmra.mxu0 %v430
        %v4275 = vpop.f32.mrf.mxu0
        %v4276 = vadd.f32 %v845, %v4275
        %v4277 = vpop.f32.mrf.mxu0
        %v4278 = vadd.f32 %v845, %v4277
        %4279 = vmatmul.bf16.gmra.mxu0 %v436
        %v4280 = vpop.f32.mrf.mxu0
        %v4281 = vadd.f32 %v845, %v4280
        %v4282 = vpop.f32.mrf.mxu0
        %v4283 = vadd.f32 %v845, %v4282
        %4284 = vmatmul.bf16.gmra.mxu0 %v442
        %v4285 = vpop.f32.mrf.mxu0
        %v4286 = vadd.f32 %v845, %v4285
        %v4287 = vpop.f32.mrf.mxu0
        %v4288 = vadd.f32 %v845, %v4287
        %4289 = vmatmul.bf16.gmra.mxu0 %v448
        %v4290 = vpop.f32.mrf.mxu0
        %v4291 = vadd.f32 %v845, %v4290
        %v4292 = vpop.f32.mrf.mxu0
        %v4293 = vadd.f32 %v845, %v4292
        %4294 = vdwg.mxu0
        %4295 = vmatpush.bf16.msra.mxu0 %v2133
        %4296 = vmatpush.bf16.msra.mxu0 %v2125
        %4297 = vmatpush.bf16.msra.mxu0 %v2117
        %4298 = vmatpush.bf16.msra.mxu0 %v2109
        %4299 = vmatpush.bf16.msra.mxu0 %v2101
        %4300 = vmatpush.bf16.msra.mxu0 %v2093
        %4301 = vmatpush.bf16.msra.mxu0 %v2085
        %4302 = vmatpush.bf16.msra.mxu0 %v2077
        %4303 = vmatmul.bf16.gmra.mxu0 %v407
        %v4304 = vpop.f32.mrf.mxu0
        %v4305 = vadd.f32 %v4256, %v4304
        %v4306 = vpop.f32.mrf.mxu0
        %v4307 = vadd.f32 %v4258, %v4306
        %4308 = vmatmul.bf16.gmra.mxu0 %v413
        %v4309 = vpop.f32.mrf.mxu0
        %v4310 = vadd.f32 %v4261, %v4309
        %v4311 = vpop.f32.mrf.mxu0
        %v4312 = vadd.f32 %v4263, %v4311
        %4313 = vmatmul.bf16.gmra.mxu0 %v419
        %v4314 = vpop.f32.mrf.mxu0
        %v4315 = vadd.f32 %v4266, %v4314
        %v4316 = vpop.f32.mrf.mxu0
        %v4317 = vadd.f32 %v4268, %v4316
        %4318 = vmatmul.bf16.gmra.mxu0 %v425
        %v4319 = vpop.f32.mrf.mxu0
        %v4320 = vadd.f32 %v4271, %v4319
        %v4321 = vpop.f32.mrf.mxu0
        %v4322 = vadd.f32 %v4273, %v4321
        %4323 = vmatmul.bf16.gmra.mxu0 %v431
        %v4324 = vpop.f32.mrf.mxu0
        %v4325 = vadd.f32 %v4276, %v4324
        %v4326 = vpop.f32.mrf.mxu0
        %v4327 = vadd.f32 %v4278, %v4326
        %4328 = vmatmul.bf16.gmra.mxu0 %v437
        %v4329 = vpop.f32.mrf.mxu0
        %v4330 = vadd.f32 %v4281, %v4329
        %v4331 = vpop.f32.mrf.mxu0
        %v4332 = vadd.f32 %v4283, %v4331
        %4333 = vmatmul.bf16.gmra.mxu0 %v443
        %v4334 = vpop.f32.mrf.mxu0
        %v4335 = vadd.f32 %v4286, %v4334
        %v4336 = vpop.f32.mrf.mxu0
        %v4337 = vadd.f32 %v4288, %v4336
        %4338 = vmatmul.bf16.gmra.mxu0 %v449
        %v4339 = vpop.f32.mrf.mxu0
        %v4340 = vadd.f32 %v4291, %v4339
        %v4341 = vpop.f32.mrf.mxu0
        %v4342 = vadd.f32 %v4293, %v4341
        %4343 = vdwg.mxu0
        %4344 = vmatpush.bf16.msra.mxu0 %v2197
        %4345 = vmatpush.bf16.msra.mxu0 %v2189
        %4346 = vmatpush.bf16.msra.mxu0 %v2181
        %4347 = vmatpush.bf16.msra.mxu0 %v2173
        %4348 = vmatpush.bf16.msra.mxu0 %v2165
        %4349 = vmatpush.bf16.msra.mxu0 %v2157
        %4350 = vmatpush.bf16.msra.mxu0 %v2149
        %4351 = vmatpush.bf16.msra.mxu0 %v2141
        %4352 = vmatmul.bf16.gmra.mxu0 %v408
        %v4353 = vpop.f32.mrf.mxu0
        %v4354 = vadd.f32 %v4305, %v4353
        %v4355 = vpop.f32.mrf.mxu0
        %v4356 = vadd.f32 %v4307, %v4355
        %4357 = vmatmul.bf16.gmra.mxu0 %v414
        %v4358 = vpop.f32.mrf.mxu0
        %v4359 = vadd.f32 %v4310, %v4358
        %v4360 = vpop.f32.mrf.mxu0
        %v4361 = vadd.f32 %v4312, %v4360
        %4362 = vmatmul.bf16.gmra.mxu0 %v420
        %v4363 = vpop.f32.mrf.mxu0
        %v4364 = vadd.f32 %v4315, %v4363
        %v4365 = vpop.f32.mrf.mxu0
        %v4366 = vadd.f32 %v4317, %v4365
        %4367 = vmatmul.bf16.gmra.mxu0 %v426
        %v4368 = vpop.f32.mrf.mxu0
        %v4369 = vadd.f32 %v4320, %v4368
        %v4370 = vpop.f32.mrf.mxu0
        %v4371 = vadd.f32 %v4322, %v4370
        %4372 = vmatmul.bf16.gmra.mxu0 %v432
        %v4373 = vpop.f32.mrf.mxu0
        %v4374 = vadd.f32 %v4325, %v4373
        %v4375 = vpop.f32.mrf.mxu0
        %v4376 = vadd.f32 %v4327, %v4375
        %4377 = vmatmul.bf16.gmra.mxu0 %v438
        %v4378 = vpop.f32.mrf.mxu0
        %v4379 = vadd.f32 %v4330, %v4378
        %v4380 = vpop.f32.mrf.mxu0
        %v4381 = vadd.f32 %v4332, %v4380
        %4382 = vmatmul.bf16.gmra.mxu0 %v444
        %v4383 = vpop.f32.mrf.mxu0
        %v4384 = vadd.f32 %v4335, %v4383
        %v4385 = vpop.f32.mrf.mxu0
        %v4386 = vadd.f32 %v4337, %v4385
        %4387 = vmatmul.bf16.gmra.mxu0 %v450
        %v4388 = vpop.f32.mrf.mxu0
        %v4389 = vadd.f32 %v4340, %v4388
        %v4390 = vpop.f32.mrf.mxu0
        %v4391 = vadd.f32 %v4342, %v4390
        %4392 = vdwg.mxu0
        %4393 = vmatpush.bf16.msra.mxu0 %v2261
        %4394 = vmatpush.bf16.msra.mxu0 %v2253
        %4395 = vmatpush.bf16.msra.mxu0 %v2245
        %4396 = vmatpush.bf16.msra.mxu0 %v2237
        %4397 = vmatpush.bf16.msra.mxu0 %v2229
        %4398 = vmatpush.bf16.msra.mxu0 %v2221
        %4399 = vmatpush.bf16.msra.mxu0 %v2213
        %4400 = vmatpush.bf16.msra.mxu0 %v2205
        %4401 = vmatmul.bf16.gmra.mxu0 %v409
        %v4402 = vpop.f32.mrf.mxu0
        %v4403 = vadd.f32 %v4354, %v4402
        %v4404 = vpop.f32.mrf.mxu0
        %v4405 = vadd.f32 %v4356, %v4404
        %4406 = vmatmul.bf16.gmra.mxu0 %v415
        %v4407 = vpop.f32.mrf.mxu0
        %v4408 = vadd.f32 %v4359, %v4407
        %v4409 = vpop.f32.mrf.mxu0
        %v4410 = vadd.f32 %v4361, %v4409
        %4411 = vmatmul.bf16.gmra.mxu0 %v421
        %v4412 = vpop.f32.mrf.mxu0
        %v4413 = vadd.f32 %v4364, %v4412
        %v4414 = vpop.f32.mrf.mxu0
        %v4415 = vadd.f32 %v4366, %v4414
        %4416 = vmatmul.bf16.gmra.mxu0 %v427
        %v4417 = vpop.f32.mrf.mxu0
        %v4418 = vadd.f32 %v4369, %v4417
        %v4419 = vpop.f32.mrf.mxu0
        %v4420 = vadd.f32 %v4371, %v4419
        %4421 = vmatmul.bf16.gmra.mxu0 %v433
        %v4422 = vpop.f32.mrf.mxu0
        %v4423 = vadd.f32 %v4374, %v4422
        %v4424 = vpop.f32.mrf.mxu0
        %v4425 = vadd.f32 %v4376, %v4424
        %4426 = vmatmul.bf16.gmra.mxu0 %v439
        %v4427 = vpop.f32.mrf.mxu0
        %v4428 = vadd.f32 %v4379, %v4427
        %v4429 = vpop.f32.mrf.mxu0
        %v4430 = vadd.f32 %v4381, %v4429
        %4431 = vmatmul.bf16.gmra.mxu0 %v445
        %v4432 = vpop.f32.mrf.mxu0
        %v4433 = vadd.f32 %v4384, %v4432
        %v4434 = vpop.f32.mrf.mxu0
        %v4435 = vadd.f32 %v4386, %v4434
        %4436 = vmatmul.bf16.gmra.mxu0 %v451
        %v4437 = vpop.f32.mrf.mxu0
        %v4438 = vadd.f32 %v4389, %v4437
        %v4439 = vpop.f32.mrf.mxu0
        %v4440 = vadd.f32 %v4391, %v4439
        %4441 = vdwg.mxu0
        %4442 = vmatpush.bf16.msra.mxu0 %v2325
        %4443 = vmatpush.bf16.msra.mxu0 %v2317
        %4444 = vmatpush.bf16.msra.mxu0 %v2309
        %4445 = vmatpush.bf16.msra.mxu0 %v2301
        %4446 = vmatpush.bf16.msra.mxu0 %v2293
        %4447 = vmatpush.bf16.msra.mxu0 %v2285
        %4448 = vmatpush.bf16.msra.mxu0 %v2277
        %4449 = vmatpush.bf16.msra.mxu0 %v2269
        %4450 = vmatmul.bf16.gmra.mxu0 %v410
        %v4451 = vpop.f32.mrf.mxu0
        %v4452 = vadd.f32 %v4403, %v4451
        %v4453 = vpop.f32.mrf.mxu0
        %v4454 = vadd.f32 %v4405, %v4453
        %4455 = vmatmul.bf16.gmra.mxu0 %v416
        %v4456 = vpop.f32.mrf.mxu0
        %v4457 = vadd.f32 %v4408, %v4456
        %v4458 = vpop.f32.mrf.mxu0
        %v4459 = vadd.f32 %v4410, %v4458
        %4460 = vmatmul.bf16.gmra.mxu0 %v422
        %v4461 = vpop.f32.mrf.mxu0
        %v4462 = vadd.f32 %v4413, %v4461
        %v4463 = vpop.f32.mrf.mxu0
        %v4464 = vadd.f32 %v4415, %v4463
        %4465 = vmatmul.bf16.gmra.mxu0 %v428
        %v4466 = vpop.f32.mrf.mxu0
        %v4467 = vadd.f32 %v4418, %v4466
        %v4468 = vpop.f32.mrf.mxu0
        %v4469 = vadd.f32 %v4420, %v4468
        %4470 = vmatmul.bf16.gmra.mxu0 %v434
        %v4471 = vpop.f32.mrf.mxu0
        %v4472 = vadd.f32 %v4423, %v4471
        %v4473 = vpop.f32.mrf.mxu0
        %v4474 = vadd.f32 %v4425, %v4473
        %4475 = vmatmul.bf16.gmra.mxu0 %v440
        %v4476 = vpop.f32.mrf.mxu0
        %v4477 = vadd.f32 %v4428, %v4476
        %v4478 = vpop.f32.mrf.mxu0
        %v4479 = vadd.f32 %v4430, %v4478
        %4480 = vmatmul.bf16.gmra.mxu0 %v446
        %v4481 = vpop.f32.mrf.mxu0
        %v4482 = vadd.f32 %v4433, %v4481
        %v4483 = vpop.f32.mrf.mxu0
        %v4484 = vadd.f32 %v4435, %v4483
        %4485 = vmatmul.bf16.gmra.mxu0 %v452
        %v4486 = vpop.f32.mrf.mxu0
        %v4487 = vadd.f32 %v4438, %v4486
        %v4488 = vpop.f32.mrf.mxu0
        %v4489 = vadd.f32 %v4440, %v4488
        %4490 = vdwg.mxu0
        %4491 = vmatpush.bf16.msra.mxu0 %v2389
        %4492 = vmatpush.bf16.msra.mxu0 %v2381
        %4493 = vmatpush.bf16.msra.mxu0 %v2373
        %4494 = vmatpush.bf16.msra.mxu0 %v2365
        %4495 = vmatpush.bf16.msra.mxu0 %v2357
        %4496 = vmatpush.bf16.msra.mxu0 %v2349
        %4497 = vmatpush.bf16.msra.mxu0 %v2341
        %4498 = vmatpush.bf16.msra.mxu0 %v2333
        %4499 = vmatmul.bf16.gmra.mxu0 %v411
        %v4500 = vpop.f32.mrf.mxu0
        %v4501 = vadd.f32 %v4452, %v4500
        %v4502 = vpop.f32.mrf.mxu0
        %v4503 = vadd.f32 %v4454, %v4502
        %4504 = vmatmul.bf16.gmra.mxu0 %v417
        %v4505 = vpop.f32.mrf.mxu0
        %v4506 = vadd.f32 %v4457, %v4505
        %v4507 = vpop.f32.mrf.mxu0
        %v4508 = vadd.f32 %v4459, %v4507
        %4509 = vmatmul.bf16.gmra.mxu0 %v423
        %v4510 = vpop.f32.mrf.mxu0
        %v4511 = vadd.f32 %v4462, %v4510
        %v4512 = vpop.f32.mrf.mxu0
        %v4513 = vadd.f32 %v4464, %v4512
        %4514 = vmatmul.bf16.gmra.mxu0 %v429
        %v4515 = vpop.f32.mrf.mxu0
        %v4516 = vadd.f32 %v4467, %v4515
        %v4517 = vpop.f32.mrf.mxu0
        %v4518 = vadd.f32 %v4469, %v4517
        %4519 = vmatmul.bf16.gmra.mxu0 %v435
        %v4520 = vpop.f32.mrf.mxu0
        %v4521 = vadd.f32 %v4472, %v4520
        %v4522 = vpop.f32.mrf.mxu0
        %v4523 = vadd.f32 %v4474, %v4522
        %4524 = vmatmul.bf16.gmra.mxu0 %v441
        %v4525 = vpop.f32.mrf.mxu0
        %v4526 = vadd.f32 %v4477, %v4525
        %v4527 = vpop.f32.mrf.mxu0
        %v4528 = vadd.f32 %v4479, %v4527
        %4529 = vmatmul.bf16.gmra.mxu0 %v447
        %v4530 = vpop.f32.mrf.mxu0
        %v4531 = vadd.f32 %v4482, %v4530
        %v4532 = vpop.f32.mrf.mxu0
        %v4533 = vadd.f32 %v4484, %v4532
        %4534 = vmatmul.bf16.gmra.mxu0 %v453
        %v4535 = vpop.f32.mrf.mxu0
        %v4536 = vadd.f32 %v4487, %v4535
        %v4537 = vpop.f32.mrf.mxu0
        %v4538 = vadd.f32 %v4489, %v4537
        %4539 = vdwg.mxu0
        %4540 = vmatpush.bf16.msra.mxu0 %v2070
        %4541 = vmatpush.bf16.msra.mxu0 %v2062
        %4542 = vmatpush.bf16.msra.mxu0 %v2054
        %4543 = vmatpush.bf16.msra.mxu0 %v2046
        %4544 = vmatpush.bf16.msra.mxu0 %v2038
        %4545 = vmatpush.bf16.msra.mxu0 %v2030
        %4546 = vmatpush.bf16.msra.mxu0 %v2022
        %4547 = vmatpush.bf16.msra.mxu0 %v2014
        %4548 = vmatmul.bf16.gmra.mxu0 %v406
        %v4549 = vpop.f32.mrf.mxu0
        %v4550 = vadd.f32 %v846, %v4549
        %v4551 = vpop.f32.mrf.mxu0
        %v4552 = vadd.f32 %v846, %v4551
        %4553 = vmatmul.bf16.gmra.mxu0 %v412
        %v4554 = vpop.f32.mrf.mxu0
        %v4555 = vadd.f32 %v846, %v4554
        %v4556 = vpop.f32.mrf.mxu0
        %v4557 = vadd.f32 %v846, %v4556
        %4558 = vmatmul.bf16.gmra.mxu0 %v418
        %v4559 = vpop.f32.mrf.mxu0
        %v4560 = vadd.f32 %v846, %v4559
        %v4561 = vpop.f32.mrf.mxu0
        %v4562 = vadd.f32 %v846, %v4561
        %4563 = vmatmul.bf16.gmra.mxu0 %v424
        %v4564 = vpop.f32.mrf.mxu0
        %v4565 = vadd.f32 %v846, %v4564
        %v4566 = vpop.f32.mrf.mxu0
        %v4567 = vadd.f32 %v846, %v4566
        %4568 = vmatmul.bf16.gmra.mxu0 %v430
        %v4569 = vpop.f32.mrf.mxu0
        %v4570 = vadd.f32 %v846, %v4569
        %v4571 = vpop.f32.mrf.mxu0
        %v4572 = vadd.f32 %v846, %v4571
        %4573 = vmatmul.bf16.gmra.mxu0 %v436
        %v4574 = vpop.f32.mrf.mxu0
        %v4575 = vadd.f32 %v846, %v4574
        %v4576 = vpop.f32.mrf.mxu0
        %v4577 = vadd.f32 %v846, %v4576
        %4578 = vmatmul.bf16.gmra.mxu0 %v442
        %v4579 = vpop.f32.mrf.mxu0
        %v4580 = vadd.f32 %v846, %v4579
        %v4581 = vpop.f32.mrf.mxu0
        %v4582 = vadd.f32 %v846, %v4581
        %4583 = vmatmul.bf16.gmra.mxu0 %v448
        %v4584 = vpop.f32.mrf.mxu0
        %v4585 = vadd.f32 %v846, %v4584
        %v4586 = vpop.f32.mrf.mxu0
        %v4587 = vadd.f32 %v846, %v4586
        %4588 = vdwg.mxu0
        %4589 = vmatpush.bf16.msra.mxu0 %v2134
        %4590 = vmatpush.bf16.msra.mxu0 %v2126
        %4591 = vmatpush.bf16.msra.mxu0 %v2118
        %4592 = vmatpush.bf16.msra.mxu0 %v2110
        %4593 = vmatpush.bf16.msra.mxu0 %v2102
        %4594 = vmatpush.bf16.msra.mxu0 %v2094
        %4595 = vmatpush.bf16.msra.mxu0 %v2086
        %4596 = vmatpush.bf16.msra.mxu0 %v2078
        %4597 = vmatmul.bf16.gmra.mxu0 %v407
        %v4598 = vpop.f32.mrf.mxu0
        %v4599 = vadd.f32 %v4550, %v4598
        %v4600 = vpop.f32.mrf.mxu0
        %v4601 = vadd.f32 %v4552, %v4600
        %4602 = vmatmul.bf16.gmra.mxu0 %v413
        %v4603 = vpop.f32.mrf.mxu0
        %v4604 = vadd.f32 %v4555, %v4603
        %v4605 = vpop.f32.mrf.mxu0
        %v4606 = vadd.f32 %v4557, %v4605
        %4607 = vmatmul.bf16.gmra.mxu0 %v419
        %v4608 = vpop.f32.mrf.mxu0
        %v4609 = vadd.f32 %v4560, %v4608
        %v4610 = vpop.f32.mrf.mxu0
        %v4611 = vadd.f32 %v4562, %v4610
        %4612 = vmatmul.bf16.gmra.mxu0 %v425
        %v4613 = vpop.f32.mrf.mxu0
        %v4614 = vadd.f32 %v4565, %v4613
        %v4615 = vpop.f32.mrf.mxu0
        %v4616 = vadd.f32 %v4567, %v4615
        %4617 = vmatmul.bf16.gmra.mxu0 %v431
        %v4618 = vpop.f32.mrf.mxu0
        %v4619 = vadd.f32 %v4570, %v4618
        %v4620 = vpop.f32.mrf.mxu0
        %v4621 = vadd.f32 %v4572, %v4620
        %4622 = vmatmul.bf16.gmra.mxu0 %v437
        %v4623 = vpop.f32.mrf.mxu0
        %v4624 = vadd.f32 %v4575, %v4623
        %v4625 = vpop.f32.mrf.mxu0
        %v4626 = vadd.f32 %v4577, %v4625
        %4627 = vmatmul.bf16.gmra.mxu0 %v443
        %v4628 = vpop.f32.mrf.mxu0
        %v4629 = vadd.f32 %v4580, %v4628
        %v4630 = vpop.f32.mrf.mxu0
        %v4631 = vadd.f32 %v4582, %v4630
        %4632 = vmatmul.bf16.gmra.mxu0 %v449
        %v4633 = vpop.f32.mrf.mxu0
        %v4634 = vadd.f32 %v4585, %v4633
        %v4635 = vpop.f32.mrf.mxu0
        %v4636 = vadd.f32 %v4587, %v4635
        %4637 = vdwg.mxu0
        %4638 = vmatpush.bf16.msra.mxu0 %v2198
        %4639 = vmatpush.bf16.msra.mxu0 %v2190
        %4640 = vmatpush.bf16.msra.mxu0 %v2182
        %4641 = vmatpush.bf16.msra.mxu0 %v2174
        %4642 = vmatpush.bf16.msra.mxu0 %v2166
        %4643 = vmatpush.bf16.msra.mxu0 %v2158
        %4644 = vmatpush.bf16.msra.mxu0 %v2150
        %4645 = vmatpush.bf16.msra.mxu0 %v2142
        %4646 = vmatmul.bf16.gmra.mxu0 %v408
        %v4647 = vpop.f32.mrf.mxu0
        %v4648 = vadd.f32 %v4599, %v4647
        %v4649 = vpop.f32.mrf.mxu0
        %v4650 = vadd.f32 %v4601, %v4649
        %4651 = vmatmul.bf16.gmra.mxu0 %v414
        %v4652 = vpop.f32.mrf.mxu0
        %v4653 = vadd.f32 %v4604, %v4652
        %v4654 = vpop.f32.mrf.mxu0
        %v4655 = vadd.f32 %v4606, %v4654
        %4656 = vmatmul.bf16.gmra.mxu0 %v420
        %v4657 = vpop.f32.mrf.mxu0
        %v4658 = vadd.f32 %v4609, %v4657
        %v4659 = vpop.f32.mrf.mxu0
        %v4660 = vadd.f32 %v4611, %v4659
        %4661 = vmatmul.bf16.gmra.mxu0 %v426
        %v4662 = vpop.f32.mrf.mxu0
        %v4663 = vadd.f32 %v4614, %v4662
        %v4664 = vpop.f32.mrf.mxu0
        %v4665 = vadd.f32 %v4616, %v4664
        %4666 = vmatmul.bf16.gmra.mxu0 %v432
        %v4667 = vpop.f32.mrf.mxu0
        %v4668 = vadd.f32 %v4619, %v4667
        %v4669 = vpop.f32.mrf.mxu0
        %v4670 = vadd.f32 %v4621, %v4669
        %4671 = vmatmul.bf16.gmra.mxu0 %v438
        %v4672 = vpop.f32.mrf.mxu0
        %v4673 = vadd.f32 %v4624, %v4672
        %v4674 = vpop.f32.mrf.mxu0
        %v4675 = vadd.f32 %v4626, %v4674
        %4676 = vmatmul.bf16.gmra.mxu0 %v444
        %v4677 = vpop.f32.mrf.mxu0
        %v4678 = vadd.f32 %v4629, %v4677
        %v4679 = vpop.f32.mrf.mxu0
        %v4680 = vadd.f32 %v4631, %v4679
        %4681 = vmatmul.bf16.gmra.mxu0 %v450
        %v4682 = vpop.f32.mrf.mxu0
        %v4683 = vadd.f32 %v4634, %v4682
        %v4684 = vpop.f32.mrf.mxu0
        %v4685 = vadd.f32 %v4636, %v4684
        %4686 = vdwg.mxu0
        %4687 = vmatpush.bf16.msra.mxu0 %v2262
        %4688 = vmatpush.bf16.msra.mxu0 %v2254
        %4689 = vmatpush.bf16.msra.mxu0 %v2246
        %4690 = vmatpush.bf16.msra.mxu0 %v2238
        %4691 = vmatpush.bf16.msra.mxu0 %v2230
        %4692 = vmatpush.bf16.msra.mxu0 %v2222
        %4693 = vmatpush.bf16.msra.mxu0 %v2214
        %4694 = vmatpush.bf16.msra.mxu0 %v2206
        %4695 = vmatmul.bf16.gmra.mxu0 %v409
        %v4696 = vpop.f32.mrf.mxu0
        %v4697 = vadd.f32 %v4648, %v4696
        %v4698 = vpop.f32.mrf.mxu0
        %v4699 = vadd.f32 %v4650, %v4698
        %4700 = vmatmul.bf16.gmra.mxu0 %v415
        %v4701 = vpop.f32.mrf.mxu0
        %v4702 = vadd.f32 %v4653, %v4701
        %v4703 = vpop.f32.mrf.mxu0
        %v4704 = vadd.f32 %v4655, %v4703
        %4705 = vmatmul.bf16.gmra.mxu0 %v421
        %v4706 = vpop.f32.mrf.mxu0
        %v4707 = vadd.f32 %v4658, %v4706
        %v4708 = vpop.f32.mrf.mxu0
        %v4709 = vadd.f32 %v4660, %v4708
        %4710 = vmatmul.bf16.gmra.mxu0 %v427
        %v4711 = vpop.f32.mrf.mxu0
        %v4712 = vadd.f32 %v4663, %v4711
        %v4713 = vpop.f32.mrf.mxu0
        %v4714 = vadd.f32 %v4665, %v4713
        %4715 = vmatmul.bf16.gmra.mxu0 %v433
        %v4716 = vpop.f32.mrf.mxu0
        %v4717 = vadd.f32 %v4668, %v4716
        %v4718 = vpop.f32.mrf.mxu0
        %v4719 = vadd.f32 %v4670, %v4718
        %4720 = vmatmul.bf16.gmra.mxu0 %v439
        %v4721 = vpop.f32.mrf.mxu0
        %v4722 = vadd.f32 %v4673, %v4721
        %v4723 = vpop.f32.mrf.mxu0
        %v4724 = vadd.f32 %v4675, %v4723
        %4725 = vmatmul.bf16.gmra.mxu0 %v445
        %v4726 = vpop.f32.mrf.mxu0
        %v4727 = vadd.f32 %v4678, %v4726
        %v4728 = vpop.f32.mrf.mxu0
        %v4729 = vadd.f32 %v4680, %v4728
        %4730 = vmatmul.bf16.gmra.mxu0 %v451
        %v4731 = vpop.f32.mrf.mxu0
        %v4732 = vadd.f32 %v4683, %v4731
        %v4733 = vpop.f32.mrf.mxu0
        %v4734 = vadd.f32 %v4685, %v4733
        %4735 = vdwg.mxu0
        %4736 = vmatpush.bf16.msra.mxu0 %v2326
        %4737 = vmatpush.bf16.msra.mxu0 %v2318
        %4738 = vmatpush.bf16.msra.mxu0 %v2310
        %4739 = vmatpush.bf16.msra.mxu0 %v2302
        %4740 = vmatpush.bf16.msra.mxu0 %v2294
        %4741 = vmatpush.bf16.msra.mxu0 %v2286
        %4742 = vmatpush.bf16.msra.mxu0 %v2278
        %4743 = vmatpush.bf16.msra.mxu0 %v2270
        %4744 = vmatmul.bf16.gmra.mxu0 %v410
        %v4745 = vpop.f32.mrf.mxu0
        %v4746 = vadd.f32 %v4697, %v4745
        %v4747 = vpop.f32.mrf.mxu0
        %v4748 = vadd.f32 %v4699, %v4747
        %4749 = vmatmul.bf16.gmra.mxu0 %v416
        %v4750 = vpop.f32.mrf.mxu0
        %v4751 = vadd.f32 %v4702, %v4750
        %v4752 = vpop.f32.mrf.mxu0
        %v4753 = vadd.f32 %v4704, %v4752
        %4754 = vmatmul.bf16.gmra.mxu0 %v422
        %v4755 = vpop.f32.mrf.mxu0
        %v4756 = vadd.f32 %v4707, %v4755
        %v4757 = vpop.f32.mrf.mxu0
        %v4758 = vadd.f32 %v4709, %v4757
        %4759 = vmatmul.bf16.gmra.mxu0 %v428
        %v4760 = vpop.f32.mrf.mxu0
        %v4761 = vadd.f32 %v4712, %v4760
        %v4762 = vpop.f32.mrf.mxu0
        %v4763 = vadd.f32 %v4714, %v4762
        %4764 = vmatmul.bf16.gmra.mxu0 %v434
        %v4765 = vpop.f32.mrf.mxu0
        %v4766 = vadd.f32 %v4717, %v4765
        %v4767 = vpop.f32.mrf.mxu0
        %v4768 = vadd.f32 %v4719, %v4767
        %4769 = vmatmul.bf16.gmra.mxu0 %v440
        %v4770 = vpop.f32.mrf.mxu0
        %v4771 = vadd.f32 %v4722, %v4770
        %v4772 = vpop.f32.mrf.mxu0
        %v4773 = vadd.f32 %v4724, %v4772
        %4774 = vmatmul.bf16.gmra.mxu0 %v446
        %v4775 = vpop.f32.mrf.mxu0
        %v4776 = vadd.f32 %v4727, %v4775
        %v4777 = vpop.f32.mrf.mxu0
        %v4778 = vadd.f32 %v4729, %v4777
        %4779 = vmatmul.bf16.gmra.mxu0 %v452
        %v4780 = vpop.f32.mrf.mxu0
        %v4781 = vadd.f32 %v4732, %v4780
        %v4782 = vpop.f32.mrf.mxu0
        %v4783 = vadd.f32 %v4734, %v4782
        %4784 = vdwg.mxu0
        %4785 = vmatpush.bf16.msra.mxu0 %v2390
        %4786 = vmatpush.bf16.msra.mxu0 %v2382
        %4787 = vmatpush.bf16.msra.mxu0 %v2374
        %4788 = vmatpush.bf16.msra.mxu0 %v2366
        %4789 = vmatpush.bf16.msra.mxu0 %v2358
        %4790 = vmatpush.bf16.msra.mxu0 %v2350
        %4791 = vmatpush.bf16.msra.mxu0 %v2342
        %4792 = vmatpush.bf16.msra.mxu0 %v2334
        %4793 = vmatmul.bf16.gmra.mxu0 %v411
        %v4794 = vpop.f32.mrf.mxu0
        %v4795 = vadd.f32 %v4746, %v4794
        %v4796 = vpop.f32.mrf.mxu0
        %v4797 = vadd.f32 %v4748, %v4796
        %4798 = vmatmul.bf16.gmra.mxu0 %v417
        %v4799 = vpop.f32.mrf.mxu0
        %v4800 = vadd.f32 %v4751, %v4799
        %v4801 = vpop.f32.mrf.mxu0
        %v4802 = vadd.f32 %v4753, %v4801
        %4803 = vmatmul.bf16.gmra.mxu0 %v423
        %v4804 = vpop.f32.mrf.mxu0
        %v4805 = vadd.f32 %v4756, %v4804
        %v4806 = vpop.f32.mrf.mxu0
        %v4807 = vadd.f32 %v4758, %v4806
        %4808 = vmatmul.bf16.gmra.mxu0 %v429
        %v4809 = vpop.f32.mrf.mxu0
        %v4810 = vadd.f32 %v4761, %v4809
        %v4811 = vpop.f32.mrf.mxu0
        %v4812 = vadd.f32 %v4763, %v4811
        %4813 = vmatmul.bf16.gmra.mxu0 %v435
        %v4814 = vpop.f32.mrf.mxu0
        %v4815 = vadd.f32 %v4766, %v4814
        %v4816 = vpop.f32.mrf.mxu0
        %v4817 = vadd.f32 %v4768, %v4816
        %4818 = vmatmul.bf16.gmra.mxu0 %v441
        %v4819 = vpop.f32.mrf.mxu0
        %v4820 = vadd.f32 %v4771, %v4819
        %v4821 = vpop.f32.mrf.mxu0
        %v4822 = vadd.f32 %v4773, %v4821
        %4823 = vmatmul.bf16.gmra.mxu0 %v447
        %v4824 = vpop.f32.mrf.mxu0
        %v4825 = vadd.f32 %v4776, %v4824
        %v4826 = vpop.f32.mrf.mxu0
        %v4827 = vadd.f32 %v4778, %v4826
        %4828 = vmatmul.bf16.gmra.mxu0 %v453
        %v4829 = vpop.f32.mrf.mxu0
        %v4830 = vadd.f32 %v4781, %v4829
        %v4831 = vpop.f32.mrf.mxu0
        %v4832 = vadd.f32 %v4783, %v4831
        %4833 = vdwg.mxu0
        %4834 = vmatpush.bf16.msra.mxu0 %v2071
        %4835 = vmatpush.bf16.msra.mxu0 %v2063
        %4836 = vmatpush.bf16.msra.mxu0 %v2055
        %4837 = vmatpush.bf16.msra.mxu0 %v2047
        %4838 = vmatpush.bf16.msra.mxu0 %v2039
        %4839 = vmatpush.bf16.msra.mxu0 %v2031
        %4840 = vmatpush.bf16.msra.mxu0 %v2023
        %4841 = vmatpush.bf16.msra.mxu0 %v2015
        %4842 = vmatmul.bf16.gmra.mxu0 %v406
        %v4843 = vpop.f32.mrf.mxu0
        %v4844 = vadd.f32 %v847, %v4843
        %v4845 = vpop.f32.mrf.mxu0
        %v4846 = vadd.f32 %v847, %v4845
        %4847 = vmatmul.bf16.gmra.mxu0 %v412
        %v4848 = vpop.f32.mrf.mxu0
        %v4849 = vadd.f32 %v847, %v4848
        %v4850 = vpop.f32.mrf.mxu0
        %v4851 = vadd.f32 %v847, %v4850
        %4852 = vmatmul.bf16.gmra.mxu0 %v418
        %v4853 = vpop.f32.mrf.mxu0
        %v4854 = vadd.f32 %v847, %v4853
        %v4855 = vpop.f32.mrf.mxu0
        %v4856 = vadd.f32 %v847, %v4855
        %4857 = vmatmul.bf16.gmra.mxu0 %v424
        %v4858 = vpop.f32.mrf.mxu0
        %v4859 = vadd.f32 %v847, %v4858
        %v4860 = vpop.f32.mrf.mxu0
        %v4861 = vadd.f32 %v847, %v4860
        %4862 = vmatmul.bf16.gmra.mxu0 %v430
        %v4863 = vpop.f32.mrf.mxu0
        %v4864 = vadd.f32 %v847, %v4863
        %v4865 = vpop.f32.mrf.mxu0
        %v4866 = vadd.f32 %v847, %v4865
        %4867 = vmatmul.bf16.gmra.mxu0 %v436
        %v4868 = vpop.f32.mrf.mxu0
        %v4869 = vadd.f32 %v847, %v4868
        %v4870 = vpop.f32.mrf.mxu0
        %v4871 = vadd.f32 %v847, %v4870
        %4872 = vmatmul.bf16.gmra.mxu0 %v442
        %v4873 = vpop.f32.mrf.mxu0
        %v4874 = vadd.f32 %v847, %v4873
        %v4875 = vpop.f32.mrf.mxu0
        %v4876 = vadd.f32 %v847, %v4875
        %4877 = vmatmul.bf16.gmra.mxu0 %v448
        %v4878 = vpop.f32.mrf.mxu0
        %v4879 = vadd.f32 %v847, %v4878
        %v4880 = vpop.f32.mrf.mxu0
        %v4881 = vadd.f32 %v847, %v4880
        %4882 = vdwg.mxu0
        %4883 = vmatpush.bf16.msra.mxu0 %v2135
        %4884 = vmatpush.bf16.msra.mxu0 %v2127
        %4885 = vmatpush.bf16.msra.mxu0 %v2119
        %4886 = vmatpush.bf16.msra.mxu0 %v2111
        %4887 = vmatpush.bf16.msra.mxu0 %v2103
        %4888 = vmatpush.bf16.msra.mxu0 %v2095
        %4889 = vmatpush.bf16.msra.mxu0 %v2087
        %4890 = vmatpush.bf16.msra.mxu0 %v2079
        %4891 = vmatmul.bf16.gmra.mxu0 %v407
        %v4892 = vpop.f32.mrf.mxu0
        %v4893 = vadd.f32 %v4844, %v4892
        %v4894 = vpop.f32.mrf.mxu0
        %v4895 = vadd.f32 %v4846, %v4894
        %4896 = vmatmul.bf16.gmra.mxu0 %v413
        %v4897 = vpop.f32.mrf.mxu0
        %v4898 = vadd.f32 %v4849, %v4897
        %v4899 = vpop.f32.mrf.mxu0
        %v4900 = vadd.f32 %v4851, %v4899
        %4901 = vmatmul.bf16.gmra.mxu0 %v419
        %v4902 = vpop.f32.mrf.mxu0
        %v4903 = vadd.f32 %v4854, %v4902
        %v4904 = vpop.f32.mrf.mxu0
        %v4905 = vadd.f32 %v4856, %v4904
        %4906 = vmatmul.bf16.gmra.mxu0 %v425
        %v4907 = vpop.f32.mrf.mxu0
        %v4908 = vadd.f32 %v4859, %v4907
        %v4909 = vpop.f32.mrf.mxu0
        %v4910 = vadd.f32 %v4861, %v4909
        %4911 = vmatmul.bf16.gmra.mxu0 %v431
        %v4912 = vpop.f32.mrf.mxu0
        %v4913 = vadd.f32 %v4864, %v4912
        %v4914 = vpop.f32.mrf.mxu0
        %v4915 = vadd.f32 %v4866, %v4914
        %4916 = vmatmul.bf16.gmra.mxu0 %v437
        %v4917 = vpop.f32.mrf.mxu0
        %v4918 = vadd.f32 %v4869, %v4917
        %v4919 = vpop.f32.mrf.mxu0
        %v4920 = vadd.f32 %v4871, %v4919
        %4921 = vmatmul.bf16.gmra.mxu0 %v443
        %v4922 = vpop.f32.mrf.mxu0
        %v4923 = vadd.f32 %v4874, %v4922
        %v4924 = vpop.f32.mrf.mxu0
        %v4925 = vadd.f32 %v4876, %v4924
        %4926 = vmatmul.bf16.gmra.mxu0 %v449
        %v4927 = vpop.f32.mrf.mxu0
        %v4928 = vadd.f32 %v4879, %v4927
        %v4929 = vpop.f32.mrf.mxu0
        %v4930 = vadd.f32 %v4881, %v4929
        %4931 = vdwg.mxu0
        %4932 = vmatpush.bf16.msra.mxu0 %v2199
        %4933 = vmatpush.bf16.msra.mxu0 %v2191
        %4934 = vmatpush.bf16.msra.mxu0 %v2183
        %4935 = vmatpush.bf16.msra.mxu0 %v2175
        %4936 = vmatpush.bf16.msra.mxu0 %v2167
        %4937 = vmatpush.bf16.msra.mxu0 %v2159
        %4938 = vmatpush.bf16.msra.mxu0 %v2151
        %4939 = vmatpush.bf16.msra.mxu0 %v2143
        %4940 = vmatmul.bf16.gmra.mxu0 %v408
        %v4941 = vpop.f32.mrf.mxu0
        %v4942 = vadd.f32 %v4893, %v4941
        %v4943 = vpop.f32.mrf.mxu0
        %v4944 = vadd.f32 %v4895, %v4943
        %4945 = vmatmul.bf16.gmra.mxu0 %v414
        %v4946 = vpop.f32.mrf.mxu0
        %v4947 = vadd.f32 %v4898, %v4946
        %v4948 = vpop.f32.mrf.mxu0
        %v4949 = vadd.f32 %v4900, %v4948
        %4950 = vmatmul.bf16.gmra.mxu0 %v420
        %v4951 = vpop.f32.mrf.mxu0
        %v4952 = vadd.f32 %v4903, %v4951
        %v4953 = vpop.f32.mrf.mxu0
        %v4954 = vadd.f32 %v4905, %v4953
        %4955 = vmatmul.bf16.gmra.mxu0 %v426
        %v4956 = vpop.f32.mrf.mxu0
        %v4957 = vadd.f32 %v4908, %v4956
        %v4958 = vpop.f32.mrf.mxu0
        %v4959 = vadd.f32 %v4910, %v4958
        %4960 = vmatmul.bf16.gmra.mxu0 %v432
        %v4961 = vpop.f32.mrf.mxu0
        %v4962 = vadd.f32 %v4913, %v4961
        %v4963 = vpop.f32.mrf.mxu0
        %v4964 = vadd.f32 %v4915, %v4963
        %4965 = vmatmul.bf16.gmra.mxu0 %v438
        %v4966 = vpop.f32.mrf.mxu0
        %v4967 = vadd.f32 %v4918, %v4966
        %v4968 = vpop.f32.mrf.mxu0
        %v4969 = vadd.f32 %v4920, %v4968
        %4970 = vmatmul.bf16.gmra.mxu0 %v444
        %v4971 = vpop.f32.mrf.mxu0
        %v4972 = vadd.f32 %v4923, %v4971
        %v4973 = vpop.f32.mrf.mxu0
        %v4974 = vadd.f32 %v4925, %v4973
        %4975 = vmatmul.bf16.gmra.mxu0 %v450
        %v4976 = vpop.f32.mrf.mxu0
        %v4977 = vadd.f32 %v4928, %v4976
        %v4978 = vpop.f32.mrf.mxu0
        %v4979 = vadd.f32 %v4930, %v4978
        %4980 = vdwg.mxu0
        %4981 = vmatpush.bf16.msra.mxu0 %v2263
        %4982 = vmatpush.bf16.msra.mxu0 %v2255
        %4983 = vmatpush.bf16.msra.mxu0 %v2247
        %4984 = vmatpush.bf16.msra.mxu0 %v2239
        %4985 = vmatpush.bf16.msra.mxu0 %v2231
        %4986 = vmatpush.bf16.msra.mxu0 %v2223
        %4987 = vmatpush.bf16.msra.mxu0 %v2215
        %4988 = vmatpush.bf16.msra.mxu0 %v2207
        %4989 = vmatmul.bf16.gmra.mxu0 %v409
        %v4990 = vpop.f32.mrf.mxu0
        %v4991 = vadd.f32 %v4942, %v4990
        %v4992 = vpop.f32.mrf.mxu0
        %v4993 = vadd.f32 %v4944, %v4992
        %4994 = vmatmul.bf16.gmra.mxu0 %v415
        %v4995 = vpop.f32.mrf.mxu0
        %v4996 = vadd.f32 %v4947, %v4995
        %v4997 = vpop.f32.mrf.mxu0
        %v4998 = vadd.f32 %v4949, %v4997
        %4999 = vmatmul.bf16.gmra.mxu0 %v421
        %v5000 = vpop.f32.mrf.mxu0
        %v5001 = vadd.f32 %v4952, %v5000
        %v5002 = vpop.f32.mrf.mxu0
        %v5003 = vadd.f32 %v4954, %v5002
        %5004 = vmatmul.bf16.gmra.mxu0 %v427
        %v5005 = vpop.f32.mrf.mxu0
        %v5006 = vadd.f32 %v4957, %v5005
        %v5007 = vpop.f32.mrf.mxu0
        %v5008 = vadd.f32 %v4959, %v5007
        %5009 = vmatmul.bf16.gmra.mxu0 %v433
        %v5010 = vpop.f32.mrf.mxu0
        %v5011 = vadd.f32 %v4962, %v5010
        %v5012 = vpop.f32.mrf.mxu0
        %v5013 = vadd.f32 %v4964, %v5012
        %5014 = vmatmul.bf16.gmra.mxu0 %v439
        %v5015 = vpop.f32.mrf.mxu0
        %v5016 = vadd.f32 %v4967, %v5015
        %v5017 = vpop.f32.mrf.mxu0
        %v5018 = vadd.f32 %v4969, %v5017
        %5019 = vmatmul.bf16.gmra.mxu0 %v445
        %v5020 = vpop.f32.mrf.mxu0
        %v5021 = vadd.f32 %v4972, %v5020
        %v5022 = vpop.f32.mrf.mxu0
        %v5023 = vadd.f32 %v4974, %v5022
        %5024 = vmatmul.bf16.gmra.mxu0 %v451
        %v5025 = vpop.f32.mrf.mxu0
        %v5026 = vadd.f32 %v4977, %v5025
        %v5027 = vpop.f32.mrf.mxu0
        %v5028 = vadd.f32 %v4979, %v5027
        %5029 = vdwg.mxu0
        %5030 = vmatpush.bf16.msra.mxu0 %v2327
        %5031 = vmatpush.bf16.msra.mxu0 %v2319
        %5032 = vmatpush.bf16.msra.mxu0 %v2311
        %5033 = vmatpush.bf16.msra.mxu0 %v2303
        %5034 = vmatpush.bf16.msra.mxu0 %v2295
        %5035 = vmatpush.bf16.msra.mxu0 %v2287
        %5036 = vmatpush.bf16.msra.mxu0 %v2279
        %5037 = vmatpush.bf16.msra.mxu0 %v2271
        %5038 = vmatmul.bf16.gmra.mxu0 %v410
        %v5039 = vpop.f32.mrf.mxu0
        %v5040 = vadd.f32 %v4991, %v5039
        %v5041 = vpop.f32.mrf.mxu0
        %v5042 = vadd.f32 %v4993, %v5041
        %5043 = vmatmul.bf16.gmra.mxu0 %v416
        %v5044 = vpop.f32.mrf.mxu0
        %v5045 = vadd.f32 %v4996, %v5044
        %v5046 = vpop.f32.mrf.mxu0
        %v5047 = vadd.f32 %v4998, %v5046
        %5048 = vmatmul.bf16.gmra.mxu0 %v422
        %v5049 = vpop.f32.mrf.mxu0
        %v5050 = vadd.f32 %v5001, %v5049
        %v5051 = vpop.f32.mrf.mxu0
        %v5052 = vadd.f32 %v5003, %v5051
        %5053 = vmatmul.bf16.gmra.mxu0 %v428
        %v5054 = vpop.f32.mrf.mxu0
        %v5055 = vadd.f32 %v5006, %v5054
        %v5056 = vpop.f32.mrf.mxu0
        %v5057 = vadd.f32 %v5008, %v5056
        %5058 = vmatmul.bf16.gmra.mxu0 %v434
        %v5059 = vpop.f32.mrf.mxu0
        %v5060 = vadd.f32 %v5011, %v5059
        %v5061 = vpop.f32.mrf.mxu0
        %v5062 = vadd.f32 %v5013, %v5061
        %5063 = vmatmul.bf16.gmra.mxu0 %v440
        %v5064 = vpop.f32.mrf.mxu0
        %v5065 = vadd.f32 %v5016, %v5064
        %v5066 = vpop.f32.mrf.mxu0
        %v5067 = vadd.f32 %v5018, %v5066
        %5068 = vmatmul.bf16.gmra.mxu0 %v446
        %v5069 = vpop.f32.mrf.mxu0
        %v5070 = vadd.f32 %v5021, %v5069
        %v5071 = vpop.f32.mrf.mxu0
        %v5072 = vadd.f32 %v5023, %v5071
        %5073 = vmatmul.bf16.gmra.mxu0 %v452
        %v5074 = vpop.f32.mrf.mxu0
        %v5075 = vadd.f32 %v5026, %v5074
        %v5076 = vpop.f32.mrf.mxu0
        %v5077 = vadd.f32 %v5028, %v5076
        %5078 = vdwg.mxu0
        %5079 = vmatpush.bf16.msra.mxu0 %v2391
        %5080 = vmatpush.bf16.msra.mxu0 %v2383
        %5081 = vmatpush.bf16.msra.mxu0 %v2375
        %5082 = vmatpush.bf16.msra.mxu0 %v2367
        %5083 = vmatpush.bf16.msra.mxu0 %v2359
        %5084 = vmatpush.bf16.msra.mxu0 %v2351
        %5085 = vmatpush.bf16.msra.mxu0 %v2343
        %5086 = vmatpush.bf16.msra.mxu0 %v2335
        %5087 = vmatmul.bf16.gmra.mxu0 %v411
        %v5088 = vpop.f32.mrf.mxu0
        %v5089 = vadd.f32 %v5040, %v5088
        %v5090 = vpop.f32.mrf.mxu0
        %v5091 = vadd.f32 %v5042, %v5090
        %5092 = vmatmul.bf16.gmra.mxu0 %v417
        %v5093 = vpop.f32.mrf.mxu0
        %v5094 = vadd.f32 %v5045, %v5093
        %v5095 = vpop.f32.mrf.mxu0
        %v5096 = vadd.f32 %v5047, %v5095
        %5097 = vmatmul.bf16.gmra.mxu0 %v423
        %v5098 = vpop.f32.mrf.mxu0
        %v5099 = vadd.f32 %v5050, %v5098
        %v5100 = vpop.f32.mrf.mxu0
        %v5101 = vadd.f32 %v5052, %v5100
        %5102 = vmatmul.bf16.gmra.mxu0 %v429
        %v5103 = vpop.f32.mrf.mxu0
        %v5104 = vadd.f32 %v5055, %v5103
        %v5105 = vpop.f32.mrf.mxu0
        %v5106 = vadd.f32 %v5057, %v5105
        %5107 = vmatmul.bf16.gmra.mxu0 %v435
        %v5108 = vpop.f32.mrf.mxu0
        %v5109 = vadd.f32 %v5060, %v5108
        %v5110 = vpop.f32.mrf.mxu0
        %v5111 = vadd.f32 %v5062, %v5110
        %5112 = vmatmul.bf16.gmra.mxu0 %v441
        %v5113 = vpop.f32.mrf.mxu0
        %v5114 = vadd.f32 %v5065, %v5113
        %v5115 = vpop.f32.mrf.mxu0
        %v5116 = vadd.f32 %v5067, %v5115
        %5117 = vmatmul.bf16.gmra.mxu0 %v447
        %v5118 = vpop.f32.mrf.mxu0
        %v5119 = vadd.f32 %v5070, %v5118
        %v5120 = vpop.f32.mrf.mxu0
        %v5121 = vadd.f32 %v5072, %v5120
        %5122 = vmatmul.bf16.gmra.mxu0 %v453
        %v5123 = vpop.f32.mrf.mxu0
        %v5124 = vadd.f32 %v5075, %v5123
        %v5125 = vpop.f32.mrf.mxu0
        %v5126 = vadd.f32 %v5077, %v5125
        %5127 = vdwg.mxu0
        %v5128 = vmax.f32 %v3031, 0.0
        %v5129 = vmax.f32 %v3325, 0.0
        %v5130 = vmax.f32 %v3619, 0.0
        %v5131 = vmax.f32 %v3913, 0.0
        %v5132 = vmax.f32 %v4207, 0.0
        %v5133 = vmax.f32 %v4501, 0.0
        %v5134 = vmax.f32 %v4795, 0.0
        %v5135 = vmax.f32 %v5089, 0.0
        %v5136 = vmax.f32 %v3033, 0.0
        %v5137 = vmax.f32 %v3327, 0.0
        %v5138 = vmax.f32 %v3621, 0.0
        %v5139 = vmax.f32 %v3915, 0.0
        %v5140 = vmax.f32 %v4209, 0.0
        %v5141 = vmax.f32 %v4503, 0.0
        %v5142 = vmax.f32 %v4797, 0.0
        %v5143 = vmax.f32 %v5091, 0.0
        %v5144 = vmax.f32 %v3036, 0.0
        %v5145 = vmax.f32 %v3330, 0.0
        %v5146 = vmax.f32 %v3624, 0.0
        %v5147 = vmax.f32 %v3918, 0.0
        %v5148 = vmax.f32 %v4212, 0.0
        %v5149 = vmax.f32 %v4506, 0.0
        %v5150 = vmax.f32 %v4800, 0.0
        %v5151 = vmax.f32 %v5094, 0.0
        %v5152 = vmax.f32 %v3038, 0.0
        %v5153 = vmax.f32 %v3332, 0.0
        %v5154 = vmax.f32 %v3626, 0.0
        %v5155 = vmax.f32 %v3920, 0.0
        %v5156 = vmax.f32 %v4214, 0.0
        %v5157 = vmax.f32 %v4508, 0.0
        %v5158 = vmax.f32 %v4802, 0.0
        %v5159 = vmax.f32 %v5096, 0.0
        %v5160 = vmax.f32 %v3041, 0.0
        %v5161 = vmax.f32 %v3335, 0.0
        %v5162 = vmax.f32 %v3629, 0.0
        %v5163 = vmax.f32 %v3923, 0.0
        %v5164 = vmax.f32 %v4217, 0.0
        %v5165 = vmax.f32 %v4511, 0.0
        %v5166 = vmax.f32 %v4805, 0.0
        %v5167 = vmax.f32 %v5099, 0.0
        %v5168 = vmax.f32 %v3043, 0.0
        %v5169 = vmax.f32 %v3337, 0.0
        %v5170 = vmax.f32 %v3631, 0.0
        %v5171 = vmax.f32 %v3925, 0.0
        %v5172 = vmax.f32 %v4219, 0.0
        %v5173 = vmax.f32 %v4513, 0.0
        %v5174 = vmax.f32 %v4807, 0.0
        %v5175 = vmax.f32 %v5101, 0.0
        %v5176 = vmax.f32 %v3046, 0.0
        %v5177 = vmax.f32 %v3340, 0.0
        %v5178 = vmax.f32 %v3634, 0.0
        %v5179 = vmax.f32 %v3928, 0.0
        %v5180 = vmax.f32 %v4222, 0.0
        %v5181 = vmax.f32 %v4516, 0.0
        %v5182 = vmax.f32 %v4810, 0.0
        %v5183 = vmax.f32 %v5104, 0.0
        %v5184 = vmax.f32 %v3048, 0.0
        %v5185 = vmax.f32 %v3342, 0.0
        %v5186 = vmax.f32 %v3636, 0.0
        %v5187 = vmax.f32 %v3930, 0.0
        %v5188 = vmax.f32 %v4224, 0.0
        %v5189 = vmax.f32 %v4518, 0.0
        %v5190 = vmax.f32 %v4812, 0.0
        %v5191 = vmax.f32 %v5106, 0.0
        %v5192 = vmax.f32 %v3051, 0.0
        %v5193 = vmax.f32 %v3345, 0.0
        %v5194 = vmax.f32 %v3639, 0.0
        %v5195 = vmax.f32 %v3933, 0.0
        %v5196 = vmax.f32 %v4227, 0.0
        %v5197 = vmax.f32 %v4521, 0.0
        %v5198 = vmax.f32 %v4815, 0.0
        %v5199 = vmax.f32 %v5109, 0.0
        %v5200 = vmax.f32 %v3053, 0.0
        %v5201 = vmax.f32 %v3347, 0.0
        %v5202 = vmax.f32 %v3641, 0.0
        %v5203 = vmax.f32 %v3935, 0.0
        %v5204 = vmax.f32 %v4229, 0.0
        %v5205 = vmax.f32 %v4523, 0.0
        %v5206 = vmax.f32 %v4817, 0.0
        %v5207 = vmax.f32 %v5111, 0.0
        %v5208 = vmax.f32 %v3056, 0.0
        %v5209 = vmax.f32 %v3350, 0.0
        %v5210 = vmax.f32 %v3644, 0.0
        %v5211 = vmax.f32 %v3938, 0.0
        %v5212 = vmax.f32 %v4232, 0.0
        %v5213 = vmax.f32 %v4526, 0.0
        %v5214 = vmax.f32 %v4820, 0.0
        %v5215 = vmax.f32 %v5114, 0.0
        %v5216 = vmax.f32 %v3058, 0.0
        %v5217 = vmax.f32 %v3352, 0.0
        %v5218 = vmax.f32 %v3646, 0.0
        %v5219 = vmax.f32 %v3940, 0.0
        %v5220 = vmax.f32 %v4234, 0.0
        %v5221 = vmax.f32 %v4528, 0.0
        %v5222 = vmax.f32 %v4822, 0.0
        %v5223 = vmax.f32 %v5116, 0.0
        %v5224 = vmax.f32 %v3061, 0.0
        %v5225 = vmax.f32 %v3355, 0.0
        %v5226 = vmax.f32 %v3649, 0.0
        %v5227 = vmax.f32 %v3943, 0.0
        %v5228 = vmax.f32 %v4237, 0.0
        %v5229 = vmax.f32 %v4531, 0.0
        %v5230 = vmax.f32 %v4825, 0.0
        %v5231 = vmax.f32 %v5119, 0.0
        %v5232 = vmax.f32 %v3063, 0.0
        %v5233 = vmax.f32 %v3357, 0.0
        %v5234 = vmax.f32 %v3651, 0.0
        %v5235 = vmax.f32 %v3945, 0.0
        %v5236 = vmax.f32 %v4239, 0.0
        %v5237 = vmax.f32 %v4533, 0.0
        %v5238 = vmax.f32 %v4827, 0.0
        %v5239 = vmax.f32 %v5121, 0.0
        %v5240 = vmax.f32 %v3066, 0.0
        %v5241 = vmax.f32 %v3360, 0.0
        %v5242 = vmax.f32 %v3654, 0.0
        %v5243 = vmax.f32 %v3948, 0.0
        %v5244 = vmax.f32 %v4242, 0.0
        %v5245 = vmax.f32 %v4536, 0.0
        %v5246 = vmax.f32 %v4830, 0.0
        %v5247 = vmax.f32 %v5124, 0.0
        %v5248 = vmax.f32 %v3068, 0.0
        %v5249 = vmax.f32 %v3362, 0.0
        %v5250 = vmax.f32 %v3656, 0.0
        %v5251 = vmax.f32 %v3950, 0.0
        %v5252 = vmax.f32 %v4244, 0.0
        %v5253 = vmax.f32 %v4538, 0.0
        %v5254 = vmax.f32 %v4832, 0.0
        %v5255 = vmax.f32 %v5126, 0.0
        %v5256 = vpack.c.bf16 %v5136, %v5128
        %v5257 = vpack.c.bf16 %v5137, %v5129
        %v5258 = vpack.c.bf16 %v5138, %v5130
        %v5259 = vpack.c.bf16 %v5139, %v5131
        %v5260 = vpack.c.bf16 %v5140, %v5132
        %v5261 = vpack.c.bf16 %v5141, %v5133
        %v5262 = vpack.c.bf16 %v5142, %v5134
        %v5263 = vpack.c.bf16 %v5143, %v5135
        %v5264 = vpack.c.bf16 %v5152, %v5144
        %v5265 = vpack.c.bf16 %v5153, %v5145
        %v5266 = vpack.c.bf16 %v5154, %v5146
        %v5267 = vpack.c.bf16 %v5155, %v5147
        %v5268 = vpack.c.bf16 %v5156, %v5148
        %v5269 = vpack.c.bf16 %v5157, %v5149
        %v5270 = vpack.c.bf16 %v5158, %v5150
        %v5271 = vpack.c.bf16 %v5159, %v5151
        %v5272 = vpack.c.bf16 %v5168, %v5160
        %v5273 = vpack.c.bf16 %v5169, %v5161
        %v5274 = vpack.c.bf16 %v5170, %v5162
        %v5275 = vpack.c.bf16 %v5171, %v5163
        %v5276 = vpack.c.bf16 %v5172, %v5164
        %v5277 = vpack.c.bf16 %v5173, %v5165
        %v5278 = vpack.c.bf16 %v5174, %v5166
        %v5279 = vpack.c.bf16 %v5175, %v5167
        %v5280 = vpack.c.bf16 %v5184, %v5176
        %v5281 = vpack.c.bf16 %v5185, %v5177
        %v5282 = vpack.c.bf16 %v5186, %v5178
        %v5283 = vpack.c.bf16 %v5187, %v5179
        %v5284 = vpack.c.bf16 %v5188, %v5180
        %v5285 = vpack.c.bf16 %v5189, %v5181
        %v5286 = vpack.c.bf16 %v5190, %v5182
        %v5287 = vpack.c.bf16 %v5191, %v5183
        %v5288 = vpack.c.bf16 %v5200, %v5192
        %v5289 = vpack.c.bf16 %v5201, %v5193
        %v5290 = vpack.c.bf16 %v5202, %v5194
        %v5291 = vpack.c.bf16 %v5203, %v5195
        %v5292 = vpack.c.bf16 %v5204, %v5196
        %v5293 = vpack.c.bf16 %v5205, %v5197
        %v5294 = vpack.c.bf16 %v5206, %v5198
        %v5295 = vpack.c.bf16 %v5207, %v5199
        %v5296 = vpack.c.bf16 %v5216, %v5208
        %v5297 = vpack.c.bf16 %v5217, %v5209
        %v5298 = vpack.c.bf16 %v5218, %v5210
        %v5299 = vpack.c.bf16 %v5219, %v5211
        %v5300 = vpack.c.bf16 %v5220, %v5212
        %v5301 = vpack.c.bf16 %v5221, %v5213
        %v5302 = vpack.c.bf16 %v5222, %v5214
        %v5303 = vpack.c.bf16 %v5223, %v5215
        %v5304 = vpack.c.bf16 %v5232, %v5224
        %v5305 = vpack.c.bf16 %v5233, %v5225
        %v5306 = vpack.c.bf16 %v5234, %v5226
        %v5307 = vpack.c.bf16 %v5235, %v5227
        %v5308 = vpack.c.bf16 %v5236, %v5228
        %v5309 = vpack.c.bf16 %v5237, %v5229
        %v5310 = vpack.c.bf16 %v5238, %v5230
        %v5311 = vpack.c.bf16 %v5239, %v5231
        %v5312 = vpack.c.bf16 %v5248, %v5240
        %v5313 = vpack.c.bf16 %v5249, %v5241
        %v5314 = vpack.c.bf16 %v5250, %v5242
        %v5315 = vpack.c.bf16 %v5251, %v5243
        %v5316 = vpack.c.bf16 %v5252, %v5244
        %v5317 = vpack.c.bf16 %v5253, %v5245
        %v5318 = vpack.c.bf16 %v5254, %v5246
        %v5319 = vpack.c.bf16 %v5255, %v5247
        %v5320 = vld [vmem:[#allocation8] sm:$0xff]
        %v5321 = vld [vmem:[#allocation8 + $0x8] sm:$0xff]
        %v5322 = vld [vmem:[#allocation8 + $0x10] sm:$0xff]
        %v5323 = vld [vmem:[#allocation8 + $0x18] sm:$0xff]
        %v5324 = vld [vmem:[#allocation8 + $0x20] sm:$0xff]
        %v5325 = vld [vmem:[#allocation8 + $0x28] sm:$0xff]
        %v5326 = vld [vmem:[#allocation8 + $0x30] sm:$0xff]
        %v5327 = vld [vmem:[#allocation8 + $0x38] sm:$0xff]
        %v5328 = vld [vmem:[#allocation8 + $0x40] sm:$0xff]
        %v5329 = vld [vmem:[#allocation8 + $0x48] sm:$0xff]
        %v5330 = vld [vmem:[#allocation8 + $0x50] sm:$0xff]
        %v5331 = vld [vmem:[#allocation8 + $0x58] sm:$0xff]
        %v5332 = vld [vmem:[#allocation8 + $0x60] sm:$0xff]
        %v5333 = vld [vmem:[#allocation8 + $0x68] sm:$0xff]
        %v5334 = vld [vmem:[#allocation8 + $0x70] sm:$0xff]
        %v5335 = vld [vmem:[#allocation8 + $0x78] sm:$0xff]
        %v5336 = vld [vmem:[#allocation8 + $0x80] sm:$0xff]
        %v5337 = vld [vmem:[#allocation8 + $0x88] sm:$0xff]
        %v5338 = vld [vmem:[#allocation8 + $0x90] sm:$0xff]
        %v5339 = vld [vmem:[#allocation8 + $0x98] sm:$0xff]
        %v5340 = vld [vmem:[#allocation8 + $0xa0] sm:$0xff]
        %v5341 = vld [vmem:[#allocation8 + $0xa8] sm:$0xff]
        %v5342 = vld [vmem:[#allocation8 + $0xb0] sm:$0xff]
        %v5343 = vld [vmem:[#allocation8 + $0xb8] sm:$0xff]
        %v5344 = vld [vmem:[#allocation8 + $0xc0] sm:$0xff]
        %v5345 = vld [vmem:[#allocation8 + $0xc8] sm:$0xff]
        %v5346 = vld [vmem:[#allocation8 + $0xd0] sm:$0xff]
        %v5347 = vld [vmem:[#allocation8 + $0xd8] sm:$0xff]
        %v5348 = vld [vmem:[#allocation8 + $0xe0] sm:$0xff]
        %v5349 = vld [vmem:[#allocation8 + $0xe8] sm:$0xff]
        %v5350 = vld [vmem:[#allocation8 + $0xf0] sm:$0xff]
        %v5351 = vld [vmem:[#allocation8 + $0xf8] sm:$0xff]
        %v5352 = vld [vmem:[#allocation8 + $0x100] sm:$0xff]
        %v5353 = vld [vmem:[#allocation8 + $0x108] sm:$0xff]
        %v5354 = vld [vmem:[#allocation8 + $0x110] sm:$0xff]
        %v5355 = vld [vmem:[#allocation8 + $0x118] sm:$0xff]
        %v5356 = vld [vmem:[#allocation8 + $0x120] sm:$0xff]
        %v5357 = vld [vmem:[#allocation8 + $0x128] sm:$0xff]
        %v5358 = vld [vmem:[#allocation8 + $0x130] sm:$0xff]
        %v5359 = vld [vmem:[#allocation8 + $0x138] sm:$0xff]
        %v5360 = vld [vmem:[#allocation8 + $0x140] sm:$0xff]
        %v5361 = vld [vmem:[#allocation8 + $0x148] sm:$0xff]
        %v5362 = vld [vmem:[#allocation8 + $0x150] sm:$0xff]
        %v5363 = vld [vmem:[#allocation8 + $0x158] sm:$0xff]
        %v5364 = vld [vmem:[#allocation8 + $0x160] sm:$0xff]
        %v5365 = vld [vmem:[#allocation8 + $0x168] sm:$0xff]
        %v5366 = vld [vmem:[#allocation8 + $0x170] sm:$0xff]
        %v5367 = vld [vmem:[#allocation8 + $0x178] sm:$0xff]
        %v5368 = vld [vmem:[#allocation8 + $0x180] sm:$0xff]
        %v5369 = vld [vmem:[#allocation8 + $0x188] sm:$0xff]
        %v5370 = vld [vmem:[#allocation8 + $0x190] sm:$0xff]
        %v5371 = vld [vmem:[#allocation8 + $0x198] sm:$0xff]
        %v5372 = vld [vmem:[#allocation8 + $0x1a0] sm:$0xff]
        %v5373 = vld [vmem:[#allocation8 + $0x1a8] sm:$0xff]
        %v5374 = vld [vmem:[#allocation8 + $0x1b0] sm:$0xff]
        %v5375 = vld [vmem:[#allocation8 + $0x1b8] sm:$0xff]
        %v5376 = vld [vmem:[#allocation8 + $0x1c0] sm:$0xff]
        %v5377 = vld [vmem:[#allocation8 + $0x1c8] sm:$0xff]
        %v5378 = vld [vmem:[#allocation8 + $0x1d0] sm:$0xff]
        %v5379 = vld [vmem:[#allocation8 + $0x1d8] sm:$0xff]
        %v5380 = vld [vmem:[#allocation8 + $0x1e0] sm:$0xff]
        %v5381 = vld [vmem:[#allocation8 + $0x1e8] sm:$0xff]
        %v5382 = vld [vmem:[#allocation8 + $0x1f0] sm:$0xff]
        %v5383 = vld [vmem:[#allocation8 + $0x1f8] sm:$0xff]
        %v5384 = vld [vmem:[#allocation8 + $0x200] sm:$0xff]
        %v5385 = vld [vmem:[#allocation8 + $0x208] sm:$0xff]
        %v5386 = vld [vmem:[#allocation8 + $0x210] sm:$0xff]
        %v5387 = vld [vmem:[#allocation8 + $0x218] sm:$0xff]
        %v5388 = vld [vmem:[#allocation8 + $0x220] sm:$0xff]
        %v5389 = vld [vmem:[#allocation8 + $0x228] sm:$0xff]
        %v5390 = vld [vmem:[#allocation8 + $0x230] sm:$0xff]
        %v5391 = vld [vmem:[#allocation8 + $0x238] sm:$0xff]
        %v5392 = vld [vmem:[#allocation8 + $0x240] sm:$0xff]
        %v5393 = vld [vmem:[#allocation8 + $0x248] sm:$0xff]
        %v5394 = vld [vmem:[#allocation8 + $0x250] sm:$0xff]
        %v5395 = vld [vmem:[#allocation8 + $0x258] sm:$0xff]
        %v5396 = vld [vmem:[#allocation8 + $0x260] sm:$0xff]
        %v5397 = vld [vmem:[#allocation8 + $0x268] sm:$0xff]
        %v5398 = vld [vmem:[#allocation8 + $0x270] sm:$0xff]
        %v5399 = vld [vmem:[#allocation8 + $0x278] sm:$0xff]
        %v5400 = vld [vmem:[#allocation8 + $0x280] sm:$0xff]
        %v5401 = vld [vmem:[#allocation8 + $0x288] sm:$0xff]
        %v5402 = vld [vmem:[#allocation8 + $0x290] sm:$0xff]
        %v5403 = vld [vmem:[#allocation8 + $0x298] sm:$0xff]
        %v5404 = vld [vmem:[#allocation8 + $0x2a0] sm:$0xff]
        %v5405 = vld [vmem:[#allocation8 + $0x2a8] sm:$0xff]
        %v5406 = vld [vmem:[#allocation8 + $0x2b0] sm:$0xff]
        %v5407 = vld [vmem:[#allocation8 + $0x2b8] sm:$0xff]
        %v5408 = vld [vmem:[#allocation8 + $0x2c0] sm:$0xff]
        %v5409 = vld [vmem:[#allocation8 + $0x2c8] sm:$0xff]
        %v5410 = vld [vmem:[#allocation8 + $0x2d0] sm:$0xff]
        %v5411 = vld [vmem:[#allocation8 + $0x2d8] sm:$0xff]
        %v5412 = vld [vmem:[#allocation8 + $0x2e0] sm:$0xff]
        %v5413 = vld [vmem:[#allocation8 + $0x2e8] sm:$0xff]
        %v5414 = vld [vmem:[#allocation8 + $0x2f0] sm:$0xff]
        %v5415 = vld [vmem:[#allocation8 + $0x2f8] sm:$0xff]
        %v5416 = vld [vmem:[#allocation8 + $0x300] sm:$0xff]
        %v5417 = vld [vmem:[#allocation8 + $0x308] sm:$0xff]
        %v5418 = vld [vmem:[#allocation8 + $0x310] sm:$0xff]
        %v5419 = vld [vmem:[#allocation8 + $0x318] sm:$0xff]
        %v5420 = vld [vmem:[#allocation8 + $0x320] sm:$0xff]
        %v5421 = vld [vmem:[#allocation8 + $0x328] sm:$0xff]
        %v5422 = vld [vmem:[#allocation8 + $0x330] sm:$0xff]
        %v5423 = vld [vmem:[#allocation8 + $0x338] sm:$0xff]
        %v5424 = vld [vmem:[#allocation8 + $0x340] sm:$0xff]
        %v5425 = vld [vmem:[#allocation8 + $0x348] sm:$0xff]
        %v5426 = vld [vmem:[#allocation8 + $0x350] sm:$0xff]
        %v5427 = vld [vmem:[#allocation8 + $0x358] sm:$0xff]
        %v5428 = vld [vmem:[#allocation8 + $0x360] sm:$0xff]
        %v5429 = vld [vmem:[#allocation8 + $0x368] sm:$0xff]
        %v5430 = vld [vmem:[#allocation8 + $0x370] sm:$0xff]
        %v5431 = vld [vmem:[#allocation8 + $0x378] sm:$0xff]
        %v5432 = vld [vmem:[#allocation8 + $0x380] sm:$0xff]
        %v5433 = vld [vmem:[#allocation8 + $0x388] sm:$0xff]
        %v5434 = vld [vmem:[#allocation8 + $0x390] sm:$0xff]
        %v5435 = vld [vmem:[#allocation8 + $0x398] sm:$0xff]
        %v5436 = vld [vmem:[#allocation8 + $0x3a0] sm:$0xff]
        %v5437 = vld [vmem:[#allocation8 + $0x3a8] sm:$0xff]
        %v5438 = vld [vmem:[#allocation8 + $0x3b0] sm:$0xff]
        %v5439 = vld [vmem:[#allocation8 + $0x3b8] sm:$0xff]
        %v5440 = vld [vmem:[#allocation8 + $0x3c0] sm:$0xff]
        %v5441 = vld [vmem:[#allocation8 + $0x3c8] sm:$0xff]
        %v5442 = vld [vmem:[#allocation8 + $0x3d0] sm:$0xff]
        %v5443 = vld [vmem:[#allocation8 + $0x3d8] sm:$0xff]
        %v5444 = vld [vmem:[#allocation8 + $0x3e0] sm:$0xff]
        %v5445 = vld [vmem:[#allocation8 + $0x3e8] sm:$0xff]
        %v5446 = vld [vmem:[#allocation8 + $0x3f0] sm:$0xff]
        %v5447 = vld [vmem:[#allocation8 + $0x3f8] sm:$0xff]
        %v5448 = vld [vmem:[#allocation8 + $0x400] sm:$0xff]
        %v5449 = vld [vmem:[#allocation8 + $0x408] sm:$0xff]
        %v5450 = vld [vmem:[#allocation8 + $0x410] sm:$0xff]
        %v5451 = vld [vmem:[#allocation8 + $0x418] sm:$0xff]
        %v5452 = vld [vmem:[#allocation8 + $0x420] sm:$0xff]
        %v5453 = vld [vmem:[#allocation8 + $0x428] sm:$0xff]
        %v5454 = vld [vmem:[#allocation8 + $0x430] sm:$0xff]
        %v5455 = vld [vmem:[#allocation8 + $0x438] sm:$0xff]
        %v5456 = vld [vmem:[#allocation8 + $0x440] sm:$0xff]
        %v5457 = vld [vmem:[#allocation8 + $0x448] sm:$0xff]
        %v5458 = vld [vmem:[#allocation8 + $0x450] sm:$0xff]
        %v5459 = vld [vmem:[#allocation8 + $0x458] sm:$0xff]
        %v5460 = vld [vmem:[#allocation8 + $0x460] sm:$0xff]
        %v5461 = vld [vmem:[#allocation8 + $0x468] sm:$0xff]
        %v5462 = vld [vmem:[#allocation8 + $0x470] sm:$0xff]
        %v5463 = vld [vmem:[#allocation8 + $0x478] sm:$0xff]
        %v5464 = vld [vmem:[#allocation8 + $0x480] sm:$0xff]
        %v5465 = vld [vmem:[#allocation8 + $0x488] sm:$0xff]
        %v5466 = vld [vmem:[#allocation8 + $0x490] sm:$0xff]
        %v5467 = vld [vmem:[#allocation8 + $0x498] sm:$0xff]
        %v5468 = vld [vmem:[#allocation8 + $0x4a0] sm:$0xff]
        %v5469 = vld [vmem:[#allocation8 + $0x4a8] sm:$0xff]
        %v5470 = vld [vmem:[#allocation8 + $0x4b0] sm:$0xff]
        %v5471 = vld [vmem:[#allocation8 + $0x4b8] sm:$0xff]
        %v5472 = vld [vmem:[#allocation8 + $0x4c0] sm:$0xff]
        %v5473 = vld [vmem:[#allocation8 + $0x4c8] sm:$0xff]
        %v5474 = vld [vmem:[#allocation8 + $0x4d0] sm:$0xff]
        %v5475 = vld [vmem:[#allocation8 + $0x4d8] sm:$0xff]
        %v5476 = vld [vmem:[#allocation8 + $0x4e0] sm:$0xff]
        %v5477 = vld [vmem:[#allocation8 + $0x4e8] sm:$0xff]
        %v5478 = vld [vmem:[#allocation8 + $0x4f0] sm:$0xff]
        %v5479 = vld [vmem:[#allocation8 + $0x4f8] sm:$0xff]
        %v5480 = vld [vmem:[#allocation8 + $0x500] sm:$0xff]
        %v5481 = vld [vmem:[#allocation8 + $0x508] sm:$0xff]
        %v5482 = vld [vmem:[#allocation8 + $0x510] sm:$0xff]
        %v5483 = vld [vmem:[#allocation8 + $0x518] sm:$0xff]
        %v5484 = vld [vmem:[#allocation8 + $0x520] sm:$0xff]
        %v5485 = vld [vmem:[#allocation8 + $0x528] sm:$0xff]
        %v5486 = vld [vmem:[#allocation8 + $0x530] sm:$0xff]
        %v5487 = vld [vmem:[#allocation8 + $0x538] sm:$0xff]
        %v5488 = vld [vmem:[#allocation8 + $0x540] sm:$0xff]
        %v5489 = vld [vmem:[#allocation8 + $0x548] sm:$0xff]
        %v5490 = vld [vmem:[#allocation8 + $0x550] sm:$0xff]
        %v5491 = vld [vmem:[#allocation8 + $0x558] sm:$0xff]
        %v5492 = vld [vmem:[#allocation8 + $0x560] sm:$0xff]
        %v5493 = vld [vmem:[#allocation8 + $0x568] sm:$0xff]
        %v5494 = vld [vmem:[#allocation8 + $0x570] sm:$0xff]
        %v5495 = vld [vmem:[#allocation8 + $0x578] sm:$0xff]
        %v5496 = vld [vmem:[#allocation8 + $0x580] sm:$0xff]
        %v5497 = vld [vmem:[#allocation8 + $0x588] sm:$0xff]
        %v5498 = vld [vmem:[#allocation8 + $0x590] sm:$0xff]
        %v5499 = vld [vmem:[#allocation8 + $0x598] sm:$0xff]
        %v5500 = vld [vmem:[#allocation8 + $0x5a0] sm:$0xff]
        %v5501 = vld [vmem:[#allocation8 + $0x5a8] sm:$0xff]
        %v5502 = vld [vmem:[#allocation8 + $0x5b0] sm:$0xff]
        %v5503 = vld [vmem:[#allocation8 + $0x5b8] sm:$0xff]
        %v5504 = vld [vmem:[#allocation8 + $0x5c0] sm:$0xff]
        %v5505 = vld [vmem:[#allocation8 + $0x5c8] sm:$0xff]
        %v5506 = vld [vmem:[#allocation8 + $0x5d0] sm:$0xff]
        %v5507 = vld [vmem:[#allocation8 + $0x5d8] sm:$0xff]
        %v5508 = vld [vmem:[#allocation8 + $0x5e0] sm:$0xff]
        %v5509 = vld [vmem:[#allocation8 + $0x5e8] sm:$0xff]
        %v5510 = vld [vmem:[#allocation8 + $0x5f0] sm:$0xff]
        %v5511 = vld [vmem:[#allocation8 + $0x5f8] sm:$0xff]
        %v5512 = vld [vmem:[#allocation8 + $0x600] sm:$0xff]
        %v5513 = vld [vmem:[#allocation8 + $0x608] sm:$0xff]
        %v5514 = vld [vmem:[#allocation8 + $0x610] sm:$0xff]
        %v5515 = vld [vmem:[#allocation8 + $0x618] sm:$0xff]
        %v5516 = vld [vmem:[#allocation8 + $0x620] sm:$0xff]
        %v5517 = vld [vmem:[#allocation8 + $0x628] sm:$0xff]
        %v5518 = vld [vmem:[#allocation8 + $0x630] sm:$0xff]
        %v5519 = vld [vmem:[#allocation8 + $0x638] sm:$0xff]
        %v5520 = vld [vmem:[#allocation8 + $0x640] sm:$0xff]
        %v5521 = vld [vmem:[#allocation8 + $0x648] sm:$0xff]
        %v5522 = vld [vmem:[#allocation8 + $0x650] sm:$0xff]
        %v5523 = vld [vmem:[#allocation8 + $0x658] sm:$0xff]
        %v5524 = vld [vmem:[#allocation8 + $0x660] sm:$0xff]
        %v5525 = vld [vmem:[#allocation8 + $0x668] sm:$0xff]
        %v5526 = vld [vmem:[#allocation8 + $0x670] sm:$0xff]
        %v5527 = vld [vmem:[#allocation8 + $0x678] sm:$0xff]
        %v5528 = vld [vmem:[#allocation8 + $0x680] sm:$0xff]
        %v5529 = vld [vmem:[#allocation8 + $0x688] sm:$0xff]
        %v5530 = vld [vmem:[#allocation8 + $0x690] sm:$0xff]
        %v5531 = vld [vmem:[#allocation8 + $0x698] sm:$0xff]
        %v5532 = vld [vmem:[#allocation8 + $0x6a0] sm:$0xff]
        %v5533 = vld [vmem:[#allocation8 + $0x6a8] sm:$0xff]
        %v5534 = vld [vmem:[#allocation8 + $0x6b0] sm:$0xff]
        %v5535 = vld [vmem:[#allocation8 + $0x6b8] sm:$0xff]
        %v5536 = vld [vmem:[#allocation8 + $0x6c0] sm:$0xff]
        %v5537 = vld [vmem:[#allocation8 + $0x6c8] sm:$0xff]
        %v5538 = vld [vmem:[#allocation8 + $0x6d0] sm:$0xff]
        %v5539 = vld [vmem:[#allocation8 + $0x6d8] sm:$0xff]
        %v5540 = vld [vmem:[#allocation8 + $0x6e0] sm:$0xff]
        %v5541 = vld [vmem:[#allocation8 + $0x6e8] sm:$0xff]
        %v5542 = vld [vmem:[#allocation8 + $0x6f0] sm:$0xff]
        %v5543 = vld [vmem:[#allocation8 + $0x6f8] sm:$0xff]
        %v5544 = vld [vmem:[#allocation8 + $0x700] sm:$0xff]
        %v5545 = vld [vmem:[#allocation8 + $0x708] sm:$0xff]
        %v5546 = vld [vmem:[#allocation8 + $0x710] sm:$0xff]
        %v5547 = vld [vmem:[#allocation8 + $0x718] sm:$0xff]
        %v5548 = vld [vmem:[#allocation8 + $0x720] sm:$0xff]
        %v5549 = vld [vmem:[#allocation8 + $0x728] sm:$0xff]
        %v5550 = vld [vmem:[#allocation8 + $0x730] sm:$0xff]
        %v5551 = vld [vmem:[#allocation8 + $0x738] sm:$0xff]
        %v5552 = vld [vmem:[#allocation8 + $0x740] sm:$0xff]
        %v5553 = vld [vmem:[#allocation8 + $0x748] sm:$0xff]
        %v5554 = vld [vmem:[#allocation8 + $0x750] sm:$0xff]
        %v5555 = vld [vmem:[#allocation8 + $0x758] sm:$0xff]
        %v5556 = vld [vmem:[#allocation8 + $0x760] sm:$0xff]
        %v5557 = vld [vmem:[#allocation8 + $0x768] sm:$0xff]
        %v5558 = vld [vmem:[#allocation8 + $0x770] sm:$0xff]
        %v5559 = vld [vmem:[#allocation8 + $0x778] sm:$0xff]
        %v5560 = vld [vmem:[#allocation8 + $0x780] sm:$0xff]
        %v5561 = vld [vmem:[#allocation8 + $0x788] sm:$0xff]
        %v5562 = vld [vmem:[#allocation8 + $0x790] sm:$0xff]
        %v5563 = vld [vmem:[#allocation8 + $0x798] sm:$0xff]
        %v5564 = vld [vmem:[#allocation8 + $0x7a0] sm:$0xff]
        %v5565 = vld [vmem:[#allocation8 + $0x7a8] sm:$0xff]
        %v5566 = vld [vmem:[#allocation8 + $0x7b0] sm:$0xff]
        %v5567 = vld [vmem:[#allocation8 + $0x7b8] sm:$0xff]
        %v5568 = vld [vmem:[#allocation8 + $0x7c0] sm:$0xff]
        %v5569 = vld [vmem:[#allocation8 + $0x7c8] sm:$0xff]
        %v5570 = vld [vmem:[#allocation8 + $0x7d0] sm:$0xff]
        %v5571 = vld [vmem:[#allocation8 + $0x7d8] sm:$0xff]
        %v5572 = vld [vmem:[#allocation8 + $0x7e0] sm:$0xff]
        %v5573 = vld [vmem:[#allocation8 + $0x7e8] sm:$0xff]
        %v5574 = vld [vmem:[#allocation8 + $0x7f0] sm:$0xff]
        %v5575 = vld [vmem:[#allocation8 + $0x7f8] sm:$0xff]
        %v5576 = vld [vmem:[#allocation8 + $0x800] sm:$0xff]
        %v5577 = vld [vmem:[#allocation8 + $0x808] sm:$0xff]
        %v5578 = vld [vmem:[#allocation8 + $0x810] sm:$0xff]
        %v5579 = vld [vmem:[#allocation8 + $0x818] sm:$0xff]
        %v5580 = vld [vmem:[#allocation8 + $0x820] sm:$0xff]
        %v5581 = vld [vmem:[#allocation8 + $0x828] sm:$0xff]
        %v5582 = vld [vmem:[#allocation8 + $0x830] sm:$0xff]
        %v5583 = vld [vmem:[#allocation8 + $0x838] sm:$0xff]
        %v5584 = vld [vmem:[#allocation8 + $0x840] sm:$0xff]
        %v5585 = vld [vmem:[#allocation8 + $0x848] sm:$0xff]
        %v5586 = vld [vmem:[#allocation8 + $0x850] sm:$0xff]
        %v5587 = vld [vmem:[#allocation8 + $0x858] sm:$0xff]
        %v5588 = vld [vmem:[#allocation8 + $0x860] sm:$0xff]
        %v5589 = vld [vmem:[#allocation8 + $0x868] sm:$0xff]
        %v5590 = vld [vmem:[#allocation8 + $0x870] sm:$0xff]
        %v5591 = vld [vmem:[#allocation8 + $0x878] sm:$0xff]
        %v5592 = vld [vmem:[#allocation8 + $0x880] sm:$0xff]
        %v5593 = vld [vmem:[#allocation8 + $0x888] sm:$0xff]
        %v5594 = vld [vmem:[#allocation8 + $0x890] sm:$0xff]
        %v5595 = vld [vmem:[#allocation8 + $0x898] sm:$0xff]
        %v5596 = vld [vmem:[#allocation8 + $0x8a0] sm:$0xff]
        %v5597 = vld [vmem:[#allocation8 + $0x8a8] sm:$0xff]
        %v5598 = vld [vmem:[#allocation8 + $0x8b0] sm:$0xff]
        %v5599 = vld [vmem:[#allocation8 + $0x8b8] sm:$0xff]
        %v5600 = vld [vmem:[#allocation8 + $0x8c0] sm:$0xff]
        %v5601 = vld [vmem:[#allocation8 + $0x8c8] sm:$0xff]
        %v5602 = vld [vmem:[#allocation8 + $0x8d0] sm:$0xff]
        %v5603 = vld [vmem:[#allocation8 + $0x8d8] sm:$0xff]
        %v5604 = vld [vmem:[#allocation8 + $0x8e0] sm:$0xff]
        %v5605 = vld [vmem:[#allocation8 + $0x8e8] sm:$0xff]
        %v5606 = vld [vmem:[#allocation8 + $0x8f0] sm:$0xff]
        %v5607 = vld [vmem:[#allocation8 + $0x8f8] sm:$0xff]
        %v5608 = vld [vmem:[#allocation8 + $0x900] sm:$0xff]
        %v5609 = vld [vmem:[#allocation8 + $0x908] sm:$0xff]
        %v5610 = vld [vmem:[#allocation8 + $0x910] sm:$0xff]
        %v5611 = vld [vmem:[#allocation8 + $0x918] sm:$0xff]
        %v5612 = vld [vmem:[#allocation8 + $0x920] sm:$0xff]
        %v5613 = vld [vmem:[#allocation8 + $0x928] sm:$0xff]
        %v5614 = vld [vmem:[#allocation8 + $0x930] sm:$0xff]
        %v5615 = vld [vmem:[#allocation8 + $0x938] sm:$0xff]
        %v5616 = vld [vmem:[#allocation8 + $0x940] sm:$0xff]
        %v5617 = vld [vmem:[#allocation8 + $0x948] sm:$0xff]
        %v5618 = vld [vmem:[#allocation8 + $0x950] sm:$0xff]
        %v5619 = vld [vmem:[#allocation8 + $0x958] sm:$0xff]
        %v5620 = vld [vmem:[#allocation8 + $0x960] sm:$0xff]
        %v5621 = vld [vmem:[#allocation8 + $0x968] sm:$0xff]
        %v5622 = vld [vmem:[#allocation8 + $0x970] sm:$0xff]
        %v5623 = vld [vmem:[#allocation8 + $0x978] sm:$0xff]
        %v5624 = vld [vmem:[#allocation8 + $0x980] sm:$0xff]
        %v5625 = vld [vmem:[#allocation8 + $0x988] sm:$0xff]
        %v5626 = vld [vmem:[#allocation8 + $0x990] sm:$0xff]
        %v5627 = vld [vmem:[#allocation8 + $0x998] sm:$0xff]
        %v5628 = vld [vmem:[#allocation8 + $0x9a0] sm:$0xff]
        %v5629 = vld [vmem:[#allocation8 + $0x9a8] sm:$0xff]
        %v5630 = vld [vmem:[#allocation8 + $0x9b0] sm:$0xff]
        %v5631 = vld [vmem:[#allocation8 + $0x9b8] sm:$0xff]
        %v5632 = vld [vmem:[#allocation8 + $0x9c0] sm:$0xff]
        %v5633 = vld [vmem:[#allocation8 + $0x9c8] sm:$0xff]
        %v5634 = vld [vmem:[#allocation8 + $0x9d0] sm:$0xff]
        %v5635 = vld [vmem:[#allocation8 + $0x9d8] sm:$0xff]
        %v5636 = vld [vmem:[#allocation8 + $0x9e0] sm:$0xff]
        %v5637 = vld [vmem:[#allocation8 + $0x9e8] sm:$0xff]
        %v5638 = vld [vmem:[#allocation8 + $0x9f0] sm:$0xff]
        %v5639 = vld [vmem:[#allocation8 + $0x9f8] sm:$0xff]
        %v5640 = vld [vmem:[#allocation8 + $0xa00] sm:$0xff]
        %v5641 = vld [vmem:[#allocation8 + $0xa08] sm:$0xff]
        %v5642 = vld [vmem:[#allocation8 + $0xa10] sm:$0xff]
        %v5643 = vld [vmem:[#allocation8 + $0xa18] sm:$0xff]
        %v5644 = vld [vmem:[#allocation8 + $0xa20] sm:$0xff]
        %v5645 = vld [vmem:[#allocation8 + $0xa28] sm:$0xff]
        %v5646 = vld [vmem:[#allocation8 + $0xa30] sm:$0xff]
        %v5647 = vld [vmem:[#allocation8 + $0xa38] sm:$0xff]
        %v5648 = vld [vmem:[#allocation8 + $0xa40] sm:$0xff]
        %v5649 = vld [vmem:[#allocation8 + $0xa48] sm:$0xff]
        %v5650 = vld [vmem:[#allocation8 + $0xa50] sm:$0xff]
        %v5651 = vld [vmem:[#allocation8 + $0xa58] sm:$0xff]
        %v5652 = vld [vmem:[#allocation8 + $0xa60] sm:$0xff]
        %v5653 = vld [vmem:[#allocation8 + $0xa68] sm:$0xff]
        %v5654 = vld [vmem:[#allocation8 + $0xa70] sm:$0xff]
        %v5655 = vld [vmem:[#allocation8 + $0xa78] sm:$0xff]
        %v5656 = vld [vmem:[#allocation8 + $0xa80] sm:$0xff]
        %v5657 = vld [vmem:[#allocation8 + $0xa88] sm:$0xff]
        %v5658 = vld [vmem:[#allocation8 + $0xa90] sm:$0xff]
        %v5659 = vld [vmem:[#allocation8 + $0xa98] sm:$0xff]
        %v5660 = vld [vmem:[#allocation8 + $0xaa0] sm:$0xff]
        %v5661 = vld [vmem:[#allocation8 + $0xaa8] sm:$0xff]
        %v5662 = vld [vmem:[#allocation8 + $0xab0] sm:$0xff]
        %v5663 = vld [vmem:[#allocation8 + $0xab8] sm:$0xff]
        %v5664 = vld [vmem:[#allocation8 + $0xac0] sm:$0xff]
        %v5665 = vld [vmem:[#allocation8 + $0xac8] sm:$0xff]
        %v5666 = vld [vmem:[#allocation8 + $0xad0] sm:$0xff]
        %v5667 = vld [vmem:[#allocation8 + $0xad8] sm:$0xff]
        %v5668 = vld [vmem:[#allocation8 + $0xae0] sm:$0xff]
        %v5669 = vld [vmem:[#allocation8 + $0xae8] sm:$0xff]
        %v5670 = vld [vmem:[#allocation8 + $0xaf0] sm:$0xff]
        %v5671 = vld [vmem:[#allocation8 + $0xaf8] sm:$0xff]
        %v5672 = vld [vmem:[#allocation8 + $0xb00] sm:$0xff]
        %v5673 = vld [vmem:[#allocation8 + $0xb08] sm:$0xff]
        %v5674 = vld [vmem:[#allocation8 + $0xb10] sm:$0xff]
        %v5675 = vld [vmem:[#allocation8 + $0xb18] sm:$0xff]
        %v5676 = vld [vmem:[#allocation8 + $0xb20] sm:$0xff]
        %v5677 = vld [vmem:[#allocation8 + $0xb28] sm:$0xff]
        %v5678 = vld [vmem:[#allocation8 + $0xb30] sm:$0xff]
        %v5679 = vld [vmem:[#allocation8 + $0xb38] sm:$0xff]
        %v5680 = vld [vmem:[#allocation8 + $0xb40] sm:$0xff]
        %v5681 = vld [vmem:[#allocation8 + $0xb48] sm:$0xff]
        %v5682 = vld [vmem:[#allocation8 + $0xb50] sm:$0xff]
        %v5683 = vld [vmem:[#allocation8 + $0xb58] sm:$0xff]
        %v5684 = vld [vmem:[#allocation8 + $0xb60] sm:$0xff]
        %v5685 = vld [vmem:[#allocation8 + $0xb68] sm:$0xff]
        %v5686 = vld [vmem:[#allocation8 + $0xb70] sm:$0xff]
        %v5687 = vld [vmem:[#allocation8 + $0xb78] sm:$0xff]
        %v5688 = vld [vmem:[#allocation8 + $0xb80] sm:$0xff]
        %v5689 = vld [vmem:[#allocation8 + $0xb88] sm:$0xff]
        %v5690 = vld [vmem:[#allocation8 + $0xb90] sm:$0xff]
        %v5691 = vld [vmem:[#allocation8 + $0xb98] sm:$0xff]
        %v5692 = vld [vmem:[#allocation8 + $0xba0] sm:$0xff]
        %v5693 = vld [vmem:[#allocation8 + $0xba8] sm:$0xff]
        %v5694 = vld [vmem:[#allocation8 + $0xbb0] sm:$0xff]
        %v5695 = vld [vmem:[#allocation8 + $0xbb8] sm:$0xff]
        %v5696 = vld [vmem:[#allocation8 + $0xbc0] sm:$0xff]
        %v5697 = vld [vmem:[#allocation8 + $0xbc8] sm:$0xff]
        %v5698 = vld [vmem:[#allocation8 + $0xbd0] sm:$0xff]
        %v5699 = vld [vmem:[#allocation8 + $0xbd8] sm:$0xff]
        %v5700 = vld [vmem:[#allocation8 + $0xbe0] sm:$0xff]
        %v5701 = vld [vmem:[#allocation8 + $0xbe8] sm:$0xff]
        %v5702 = vld [vmem:[#allocation8 + $0xbf0] sm:$0xff]
        %v5703 = vld [vmem:[#allocation8 + $0xbf8] sm:$0xff]
        %v5704 = vld [vmem:[#allocation8 + $0xc00] sm:$0xff]
        %v5705 = vld [vmem:[#allocation8 + $0xc08] sm:$0xff]
        %v5706 = vld [vmem:[#allocation8 + $0xc10] sm:$0xff]
        %v5707 = vld [vmem:[#allocation8 + $0xc18] sm:$0xff]
        %v5708 = vld [vmem:[#allocation8 + $0xc20] sm:$0xff]
        %v5709 = vld [vmem:[#allocation8 + $0xc28] sm:$0xff]
        %v5710 = vld [vmem:[#allocation8 + $0xc30] sm:$0xff]
        %v5711 = vld [vmem:[#allocation8 + $0xc38] sm:$0xff]
        %v5712 = vld [vmem:[#allocation8 + $0xc40] sm:$0xff]
        %v5713 = vld [vmem:[#allocation8 + $0xc48] sm:$0xff]
        %v5714 = vld [vmem:[#allocation8 + $0xc50] sm:$0xff]
        %v5715 = vld [vmem:[#allocation8 + $0xc58] sm:$0xff]
        %v5716 = vld [vmem:[#allocation8 + $0xc60] sm:$0xff]
        %v5717 = vld [vmem:[#allocation8 + $0xc68] sm:$0xff]
        %v5718 = vld [vmem:[#allocation8 + $0xc70] sm:$0xff]
        %v5719 = vld [vmem:[#allocation8 + $0xc78] sm:$0xff]
        %v5720 = vld [vmem:[#allocation8 + $0xc80] sm:$0xff]
        %v5721 = vld [vmem:[#allocation8 + $0xc88] sm:$0xff]
        %v5722 = vld [vmem:[#allocation8 + $0xc90] sm:$0xff]
        %v5723 = vld [vmem:[#allocation8 + $0xc98] sm:$0xff]
        %v5724 = vld [vmem:[#allocation8 + $0xca0] sm:$0xff]
        %v5725 = vld [vmem:[#allocation8 + $0xca8] sm:$0xff]
        %v5726 = vld [vmem:[#allocation8 + $0xcb0] sm:$0xff]
        %v5727 = vld [vmem:[#allocation8 + $0xcb8] sm:$0xff]
        %v5728 = vld [vmem:[#allocation8 + $0xcc0] sm:$0xff]
        %v5729 = vld [vmem:[#allocation8 + $0xcc8] sm:$0xff]
        %v5730 = vld [vmem:[#allocation8 + $0xcd0] sm:$0xff]
        %v5731 = vld [vmem:[#allocation8 + $0xcd8] sm:$0xff]
        %v5732 = vld [vmem:[#allocation8 + $0xce0] sm:$0xff]
        %v5733 = vld [vmem:[#allocation8 + $0xce8] sm:$0xff]
        %v5734 = vld [vmem:[#allocation8 + $0xcf0] sm:$0xff]
        %v5735 = vld [vmem:[#allocation8 + $0xcf8] sm:$0xff]
        %v5736 = vld [vmem:[#allocation8 + $0xd00] sm:$0xff]
        %v5737 = vld [vmem:[#allocation8 + $0xd08] sm:$0xff]
        %v5738 = vld [vmem:[#allocation8 + $0xd10] sm:$0xff]
        %v5739 = vld [vmem:[#allocation8 + $0xd18] sm:$0xff]
        %v5740 = vld [vmem:[#allocation8 + $0xd20] sm:$0xff]
        %v5741 = vld [vmem:[#allocation8 + $0xd28] sm:$0xff]
        %v5742 = vld [vmem:[#allocation8 + $0xd30] sm:$0xff]
        %v5743 = vld [vmem:[#allocation8 + $0xd38] sm:$0xff]
        %v5744 = vld [vmem:[#allocation8 + $0xd40] sm:$0xff]
        %v5745 = vld [vmem:[#allocation8 + $0xd48] sm:$0xff]
        %v5746 = vld [vmem:[#allocation8 + $0xd50] sm:$0xff]
        %v5747 = vld [vmem:[#allocation8 + $0xd58] sm:$0xff]
        %v5748 = vld [vmem:[#allocation8 + $0xd60] sm:$0xff]
        %v5749 = vld [vmem:[#allocation8 + $0xd68] sm:$0xff]
        %v5750 = vld [vmem:[#allocation8 + $0xd70] sm:$0xff]
        %v5751 = vld [vmem:[#allocation8 + $0xd78] sm:$0xff]
        %v5752 = vld [vmem:[#allocation8 + $0xd80] sm:$0xff]
        %v5753 = vld [vmem:[#allocation8 + $0xd88] sm:$0xff]
        %v5754 = vld [vmem:[#allocation8 + $0xd90] sm:$0xff]
        %v5755 = vld [vmem:[#allocation8 + $0xd98] sm:$0xff]
        %v5756 = vld [vmem:[#allocation8 + $0xda0] sm:$0xff]
        %v5757 = vld [vmem:[#allocation8 + $0xda8] sm:$0xff]
        %v5758 = vld [vmem:[#allocation8 + $0xdb0] sm:$0xff]
        %v5759 = vld [vmem:[#allocation8 + $0xdb8] sm:$0xff]
        %v5760 = vld [vmem:[#allocation8 + $0xdc0] sm:$0xff]
        %v5761 = vld [vmem:[#allocation8 + $0xdc8] sm:$0xff]
        %v5762 = vld [vmem:[#allocation8 + $0xdd0] sm:$0xff]
        %v5763 = vld [vmem:[#allocation8 + $0xdd8] sm:$0xff]
        %v5764 = vld [vmem:[#allocation8 + $0xde0] sm:$0xff]
        %v5765 = vld [vmem:[#allocation8 + $0xde8] sm:$0xff]
        %v5766 = vld [vmem:[#allocation8 + $0xdf0] sm:$0xff]
        %v5767 = vld [vmem:[#allocation8 + $0xdf8] sm:$0xff]
        %v5768 = vld [vmem:[#allocation8 + $0xe00] sm:$0xff]
        %v5769 = vld [vmem:[#allocation8 + $0xe08] sm:$0xff]
        %v5770 = vld [vmem:[#allocation8 + $0xe10] sm:$0xff]
        %v5771 = vld [vmem:[#allocation8 + $0xe18] sm:$0xff]
        %v5772 = vld [vmem:[#allocation8 + $0xe20] sm:$0xff]
        %v5773 = vld [vmem:[#allocation8 + $0xe28] sm:$0xff]
        %v5774 = vld [vmem:[#allocation8 + $0xe30] sm:$0xff]
        %v5775 = vld [vmem:[#allocation8 + $0xe38] sm:$0xff]
        %v5776 = vld [vmem:[#allocation8 + $0xe40] sm:$0xff]
        %v5777 = vld [vmem:[#allocation8 + $0xe48] sm:$0xff]
        %v5778 = vld [vmem:[#allocation8 + $0xe50] sm:$0xff]
        %v5779 = vld [vmem:[#allocation8 + $0xe58] sm:$0xff]
        %v5780 = vld [vmem:[#allocation8 + $0xe60] sm:$0xff]
        %v5781 = vld [vmem:[#allocation8 + $0xe68] sm:$0xff]
        %v5782 = vld [vmem:[#allocation8 + $0xe70] sm:$0xff]
        %v5783 = vld [vmem:[#allocation8 + $0xe78] sm:$0xff]
        %v5784 = vld [vmem:[#allocation8 + $0xe80] sm:$0xff]
        %v5785 = vld [vmem:[#allocation8 + $0xe88] sm:$0xff]
        %v5786 = vld [vmem:[#allocation8 + $0xe90] sm:$0xff]
        %v5787 = vld [vmem:[#allocation8 + $0xe98] sm:$0xff]
        %v5788 = vld [vmem:[#allocation8 + $0xea0] sm:$0xff]
        %v5789 = vld [vmem:[#allocation8 + $0xea8] sm:$0xff]
        %v5790 = vld [vmem:[#allocation8 + $0xeb0] sm:$0xff]
        %v5791 = vld [vmem:[#allocation8 + $0xeb8] sm:$0xff]
        %v5792 = vld [vmem:[#allocation8 + $0xec0] sm:$0xff]
        %v5793 = vld [vmem:[#allocation8 + $0xec8] sm:$0xff]
        %v5794 = vld [vmem:[#allocation8 + $0xed0] sm:$0xff]
        %v5795 = vld [vmem:[#allocation8 + $0xed8] sm:$0xff]
        %v5796 = vld [vmem:[#allocation8 + $0xee0] sm:$0xff]
        %v5797 = vld [vmem:[#allocation8 + $0xee8] sm:$0xff]
        %v5798 = vld [vmem:[#allocation8 + $0xef0] sm:$0xff]
        %v5799 = vld [vmem:[#allocation8 + $0xef8] sm:$0xff]
        %v5800 = vld [vmem:[#allocation8 + $0xf00] sm:$0xff]
        %v5801 = vld [vmem:[#allocation8 + $0xf08] sm:$0xff]
        %v5802 = vld [vmem:[#allocation8 + $0xf10] sm:$0xff]
        %v5803 = vld [vmem:[#allocation8 + $0xf18] sm:$0xff]
        %v5804 = vld [vmem:[#allocation8 + $0xf20] sm:$0xff]
        %v5805 = vld [vmem:[#allocation8 + $0xf28] sm:$0xff]
        %v5806 = vld [vmem:[#allocation8 + $0xf30] sm:$0xff]
        %v5807 = vld [vmem:[#allocation8 + $0xf38] sm:$0xff]
        %v5808 = vld [vmem:[#allocation8 + $0xf40] sm:$0xff]
        %v5809 = vld [vmem:[#allocation8 + $0xf48] sm:$0xff]
        %v5810 = vld [vmem:[#allocation8 + $0xf50] sm:$0xff]
        %v5811 = vld [vmem:[#allocation8 + $0xf58] sm:$0xff]
        %v5812 = vld [vmem:[#allocation8 + $0xf60] sm:$0xff]
        %v5813 = vld [vmem:[#allocation8 + $0xf68] sm:$0xff]
        %v5814 = vld [vmem:[#allocation8 + $0xf70] sm:$0xff]
        %v5815 = vld [vmem:[#allocation8 + $0xf78] sm:$0xff]
        %v5816 = vld [vmem:[#allocation8 + $0xf80] sm:$0xff]
        %v5817 = vld [vmem:[#allocation8 + $0xf88] sm:$0xff]
        %v5818 = vld [vmem:[#allocation8 + $0xf90] sm:$0xff]
        %v5819 = vld [vmem:[#allocation8 + $0xf98] sm:$0xff]
        %v5820 = vld [vmem:[#allocation8 + $0xfa0] sm:$0xff]
        %v5821 = vld [vmem:[#allocation8 + $0xfa8] sm:$0xff]
        %v5822 = vld [vmem:[#allocation8 + $0xfb0] sm:$0xff]
        %v5823 = vld [vmem:[#allocation8 + $0xfb8] sm:$0xff]
        %v5824 = vld [vmem:[#allocation8 + $0xfc0] sm:$0xff]
        %v5825 = vld [vmem:[#allocation8 + $0xfc8] sm:$0xff]
        %v5826 = vld [vmem:[#allocation8 + $0xfd0] sm:$0xff]
        %v5827 = vld [vmem:[#allocation8 + $0xfd8] sm:$0xff]
        %v5828 = vld [vmem:[#allocation8 + $0xfe0] sm:$0xff]
        %v5829 = vld [vmem:[#allocation8 + $0xfe8] sm:$0xff]
        %v5830 = vld [vmem:[#allocation8 + $0xff0] sm:$0xff]
        %v5831 = vld [vmem:[#allocation8 + $0xff8] sm:$0xff]
        %v5832 = vld [vmem:[#allocation10] sm:$0xff]
        %v5834 = vperm.slane %v5832, 0
        %v5835 = vperm.slane %v5832, 1
        %v5836 = vperm.slane %v5832, 2
        %v5837 = vperm.slane %v5832, 3
        %v5838 = vperm.slane %v5832, 4
        %v5839 = vperm.slane %v5832, 5
        %v5840 = vperm.slane %v5832, 6
        %v5841 = vperm.slane %v5832, 7
        %v6362 = vunpack.c.l.b16 %v5320
        %v6363 = vunpack.c.h.b16 %v5320
        %v6364 = vunpack.c.l.b16 %v5321
        %v6365 = vunpack.c.h.b16 %v5321
        %v6366 = vunpack.c.l.b16 %v5322
        %v6367 = vunpack.c.h.b16 %v5322
        %v6368 = vunpack.c.l.b16 %v5323
        %v6369 = vunpack.c.h.b16 %v5323
        %v6370 = vunpack.c.l.b16 %v5324
        %v6371 = vunpack.c.h.b16 %v5324
        %v6372 = vunpack.c.l.b16 %v5325
        %v6373 = vunpack.c.h.b16 %v5325
        %v6374 = vunpack.c.l.b16 %v5326
        %v6375 = vunpack.c.h.b16 %v5326
        %v6376 = vunpack.c.l.b16 %v5327
        %v6377 = vunpack.c.h.b16 %v5327
        %v6378 = vunpack.c.l.b16 %v5328
        %v6379 = vunpack.c.h.b16 %v5328
        %v6380 = vunpack.c.l.b16 %v5329
        %v6381 = vunpack.c.h.b16 %v5329
        %v6382 = vunpack.c.l.b16 %v5330
        %v6383 = vunpack.c.h.b16 %v5330
        %v6384 = vunpack.c.l.b16 %v5331
        %v6385 = vunpack.c.h.b16 %v5331
        %v6386 = vunpack.c.l.b16 %v5332
        %v6387 = vunpack.c.h.b16 %v5332
        %v6388 = vunpack.c.l.b16 %v5333
        %v6389 = vunpack.c.h.b16 %v5333
        %v6390 = vunpack.c.l.b16 %v5334
        %v6391 = vunpack.c.h.b16 %v5334
        %v6392 = vunpack.c.l.b16 %v5335
        %v6393 = vunpack.c.h.b16 %v5335
        %v6394 = vunpack.c.l.b16 %v5336
        %v6395 = vunpack.c.h.b16 %v5336
        %v6396 = vunpack.c.l.b16 %v5337
        %v6397 = vunpack.c.h.b16 %v5337
        %v6398 = vunpack.c.l.b16 %v5338
        %v6399 = vunpack.c.h.b16 %v5338
        %v6400 = vunpack.c.l.b16 %v5339
        %v6401 = vunpack.c.h.b16 %v5339
        %v6402 = vunpack.c.l.b16 %v5340
        %v6403 = vunpack.c.h.b16 %v5340
        %v6404 = vunpack.c.l.b16 %v5341
        %v6405 = vunpack.c.h.b16 %v5341
        %v6406 = vunpack.c.l.b16 %v5342
        %v6407 = vunpack.c.h.b16 %v5342
        %v6408 = vunpack.c.l.b16 %v5343
        %v6409 = vunpack.c.h.b16 %v5343
        %v6410 = vunpack.c.l.b16 %v5344
        %v6411 = vunpack.c.h.b16 %v5344
        %v6412 = vunpack.c.l.b16 %v5345
        %v6413 = vunpack.c.h.b16 %v5345
        %v6414 = vunpack.c.l.b16 %v5346
        %v6415 = vunpack.c.h.b16 %v5346
        %v6416 = vunpack.c.l.b16 %v5347
        %v6417 = vunpack.c.h.b16 %v5347
        %v6418 = vunpack.c.l.b16 %v5348
        %v6419 = vunpack.c.h.b16 %v5348
        %v6420 = vunpack.c.l.b16 %v5349
        %v6421 = vunpack.c.h.b16 %v5349
        %v6422 = vunpack.c.l.b16 %v5350
        %v6423 = vunpack.c.h.b16 %v5350
        %v6424 = vunpack.c.l.b16 %v5351
        %v6425 = vunpack.c.h.b16 %v5351
        %v6426 = vunpack.c.l.b16 %v5352
        %v6427 = vunpack.c.h.b16 %v5352
        %v6428 = vunpack.c.l.b16 %v5353
        %v6429 = vunpack.c.h.b16 %v5353
        %v6430 = vunpack.c.l.b16 %v5354
        %v6431 = vunpack.c.h.b16 %v5354
        %v6432 = vunpack.c.l.b16 %v5355
        %v6433 = vunpack.c.h.b16 %v5355
        %v6434 = vunpack.c.l.b16 %v5356
        %v6435 = vunpack.c.h.b16 %v5356
        %v6436 = vunpack.c.l.b16 %v5357
        %v6437 = vunpack.c.h.b16 %v5357
        %v6438 = vunpack.c.l.b16 %v5358
        %v6439 = vunpack.c.h.b16 %v5358
        %v6440 = vunpack.c.l.b16 %v5359
        %v6441 = vunpack.c.h.b16 %v5359
        %v6442 = vunpack.c.l.b16 %v5360
        %v6443 = vunpack.c.h.b16 %v5360
        %v6444 = vunpack.c.l.b16 %v5361
        %v6445 = vunpack.c.h.b16 %v5361
        %v6446 = vunpack.c.l.b16 %v5362
        %v6447 = vunpack.c.h.b16 %v5362
        %v6448 = vunpack.c.l.b16 %v5363
        %v6449 = vunpack.c.h.b16 %v5363
        %v6450 = vunpack.c.l.b16 %v5364
        %v6451 = vunpack.c.h.b16 %v5364
        %v6452 = vunpack.c.l.b16 %v5365
        %v6453 = vunpack.c.h.b16 %v5365
        %v6454 = vunpack.c.l.b16 %v5366
        %v6455 = vunpack.c.h.b16 %v5366
        %v6456 = vunpack.c.l.b16 %v5367
        %v6457 = vunpack.c.h.b16 %v5367
        %v6458 = vunpack.c.l.b16 %v5368
        %v6459 = vunpack.c.h.b16 %v5368
        %v6460 = vunpack.c.l.b16 %v5369
        %v6461 = vunpack.c.h.b16 %v5369
        %v6462 = vunpack.c.l.b16 %v5370
        %v6463 = vunpack.c.h.b16 %v5370
        %v6464 = vunpack.c.l.b16 %v5371
        %v6465 = vunpack.c.h.b16 %v5371
        %v6466 = vunpack.c.l.b16 %v5372
        %v6467 = vunpack.c.h.b16 %v5372
        %v6468 = vunpack.c.l.b16 %v5373
        %v6469 = vunpack.c.h.b16 %v5373
        %v6470 = vunpack.c.l.b16 %v5374
        %v6471 = vunpack.c.h.b16 %v5374
        %v6472 = vunpack.c.l.b16 %v5375
        %v6473 = vunpack.c.h.b16 %v5375
        %v6474 = vunpack.c.l.b16 %v5376
        %v6475 = vunpack.c.h.b16 %v5376
        %v6476 = vunpack.c.l.b16 %v5377
        %v6477 = vunpack.c.h.b16 %v5377
        %v6478 = vunpack.c.l.b16 %v5378
        %v6479 = vunpack.c.h.b16 %v5378
        %v6480 = vunpack.c.l.b16 %v5379
        %v6481 = vunpack.c.h.b16 %v5379
        %v6482 = vunpack.c.l.b16 %v5380
        %v6483 = vunpack.c.h.b16 %v5380
        %v6484 = vunpack.c.l.b16 %v5381
        %v6485 = vunpack.c.h.b16 %v5381
        %v6486 = vunpack.c.l.b16 %v5382
        %v6487 = vunpack.c.h.b16 %v5382
        %v6488 = vunpack.c.l.b16 %v5383
        %v6489 = vunpack.c.h.b16 %v5383
        %v6490 = vunpack.c.l.b16 %v5384
        %v6491 = vunpack.c.h.b16 %v5384
        %v6492 = vunpack.c.l.b16 %v5385
        %v6493 = vunpack.c.h.b16 %v5385
        %v6494 = vunpack.c.l.b16 %v5386
        %v6495 = vunpack.c.h.b16 %v5386
        %v6496 = vunpack.c.l.b16 %v5387
        %v6497 = vunpack.c.h.b16 %v5387
        %v6498 = vunpack.c.l.b16 %v5388
        %v6499 = vunpack.c.h.b16 %v5388
        %v6500 = vunpack.c.l.b16 %v5389
        %v6501 = vunpack.c.h.b16 %v5389
        %v6502 = vunpack.c.l.b16 %v5390
        %v6503 = vunpack.c.h.b16 %v5390
        %v6504 = vunpack.c.l.b16 %v5391
        %v6505 = vunpack.c.h.b16 %v5391
        %v6506 = vunpack.c.l.b16 %v5392
        %v6507 = vunpack.c.h.b16 %v5392
        %v6508 = vunpack.c.l.b16 %v5393
        %v6509 = vunpack.c.h.b16 %v5393
        %v6510 = vunpack.c.l.b16 %v5394
        %v6511 = vunpack.c.h.b16 %v5394
        %v6512 = vunpack.c.l.b16 %v5395
        %v6513 = vunpack.c.h.b16 %v5395
        %v6514 = vunpack.c.l.b16 %v5396
        %v6515 = vunpack.c.h.b16 %v5396
        %v6516 = vunpack.c.l.b16 %v5397
        %v6517 = vunpack.c.h.b16 %v5397
        %v6518 = vunpack.c.l.b16 %v5398
        %v6519 = vunpack.c.h.b16 %v5398
        %v6520 = vunpack.c.l.b16 %v5399
        %v6521 = vunpack.c.h.b16 %v5399
        %v6522 = vunpack.c.l.b16 %v5400
        %v6523 = vunpack.c.h.b16 %v5400
        %v6524 = vunpack.c.l.b16 %v5401
        %v6525 = vunpack.c.h.b16 %v5401
        %v6526 = vunpack.c.l.b16 %v5402
        %v6527 = vunpack.c.h.b16 %v5402
        %v6528 = vunpack.c.l.b16 %v5403
        %v6529 = vunpack.c.h.b16 %v5403
        %v6530 = vunpack.c.l.b16 %v5404
        %v6531 = vunpack.c.h.b16 %v5404
        %v6532 = vunpack.c.l.b16 %v5405
        %v6533 = vunpack.c.h.b16 %v5405
        %v6534 = vunpack.c.l.b16 %v5406
        %v6535 = vunpack.c.h.b16 %v5406
        %v6536 = vunpack.c.l.b16 %v5407
        %v6537 = vunpack.c.h.b16 %v5407
        %v6538 = vunpack.c.l.b16 %v5408
        %v6539 = vunpack.c.h.b16 %v5408
        %v6540 = vunpack.c.l.b16 %v5409
        %v6541 = vunpack.c.h.b16 %v5409
        %v6542 = vunpack.c.l.b16 %v5410
        %v6543 = vunpack.c.h.b16 %v5410
        %v6544 = vunpack.c.l.b16 %v5411
        %v6545 = vunpack.c.h.b16 %v5411
        %v6546 = vunpack.c.l.b16 %v5412
        %v6547 = vunpack.c.h.b16 %v5412
        %v6548 = vunpack.c.l.b16 %v5413
        %v6549 = vunpack.c.h.b16 %v5413
        %v6550 = vunpack.c.l.b16 %v5414
        %v6551 = vunpack.c.h.b16 %v5414
        %v6552 = vunpack.c.l.b16 %v5415
        %v6553 = vunpack.c.h.b16 %v5415
        %v6554 = vunpack.c.l.b16 %v5416
        %v6555 = vunpack.c.h.b16 %v5416
        %v6556 = vunpack.c.l.b16 %v5417
        %v6557 = vunpack.c.h.b16 %v5417
        %v6558 = vunpack.c.l.b16 %v5418
        %v6559 = vunpack.c.h.b16 %v5418
        %v6560 = vunpack.c.l.b16 %v5419
        %v6561 = vunpack.c.h.b16 %v5419
        %v6562 = vunpack.c.l.b16 %v5420
        %v6563 = vunpack.c.h.b16 %v5420
        %v6564 = vunpack.c.l.b16 %v5421
        %v6565 = vunpack.c.h.b16 %v5421
        %v6566 = vunpack.c.l.b16 %v5422
        %v6567 = vunpack.c.h.b16 %v5422
        %v6568 = vunpack.c.l.b16 %v5423
        %v6569 = vunpack.c.h.b16 %v5423
        %v6570 = vunpack.c.l.b16 %v5424
        %v6571 = vunpack.c.h.b16 %v5424
        %v6572 = vunpack.c.l.b16 %v5425
        %v6573 = vunpack.c.h.b16 %v5425
        %v6574 = vunpack.c.l.b16 %v5426
        %v6575 = vunpack.c.h.b16 %v5426
        %v6576 = vunpack.c.l.b16 %v5427
        %v6577 = vunpack.c.h.b16 %v5427
        %v6578 = vunpack.c.l.b16 %v5428
        %v6579 = vunpack.c.h.b16 %v5428
        %v6580 = vunpack.c.l.b16 %v5429
        %v6581 = vunpack.c.h.b16 %v5429
        %v6582 = vunpack.c.l.b16 %v5430
        %v6583 = vunpack.c.h.b16 %v5430
        %v6584 = vunpack.c.l.b16 %v5431
        %v6585 = vunpack.c.h.b16 %v5431
        %v6586 = vunpack.c.l.b16 %v5432
        %v6587 = vunpack.c.h.b16 %v5432
        %v6588 = vunpack.c.l.b16 %v5433
        %v6589 = vunpack.c.h.b16 %v5433
        %v6590 = vunpack.c.l.b16 %v5434
        %v6591 = vunpack.c.h.b16 %v5434
        %v6592 = vunpack.c.l.b16 %v5435
        %v6593 = vunpack.c.h.b16 %v5435
        %v6594 = vunpack.c.l.b16 %v5436
        %v6595 = vunpack.c.h.b16 %v5436
        %v6596 = vunpack.c.l.b16 %v5437
        %v6597 = vunpack.c.h.b16 %v5437
        %v6598 = vunpack.c.l.b16 %v5438
        %v6599 = vunpack.c.h.b16 %v5438
        %v6600 = vunpack.c.l.b16 %v5439
        %v6601 = vunpack.c.h.b16 %v5439
        %v6602 = vunpack.c.l.b16 %v5440
        %v6603 = vunpack.c.h.b16 %v5440
        %v6604 = vunpack.c.l.b16 %v5441
        %v6605 = vunpack.c.h.b16 %v5441
        %v6606 = vunpack.c.l.b16 %v5442
        %v6607 = vunpack.c.h.b16 %v5442
        %v6608 = vunpack.c.l.b16 %v5443
        %v6609 = vunpack.c.h.b16 %v5443
        %v6610 = vunpack.c.l.b16 %v5444
        %v6611 = vunpack.c.h.b16 %v5444
        %v6612 = vunpack.c.l.b16 %v5445
        %v6613 = vunpack.c.h.b16 %v5445
        %v6614 = vunpack.c.l.b16 %v5446
        %v6615 = vunpack.c.h.b16 %v5446
        %v6616 = vunpack.c.l.b16 %v5447
        %v6617 = vunpack.c.h.b16 %v5447
        %v6618 = vunpack.c.l.b16 %v5448
        %v6619 = vunpack.c.h.b16 %v5448
        %v6620 = vunpack.c.l.b16 %v5449
        %v6621 = vunpack.c.h.b16 %v5449
        %v6622 = vunpack.c.l.b16 %v5450
        %v6623 = vunpack.c.h.b16 %v5450
        %v6624 = vunpack.c.l.b16 %v5451
        %v6625 = vunpack.c.h.b16 %v5451
        %v6626 = vunpack.c.l.b16 %v5452
        %v6627 = vunpack.c.h.b16 %v5452
        %v6628 = vunpack.c.l.b16 %v5453
        %v6629 = vunpack.c.h.b16 %v5453
        %v6630 = vunpack.c.l.b16 %v5454
        %v6631 = vunpack.c.h.b16 %v5454
        %v6632 = vunpack.c.l.b16 %v5455
        %v6633 = vunpack.c.h.b16 %v5455
        %v6634 = vunpack.c.l.b16 %v5456
        %v6635 = vunpack.c.h.b16 %v5456
        %v6636 = vunpack.c.l.b16 %v5457
        %v6637 = vunpack.c.h.b16 %v5457
        %v6638 = vunpack.c.l.b16 %v5458
        %v6639 = vunpack.c.h.b16 %v5458
        %v6640 = vunpack.c.l.b16 %v5459
        %v6641 = vunpack.c.h.b16 %v5459
        %v6642 = vunpack.c.l.b16 %v5460
        %v6643 = vunpack.c.h.b16 %v5460
        %v6644 = vunpack.c.l.b16 %v5461
        %v6645 = vunpack.c.h.b16 %v5461
        %v6646 = vunpack.c.l.b16 %v5462
        %v6647 = vunpack.c.h.b16 %v5462
        %v6648 = vunpack.c.l.b16 %v5463
        %v6649 = vunpack.c.h.b16 %v5463
        %v6650 = vunpack.c.l.b16 %v5464
        %v6651 = vunpack.c.h.b16 %v5464
        %v6652 = vunpack.c.l.b16 %v5465
        %v6653 = vunpack.c.h.b16 %v5465
        %v6654 = vunpack.c.l.b16 %v5466
        %v6655 = vunpack.c.h.b16 %v5466
        %v6656 = vunpack.c.l.b16 %v5467
        %v6657 = vunpack.c.h.b16 %v5467
        %v6658 = vunpack.c.l.b16 %v5468
        %v6659 = vunpack.c.h.b16 %v5468
        %v6660 = vunpack.c.l.b16 %v5469
        %v6661 = vunpack.c.h.b16 %v5469
        %v6662 = vunpack.c.l.b16 %v5470
        %v6663 = vunpack.c.h.b16 %v5470
        %v6664 = vunpack.c.l.b16 %v5471
        %v6665 = vunpack.c.h.b16 %v5471
        %v6666 = vunpack.c.l.b16 %v5472
        %v6667 = vunpack.c.h.b16 %v5472
        %v6668 = vunpack.c.l.b16 %v5473
        %v6669 = vunpack.c.h.b16 %v5473
        %v6670 = vunpack.c.l.b16 %v5474
        %v6671 = vunpack.c.h.b16 %v5474
        %v6672 = vunpack.c.l.b16 %v5475
        %v6673 = vunpack.c.h.b16 %v5475
        %v6674 = vunpack.c.l.b16 %v5476
        %v6675 = vunpack.c.h.b16 %v5476
        %v6676 = vunpack.c.l.b16 %v5477
        %v6677 = vunpack.c.h.b16 %v5477
        %v6678 = vunpack.c.l.b16 %v5478
        %v6679 = vunpack.c.h.b16 %v5478
        %v6680 = vunpack.c.l.b16 %v5479
        %v6681 = vunpack.c.h.b16 %v5479
        %v6682 = vunpack.c.l.b16 %v5480
        %v6683 = vunpack.c.h.b16 %v5480
        %v6684 = vunpack.c.l.b16 %v5481
        %v6685 = vunpack.c.h.b16 %v5481
        %v6686 = vunpack.c.l.b16 %v5482
        %v6687 = vunpack.c.h.b16 %v5482
        %v6688 = vunpack.c.l.b16 %v5483
        %v6689 = vunpack.c.h.b16 %v5483
        %v6690 = vunpack.c.l.b16 %v5484
        %v6691 = vunpack.c.h.b16 %v5484
        %v6692 = vunpack.c.l.b16 %v5485
        %v6693 = vunpack.c.h.b16 %v5485
        %v6694 = vunpack.c.l.b16 %v5486
        %v6695 = vunpack.c.h.b16 %v5486
        %v6696 = vunpack.c.l.b16 %v5487
        %v6697 = vunpack.c.h.b16 %v5487
        %v6698 = vunpack.c.l.b16 %v5488
        %v6699 = vunpack.c.h.b16 %v5488
        %v6700 = vunpack.c.l.b16 %v5489
        %v6701 = vunpack.c.h.b16 %v5489
        %v6702 = vunpack.c.l.b16 %v5490
        %v6703 = vunpack.c.h.b16 %v5490
        %v6704 = vunpack.c.l.b16 %v5491
        %v6705 = vunpack.c.h.b16 %v5491
        %v6706 = vunpack.c.l.b16 %v5492
        %v6707 = vunpack.c.h.b16 %v5492
        %v6708 = vunpack.c.l.b16 %v5493
        %v6709 = vunpack.c.h.b16 %v5493
        %v6710 = vunpack.c.l.b16 %v5494
        %v6711 = vunpack.c.h.b16 %v5494
        %v6712 = vunpack.c.l.b16 %v5495
        %v6713 = vunpack.c.h.b16 %v5495
        %v6714 = vunpack.c.l.b16 %v5496
        %v6715 = vunpack.c.h.b16 %v5496
        %v6716 = vunpack.c.l.b16 %v5497
        %v6717 = vunpack.c.h.b16 %v5497
        %v6718 = vunpack.c.l.b16 %v5498
        %v6719 = vunpack.c.h.b16 %v5498
        %v6720 = vunpack.c.l.b16 %v5499
        %v6721 = vunpack.c.h.b16 %v5499
        %v6722 = vunpack.c.l.b16 %v5500
        %v6723 = vunpack.c.h.b16 %v5500
        %v6724 = vunpack.c.l.b16 %v5501
        %v6725 = vunpack.c.h.b16 %v5501
        %v6726 = vunpack.c.l.b16 %v5502
        %v6727 = vunpack.c.h.b16 %v5502
        %v6728 = vunpack.c.l.b16 %v5503
        %v6729 = vunpack.c.h.b16 %v5503
        %v6730 = vunpack.c.l.b16 %v5504
        %v6731 = vunpack.c.h.b16 %v5504
        %v6732 = vunpack.c.l.b16 %v5505
        %v6733 = vunpack.c.h.b16 %v5505
        %v6734 = vunpack.c.l.b16 %v5506
        %v6735 = vunpack.c.h.b16 %v5506
        %v6736 = vunpack.c.l.b16 %v5507
        %v6737 = vunpack.c.h.b16 %v5507
        %v6738 = vunpack.c.l.b16 %v5508
        %v6739 = vunpack.c.h.b16 %v5508
        %v6740 = vunpack.c.l.b16 %v5509
        %v6741 = vunpack.c.h.b16 %v5509
        %v6742 = vunpack.c.l.b16 %v5510
        %v6743 = vunpack.c.h.b16 %v5510
        %v6744 = vunpack.c.l.b16 %v5511
        %v6745 = vunpack.c.h.b16 %v5511
        %v6746 = vunpack.c.l.b16 %v5512
        %v6747 = vunpack.c.h.b16 %v5512
        %v6748 = vunpack.c.l.b16 %v5513
        %v6749 = vunpack.c.h.b16 %v5513
        %v6750 = vunpack.c.l.b16 %v5514
        %v6751 = vunpack.c.h.b16 %v5514
        %v6752 = vunpack.c.l.b16 %v5515
        %v6753 = vunpack.c.h.b16 %v5515
        %v6754 = vunpack.c.l.b16 %v5516
        %v6755 = vunpack.c.h.b16 %v5516
        %v6756 = vunpack.c.l.b16 %v5517
        %v6757 = vunpack.c.h.b16 %v5517
        %v6758 = vunpack.c.l.b16 %v5518
        %v6759 = vunpack.c.h.b16 %v5518
        %v6760 = vunpack.c.l.b16 %v5519
        %v6761 = vunpack.c.h.b16 %v5519
        %v6762 = vunpack.c.l.b16 %v5520
        %v6763 = vunpack.c.h.b16 %v5520
        %v6764 = vunpack.c.l.b16 %v5521
        %v6765 = vunpack.c.h.b16 %v5521
        %v6766 = vunpack.c.l.b16 %v5522
        %v6767 = vunpack.c.h.b16 %v5522
        %v6768 = vunpack.c.l.b16 %v5523
        %v6769 = vunpack.c.h.b16 %v5523
        %v6770 = vunpack.c.l.b16 %v5524
        %v6771 = vunpack.c.h.b16 %v5524
        %v6772 = vunpack.c.l.b16 %v5525
        %v6773 = vunpack.c.h.b16 %v5525
        %v6774 = vunpack.c.l.b16 %v5526
        %v6775 = vunpack.c.h.b16 %v5526
        %v6776 = vunpack.c.l.b16 %v5527
        %v6777 = vunpack.c.h.b16 %v5527
        %v6778 = vunpack.c.l.b16 %v5528
        %v6779 = vunpack.c.h.b16 %v5528
        %v6780 = vunpack.c.l.b16 %v5529
        %v6781 = vunpack.c.h.b16 %v5529
        %v6782 = vunpack.c.l.b16 %v5530
        %v6783 = vunpack.c.h.b16 %v5530
        %v6784 = vunpack.c.l.b16 %v5531
        %v6785 = vunpack.c.h.b16 %v5531
        %v6786 = vunpack.c.l.b16 %v5532
        %v6787 = vunpack.c.h.b16 %v5532
        %v6788 = vunpack.c.l.b16 %v5533
        %v6789 = vunpack.c.h.b16 %v5533
        %v6790 = vunpack.c.l.b16 %v5534
        %v6791 = vunpack.c.h.b16 %v5534
        %v6792 = vunpack.c.l.b16 %v5535
        %v6793 = vunpack.c.h.b16 %v5535
        %v6794 = vunpack.c.l.b16 %v5536
        %v6795 = vunpack.c.h.b16 %v5536
        %v6796 = vunpack.c.l.b16 %v5537
        %v6797 = vunpack.c.h.b16 %v5537
        %v6798 = vunpack.c.l.b16 %v5538
        %v6799 = vunpack.c.h.b16 %v5538
        %v6800 = vunpack.c.l.b16 %v5539
        %v6801 = vunpack.c.h.b16 %v5539
        %v6802 = vunpack.c.l.b16 %v5540
        %v6803 = vunpack.c.h.b16 %v5540
        %v6804 = vunpack.c.l.b16 %v5541
        %v6805 = vunpack.c.h.b16 %v5541
        %v6806 = vunpack.c.l.b16 %v5542
        %v6807 = vunpack.c.h.b16 %v5542
        %v6808 = vunpack.c.l.b16 %v5543
        %v6809 = vunpack.c.h.b16 %v5543
        %v6810 = vunpack.c.l.b16 %v5544
        %v6811 = vunpack.c.h.b16 %v5544
        %v6812 = vunpack.c.l.b16 %v5545
        %v6813 = vunpack.c.h.b16 %v5545
        %v6814 = vunpack.c.l.b16 %v5546
        %v6815 = vunpack.c.h.b16 %v5546
        %v6816 = vunpack.c.l.b16 %v5547
        %v6817 = vunpack.c.h.b16 %v5547
        %v6818 = vunpack.c.l.b16 %v5548
        %v6819 = vunpack.c.h.b16 %v5548
        %v6820 = vunpack.c.l.b16 %v5549
        %v6821 = vunpack.c.h.b16 %v5549
        %v6822 = vunpack.c.l.b16 %v5550
        %v6823 = vunpack.c.h.b16 %v5550
        %v6824 = vunpack.c.l.b16 %v5551
        %v6825 = vunpack.c.h.b16 %v5551
        %v6826 = vunpack.c.l.b16 %v5552
        %v6827 = vunpack.c.h.b16 %v5552
        %v6828 = vunpack.c.l.b16 %v5553
        %v6829 = vunpack.c.h.b16 %v5553
        %v6830 = vunpack.c.l.b16 %v5554
        %v6831 = vunpack.c.h.b16 %v5554
        %v6832 = vunpack.c.l.b16 %v5555
        %v6833 = vunpack.c.h.b16 %v5555
        %v6834 = vunpack.c.l.b16 %v5556
        %v6835 = vunpack.c.h.b16 %v5556
        %v6836 = vunpack.c.l.b16 %v5557
        %v6837 = vunpack.c.h.b16 %v5557
        %v6838 = vunpack.c.l.b16 %v5558
        %v6839 = vunpack.c.h.b16 %v5558
        %v6840 = vunpack.c.l.b16 %v5559
        %v6841 = vunpack.c.h.b16 %v5559
        %v6842 = vunpack.c.l.b16 %v5560
        %v6843 = vunpack.c.h.b16 %v5560
        %v6844 = vunpack.c.l.b16 %v5561
        %v6845 = vunpack.c.h.b16 %v5561
        %v6846 = vunpack.c.l.b16 %v5562
        %v6847 = vunpack.c.h.b16 %v5562
        %v6848 = vunpack.c.l.b16 %v5563
        %v6849 = vunpack.c.h.b16 %v5563
        %v6850 = vunpack.c.l.b16 %v5564
        %v6851 = vunpack.c.h.b16 %v5564
        %v6852 = vunpack.c.l.b16 %v5565
        %v6853 = vunpack.c.h.b16 %v5565
        %v6854 = vunpack.c.l.b16 %v5566
        %v6855 = vunpack.c.h.b16 %v5566
        %v6856 = vunpack.c.l.b16 %v5567
        %v6857 = vunpack.c.h.b16 %v5567
        %v6858 = vunpack.c.l.b16 %v5568
        %v6859 = vunpack.c.h.b16 %v5568
        %v6860 = vunpack.c.l.b16 %v5569
        %v6861 = vunpack.c.h.b16 %v5569
        %v6862 = vunpack.c.l.b16 %v5570
        %v6863 = vunpack.c.h.b16 %v5570
        %v6864 = vunpack.c.l.b16 %v5571
        %v6865 = vunpack.c.h.b16 %v5571
        %v6866 = vunpack.c.l.b16 %v5572
        %v6867 = vunpack.c.h.b16 %v5572
        %v6868 = vunpack.c.l.b16 %v5573
        %v6869 = vunpack.c.h.b16 %v5573
        %v6870 = vunpack.c.l.b16 %v5574
        %v6871 = vunpack.c.h.b16 %v5574
        %v6872 = vunpack.c.l.b16 %v5575
        %v6873 = vunpack.c.h.b16 %v5575
        %v6874 = vunpack.c.l.b16 %v5576
        %v6875 = vunpack.c.h.b16 %v5576
        %v6876 = vunpack.c.l.b16 %v5577
        %v6877 = vunpack.c.h.b16 %v5577
        %v6878 = vunpack.c.l.b16 %v5578
        %v6879 = vunpack.c.h.b16 %v5578
        %v6880 = vunpack.c.l.b16 %v5579
        %v6881 = vunpack.c.h.b16 %v5579
        %v6882 = vunpack.c.l.b16 %v5580
        %v6883 = vunpack.c.h.b16 %v5580
        %v6884 = vunpack.c.l.b16 %v5581
        %v6885 = vunpack.c.h.b16 %v5581
        %v6886 = vunpack.c.l.b16 %v5582
        %v6887 = vunpack.c.h.b16 %v5582
        %v6888 = vunpack.c.l.b16 %v5583
        %v6889 = vunpack.c.h.b16 %v5583
        %v6890 = vunpack.c.l.b16 %v5584
        %v6891 = vunpack.c.h.b16 %v5584
        %v6892 = vunpack.c.l.b16 %v5585
        %v6893 = vunpack.c.h.b16 %v5585
        %v6894 = vunpack.c.l.b16 %v5586
        %v6895 = vunpack.c.h.b16 %v5586
        %v6896 = vunpack.c.l.b16 %v5587
        %v6897 = vunpack.c.h.b16 %v5587
        %v6898 = vunpack.c.l.b16 %v5588
        %v6899 = vunpack.c.h.b16 %v5588
        %v6900 = vunpack.c.l.b16 %v5589
        %v6901 = vunpack.c.h.b16 %v5589
        %v6902 = vunpack.c.l.b16 %v5590
        %v6903 = vunpack.c.h.b16 %v5590
        %v6904 = vunpack.c.l.b16 %v5591
        %v6905 = vunpack.c.h.b16 %v5591
        %v6906 = vunpack.c.l.b16 %v5592
        %v6907 = vunpack.c.h.b16 %v5592
        %v6908 = vunpack.c.l.b16 %v5593
        %v6909 = vunpack.c.h.b16 %v5593
        %v6910 = vunpack.c.l.b16 %v5594
        %v6911 = vunpack.c.h.b16 %v5594
        %v6912 = vunpack.c.l.b16 %v5595
        %v6913 = vunpack.c.h.b16 %v5595
        %v6914 = vunpack.c.l.b16 %v5596
        %v6915 = vunpack.c.h.b16 %v5596
        %v6916 = vunpack.c.l.b16 %v5597
        %v6917 = vunpack.c.h.b16 %v5597
        %v6918 = vunpack.c.l.b16 %v5598
        %v6919 = vunpack.c.h.b16 %v5598
        %v6920 = vunpack.c.l.b16 %v5599
        %v6921 = vunpack.c.h.b16 %v5599
        %v6922 = vunpack.c.l.b16 %v5600
        %v6923 = vunpack.c.h.b16 %v5600
        %v6924 = vunpack.c.l.b16 %v5601
        %v6925 = vunpack.c.h.b16 %v5601
        %v6926 = vunpack.c.l.b16 %v5602
        %v6927 = vunpack.c.h.b16 %v5602
        %v6928 = vunpack.c.l.b16 %v5603
        %v6929 = vunpack.c.h.b16 %v5603
        %v6930 = vunpack.c.l.b16 %v5604
        %v6931 = vunpack.c.h.b16 %v5604
        %v6932 = vunpack.c.l.b16 %v5605
        %v6933 = vunpack.c.h.b16 %v5605
        %v6934 = vunpack.c.l.b16 %v5606
        %v6935 = vunpack.c.h.b16 %v5606
        %v6936 = vunpack.c.l.b16 %v5607
        %v6937 = vunpack.c.h.b16 %v5607
        %v6938 = vunpack.c.l.b16 %v5608
        %v6939 = vunpack.c.h.b16 %v5608
        %v6940 = vunpack.c.l.b16 %v5609
        %v6941 = vunpack.c.h.b16 %v5609
        %v6942 = vunpack.c.l.b16 %v5610
        %v6943 = vunpack.c.h.b16 %v5610
        %v6944 = vunpack.c.l.b16 %v5611
        %v6945 = vunpack.c.h.b16 %v5611
        %v6946 = vunpack.c.l.b16 %v5612
        %v6947 = vunpack.c.h.b16 %v5612
        %v6948 = vunpack.c.l.b16 %v5613
        %v6949 = vunpack.c.h.b16 %v5613
        %v6950 = vunpack.c.l.b16 %v5614
        %v6951 = vunpack.c.h.b16 %v5614
        %v6952 = vunpack.c.l.b16 %v5615
        %v6953 = vunpack.c.h.b16 %v5615
        %v6954 = vunpack.c.l.b16 %v5616
        %v6955 = vunpack.c.h.b16 %v5616
        %v6956 = vunpack.c.l.b16 %v5617
        %v6957 = vunpack.c.h.b16 %v5617
        %v6958 = vunpack.c.l.b16 %v5618
        %v6959 = vunpack.c.h.b16 %v5618
        %v6960 = vunpack.c.l.b16 %v5619
        %v6961 = vunpack.c.h.b16 %v5619
        %v6962 = vunpack.c.l.b16 %v5620
        %v6963 = vunpack.c.h.b16 %v5620
        %v6964 = vunpack.c.l.b16 %v5621
        %v6965 = vunpack.c.h.b16 %v5621
        %v6966 = vunpack.c.l.b16 %v5622
        %v6967 = vunpack.c.h.b16 %v5622
        %v6968 = vunpack.c.l.b16 %v5623
        %v6969 = vunpack.c.h.b16 %v5623
        %v6970 = vunpack.c.l.b16 %v5624
        %v6971 = vunpack.c.h.b16 %v5624
        %v6972 = vunpack.c.l.b16 %v5625
        %v6973 = vunpack.c.h.b16 %v5625
        %v6974 = vunpack.c.l.b16 %v5626
        %v6975 = vunpack.c.h.b16 %v5626
        %v6976 = vunpack.c.l.b16 %v5627
        %v6977 = vunpack.c.h.b16 %v5627
        %v6978 = vunpack.c.l.b16 %v5628
        %v6979 = vunpack.c.h.b16 %v5628
        %v6980 = vunpack.c.l.b16 %v5629
        %v6981 = vunpack.c.h.b16 %v5629
        %v6982 = vunpack.c.l.b16 %v5630
        %v6983 = vunpack.c.h.b16 %v5630
        %v6984 = vunpack.c.l.b16 %v5631
        %v6985 = vunpack.c.h.b16 %v5631
        %v6986 = vunpack.c.l.b16 %v5632
        %v6987 = vunpack.c.h.b16 %v5632
        %v6988 = vunpack.c.l.b16 %v5633
        %v6989 = vunpack.c.h.b16 %v5633
        %v6990 = vunpack.c.l.b16 %v5634
        %v6991 = vunpack.c.h.b16 %v5634
        %v6992 = vunpack.c.l.b16 %v5635
        %v6993 = vunpack.c.h.b16 %v5635
        %v6994 = vunpack.c.l.b16 %v5636
        %v6995 = vunpack.c.h.b16 %v5636
        %v6996 = vunpack.c.l.b16 %v5637
        %v6997 = vunpack.c.h.b16 %v5637
        %v6998 = vunpack.c.l.b16 %v5638
        %v6999 = vunpack.c.h.b16 %v5638
        %v7000 = vunpack.c.l.b16 %v5639
        %v7001 = vunpack.c.h.b16 %v5639
        %v7002 = vunpack.c.l.b16 %v5640
        %v7003 = vunpack.c.h.b16 %v5640
        %v7004 = vunpack.c.l.b16 %v5641
        %v7005 = vunpack.c.h.b16 %v5641
        %v7006 = vunpack.c.l.b16 %v5642
        %v7007 = vunpack.c.h.b16 %v5642
        %v7008 = vunpack.c.l.b16 %v5643
        %v7009 = vunpack.c.h.b16 %v5643
        %v7010 = vunpack.c.l.b16 %v5644
        %v7011 = vunpack.c.h.b16 %v5644
        %v7012 = vunpack.c.l.b16 %v5645
        %v7013 = vunpack.c.h.b16 %v5645
        %v7014 = vunpack.c.l.b16 %v5646
        %v7015 = vunpack.c.h.b16 %v5646
        %v7016 = vunpack.c.l.b16 %v5647
        %v7017 = vunpack.c.h.b16 %v5647
        %v7018 = vunpack.c.l.b16 %v5648
        %v7019 = vunpack.c.h.b16 %v5648
        %v7020 = vunpack.c.l.b16 %v5649
        %v7021 = vunpack.c.h.b16 %v5649
        %v7022 = vunpack.c.l.b16 %v5650
        %v7023 = vunpack.c.h.b16 %v5650
        %v7024 = vunpack.c.l.b16 %v5651
        %v7025 = vunpack.c.h.b16 %v5651
        %v7026 = vunpack.c.l.b16 %v5652
        %v7027 = vunpack.c.h.b16 %v5652
        %v7028 = vunpack.c.l.b16 %v5653
        %v7029 = vunpack.c.h.b16 %v5653
        %v7030 = vunpack.c.l.b16 %v5654
        %v7031 = vunpack.c.h.b16 %v5654
        %v7032 = vunpack.c.l.b16 %v5655
        %v7033 = vunpack.c.h.b16 %v5655
        %v7034 = vunpack.c.l.b16 %v5656
        %v7035 = vunpack.c.h.b16 %v5656
        %v7036 = vunpack.c.l.b16 %v5657
        %v7037 = vunpack.c.h.b16 %v5657
        %v7038 = vunpack.c.l.b16 %v5658
        %v7039 = vunpack.c.h.b16 %v5658
        %v7040 = vunpack.c.l.b16 %v5659
        %v7041 = vunpack.c.h.b16 %v5659
        %v7042 = vunpack.c.l.b16 %v5660
        %v7043 = vunpack.c.h.b16 %v5660
        %v7044 = vunpack.c.l.b16 %v5661
        %v7045 = vunpack.c.h.b16 %v5661
        %v7046 = vunpack.c.l.b16 %v5662
        %v7047 = vunpack.c.h.b16 %v5662
        %v7048 = vunpack.c.l.b16 %v5663
        %v7049 = vunpack.c.h.b16 %v5663
        %v7050 = vunpack.c.l.b16 %v5664
        %v7051 = vunpack.c.h.b16 %v5664
        %v7052 = vunpack.c.l.b16 %v5665
        %v7053 = vunpack.c.h.b16 %v5665
        %v7054 = vunpack.c.l.b16 %v5666
        %v7055 = vunpack.c.h.b16 %v5666
        %v7056 = vunpack.c.l.b16 %v5667
        %v7057 = vunpack.c.h.b16 %v5667
        %v7058 = vunpack.c.l.b16 %v5668
        %v7059 = vunpack.c.h.b16 %v5668
        %v7060 = vunpack.c.l.b16 %v5669
        %v7061 = vunpack.c.h.b16 %v5669
        %v7062 = vunpack.c.l.b16 %v5670
        %v7063 = vunpack.c.h.b16 %v5670
        %v7064 = vunpack.c.l.b16 %v5671
        %v7065 = vunpack.c.h.b16 %v5671
        %v7066 = vunpack.c.l.b16 %v5672
        %v7067 = vunpack.c.h.b16 %v5672
        %v7068 = vunpack.c.l.b16 %v5673
        %v7069 = vunpack.c.h.b16 %v5673
        %v7070 = vunpack.c.l.b16 %v5674
        %v7071 = vunpack.c.h.b16 %v5674
        %v7072 = vunpack.c.l.b16 %v5675
        %v7073 = vunpack.c.h.b16 %v5675
        %v7074 = vunpack.c.l.b16 %v5676
        %v7075 = vunpack.c.h.b16 %v5676
        %v7076 = vunpack.c.l.b16 %v5677
        %v7077 = vunpack.c.h.b16 %v5677
        %v7078 = vunpack.c.l.b16 %v5678
        %v7079 = vunpack.c.h.b16 %v5678
        %v7080 = vunpack.c.l.b16 %v5679
        %v7081 = vunpack.c.h.b16 %v5679
        %v7082 = vunpack.c.l.b16 %v5680
        %v7083 = vunpack.c.h.b16 %v5680
        %v7084 = vunpack.c.l.b16 %v5681
        %v7085 = vunpack.c.h.b16 %v5681
        %v7086 = vunpack.c.l.b16 %v5682
        %v7087 = vunpack.c.h.b16 %v5682
        %v7088 = vunpack.c.l.b16 %v5683
        %v7089 = vunpack.c.h.b16 %v5683
        %v7090 = vunpack.c.l.b16 %v5684
        %v7091 = vunpack.c.h.b16 %v5684
        %v7092 = vunpack.c.l.b16 %v5685
        %v7093 = vunpack.c.h.b16 %v5685
        %v7094 = vunpack.c.l.b16 %v5686
        %v7095 = vunpack.c.h.b16 %v5686
        %v7096 = vunpack.c.l.b16 %v5687
        %v7097 = vunpack.c.h.b16 %v5687
        %v7098 = vunpack.c.l.b16 %v5688
        %v7099 = vunpack.c.h.b16 %v5688
        %v7100 = vunpack.c.l.b16 %v5689
        %v7101 = vunpack.c.h.b16 %v5689
        %v7102 = vunpack.c.l.b16 %v5690
        %v7103 = vunpack.c.h.b16 %v5690
        %v7104 = vunpack.c.l.b16 %v5691
        %v7105 = vunpack.c.h.b16 %v5691
        %v7106 = vunpack.c.l.b16 %v5692
        %v7107 = vunpack.c.h.b16 %v5692
        %v7108 = vunpack.c.l.b16 %v5693
        %v7109 = vunpack.c.h.b16 %v5693
        %v7110 = vunpack.c.l.b16 %v5694
        %v7111 = vunpack.c.h.b16 %v5694
        %v7112 = vunpack.c.l.b16 %v5695
        %v7113 = vunpack.c.h.b16 %v5695
        %v7114 = vunpack.c.l.b16 %v5696
        %v7115 = vunpack.c.h.b16 %v5696
        %v7116 = vunpack.c.l.b16 %v5697
        %v7117 = vunpack.c.h.b16 %v5697
        %v7118 = vunpack.c.l.b16 %v5698
        %v7119 = vunpack.c.h.b16 %v5698
        %v7120 = vunpack.c.l.b16 %v5699
        %v7121 = vunpack.c.h.b16 %v5699
        %v7122 = vunpack.c.l.b16 %v5700
        %v7123 = vunpack.c.h.b16 %v5700
        %v7124 = vunpack.c.l.b16 %v5701
        %v7125 = vunpack.c.h.b16 %v5701
        %v7126 = vunpack.c.l.b16 %v5702
        %v7127 = vunpack.c.h.b16 %v5702
        %v7128 = vunpack.c.l.b16 %v5703
        %v7129 = vunpack.c.h.b16 %v5703
        %v7130 = vunpack.c.l.b16 %v5704
        %v7131 = vunpack.c.h.b16 %v5704
        %v7132 = vunpack.c.l.b16 %v5705
        %v7133 = vunpack.c.h.b16 %v5705
        %v7134 = vunpack.c.l.b16 %v5706
        %v7135 = vunpack.c.h.b16 %v5706
        %v7136 = vunpack.c.l.b16 %v5707
        %v7137 = vunpack.c.h.b16 %v5707
        %v7138 = vunpack.c.l.b16 %v5708
        %v7139 = vunpack.c.h.b16 %v5708
        %v7140 = vunpack.c.l.b16 %v5709
        %v7141 = vunpack.c.h.b16 %v5709
        %v7142 = vunpack.c.l.b16 %v5710
        %v7143 = vunpack.c.h.b16 %v5710
        %v7144 = vunpack.c.l.b16 %v5711
        %v7145 = vunpack.c.h.b16 %v5711
        %v7146 = vunpack.c.l.b16 %v5712
        %v7147 = vunpack.c.h.b16 %v5712
        %v7148 = vunpack.c.l.b16 %v5713
        %v7149 = vunpack.c.h.b16 %v5713
        %v7150 = vunpack.c.l.b16 %v5714
        %v7151 = vunpack.c.h.b16 %v5714
        %v7152 = vunpack.c.l.b16 %v5715
        %v7153 = vunpack.c.h.b16 %v5715
        %v7154 = vunpack.c.l.b16 %v5716
        %v7155 = vunpack.c.h.b16 %v5716
        %v7156 = vunpack.c.l.b16 %v5717
        %v7157 = vunpack.c.h.b16 %v5717
        %v7158 = vunpack.c.l.b16 %v5718
        %v7159 = vunpack.c.h.b16 %v5718
        %v7160 = vunpack.c.l.b16 %v5719
        %v7161 = vunpack.c.h.b16 %v5719
        %v7162 = vunpack.c.l.b16 %v5720
        %v7163 = vunpack.c.h.b16 %v5720
        %v7164 = vunpack.c.l.b16 %v5721
        %v7165 = vunpack.c.h.b16 %v5721
        %v7166 = vunpack.c.l.b16 %v5722
        %v7167 = vunpack.c.h.b16 %v5722
        %v7168 = vunpack.c.l.b16 %v5723
        %v7169 = vunpack.c.h.b16 %v5723
        %v7170 = vunpack.c.l.b16 %v5724
        %v7171 = vunpack.c.h.b16 %v5724
        %v7172 = vunpack.c.l.b16 %v5725
        %v7173 = vunpack.c.h.b16 %v5725
        %v7174 = vunpack.c.l.b16 %v5726
        %v7175 = vunpack.c.h.b16 %v5726
        %v7176 = vunpack.c.l.b16 %v5727
        %v7177 = vunpack.c.h.b16 %v5727
        %v7178 = vunpack.c.l.b16 %v5728
        %v7179 = vunpack.c.h.b16 %v5728
        %v7180 = vunpack.c.l.b16 %v5729
        %v7181 = vunpack.c.h.b16 %v5729
        %v7182 = vunpack.c.l.b16 %v5730
        %v7183 = vunpack.c.h.b16 %v5730
        %v7184 = vunpack.c.l.b16 %v5731
        %v7185 = vunpack.c.h.b16 %v5731
        %v7186 = vunpack.c.l.b16 %v5732
        %v7187 = vunpack.c.h.b16 %v5732
        %v7188 = vunpack.c.l.b16 %v5733
        %v7189 = vunpack.c.h.b16 %v5733
        %v7190 = vunpack.c.l.b16 %v5734
        %v7191 = vunpack.c.h.b16 %v5734
        %v7192 = vunpack.c.l.b16 %v5735
        %v7193 = vunpack.c.h.b16 %v5735
        %v7194 = vunpack.c.l.b16 %v5736
        %v7195 = vunpack.c.h.b16 %v5736
        %v7196 = vunpack.c.l.b16 %v5737
        %v7197 = vunpack.c.h.b16 %v5737
        %v7198 = vunpack.c.l.b16 %v5738
        %v7199 = vunpack.c.h.b16 %v5738
        %v7200 = vunpack.c.l.b16 %v5739
        %v7201 = vunpack.c.h.b16 %v5739
        %v7202 = vunpack.c.l.b16 %v5740
        %v7203 = vunpack.c.h.b16 %v5740
        %v7204 = vunpack.c.l.b16 %v5741
        %v7205 = vunpack.c.h.b16 %v5741
        %v7206 = vunpack.c.l.b16 %v5742
        %v7207 = vunpack.c.h.b16 %v5742
        %v7208 = vunpack.c.l.b16 %v5743
        %v7209 = vunpack.c.h.b16 %v5743
        %v7210 = vunpack.c.l.b16 %v5744
        %v7211 = vunpack.c.h.b16 %v5744
        %v7212 = vunpack.c.l.b16 %v5745
        %v7213 = vunpack.c.h.b16 %v5745
        %v7214 = vunpack.c.l.b16 %v5746
        %v7215 = vunpack.c.h.b16 %v5746
        %v7216 = vunpack.c.l.b16 %v5747
        %v7217 = vunpack.c.h.b16 %v5747
        %v7218 = vunpack.c.l.b16 %v5748
        %v7219 = vunpack.c.h.b16 %v5748
        %v7220 = vunpack.c.l.b16 %v5749
        %v7221 = vunpack.c.h.b16 %v5749
        %v7222 = vunpack.c.l.b16 %v5750
        %v7223 = vunpack.c.h.b16 %v5750
        %v7224 = vunpack.c.l.b16 %v5751
        %v7225 = vunpack.c.h.b16 %v5751
        %v7226 = vunpack.c.l.b16 %v5752
        %v7227 = vunpack.c.h.b16 %v5752
        %v7228 = vunpack.c.l.b16 %v5753
        %v7229 = vunpack.c.h.b16 %v5753
        %v7230 = vunpack.c.l.b16 %v5754
        %v7231 = vunpack.c.h.b16 %v5754
        %v7232 = vunpack.c.l.b16 %v5755
        %v7233 = vunpack.c.h.b16 %v5755
        %v7234 = vunpack.c.l.b16 %v5756
        %v7235 = vunpack.c.h.b16 %v5756
        %v7236 = vunpack.c.l.b16 %v5757
        %v7237 = vunpack.c.h.b16 %v5757
        %v7238 = vunpack.c.l.b16 %v5758
        %v7239 = vunpack.c.h.b16 %v5758
        %v7240 = vunpack.c.l.b16 %v5759
        %v7241 = vunpack.c.h.b16 %v5759
        %v7242 = vunpack.c.l.b16 %v5760
        %v7243 = vunpack.c.h.b16 %v5760
        %v7244 = vunpack.c.l.b16 %v5761
        %v7245 = vunpack.c.h.b16 %v5761
        %v7246 = vunpack.c.l.b16 %v5762
        %v7247 = vunpack.c.h.b16 %v5762
        %v7248 = vunpack.c.l.b16 %v5763
        %v7249 = vunpack.c.h.b16 %v5763
        %v7250 = vunpack.c.l.b16 %v5764
        %v7251 = vunpack.c.h.b16 %v5764
        %v7252 = vunpack.c.l.b16 %v5765
        %v7253 = vunpack.c.h.b16 %v5765
        %v7254 = vunpack.c.l.b16 %v5766
        %v7255 = vunpack.c.h.b16 %v5766
        %v7256 = vunpack.c.l.b16 %v5767
        %v7257 = vunpack.c.h.b16 %v5767
        %v7258 = vunpack.c.l.b16 %v5768
        %v7259 = vunpack.c.h.b16 %v5768
        %v7260 = vunpack.c.l.b16 %v5769
        %v7261 = vunpack.c.h.b16 %v5769
        %v7262 = vunpack.c.l.b16 %v5770
        %v7263 = vunpack.c.h.b16 %v5770
        %v7264 = vunpack.c.l.b16 %v5771
        %v7265 = vunpack.c.h.b16 %v5771
        %v7266 = vunpack.c.l.b16 %v5772
        %v7267 = vunpack.c.h.b16 %v5772
        %v7268 = vunpack.c.l.b16 %v5773
        %v7269 = vunpack.c.h.b16 %v5773
        %v7270 = vunpack.c.l.b16 %v5774
        %v7271 = vunpack.c.h.b16 %v5774
        %v7272 = vunpack.c.l.b16 %v5775
        %v7273 = vunpack.c.h.b16 %v5775
        %v7274 = vunpack.c.l.b16 %v5776
        %v7275 = vunpack.c.h.b16 %v5776
        %v7276 = vunpack.c.l.b16 %v5777
        %v7277 = vunpack.c.h.b16 %v5777
        %v7278 = vunpack.c.l.b16 %v5778
        %v7279 = vunpack.c.h.b16 %v5778
        %v7280 = vunpack.c.l.b16 %v5779
        %v7281 = vunpack.c.h.b16 %v5779
        %v7282 = vunpack.c.l.b16 %v5780
        %v7283 = vunpack.c.h.b16 %v5780
        %v7284 = vunpack.c.l.b16 %v5781
        %v7285 = vunpack.c.h.b16 %v5781
        %v7286 = vunpack.c.l.b16 %v5782
        %v7287 = vunpack.c.h.b16 %v5782
        %v7288 = vunpack.c.l.b16 %v5783
        %v7289 = vunpack.c.h.b16 %v5783
        %v7290 = vunpack.c.l.b16 %v5784
        %v7291 = vunpack.c.h.b16 %v5784
        %v7292 = vunpack.c.l.b16 %v5785
        %v7293 = vunpack.c.h.b16 %v5785
        %v7294 = vunpack.c.l.b16 %v5786
        %v7295 = vunpack.c.h.b16 %v5786
        %v7296 = vunpack.c.l.b16 %v5787
        %v7297 = vunpack.c.h.b16 %v5787
        %v7298 = vunpack.c.l.b16 %v5788
        %v7299 = vunpack.c.h.b16 %v5788
        %v7300 = vunpack.c.l.b16 %v5789
        %v7301 = vunpack.c.h.b16 %v5789
        %v7302 = vunpack.c.l.b16 %v5790
        %v7303 = vunpack.c.h.b16 %v5790
        %v7304 = vunpack.c.l.b16 %v5791
        %v7305 = vunpack.c.h.b16 %v5791
        %v7306 = vunpack.c.l.b16 %v5792
        %v7307 = vunpack.c.h.b16 %v5792
        %v7308 = vunpack.c.l.b16 %v5793
        %v7309 = vunpack.c.h.b16 %v5793
        %v7310 = vunpack.c.l.b16 %v5794
        %v7311 = vunpack.c.h.b16 %v5794
        %v7312 = vunpack.c.l.b16 %v5795
        %v7313 = vunpack.c.h.b16 %v5795
        %v7314 = vunpack.c.l.b16 %v5796
        %v7315 = vunpack.c.h.b16 %v5796
        %v7316 = vunpack.c.l.b16 %v5797
        %v7317 = vunpack.c.h.b16 %v5797
        %v7318 = vunpack.c.l.b16 %v5798
        %v7319 = vunpack.c.h.b16 %v5798
        %v7320 = vunpack.c.l.b16 %v5799
        %v7321 = vunpack.c.h.b16 %v5799
        %v7322 = vunpack.c.l.b16 %v5800
        %v7323 = vunpack.c.h.b16 %v5800
        %v7324 = vunpack.c.l.b16 %v5801
        %v7325 = vunpack.c.h.b16 %v5801
        %v7326 = vunpack.c.l.b16 %v5802
        %v7327 = vunpack.c.h.b16 %v5802
        %v7328 = vunpack.c.l.b16 %v5803
        %v7329 = vunpack.c.h.b16 %v5803
        %v7330 = vunpack.c.l.b16 %v5804
        %v7331 = vunpack.c.h.b16 %v5804
        %v7332 = vunpack.c.l.b16 %v5805
        %v7333 = vunpack.c.h.b16 %v5805
        %v7334 = vunpack.c.l.b16 %v5806
        %v7335 = vunpack.c.h.b16 %v5806
        %v7336 = vunpack.c.l.b16 %v5807
        %v7337 = vunpack.c.h.b16 %v5807
        %v7338 = vunpack.c.l.b16 %v5808
        %v7339 = vunpack.c.h.b16 %v5808
        %v7340 = vunpack.c.l.b16 %v5809
        %v7341 = vunpack.c.h.b16 %v5809
        %v7342 = vunpack.c.l.b16 %v5810
        %v7343 = vunpack.c.h.b16 %v5810
        %v7344 = vunpack.c.l.b16 %v5811
        %v7345 = vunpack.c.h.b16 %v5811
        %v7346 = vunpack.c.l.b16 %v5812
        %v7347 = vunpack.c.h.b16 %v5812
        %v7348 = vunpack.c.l.b16 %v5813
        %v7349 = vunpack.c.h.b16 %v5813
        %v7350 = vunpack.c.l.b16 %v5814
        %v7351 = vunpack.c.h.b16 %v5814
        %v7352 = vunpack.c.l.b16 %v5815
        %v7353 = vunpack.c.h.b16 %v5815
        %v7354 = vunpack.c.l.b16 %v5816
        %v7355 = vunpack.c.h.b16 %v5816
        %v7356 = vunpack.c.l.b16 %v5817
        %v7357 = vunpack.c.h.b16 %v5817
        %v7358 = vunpack.c.l.b16 %v5818
        %v7359 = vunpack.c.h.b16 %v5818
        %v7360 = vunpack.c.l.b16 %v5819
        %v7361 = vunpack.c.h.b16 %v5819
        %v7362 = vunpack.c.l.b16 %v5820
        %v7363 = vunpack.c.h.b16 %v5820
        %v7364 = vunpack.c.l.b16 %v5821
        %v7365 = vunpack.c.h.b16 %v5821
        %v7366 = vunpack.c.l.b16 %v5822
        %v7367 = vunpack.c.h.b16 %v5822
        %v7368 = vunpack.c.l.b16 %v5823
        %v7369 = vunpack.c.h.b16 %v5823
        %v7370 = vunpack.c.l.b16 %v5824
        %v7371 = vunpack.c.h.b16 %v5824
        %v7372 = vunpack.c.l.b16 %v5825
        %v7373 = vunpack.c.h.b16 %v5825
        %v7374 = vunpack.c.l.b16 %v5826
        %v7375 = vunpack.c.h.b16 %v5826
        %v7376 = vunpack.c.l.b16 %v5827
        %v7377 = vunpack.c.h.b16 %v5827
        %v7378 = vunpack.c.l.b16 %v5828
        %v7379 = vunpack.c.h.b16 %v5828
        %v7380 = vunpack.c.l.b16 %v5829
        %v7381 = vunpack.c.h.b16 %v5829
        %v7382 = vunpack.c.l.b16 %v5830
        %v7383 = vunpack.c.h.b16 %v5830
        %v7384 = vunpack.c.l.b16 %v5831
        %v7385 = vunpack.c.h.b16 %v5831
        %v7386 = vpack.c.b16 %v6370, %v6362
        %v7387 = vpack.c.b16 %v6371, %v6363
        %v7388 = vpack.c.b16 %v6372, %v6364
        %v7389 = vpack.c.b16 %v6373, %v6365
        %v7390 = vpack.c.b16 %v6374, %v6366
        %v7391 = vpack.c.b16 %v6375, %v6367
        %v7392 = vpack.c.b16 %v6376, %v6368
        %v7393 = vpack.c.b16 %v6377, %v6369
        %v7394 = vpack.c.b16 %v6386, %v6378
        %v7395 = vpack.c.b16 %v6387, %v6379
        %v7396 = vpack.c.b16 %v6388, %v6380
        %v7397 = vpack.c.b16 %v6389, %v6381
        %v7398 = vpack.c.b16 %v6390, %v6382
        %v7399 = vpack.c.b16 %v6391, %v6383
        %v7400 = vpack.c.b16 %v6392, %v6384
        %v7401 = vpack.c.b16 %v6393, %v6385
        %v7402 = vpack.c.b16 %v6402, %v6394
        %v7403 = vpack.c.b16 %v6403, %v6395
        %v7404 = vpack.c.b16 %v6404, %v6396
        %v7405 = vpack.c.b16 %v6405, %v6397
        %v7406 = vpack.c.b16 %v6406, %v6398
        %v7407 = vpack.c.b16 %v6407, %v6399
        %v7408 = vpack.c.b16 %v6408, %v6400
        %v7409 = vpack.c.b16 %v6409, %v6401
        %v7410 = vpack.c.b16 %v6418, %v6410
        %v7411 = vpack.c.b16 %v6419, %v6411
        %v7412 = vpack.c.b16 %v6420, %v6412
        %v7413 = vpack.c.b16 %v6421, %v6413
        %v7414 = vpack.c.b16 %v6422, %v6414
        %v7415 = vpack.c.b16 %v6423, %v6415
        %v7416 = vpack.c.b16 %v6424, %v6416
        %v7417 = vpack.c.b16 %v6425, %v6417
        %v7418 = vpack.c.b16 %v6434, %v6426
        %v7419 = vpack.c.b16 %v6435, %v6427
        %v7420 = vpack.c.b16 %v6436, %v6428
        %v7421 = vpack.c.b16 %v6437, %v6429
        %v7422 = vpack.c.b16 %v6438, %v6430
        %v7423 = vpack.c.b16 %v6439, %v6431
        %v7424 = vpack.c.b16 %v6440, %v6432
        %v7425 = vpack.c.b16 %v6441, %v6433
        %v7426 = vpack.c.b16 %v6450, %v6442
        %v7427 = vpack.c.b16 %v6451, %v6443
        %v7428 = vpack.c.b16 %v6452, %v6444
        %v7429 = vpack.c.b16 %v6453, %v6445
        %v7430 = vpack.c.b16 %v6454, %v6446
        %v7431 = vpack.c.b16 %v6455, %v6447
        %v7432 = vpack.c.b16 %v6456, %v6448
        %v7433 = vpack.c.b16 %v6457, %v6449
        %v7434 = vpack.c.b16 %v6466, %v6458
        %v7435 = vpack.c.b16 %v6467, %v6459
        %v7436 = vpack.c.b16 %v6468, %v6460
        %v7437 = vpack.c.b16 %v6469, %v6461
        %v7438 = vpack.c.b16 %v6470, %v6462
        %v7439 = vpack.c.b16 %v6471, %v6463
        %v7440 = vpack.c.b16 %v6472, %v6464
        %v7441 = vpack.c.b16 %v6473, %v6465
        %v7442 = vpack.c.b16 %v6482, %v6474
        %v7443 = vpack.c.b16 %v6483, %v6475
        %v7444 = vpack.c.b16 %v6484, %v6476
        %v7445 = vpack.c.b16 %v6485, %v6477
        %v7446 = vpack.c.b16 %v6486, %v6478
        %v7447 = vpack.c.b16 %v6487, %v6479
        %v7448 = vpack.c.b16 %v6488, %v6480
        %v7449 = vpack.c.b16 %v6489, %v6481
        %v7450 = vpack.c.b16 %v6498, %v6490
        %v7451 = vpack.c.b16 %v6499, %v6491
        %v7452 = vpack.c.b16 %v6500, %v6492
        %v7453 = vpack.c.b16 %v6501, %v6493
        %v7454 = vpack.c.b16 %v6502, %v6494
        %v7455 = vpack.c.b16 %v6503, %v6495
        %v7456 = vpack.c.b16 %v6504, %v6496
        %v7457 = vpack.c.b16 %v6505, %v6497
        %v7458 = vpack.c.b16 %v6514, %v6506
        %v7459 = vpack.c.b16 %v6515, %v6507
        %v7460 = vpack.c.b16 %v6516, %v6508
        %v7461 = vpack.c.b16 %v6517, %v6509
        %v7462 = vpack.c.b16 %v6518, %v6510
        %v7463 = vpack.c.b16 %v6519, %v6511
        %v7464 = vpack.c.b16 %v6520, %v6512
        %v7465 = vpack.c.b16 %v6521, %v6513
        %v7466 = vpack.c.b16 %v6530, %v6522
        %v7467 = vpack.c.b16 %v6531, %v6523
        %v7468 = vpack.c.b16 %v6532, %v6524
        %v7469 = vpack.c.b16 %v6533, %v6525
        %v7470 = vpack.c.b16 %v6534, %v6526
        %v7471 = vpack.c.b16 %v6535, %v6527
        %v7472 = vpack.c.b16 %v6536, %v6528
        %v7473 = vpack.c.b16 %v6537, %v6529
        %v7474 = vpack.c.b16 %v6546, %v6538
        %v7475 = vpack.c.b16 %v6547, %v6539
        %v7476 = vpack.c.b16 %v6548, %v6540
        %v7477 = vpack.c.b16 %v6549, %v6541
        %v7478 = vpack.c.b16 %v6550, %v6542
        %v7479 = vpack.c.b16 %v6551, %v6543
        %v7480 = vpack.c.b16 %v6552, %v6544
        %v7481 = vpack.c.b16 %v6553, %v6545
        %v7482 = vpack.c.b16 %v6562, %v6554
        %v7483 = vpack.c.b16 %v6563, %v6555
        %v7484 = vpack.c.b16 %v6564, %v6556
        %v7485 = vpack.c.b16 %v6565, %v6557
        %v7486 = vpack.c.b16 %v6566, %v6558
        %v7487 = vpack.c.b16 %v6567, %v6559
        %v7488 = vpack.c.b16 %v6568, %v6560
        %v7489 = vpack.c.b16 %v6569, %v6561
        %v7490 = vpack.c.b16 %v6578, %v6570
        %v7491 = vpack.c.b16 %v6579, %v6571
        %v7492 = vpack.c.b16 %v6580, %v6572
        %v7493 = vpack.c.b16 %v6581, %v6573
        %v7494 = vpack.c.b16 %v6582, %v6574
        %v7495 = vpack.c.b16 %v6583, %v6575
        %v7496 = vpack.c.b16 %v6584, %v6576
        %v7497 = vpack.c.b16 %v6585, %v6577
        %v7498 = vpack.c.b16 %v6594, %v6586
        %v7499 = vpack.c.b16 %v6595, %v6587
        %v7500 = vpack.c.b16 %v6596, %v6588
        %v7501 = vpack.c.b16 %v6597, %v6589
        %v7502 = vpack.c.b16 %v6598, %v6590
        %v7503 = vpack.c.b16 %v6599, %v6591
        %v7504 = vpack.c.b16 %v6600, %v6592
        %v7505 = vpack.c.b16 %v6601, %v6593
        %v7506 = vpack.c.b16 %v6610, %v6602
        %v7507 = vpack.c.b16 %v6611, %v6603
        %v7508 = vpack.c.b16 %v6612, %v6604
        %v7509 = vpack.c.b16 %v6613, %v6605
        %v7510 = vpack.c.b16 %v6614, %v6606
        %v7511 = vpack.c.b16 %v6615, %v6607
        %v7512 = vpack.c.b16 %v6616, %v6608
        %v7513 = vpack.c.b16 %v6617, %v6609
        %v7514 = vpack.c.b16 %v6626, %v6618
        %v7515 = vpack.c.b16 %v6627, %v6619
        %v7516 = vpack.c.b16 %v6628, %v6620
        %v7517 = vpack.c.b16 %v6629, %v6621
        %v7518 = vpack.c.b16 %v6630, %v6622
        %v7519 = vpack.c.b16 %v6631, %v6623
        %v7520 = vpack.c.b16 %v6632, %v6624
        %v7521 = vpack.c.b16 %v6633, %v6625
        %v7522 = vpack.c.b16 %v6642, %v6634
        %v7523 = vpack.c.b16 %v6643, %v6635
        %v7524 = vpack.c.b16 %v6644, %v6636
        %v7525 = vpack.c.b16 %v6645, %v6637
        %v7526 = vpack.c.b16 %v6646, %v6638
        %v7527 = vpack.c.b16 %v6647, %v6639
        %v7528 = vpack.c.b16 %v6648, %v6640
        %v7529 = vpack.c.b16 %v6649, %v6641
        %v7530 = vpack.c.b16 %v6658, %v6650
        %v7531 = vpack.c.b16 %v6659, %v6651
        %v7532 = vpack.c.b16 %v6660, %v6652
        %v7533 = vpack.c.b16 %v6661, %v6653
        %v7534 = vpack.c.b16 %v6662, %v6654
        %v7535 = vpack.c.b16 %v6663, %v6655
        %v7536 = vpack.c.b16 %v6664, %v6656
        %v7537 = vpack.c.b16 %v6665, %v6657
        %v7538 = vpack.c.b16 %v6674, %v6666
        %v7539 = vpack.c.b16 %v6675, %v6667
        %v7540 = vpack.c.b16 %v6676, %v6668
        %v7541 = vpack.c.b16 %v6677, %v6669
        %v7542 = vpack.c.b16 %v6678, %v6670
        %v7543 = vpack.c.b16 %v6679, %v6671
        %v7544 = vpack.c.b16 %v6680, %v6672
        %v7545 = vpack.c.b16 %v6681, %v6673
        %v7546 = vpack.c.b16 %v6690, %v6682
        %v7547 = vpack.c.b16 %v6691, %v6683
        %v7548 = vpack.c.b16 %v6692, %v6684
        %v7549 = vpack.c.b16 %v6693, %v6685
        %v7550 = vpack.c.b16 %v6694, %v6686
        %v7551 = vpack.c.b16 %v6695, %v6687
        %v7552 = vpack.c.b16 %v6696, %v6688
        %v7553 = vpack.c.b16 %v6697, %v6689
        %v7554 = vpack.c.b16 %v6706, %v6698
        %v7555 = vpack.c.b16 %v6707, %v6699
        %v7556 = vpack.c.b16 %v6708, %v6700
        %v7557 = vpack.c.b16 %v6709, %v6701
        %v7558 = vpack.c.b16 %v6710, %v6702
        %v7559 = vpack.c.b16 %v6711, %v6703
        %v7560 = vpack.c.b16 %v6712, %v6704
        %v7561 = vpack.c.b16 %v6713, %v6705
        %v7562 = vpack.c.b16 %v6722, %v6714
        %v7563 = vpack.c.b16 %v6723, %v6715
        %v7564 = vpack.c.b16 %v6724, %v6716
        %v7565 = vpack.c.b16 %v6725, %v6717
        %v7566 = vpack.c.b16 %v6726, %v6718
        %v7567 = vpack.c.b16 %v6727, %v6719
        %v7568 = vpack.c.b16 %v6728, %v6720
        %v7569 = vpack.c.b16 %v6729, %v6721
        %v7570 = vpack.c.b16 %v6738, %v6730
        %v7571 = vpack.c.b16 %v6739, %v6731
        %v7572 = vpack.c.b16 %v6740, %v6732
        %v7573 = vpack.c.b16 %v6741, %v6733
        %v7574 = vpack.c.b16 %v6742, %v6734
        %v7575 = vpack.c.b16 %v6743, %v6735
        %v7576 = vpack.c.b16 %v6744, %v6736
        %v7577 = vpack.c.b16 %v6745, %v6737
        %v7578 = vpack.c.b16 %v6754, %v6746
        %v7579 = vpack.c.b16 %v6755, %v6747
        %v7580 = vpack.c.b16 %v6756, %v6748
        %v7581 = vpack.c.b16 %v6757, %v6749
        %v7582 = vpack.c.b16 %v6758, %v6750
        %v7583 = vpack.c.b16 %v6759, %v6751
        %v7584 = vpack.c.b16 %v6760, %v6752
        %v7585 = vpack.c.b16 %v6761, %v6753
        %v7586 = vpack.c.b16 %v6770, %v6762
        %v7587 = vpack.c.b16 %v6771, %v6763
        %v7588 = vpack.c.b16 %v6772, %v6764
        %v7589 = vpack.c.b16 %v6773, %v6765
        %v7590 = vpack.c.b16 %v6774, %v6766
        %v7591 = vpack.c.b16 %v6775, %v6767
        %v7592 = vpack.c.b16 %v6776, %v6768
        %v7593 = vpack.c.b16 %v6777, %v6769
        %v7594 = vpack.c.b16 %v6786, %v6778
        %v7595 = vpack.c.b16 %v6787, %v6779
        %v7596 = vpack.c.b16 %v6788, %v6780
        %v7597 = vpack.c.b16 %v6789, %v6781
        %v7598 = vpack.c.b16 %v6790, %v6782
        %v7599 = vpack.c.b16 %v6791, %v6783
        %v7600 = vpack.c.b16 %v6792, %v6784
        %v7601 = vpack.c.b16 %v6793, %v6785
        %v7602 = vpack.c.b16 %v6802, %v6794
        %v7603 = vpack.c.b16 %v6803, %v6795
        %v7604 = vpack.c.b16 %v6804, %v6796
        %v7605 = vpack.c.b16 %v6805, %v6797
        %v7606 = vpack.c.b16 %v6806, %v6798
        %v7607 = vpack.c.b16 %v6807, %v6799
        %v7608 = vpack.c.b16 %v6808, %v6800
        %v7609 = vpack.c.b16 %v6809, %v6801
        %v7610 = vpack.c.b16 %v6818, %v6810
        %v7611 = vpack.c.b16 %v6819, %v6811
        %v7612 = vpack.c.b16 %v6820, %v6812
        %v7613 = vpack.c.b16 %v6821, %v6813
        %v7614 = vpack.c.b16 %v6822, %v6814
        %v7615 = vpack.c.b16 %v6823, %v6815
        %v7616 = vpack.c.b16 %v6824, %v6816
        %v7617 = vpack.c.b16 %v6825, %v6817
        %v7618 = vpack.c.b16 %v6834, %v6826
        %v7619 = vpack.c.b16 %v6835, %v6827
        %v7620 = vpack.c.b16 %v6836, %v6828
        %v7621 = vpack.c.b16 %v6837, %v6829
        %v7622 = vpack.c.b16 %v6838, %v6830
        %v7623 = vpack.c.b16 %v6839, %v6831
        %v7624 = vpack.c.b16 %v6840, %v6832
        %v7625 = vpack.c.b16 %v6841, %v6833
        %v7626 = vpack.c.b16 %v6850, %v6842
        %v7627 = vpack.c.b16 %v6851, %v6843
        %v7628 = vpack.c.b16 %v6852, %v6844
        %v7629 = vpack.c.b16 %v6853, %v6845
        %v7630 = vpack.c.b16 %v6854, %v6846
        %v7631 = vpack.c.b16 %v6855, %v6847
        %v7632 = vpack.c.b16 %v6856, %v6848
        %v7633 = vpack.c.b16 %v6857, %v6849
        %v7634 = vpack.c.b16 %v6866, %v6858
        %v7635 = vpack.c.b16 %v6867, %v6859
        %v7636 = vpack.c.b16 %v6868, %v6860
        %v7637 = vpack.c.b16 %v6869, %v6861
        %v7638 = vpack.c.b16 %v6870, %v6862
        %v7639 = vpack.c.b16 %v6871, %v6863
        %v7640 = vpack.c.b16 %v6872, %v6864
        %v7641 = vpack.c.b16 %v6873, %v6865
        %v7642 = vpack.c.b16 %v6882, %v6874
        %v7643 = vpack.c.b16 %v6883, %v6875
        %v7644 = vpack.c.b16 %v6884, %v6876
        %v7645 = vpack.c.b16 %v6885, %v6877
        %v7646 = vpack.c.b16 %v6886, %v6878
        %v7647 = vpack.c.b16 %v6887, %v6879
        %v7648 = vpack.c.b16 %v6888, %v6880
        %v7649 = vpack.c.b16 %v6889, %v6881
        %v7650 = vpack.c.b16 %v6898, %v6890
        %v7651 = vpack.c.b16 %v6899, %v6891
        %v7652 = vpack.c.b16 %v6900, %v6892
        %v7653 = vpack.c.b16 %v6901, %v6893
        %v7654 = vpack.c.b16 %v6902, %v6894
        %v7655 = vpack.c.b16 %v6903, %v6895
        %v7656 = vpack.c.b16 %v6904, %v6896
        %v7657 = vpack.c.b16 %v6905, %v6897
        %v7658 = vpack.c.b16 %v6914, %v6906
        %v7659 = vpack.c.b16 %v6915, %v6907
        %v7660 = vpack.c.b16 %v6916, %v6908
        %v7661 = vpack.c.b16 %v6917, %v6909
        %v7662 = vpack.c.b16 %v6918, %v6910
        %v7663 = vpack.c.b16 %v6919, %v6911
        %v7664 = vpack.c.b16 %v6920, %v6912
        %v7665 = vpack.c.b16 %v6921, %v6913
        %v7666 = vpack.c.b16 %v6930, %v6922
        %v7667 = vpack.c.b16 %v6931, %v6923
        %v7668 = vpack.c.b16 %v6932, %v6924
        %v7669 = vpack.c.b16 %v6933, %v6925
        %v7670 = vpack.c.b16 %v6934, %v6926
        %v7671 = vpack.c.b16 %v6935, %v6927
        %v7672 = vpack.c.b16 %v6936, %v6928
        %v7673 = vpack.c.b16 %v6937, %v6929
        %v7674 = vpack.c.b16 %v6946, %v6938
        %v7675 = vpack.c.b16 %v6947, %v6939
        %v7676 = vpack.c.b16 %v6948, %v6940
        %v7677 = vpack.c.b16 %v6949, %v6941
        %v7678 = vpack.c.b16 %v6950, %v6942
        %v7679 = vpack.c.b16 %v6951, %v6943
        %v7680 = vpack.c.b16 %v6952, %v6944
        %v7681 = vpack.c.b16 %v6953, %v6945
        %v7682 = vpack.c.b16 %v6962, %v6954
        %v7683 = vpack.c.b16 %v6963, %v6955
        %v7684 = vpack.c.b16 %v6964, %v6956
        %v7685 = vpack.c.b16 %v6965, %v6957
        %v7686 = vpack.c.b16 %v6966, %v6958
        %v7687 = vpack.c.b16 %v6967, %v6959
        %v7688 = vpack.c.b16 %v6968, %v6960
        %v7689 = vpack.c.b16 %v6969, %v6961
        %v7690 = vpack.c.b16 %v6978, %v6970
        %v7691 = vpack.c.b16 %v6979, %v6971
        %v7692 = vpack.c.b16 %v6980, %v6972
        %v7693 = vpack.c.b16 %v6981, %v6973
        %v7694 = vpack.c.b16 %v6982, %v6974
        %v7695 = vpack.c.b16 %v6983, %v6975
        %v7696 = vpack.c.b16 %v6984, %v6976
        %v7697 = vpack.c.b16 %v6985, %v6977
        %v7698 = vpack.c.b16 %v6994, %v6986
        %v7699 = vpack.c.b16 %v6995, %v6987
        %v7700 = vpack.c.b16 %v6996, %v6988
        %v7701 = vpack.c.b16 %v6997, %v6989
        %v7702 = vpack.c.b16 %v6998, %v6990
        %v7703 = vpack.c.b16 %v6999, %v6991
        %v7704 = vpack.c.b16 %v7000, %v6992
        %v7705 = vpack.c.b16 %v7001, %v6993
        %v7706 = vpack.c.b16 %v7010, %v7002
        %v7707 = vpack.c.b16 %v7011, %v7003
        %v7708 = vpack.c.b16 %v7012, %v7004
        %v7709 = vpack.c.b16 %v7013, %v7005
        %v7710 = vpack.c.b16 %v7014, %v7006
        %v7711 = vpack.c.b16 %v7015, %v7007
        %v7712 = vpack.c.b16 %v7016, %v7008
        %v7713 = vpack.c.b16 %v7017, %v7009
        %v7714 = vpack.c.b16 %v7026, %v7018
        %v7715 = vpack.c.b16 %v7027, %v7019
        %v7716 = vpack.c.b16 %v7028, %v7020
        %v7717 = vpack.c.b16 %v7029, %v7021
        %v7718 = vpack.c.b16 %v7030, %v7022
        %v7719 = vpack.c.b16 %v7031, %v7023
        %v7720 = vpack.c.b16 %v7032, %v7024
        %v7721 = vpack.c.b16 %v7033, %v7025
        %v7722 = vpack.c.b16 %v7042, %v7034
        %v7723 = vpack.c.b16 %v7043, %v7035
        %v7724 = vpack.c.b16 %v7044, %v7036
        %v7725 = vpack.c.b16 %v7045, %v7037
        %v7726 = vpack.c.b16 %v7046, %v7038
        %v7727 = vpack.c.b16 %v7047, %v7039
        %v7728 = vpack.c.b16 %v7048, %v7040
        %v7729 = vpack.c.b16 %v7049, %v7041
        %v7730 = vpack.c.b16 %v7058, %v7050
        %v7731 = vpack.c.b16 %v7059, %v7051
        %v7732 = vpack.c.b16 %v7060, %v7052
        %v7733 = vpack.c.b16 %v7061, %v7053
        %v7734 = vpack.c.b16 %v7062, %v7054
        %v7735 = vpack.c.b16 %v7063, %v7055
        %v7736 = vpack.c.b16 %v7064, %v7056
        %v7737 = vpack.c.b16 %v7065, %v7057
        %v7738 = vpack.c.b16 %v7074, %v7066
        %v7739 = vpack.c.b16 %v7075, %v7067
        %v7740 = vpack.c.b16 %v7076, %v7068
        %v7741 = vpack.c.b16 %v7077, %v7069
        %v7742 = vpack.c.b16 %v7078, %v7070
        %v7743 = vpack.c.b16 %v7079, %v7071
        %v7744 = vpack.c.b16 %v7080, %v7072
        %v7745 = vpack.c.b16 %v7081, %v7073
        %v7746 = vpack.c.b16 %v7090, %v7082
        %v7747 = vpack.c.b16 %v7091, %v7083
        %v7748 = vpack.c.b16 %v7092, %v7084
        %v7749 = vpack.c.b16 %v7093, %v7085
        %v7750 = vpack.c.b16 %v7094, %v7086
        %v7751 = vpack.c.b16 %v7095, %v7087
        %v7752 = vpack.c.b16 %v7096, %v7088
        %v7753 = vpack.c.b16 %v7097, %v7089
        %v7754 = vpack.c.b16 %v7106, %v7098
        %v7755 = vpack.c.b16 %v7107, %v7099
        %v7756 = vpack.c.b16 %v7108, %v7100
        %v7757 = vpack.c.b16 %v7109, %v7101
        %v7758 = vpack.c.b16 %v7110, %v7102
        %v7759 = vpack.c.b16 %v7111, %v7103
        %v7760 = vpack.c.b16 %v7112, %v7104
        %v7761 = vpack.c.b16 %v7113, %v7105
        %v7762 = vpack.c.b16 %v7122, %v7114
        %v7763 = vpack.c.b16 %v7123, %v7115
        %v7764 = vpack.c.b16 %v7124, %v7116
        %v7765 = vpack.c.b16 %v7125, %v7117
        %v7766 = vpack.c.b16 %v7126, %v7118
        %v7767 = vpack.c.b16 %v7127, %v7119
        %v7768 = vpack.c.b16 %v7128, %v7120
        %v7769 = vpack.c.b16 %v7129, %v7121
        %v7770 = vpack.c.b16 %v7138, %v7130
        %v7771 = vpack.c.b16 %v7139, %v7131
        %v7772 = vpack.c.b16 %v7140, %v7132
        %v7773 = vpack.c.b16 %v7141, %v7133
        %v7774 = vpack.c.b16 %v7142, %v7134
        %v7775 = vpack.c.b16 %v7143, %v7135
        %v7776 = vpack.c.b16 %v7144, %v7136
        %v7777 = vpack.c.b16 %v7145, %v7137
        %v7778 = vpack.c.b16 %v7154, %v7146
        %v7779 = vpack.c.b16 %v7155, %v7147
        %v7780 = vpack.c.b16 %v7156, %v7148
        %v7781 = vpack.c.b16 %v7157, %v7149
        %v7782 = vpack.c.b16 %v7158, %v7150
        %v7783 = vpack.c.b16 %v7159, %v7151
        %v7784 = vpack.c.b16 %v7160, %v7152
        %v7785 = vpack.c.b16 %v7161, %v7153
        %v7786 = vpack.c.b16 %v7170, %v7162
        %v7787 = vpack.c.b16 %v7171, %v7163
        %v7788 = vpack.c.b16 %v7172, %v7164
        %v7789 = vpack.c.b16 %v7173, %v7165
        %v7790 = vpack.c.b16 %v7174, %v7166
        %v7791 = vpack.c.b16 %v7175, %v7167
        %v7792 = vpack.c.b16 %v7176, %v7168
        %v7793 = vpack.c.b16 %v7177, %v7169
        %v7794 = vpack.c.b16 %v7186, %v7178
        %v7795 = vpack.c.b16 %v7187, %v7179
        %v7796 = vpack.c.b16 %v7188, %v7180
        %v7797 = vpack.c.b16 %v7189, %v7181
        %v7798 = vpack.c.b16 %v7190, %v7182
        %v7799 = vpack.c.b16 %v7191, %v7183
        %v7800 = vpack.c.b16 %v7192, %v7184
        %v7801 = vpack.c.b16 %v7193, %v7185
        %v7802 = vpack.c.b16 %v7202, %v7194
        %v7803 = vpack.c.b16 %v7203, %v7195
        %v7804 = vpack.c.b16 %v7204, %v7196
        %v7805 = vpack.c.b16 %v7205, %v7197
        %v7806 = vpack.c.b16 %v7206, %v7198
        %v7807 = vpack.c.b16 %v7207, %v7199
        %v7808 = vpack.c.b16 %v7208, %v7200
        %v7809 = vpack.c.b16 %v7209, %v7201
        %v7810 = vpack.c.b16 %v7218, %v7210
        %v7811 = vpack.c.b16 %v7219, %v7211
        %v7812 = vpack.c.b16 %v7220, %v7212
        %v7813 = vpack.c.b16 %v7221, %v7213
        %v7814 = vpack.c.b16 %v7222, %v7214
        %v7815 = vpack.c.b16 %v7223, %v7215
        %v7816 = vpack.c.b16 %v7224, %v7216
        %v7817 = vpack.c.b16 %v7225, %v7217
        %v7818 = vpack.c.b16 %v7234, %v7226
        %v7819 = vpack.c.b16 %v7235, %v7227
        %v7820 = vpack.c.b16 %v7236, %v7228
        %v7821 = vpack.c.b16 %v7237, %v7229
        %v7822 = vpack.c.b16 %v7238, %v7230
        %v7823 = vpack.c.b16 %v7239, %v7231
        %v7824 = vpack.c.b16 %v7240, %v7232
        %v7825 = vpack.c.b16 %v7241, %v7233
        %v7826 = vpack.c.b16 %v7250, %v7242
        %v7827 = vpack.c.b16 %v7251, %v7243
        %v7828 = vpack.c.b16 %v7252, %v7244
        %v7829 = vpack.c.b16 %v7253, %v7245
        %v7830 = vpack.c.b16 %v7254, %v7246
        %v7831 = vpack.c.b16 %v7255, %v7247
        %v7832 = vpack.c.b16 %v7256, %v7248
        %v7833 = vpack.c.b16 %v7257, %v7249
        %v7834 = vpack.c.b16 %v7266, %v7258
        %v7835 = vpack.c.b16 %v7267, %v7259
        %v7836 = vpack.c.b16 %v7268, %v7260
        %v7837 = vpack.c.b16 %v7269, %v7261
        %v7838 = vpack.c.b16 %v7270, %v7262
        %v7839 = vpack.c.b16 %v7271, %v7263
        %v7840 = vpack.c.b16 %v7272, %v7264
        %v7841 = vpack.c.b16 %v7273, %v7265
        %v7842 = vpack.c.b16 %v7282, %v7274
        %v7843 = vpack.c.b16 %v7283, %v7275
        %v7844 = vpack.c.b16 %v7284, %v7276
        %v7845 = vpack.c.b16 %v7285, %v7277
        %v7846 = vpack.c.b16 %v7286, %v7278
        %v7847 = vpack.c.b16 %v7287, %v7279
        %v7848 = vpack.c.b16 %v7288, %v7280
        %v7849 = vpack.c.b16 %v7289, %v7281
        %v7850 = vpack.c.b16 %v7298, %v7290
        %v7851 = vpack.c.b16 %v7299, %v7291
        %v7852 = vpack.c.b16 %v7300, %v7292
        %v7853 = vpack.c.b16 %v7301, %v7293
        %v7854 = vpack.c.b16 %v7302, %v7294
        %v7855 = vpack.c.b16 %v7303, %v7295
        %v7856 = vpack.c.b16 %v7304, %v7296
        %v7857 = vpack.c.b16 %v7305, %v7297
        %v7858 = vpack.c.b16 %v7314, %v7306
        %v7859 = vpack.c.b16 %v7315, %v7307
        %v7860 = vpack.c.b16 %v7316, %v7308
        %v7861 = vpack.c.b16 %v7317, %v7309
        %v7862 = vpack.c.b16 %v7318, %v7310
        %v7863 = vpack.c.b16 %v7319, %v7311
        %v7864 = vpack.c.b16 %v7320, %v7312
        %v7865 = vpack.c.b16 %v7321, %v7313
        %v7866 = vpack.c.b16 %v7330, %v7322
        %v7867 = vpack.c.b16 %v7331, %v7323
        %v7868 = vpack.c.b16 %v7332, %v7324
        %v7869 = vpack.c.b16 %v7333, %v7325
        %v7870 = vpack.c.b16 %v7334, %v7326
        %v7871 = vpack.c.b16 %v7335, %v7327
        %v7872 = vpack.c.b16 %v7336, %v7328
        %v7873 = vpack.c.b16 %v7337, %v7329
        %v7874 = vpack.c.b16 %v7346, %v7338
        %v7875 = vpack.c.b16 %v7347, %v7339
        %v7876 = vpack.c.b16 %v7348, %v7340
        %v7877 = vpack.c.b16 %v7349, %v7341
        %v7878 = vpack.c.b16 %v7350, %v7342
        %v7879 = vpack.c.b16 %v7351, %v7343
        %v7880 = vpack.c.b16 %v7352, %v7344
        %v7881 = vpack.c.b16 %v7353, %v7345
        %v7882 = vpack.c.b16 %v7362, %v7354
        %v7883 = vpack.c.b16 %v7363, %v7355
        %v7884 = vpack.c.b16 %v7364, %v7356
        %v7885 = vpack.c.b16 %v7365, %v7357
        %v7886 = vpack.c.b16 %v7366, %v7358
        %v7887 = vpack.c.b16 %v7367, %v7359
        %v7888 = vpack.c.b16 %v7368, %v7360
        %v7889 = vpack.c.b16 %v7369, %v7361
        %v7890 = vpack.c.b16 %v7378, %v7370
        %v7891 = vpack.c.b16 %v7379, %v7371
        %v7892 = vpack.c.b16 %v7380, %v7372
        %v7893 = vpack.c.b16 %v7381, %v7373
        %v7894 = vpack.c.b16 %v7382, %v7374
        %v7895 = vpack.c.b16 %v7383, %v7375
        %v7896 = vpack.c.b16 %v7384, %v7376
        %v7897 = vpack.c.b16 %v7385, %v7377
        %8410 = vmatpush.bf16.msra.mxu0 %v7442
        %8411 = vmatpush.bf16.msra.mxu0 %v7434
        %8412 = vmatpush.bf16.msra.mxu0 %v7426
        %8413 = vmatpush.bf16.msra.mxu0 %v7418
        %8414 = vmatpush.bf16.msra.mxu0 %v7410
        %8415 = vmatpush.bf16.msra.mxu0 %v7402
        %8416 = vmatpush.bf16.msra.mxu0 %v7394
        %8417 = vmatpush.bf16.msra.mxu0 %v7386
        %8418 = vmatmul.bf16.gmra.mxu0 %v5256
        %v8419 = vpop.f32.mrf.mxu0
        %v8420 = vadd.f32 %v5834, %v8419
        %v8421 = vpop.f32.mrf.mxu0
        %v8422 = vadd.f32 %v5834, %v8421
        %8423 = vmatmul.bf16.gmra.mxu0 %v5264
        %v8424 = vpop.f32.mrf.mxu0
        %v8425 = vadd.f32 %v5834, %v8424
        %v8426 = vpop.f32.mrf.mxu0
        %v8427 = vadd.f32 %v5834, %v8426
        %8428 = vmatmul.bf16.gmra.mxu0 %v5272
        %v8429 = vpop.f32.mrf.mxu0
        %v8430 = vadd.f32 %v5834, %v8429
        %v8431 = vpop.f32.mrf.mxu0
        %v8432 = vadd.f32 %v5834, %v8431
        %8433 = vmatmul.bf16.gmra.mxu0 %v5280
        %v8434 = vpop.f32.mrf.mxu0
        %v8435 = vadd.f32 %v5834, %v8434
        %v8436 = vpop.f32.mrf.mxu0
        %v8437 = vadd.f32 %v5834, %v8436
        %8438 = vmatmul.bf16.gmra.mxu0 %v5288
        %v8439 = vpop.f32.mrf.mxu0
        %v8440 = vadd.f32 %v5834, %v8439
        %v8441 = vpop.f32.mrf.mxu0
        %v8442 = vadd.f32 %v5834, %v8441
        %8443 = vmatmul.bf16.gmra.mxu0 %v5296
        %v8444 = vpop.f32.mrf.mxu0
        %v8445 = vadd.f32 %v5834, %v8444
        %v8446 = vpop.f32.mrf.mxu0
        %v8447 = vadd.f32 %v5834, %v8446
        %8448 = vmatmul.bf16.gmra.mxu0 %v5304
        %v8449 = vpop.f32.mrf.mxu0
        %v8450 = vadd.f32 %v5834, %v8449
        %v8451 = vpop.f32.mrf.mxu0
        %v8452 = vadd.f32 %v5834, %v8451
        %8453 = vmatmul.bf16.gmra.mxu0 %v5312
        %v8454 = vpop.f32.mrf.mxu0
        %v8455 = vadd.f32 %v5834, %v8454
        %v8456 = vpop.f32.mrf.mxu0
        %v8457 = vadd.f32 %v5834, %v8456
        %8458 = vdwg.mxu0
        %8459 = vmatpush.bf16.msra.mxu0 %v7506
        %8460 = vmatpush.bf16.msra.mxu0 %v7498
        %8461 = vmatpush.bf16.msra.mxu0 %v7490
        %8462 = vmatpush.bf16.msra.mxu0 %v7482
        %8463 = vmatpush.bf16.msra.mxu0 %v7474
        %8464 = vmatpush.bf16.msra.mxu0 %v7466
        %8465 = vmatpush.bf16.msra.mxu0 %v7458
        %8466 = vmatpush.bf16.msra.mxu0 %v7450
        %8467 = vmatmul.bf16.gmra.mxu0 %v5257
        %v8468 = vpop.f32.mrf.mxu0
        %v8469 = vadd.f32 %v8420, %v8468
        %v8470 = vpop.f32.mrf.mxu0
        %v8471 = vadd.f32 %v8422, %v8470
        %8472 = vmatmul.bf16.gmra.mxu0 %v5265
        %v8473 = vpop.f32.mrf.mxu0
        %v8474 = vadd.f32 %v8425, %v8473
        %v8475 = vpop.f32.mrf.mxu0
        %v8476 = vadd.f32 %v8427, %v8475
        %8477 = vmatmul.bf16.gmra.mxu0 %v5273
        %v8478 = vpop.f32.mrf.mxu0
        %v8479 = vadd.f32 %v8430, %v8478
        %v8480 = vpop.f32.mrf.mxu0
        %v8481 = vadd.f32 %v8432, %v8480
        %8482 = vmatmul.bf16.gmra.mxu0 %v5281
        %v8483 = vpop.f32.mrf.mxu0
        %v8484 = vadd.f32 %v8435, %v8483
        %v8485 = vpop.f32.mrf.mxu0
        %v8486 = vadd.f32 %v8437, %v8485
        %8487 = vmatmul.bf16.gmra.mxu0 %v5289
        %v8488 = vpop.f32.mrf.mxu0
        %v8489 = vadd.f32 %v8440, %v8488
        %v8490 = vpop.f32.mrf.mxu0
        %v8491 = vadd.f32 %v8442, %v8490
        %8492 = vmatmul.bf16.gmra.mxu0 %v5297
        %v8493 = vpop.f32.mrf.mxu0
        %v8494 = vadd.f32 %v8445, %v8493
        %v8495 = vpop.f32.mrf.mxu0
        %v8496 = vadd.f32 %v8447, %v8495
        %8497 = vmatmul.bf16.gmra.mxu0 %v5305
        %v8498 = vpop.f32.mrf.mxu0
        %v8499 = vadd.f32 %v8450, %v8498
        %v8500 = vpop.f32.mrf.mxu0
        %v8501 = vadd.f32 %v8452, %v8500
        %8502 = vmatmul.bf16.gmra.mxu0 %v5313
        %v8503 = vpop.f32.mrf.mxu0
        %v8504 = vadd.f32 %v8455, %v8503
        %v8505 = vpop.f32.mrf.mxu0
        %v8506 = vadd.f32 %v8457, %v8505
        %8507 = vdwg.mxu0
        %8508 = vmatpush.bf16.msra.mxu0 %v7570
        %8509 = vmatpush.bf16.msra.mxu0 %v7562
        %8510 = vmatpush.bf16.msra.mxu0 %v7554
        %8511 = vmatpush.bf16.msra.mxu0 %v7546
        %8512 = vmatpush.bf16.msra.mxu0 %v7538
        %8513 = vmatpush.bf16.msra.mxu0 %v7530
        %8514 = vmatpush.bf16.msra.mxu0 %v7522
        %8515 = vmatpush.bf16.msra.mxu0 %v7514
        %8516 = vmatmul.bf16.gmra.mxu0 %v5258
        %v8517 = vpop.f32.mrf.mxu0
        %v8518 = vadd.f32 %v8469, %v8517
        %v8519 = vpop.f32.mrf.mxu0
        %v8520 = vadd.f32 %v8471, %v8519
        %8521 = vmatmul.bf16.gmra.mxu0 %v5266
        %v8522 = vpop.f32.mrf.mxu0
        %v8523 = vadd.f32 %v8474, %v8522
        %v8524 = vpop.f32.mrf.mxu0
        %v8525 = vadd.f32 %v8476, %v8524
        %8526 = vmatmul.bf16.gmra.mxu0 %v5274
        %v8527 = vpop.f32.mrf.mxu0
        %v8528 = vadd.f32 %v8479, %v8527
        %v8529 = vpop.f32.mrf.mxu0
        %v8530 = vadd.f32 %v8481, %v8529
        %8531 = vmatmul.bf16.gmra.mxu0 %v5282
        %v8532 = vpop.f32.mrf.mxu0
        %v8533 = vadd.f32 %v8484, %v8532
        %v8534 = vpop.f32.mrf.mxu0
        %v8535 = vadd.f32 %v8486, %v8534
        %8536 = vmatmul.bf16.gmra.mxu0 %v5290
        %v8537 = vpop.f32.mrf.mxu0
        %v8538 = vadd.f32 %v8489, %v8537
        %v8539 = vpop.f32.mrf.mxu0
        %v8540 = vadd.f32 %v8491, %v8539
        %8541 = vmatmul.bf16.gmra.mxu0 %v5298
        %v8542 = vpop.f32.mrf.mxu0
        %v8543 = vadd.f32 %v8494, %v8542
        %v8544 = vpop.f32.mrf.mxu0
        %v8545 = vadd.f32 %v8496, %v8544
        %8546 = vmatmul.bf16.gmra.mxu0 %v5306
        %v8547 = vpop.f32.mrf.mxu0
        %v8548 = vadd.f32 %v8499, %v8547
        %v8549 = vpop.f32.mrf.mxu0
        %v8550 = vadd.f32 %v8501, %v8549
        %8551 = vmatmul.bf16.gmra.mxu0 %v5314
        %v8552 = vpop.f32.mrf.mxu0
        %v8553 = vadd.f32 %v8504, %v8552
        %v8554 = vpop.f32.mrf.mxu0
        %v8555 = vadd.f32 %v8506, %v8554
        %8556 = vdwg.mxu0
        %8557 = vmatpush.bf16.msra.mxu0 %v7634
        %8558 = vmatpush.bf16.msra.mxu0 %v7626
        %8559 = vmatpush.bf16.msra.mxu0 %v7618
        %8560 = vmatpush.bf16.msra.mxu0 %v7610
        %8561 = vmatpush.bf16.msra.mxu0 %v7602
        %8562 = vmatpush.bf16.msra.mxu0 %v7594
        %8563 = vmatpush.bf16.msra.mxu0 %v7586
        %8564 = vmatpush.bf16.msra.mxu0 %v7578
        %8565 = vmatmul.bf16.gmra.mxu0 %v5259
        %v8566 = vpop.f32.mrf.mxu0
        %v8567 = vadd.f32 %v8518, %v8566
        %v8568 = vpop.f32.mrf.mxu0
        %v8569 = vadd.f32 %v8520, %v8568
        %8570 = vmatmul.bf16.gmra.mxu0 %v5267
        %v8571 = vpop.f32.mrf.mxu0
        %v8572 = vadd.f32 %v8523, %v8571
        %v8573 = vpop.f32.mrf.mxu0
        %v8574 = vadd.f32 %v8525, %v8573
        %8575 = vmatmul.bf16.gmra.mxu0 %v5275
        %v8576 = vpop.f32.mrf.mxu0
        %v8577 = vadd.f32 %v8528, %v8576
        %v8578 = vpop.f32.mrf.mxu0
        %v8579 = vadd.f32 %v8530, %v8578
        %8580 = vmatmul.bf16.gmra.mxu0 %v5283
        %v8581 = vpop.f32.mrf.mxu0
        %v8582 = vadd.f32 %v8533, %v8581
        %v8583 = vpop.f32.mrf.mxu0
        %v8584 = vadd.f32 %v8535, %v8583
        %8585 = vmatmul.bf16.gmra.mxu0 %v5291
        %v8586 = vpop.f32.mrf.mxu0
        %v8587 = vadd.f32 %v8538, %v8586
        %v8588 = vpop.f32.mrf.mxu0
        %v8589 = vadd.f32 %v8540, %v8588
        %8590 = vmatmul.bf16.gmra.mxu0 %v5299
        %v8591 = vpop.f32.mrf.mxu0
        %v8592 = vadd.f32 %v8543, %v8591
        %v8593 = vpop.f32.mrf.mxu0
        %v8594 = vadd.f32 %v8545, %v8593
        %8595 = vmatmul.bf16.gmra.mxu0 %v5307
        %v8596 = vpop.f32.mrf.mxu0
        %v8597 = vadd.f32 %v8548, %v8596
        %v8598 = vpop.f32.mrf.mxu0
        %v8599 = vadd.f32 %v8550, %v8598
        %8600 = vmatmul.bf16.gmra.mxu0 %v5315
        %v8601 = vpop.f32.mrf.mxu0
        %v8602 = vadd.f32 %v8553, %v8601
        %v8603 = vpop.f32.mrf.mxu0
        %v8604 = vadd.f32 %v8555, %v8603
        %8605 = vdwg.mxu0
        %8606 = vmatpush.bf16.msra.mxu0 %v7698
        %8607 = vmatpush.bf16.msra.mxu0 %v7690
        %8608 = vmatpush.bf16.msra.mxu0 %v7682
        %8609 = vmatpush.bf16.msra.mxu0 %v7674
        %8610 = vmatpush.bf16.msra.mxu0 %v7666
        %8611 = vmatpush.bf16.msra.mxu0 %v7658
        %8612 = vmatpush.bf16.msra.mxu0 %v7650
        %8613 = vmatpush.bf16.msra.mxu0 %v7642
        %8614 = vmatmul.bf16.gmra.mxu0 %v5260
        %v8615 = vpop.f32.mrf.mxu0
        %v8616 = vadd.f32 %v8567, %v8615
        %v8617 = vpop.f32.mrf.mxu0
        %v8618 = vadd.f32 %v8569, %v8617
        %8619 = vmatmul.bf16.gmra.mxu0 %v5268
        %v8620 = vpop.f32.mrf.mxu0
        %v8621 = vadd.f32 %v8572, %v8620
        %v8622 = vpop.f32.mrf.mxu0
        %v8623 = vadd.f32 %v8574, %v8622
        %8624 = vmatmul.bf16.gmra.mxu0 %v5276
        %v8625 = vpop.f32.mrf.mxu0
        %v8626 = vadd.f32 %v8577, %v8625
        %v8627 = vpop.f32.mrf.mxu0
        %v8628 = vadd.f32 %v8579, %v8627
        %8629 = vmatmul.bf16.gmra.mxu0 %v5284
        %v8630 = vpop.f32.mrf.mxu0
        %v8631 = vadd.f32 %v8582, %v8630
        %v8632 = vpop.f32.mrf.mxu0
        %v8633 = vadd.f32 %v8584, %v8632
        %8634 = vmatmul.bf16.gmra.mxu0 %v5292
        %v8635 = vpop.f32.mrf.mxu0
        %v8636 = vadd.f32 %v8587, %v8635
        %v8637 = vpop.f32.mrf.mxu0
        %v8638 = vadd.f32 %v8589, %v8637
        %8639 = vmatmul.bf16.gmra.mxu0 %v5300
        %v8640 = vpop.f32.mrf.mxu0
        %v8641 = vadd.f32 %v8592, %v8640
        %v8642 = vpop.f32.mrf.mxu0
        %v8643 = vadd.f32 %v8594, %v8642
        %8644 = vmatmul.bf16.gmra.mxu0 %v5308
        %v8645 = vpop.f32.mrf.mxu0
        %v8646 = vadd.f32 %v8597, %v8645
        %v8647 = vpop.f32.mrf.mxu0
        %v8648 = vadd.f32 %v8599, %v8647
        %8649 = vmatmul.bf16.gmra.mxu0 %v5316
        %v8650 = vpop.f32.mrf.mxu0
        %v8651 = vadd.f32 %v8602, %v8650
        %v8652 = vpop.f32.mrf.mxu0
        %v8653 = vadd.f32 %v8604, %v8652
        %8654 = vdwg.mxu0
        %8655 = vmatpush.bf16.msra.mxu0 %v7762
        %8656 = vmatpush.bf16.msra.mxu0 %v7754
        %8657 = vmatpush.bf16.msra.mxu0 %v7746
        %8658 = vmatpush.bf16.msra.mxu0 %v7738
        %8659 = vmatpush.bf16.msra.mxu0 %v7730
        %8660 = vmatpush.bf16.msra.mxu0 %v7722
        %8661 = vmatpush.bf16.msra.mxu0 %v7714
        %8662 = vmatpush.bf16.msra.mxu0 %v7706
        %8663 = vmatmul.bf16.gmra.mxu0 %v5261
        %v8664 = vpop.f32.mrf.mxu0
        %v8665 = vadd.f32 %v8616, %v8664
        %v8666 = vpop.f32.mrf.mxu0
        %v8667 = vadd.f32 %v8618, %v8666
        %8668 = vmatmul.bf16.gmra.mxu0 %v5269
        %v8669 = vpop.f32.mrf.mxu0
        %v8670 = vadd.f32 %v8621, %v8669
        %v8671 = vpop.f32.mrf.mxu0
        %v8672 = vadd.f32 %v8623, %v8671
        %8673 = vmatmul.bf16.gmra.mxu0 %v5277
        %v8674 = vpop.f32.mrf.mxu0
        %v8675 = vadd.f32 %v8626, %v8674
        %v8676 = vpop.f32.mrf.mxu0
        %v8677 = vadd.f32 %v8628, %v8676
        %8678 = vmatmul.bf16.gmra.mxu0 %v5285
        %v8679 = vpop.f32.mrf.mxu0
        %v8680 = vadd.f32 %v8631, %v8679
        %v8681 = vpop.f32.mrf.mxu0
        %v8682 = vadd.f32 %v8633, %v8681
        %8683 = vmatmul.bf16.gmra.mxu0 %v5293
        %v8684 = vpop.f32.mrf.mxu0
        %v8685 = vadd.f32 %v8636, %v8684
        %v8686 = vpop.f32.mrf.mxu0
        %v8687 = vadd.f32 %v8638, %v8686
        %8688 = vmatmul.bf16.gmra.mxu0 %v5301
        %v8689 = vpop.f32.mrf.mxu0
        %v8690 = vadd.f32 %v8641, %v8689
        %v8691 = vpop.f32.mrf.mxu0
        %v8692 = vadd.f32 %v8643, %v8691
        %8693 = vmatmul.bf16.gmra.mxu0 %v5309
        %v8694 = vpop.f32.mrf.mxu0
        %v8695 = vadd.f32 %v8646, %v8694
        %v8696 = vpop.f32.mrf.mxu0
        %v8697 = vadd.f32 %v8648, %v8696
        %8698 = vmatmul.bf16.gmra.mxu0 %v5317
        %v8699 = vpop.f32.mrf.mxu0
        %v8700 = vadd.f32 %v8651, %v8699
        %v8701 = vpop.f32.mrf.mxu0
        %v8702 = vadd.f32 %v8653, %v8701
        %8703 = vdwg.mxu0
        %8704 = vmatpush.bf16.msra.mxu0 %v7826
        %8705 = vmatpush.bf16.msra.mxu0 %v7818
        %8706 = vmatpush.bf16.msra.mxu0 %v7810
        %8707 = vmatpush.bf16.msra.mxu0 %v7802
        %8708 = vmatpush.bf16.msra.mxu0 %v7794
        %8709 = vmatpush.bf16.msra.mxu0 %v7786
        %8710 = vmatpush.bf16.msra.mxu0 %v7778
        %8711 = vmatpush.bf16.msra.mxu0 %v7770
        %8712 = vmatmul.bf16.gmra.mxu0 %v5262
        %v8713 = vpop.f32.mrf.mxu0
        %v8714 = vadd.f32 %v8665, %v8713
        %v8715 = vpop.f32.mrf.mxu0
        %v8716 = vadd.f32 %v8667, %v8715
        %8717 = vmatmul.bf16.gmra.mxu0 %v5270
        %v8718 = vpop.f32.mrf.mxu0
        %v8719 = vadd.f32 %v8670, %v8718
        %v8720 = vpop.f32.mrf.mxu0
        %v8721 = vadd.f32 %v8672, %v8720
        %8722 = vmatmul.bf16.gmra.mxu0 %v5278
        %v8723 = vpop.f32.mrf.mxu0
        %v8724 = vadd.f32 %v8675, %v8723
        %v8725 = vpop.f32.mrf.mxu0
        %v8726 = vadd.f32 %v8677, %v8725
        %8727 = vmatmul.bf16.gmra.mxu0 %v5286
        %v8728 = vpop.f32.mrf.mxu0
        %v8729 = vadd.f32 %v8680, %v8728
        %v8730 = vpop.f32.mrf.mxu0
        %v8731 = vadd.f32 %v8682, %v8730
        %8732 = vmatmul.bf16.gmra.mxu0 %v5294
        %v8733 = vpop.f32.mrf.mxu0
        %v8734 = vadd.f32 %v8685, %v8733
        %v8735 = vpop.f32.mrf.mxu0
        %v8736 = vadd.f32 %v8687, %v8735
        %8737 = vmatmul.bf16.gmra.mxu0 %v5302
        %v8738 = vpop.f32.mrf.mxu0
        %v8739 = vadd.f32 %v8690, %v8738
        %v8740 = vpop.f32.mrf.mxu0
        %v8741 = vadd.f32 %v8692, %v8740
        %8742 = vmatmul.bf16.gmra.mxu0 %v5310
        %v8743 = vpop.f32.mrf.mxu0
        %v8744 = vadd.f32 %v8695, %v8743
        %v8745 = vpop.f32.mrf.mxu0
        %v8746 = vadd.f32 %v8697, %v8745
        %8747 = vmatmul.bf16.gmra.mxu0 %v5318
        %v8748 = vpop.f32.mrf.mxu0
        %v8749 = vadd.f32 %v8700, %v8748
        %v8750 = vpop.f32.mrf.mxu0
        %v8751 = vadd.f32 %v8702, %v8750
        %8752 = vdwg.mxu0
        %8753 = vmatpush.bf16.msra.mxu0 %v7890
        %8754 = vmatpush.bf16.msra.mxu0 %v7882
        %8755 = vmatpush.bf16.msra.mxu0 %v7874
        %8756 = vmatpush.bf16.msra.mxu0 %v7866
        %8757 = vmatpush.bf16.msra.mxu0 %v7858
        %8758 = vmatpush.bf16.msra.mxu0 %v7850
        %8759 = vmatpush.bf16.msra.mxu0 %v7842
        %8760 = vmatpush.bf16.msra.mxu0 %v7834
        %8761 = vmatmul.bf16.gmra.mxu0 %v5263
        %v8762 = vpop.f32.mrf.mxu0
        %v8763 = vadd.f32 %v8714, %v8762
        %v8764 = vpop.f32.mrf.mxu0
        %v8765 = vadd.f32 %v8716, %v8764
        %8766 = vmatmul.bf16.gmra.mxu0 %v5271
        %v8767 = vpop.f32.mrf.mxu0
        %v8768 = vadd.f32 %v8719, %v8767
        %v8769 = vpop.f32.mrf.mxu0
        %v8770 = vadd.f32 %v8721, %v8769
        %8771 = vmatmul.bf16.gmra.mxu0 %v5279
        %v8772 = vpop.f32.mrf.mxu0
        %v8773 = vadd.f32 %v8724, %v8772
        %v8774 = vpop.f32.mrf.mxu0
        %v8775 = vadd.f32 %v8726, %v8774
        %8776 = vmatmul.bf16.gmra.mxu0 %v5287
        %v8777 = vpop.f32.mrf.mxu0
        %v8778 = vadd.f32 %v8729, %v8777
        %v8779 = vpop.f32.mrf.mxu0
        %v8780 = vadd.f32 %v8731, %v8779
        %8781 = vmatmul.bf16.gmra.mxu0 %v5295
        %v8782 = vpop.f32.mrf.mxu0
        %v8783 = vadd.f32 %v8734, %v8782
        %v8784 = vpop.f32.mrf.mxu0
        %v8785 = vadd.f32 %v8736, %v8784
        %8786 = vmatmul.bf16.gmra.mxu0 %v5303
        %v8787 = vpop.f32.mrf.mxu0
        %v8788 = vadd.f32 %v8739, %v8787
        %v8789 = vpop.f32.mrf.mxu0
        %v8790 = vadd.f32 %v8741, %v8789
        %8791 = vmatmul.bf16.gmra.mxu0 %v5311
        %v8792 = vpop.f32.mrf.mxu0
        %v8793 = vadd.f32 %v8744, %v8792
        %v8794 = vpop.f32.mrf.mxu0
        %v8795 = vadd.f32 %v8746, %v8794
        %8796 = vmatmul.bf16.gmra.mxu0 %v5319
        %v8797 = vpop.f32.mrf.mxu0
        %v8798 = vadd.f32 %v8749, %v8797
        %v8799 = vpop.f32.mrf.mxu0
        %v8800 = vadd.f32 %v8751, %v8799
        %8801 = vdwg.mxu0
        %8802 = vmatpush.bf16.msra.mxu0 %v7443
        %8803 = vmatpush.bf16.msra.mxu0 %v7435
        %8804 = vmatpush.bf16.msra.mxu0 %v7427
        %8805 = vmatpush.bf16.msra.mxu0 %v7419
        %8806 = vmatpush.bf16.msra.mxu0 %v7411
        %8807 = vmatpush.bf16.msra.mxu0 %v7403
        %8808 = vmatpush.bf16.msra.mxu0 %v7395
        %8809 = vmatpush.bf16.msra.mxu0 %v7387
        %8810 = vmatmul.bf16.gmra.mxu0 %v5256
        %v8811 = vpop.f32.mrf.mxu0
        %v8812 = vadd.f32 %v5835, %v8811
        %v8813 = vpop.f32.mrf.mxu0
        %v8814 = vadd.f32 %v5835, %v8813
        %8815 = vmatmul.bf16.gmra.mxu0 %v5264
        %v8816 = vpop.f32.mrf.mxu0
        %v8817 = vadd.f32 %v5835, %v8816
        %v8818 = vpop.f32.mrf.mxu0
        %v8819 = vadd.f32 %v5835, %v8818
        %8820 = vmatmul.bf16.gmra.mxu0 %v5272
        %v8821 = vpop.f32.mrf.mxu0
        %v8822 = vadd.f32 %v5835, %v8821
        %v8823 = vpop.f32.mrf.mxu0
        %v8824 = vadd.f32 %v5835, %v8823
        %8825 = vmatmul.bf16.gmra.mxu0 %v5280
        %v8826 = vpop.f32.mrf.mxu0
        %v8827 = vadd.f32 %v5835, %v8826
        %v8828 = vpop.f32.mrf.mxu0
        %v8829 = vadd.f32 %v5835, %v8828
        %8830 = vmatmul.bf16.gmra.mxu0 %v5288
        %v8831 = vpop.f32.mrf.mxu0
        %v8832 = vadd.f32 %v5835, %v8831
        %v8833 = vpop.f32.mrf.mxu0
        %v8834 = vadd.f32 %v5835, %v8833
        %8835 = vmatmul.bf16.gmra.mxu0 %v5296
        %v8836 = vpop.f32.mrf.mxu0
        %v8837 = vadd.f32 %v5835, %v8836
        %v8838 = vpop.f32.mrf.mxu0
        %v8839 = vadd.f32 %v5835, %v8838
        %8840 = vmatmul.bf16.gmra.mxu0 %v5304
        %v8841 = vpop.f32.mrf.mxu0
        %v8842 = vadd.f32 %v5835, %v8841
        %v8843 = vpop.f32.mrf.mxu0
        %v8844 = vadd.f32 %v5835, %v8843
        %8845 = vmatmul.bf16.gmra.mxu0 %v5312
        %v8846 = vpop.f32.mrf.mxu0
        %v8847 = vadd.f32 %v5835, %v8846
        %v8848 = vpop.f32.mrf.mxu0
        %v8849 = vadd.f32 %v5835, %v8848
        %8850 = vdwg.mxu0
        %8851 = vmatpush.bf16.msra.mxu0 %v7507
        %8852 = vmatpush.bf16.msra.mxu0 %v7499
        %8853 = vmatpush.bf16.msra.mxu0 %v7491
        %8854 = vmatpush.bf16.msra.mxu0 %v7483
        %8855 = vmatpush.bf16.msra.mxu0 %v7475
        %8856 = vmatpush.bf16.msra.mxu0 %v7467
        %8857 = vmatpush.bf16.msra.mxu0 %v7459
        %8858 = vmatpush.bf16.msra.mxu0 %v7451
        %8859 = vmatmul.bf16.gmra.mxu0 %v5257
        %v8860 = vpop.f32.mrf.mxu0
        %v8861 = vadd.f32 %v8812, %v8860
        %v8862 = vpop.f32.mrf.mxu0
        %v8863 = vadd.f32 %v8814, %v8862
        %8864 = vmatmul.bf16.gmra.mxu0 %v5265
        %v8865 = vpop.f32.mrf.mxu0
        %v8866 = vadd.f32 %v8817, %v8865
        %v8867 = vpop.f32.mrf.mxu0
        %v8868 = vadd.f32 %v8819, %v8867
        %8869 = vmatmul.bf16.gmra.mxu0 %v5273
        %v8870 = vpop.f32.mrf.mxu0
        %v8871 = vadd.f32 %v8822, %v8870
        %v8872 = vpop.f32.mrf.mxu0
        %v8873 = vadd.f32 %v8824, %v8872
        %8874 = vmatmul.bf16.gmra.mxu0 %v5281
        %v8875 = vpop.f32.mrf.mxu0
        %v8876 = vadd.f32 %v8827, %v8875
        %v8877 = vpop.f32.mrf.mxu0
        %v8878 = vadd.f32 %v8829, %v8877
        %8879 = vmatmul.bf16.gmra.mxu0 %v5289
        %v8880 = vpop.f32.mrf.mxu0
        %v8881 = vadd.f32 %v8832, %v8880
        %v8882 = vpop.f32.mrf.mxu0
        %v8883 = vadd.f32 %v8834, %v8882
        %8884 = vmatmul.bf16.gmra.mxu0 %v5297
        %v8885 = vpop.f32.mrf.mxu0
        %v8886 = vadd.f32 %v8837, %v8885
        %v8887 = vpop.f32.mrf.mxu0
        %v8888 = vadd.f32 %v8839, %v8887
        %8889 = vmatmul.bf16.gmra.mxu0 %v5305
        %v8890 = vpop.f32.mrf.mxu0
        %v8891 = vadd.f32 %v8842, %v8890
        %v8892 = vpop.f32.mrf.mxu0
        %v8893 = vadd.f32 %v8844, %v8892
        %8894 = vmatmul.bf16.gmra.mxu0 %v5313
        %v8895 = vpop.f32.mrf.mxu0
        %v8896 = vadd.f32 %v8847, %v8895
        %v8897 = vpop.f32.mrf.mxu0
        %v8898 = vadd.f32 %v8849, %v8897
        %8899 = vdwg.mxu0
        %8900 = vmatpush.bf16.msra.mxu0 %v7571
        %8901 = vmatpush.bf16.msra.mxu0 %v7563
        %8902 = vmatpush.bf16.msra.mxu0 %v7555
        %8903 = vmatpush.bf16.msra.mxu0 %v7547
        %8904 = vmatpush.bf16.msra.mxu0 %v7539
        %8905 = vmatpush.bf16.msra.mxu0 %v7531
        %8906 = vmatpush.bf16.msra.mxu0 %v7523
        %8907 = vmatpush.bf16.msra.mxu0 %v7515
        %8908 = vmatmul.bf16.gmra.mxu0 %v5258
        %v8909 = vpop.f32.mrf.mxu0
        %v8910 = vadd.f32 %v8861, %v8909
        %v8911 = vpop.f32.mrf.mxu0
        %v8912 = vadd.f32 %v8863, %v8911
        %8913 = vmatmul.bf16.gmra.mxu0 %v5266
        %v8914 = vpop.f32.mrf.mxu0
        %v8915 = vadd.f32 %v8866, %v8914
        %v8916 = vpop.f32.mrf.mxu0
        %v8917 = vadd.f32 %v8868, %v8916
        %8918 = vmatmul.bf16.gmra.mxu0 %v5274
        %v8919 = vpop.f32.mrf.mxu0
        %v8920 = vadd.f32 %v8871, %v8919
        %v8921 = vpop.f32.mrf.mxu0
        %v8922 = vadd.f32 %v8873, %v8921
        %8923 = vmatmul.bf16.gmra.mxu0 %v5282
        %v8924 = vpop.f32.mrf.mxu0
        %v8925 = vadd.f32 %v8876, %v8924
        %v8926 = vpop.f32.mrf.mxu0
        %v8927 = vadd.f32 %v8878, %v8926
        %8928 = vmatmul.bf16.gmra.mxu0 %v5290
        %v8929 = vpop.f32.mrf.mxu0
        %v8930 = vadd.f32 %v8881, %v8929
        %v8931 = vpop.f32.mrf.mxu0
        %v8932 = vadd.f32 %v8883, %v8931
        %8933 = vmatmul.bf16.gmra.mxu0 %v5298
        %v8934 = vpop.f32.mrf.mxu0
        %v8935 = vadd.f32 %v8886, %v8934
        %v8936 = vpop.f32.mrf.mxu0
        %v8937 = vadd.f32 %v8888, %v8936
        %8938 = vmatmul.bf16.gmra.mxu0 %v5306
        %v8939 = vpop.f32.mrf.mxu0
        %v8940 = vadd.f32 %v8891, %v8939
        %v8941 = vpop.f32.mrf.mxu0
        %v8942 = vadd.f32 %v8893, %v8941
        %8943 = vmatmul.bf16.gmra.mxu0 %v5314
        %v8944 = vpop.f32.mrf.mxu0
        %v8945 = vadd.f32 %v8896, %v8944
        %v8946 = vpop.f32.mrf.mxu0
        %v8947 = vadd.f32 %v8898, %v8946
        %8948 = vdwg.mxu0
        %8949 = vmatpush.bf16.msra.mxu0 %v7635
        %8950 = vmatpush.bf16.msra.mxu0 %v7627
        %8951 = vmatpush.bf16.msra.mxu0 %v7619
        %8952 = vmatpush.bf16.msra.mxu0 %v7611
        %8953 = vmatpush.bf16.msra.mxu0 %v7603
        %8954 = vmatpush.bf16.msra.mxu0 %v7595
        %8955 = vmatpush.bf16.msra.mxu0 %v7587
        %8956 = vmatpush.bf16.msra.mxu0 %v7579
        %8957 = vmatmul.bf16.gmra.mxu0 %v5259
        %v8958 = vpop.f32.mrf.mxu0
        %v8959 = vadd.f32 %v8910, %v8958
        %v8960 = vpop.f32.mrf.mxu0
        %v8961 = vadd.f32 %v8912, %v8960
        %8962 = vmatmul.bf16.gmra.mxu0 %v5267
        %v8963 = vpop.f32.mrf.mxu0
        %v8964 = vadd.f32 %v8915, %v8963
        %v8965 = vpop.f32.mrf.mxu0
        %v8966 = vadd.f32 %v8917, %v8965
        %8967 = vmatmul.bf16.gmra.mxu0 %v5275
        %v8968 = vpop.f32.mrf.mxu0
        %v8969 = vadd.f32 %v8920, %v8968
        %v8970 = vpop.f32.mrf.mxu0
        %v8971 = vadd.f32 %v8922, %v8970
        %8972 = vmatmul.bf16.gmra.mxu0 %v5283
        %v8973 = vpop.f32.mrf.mxu0
        %v8974 = vadd.f32 %v8925, %v8973
        %v8975 = vpop.f32.mrf.mxu0
        %v8976 = vadd.f32 %v8927, %v8975
        %8977 = vmatmul.bf16.gmra.mxu0 %v5291
        %v8978 = vpop.f32.mrf.mxu0
        %v8979 = vadd.f32 %v8930, %v8978
        %v8980 = vpop.f32.mrf.mxu0
        %v8981 = vadd.f32 %v8932, %v8980
        %8982 = vmatmul.bf16.gmra.mxu0 %v5299
        %v8983 = vpop.f32.mrf.mxu0
        %v8984 = vadd.f32 %v8935, %v8983
        %v8985 = vpop.f32.mrf.mxu0
        %v8986 = vadd.f32 %v8937, %v8985
        %8987 = vmatmul.bf16.gmra.mxu0 %v5307
        %v8988 = vpop.f32.mrf.mxu0
        %v8989 = vadd.f32 %v8940, %v8988
        %v8990 = vpop.f32.mrf.mxu0
        %v8991 = vadd.f32 %v8942, %v8990
        %8992 = vmatmul.bf16.gmra.mxu0 %v5315
        %v8993 = vpop.f32.mrf.mxu0
        %v8994 = vadd.f32 %v8945, %v8993
        %v8995 = vpop.f32.mrf.mxu0
        %v8996 = vadd.f32 %v8947, %v8995
        %8997 = vdwg.mxu0
        %8998 = vmatpush.bf16.msra.mxu0 %v7699
        %8999 = vmatpush.bf16.msra.mxu0 %v7691
        %9000 = vmatpush.bf16.msra.mxu0 %v7683
        %9001 = vmatpush.bf16.msra.mxu0 %v7675
        %9002 = vmatpush.bf16.msra.mxu0 %v7667
        %9003 = vmatpush.bf16.msra.mxu0 %v7659
        %9004 = vmatpush.bf16.msra.mxu0 %v7651
        %9005 = vmatpush.bf16.msra.mxu0 %v7643
        %9006 = vmatmul.bf16.gmra.mxu0 %v5260
        %v9007 = vpop.f32.mrf.mxu0
        %v9008 = vadd.f32 %v8959, %v9007
        %v9009 = vpop.f32.mrf.mxu0
        %v9010 = vadd.f32 %v8961, %v9009
        %9011 = vmatmul.bf16.gmra.mxu0 %v5268
        %v9012 = vpop.f32.mrf.mxu0
        %v9013 = vadd.f32 %v8964, %v9012
        %v9014 = vpop.f32.mrf.mxu0
        %v9015 = vadd.f32 %v8966, %v9014
        %9016 = vmatmul.bf16.gmra.mxu0 %v5276
        %v9017 = vpop.f32.mrf.mxu0
        %v9018 = vadd.f32 %v8969, %v9017
        %v9019 = vpop.f32.mrf.mxu0
        %v9020 = vadd.f32 %v8971, %v9019
        %9021 = vmatmul.bf16.gmra.mxu0 %v5284
        %v9022 = vpop.f32.mrf.mxu0
        %v9023 = vadd.f32 %v8974, %v9022
        %v9024 = vpop.f32.mrf.mxu0
        %v9025 = vadd.f32 %v8976, %v9024
        %9026 = vmatmul.bf16.gmra.mxu0 %v5292
        %v9027 = vpop.f32.mrf.mxu0
        %v9028 = vadd.f32 %v8979, %v9027
        %v9029 = vpop.f32.mrf.mxu0
        %v9030 = vadd.f32 %v8981, %v9029
        %9031 = vmatmul.bf16.gmra.mxu0 %v5300
        %v9032 = vpop.f32.mrf.mxu0
        %v9033 = vadd.f32 %v8984, %v9032
        %v9034 = vpop.f32.mrf.mxu0
        %v9035 = vadd.f32 %v8986, %v9034
        %9036 = vmatmul.bf16.gmra.mxu0 %v5308
        %v9037 = vpop.f32.mrf.mxu0
        %v9038 = vadd.f32 %v8989, %v9037
        %v9039 = vpop.f32.mrf.mxu0
        %v9040 = vadd.f32 %v8991, %v9039
        %9041 = vmatmul.bf16.gmra.mxu0 %v5316
        %v9042 = vpop.f32.mrf.mxu0
        %v9043 = vadd.f32 %v8994, %v9042
        %v9044 = vpop.f32.mrf.mxu0
        %v9045 = vadd.f32 %v8996, %v9044
        %9046 = vdwg.mxu0
        %9047 = vmatpush.bf16.msra.mxu0 %v7763
        %9048 = vmatpush.bf16.msra.mxu0 %v7755
        %9049 = vmatpush.bf16.msra.mxu0 %v7747
        %9050 = vmatpush.bf16.msra.mxu0 %v7739
        %9051 = vmatpush.bf16.msra.mxu0 %v7731
        %9052 = vmatpush.bf16.msra.mxu0 %v7723
        %9053 = vmatpush.bf16.msra.mxu0 %v7715
        %9054 = vmatpush.bf16.msra.mxu0 %v7707
        %9055 = vmatmul.bf16.gmra.mxu0 %v5261
        %v9056 = vpop.f32.mrf.mxu0
        %v9057 = vadd.f32 %v9008, %v9056
        %v9058 = vpop.f32.mrf.mxu0
        %v9059 = vadd.f32 %v9010, %v9058
        %9060 = vmatmul.bf16.gmra.mxu0 %v5269
        %v9061 = vpop.f32.mrf.mxu0
        %v9062 = vadd.f32 %v9013, %v9061
        %v9063 = vpop.f32.mrf.mxu0
        %v9064 = vadd.f32 %v9015, %v9063
        %9065 = vmatmul.bf16.gmra.mxu0 %v5277
        %v9066 = vpop.f32.mrf.mxu0
        %v9067 = vadd.f32 %v9018, %v9066
        %v9068 = vpop.f32.mrf.mxu0
        %v9069 = vadd.f32 %v9020, %v9068
        %9070 = vmatmul.bf16.gmra.mxu0 %v5285
        %v9071 = vpop.f32.mrf.mxu0
        %v9072 = vadd.f32 %v9023, %v9071
        %v9073 = vpop.f32.mrf.mxu0
        %v9074 = vadd.f32 %v9025, %v9073
        %9075 = vmatmul.bf16.gmra.mxu0 %v5293
        %v9076 = vpop.f32.mrf.mxu0
        %v9077 = vadd.f32 %v9028, %v9076
        %v9078 = vpop.f32.mrf.mxu0
        %v9079 = vadd.f32 %v9030, %v9078
        %9080 = vmatmul.bf16.gmra.mxu0 %v5301
        %v9081 = vpop.f32.mrf.mxu0
        %v9082 = vadd.f32 %v9033, %v9081
        %v9083 = vpop.f32.mrf.mxu0
        %v9084 = vadd.f32 %v9035, %v9083
        %9085 = vmatmul.bf16.gmra.mxu0 %v5309
        %v9086 = vpop.f32.mrf.mxu0
        %v9087 = vadd.f32 %v9038, %v9086
        %v9088 = vpop.f32.mrf.mxu0
        %v9089 = vadd.f32 %v9040, %v9088
        %9090 = vmatmul.bf16.gmra.mxu0 %v5317
        %v9091 = vpop.f32.mrf.mxu0
        %v9092 = vadd.f32 %v9043, %v9091
        %v9093 = vpop.f32.mrf.mxu0
        %v9094 = vadd.f32 %v9045, %v9093
        %9095 = vdwg.mxu0
        %9096 = vmatpush.bf16.msra.mxu0 %v7827
        %9097 = vmatpush.bf16.msra.mxu0 %v7819
        %9098 = vmatpush.bf16.msra.mxu0 %v7811
        %9099 = vmatpush.bf16.msra.mxu0 %v7803
        %9100 = vmatpush.bf16.msra.mxu0 %v7795
        %9101 = vmatpush.bf16.msra.mxu0 %v7787
        %9102 = vmatpush.bf16.msra.mxu0 %v7779
        %9103 = vmatpush.bf16.msra.mxu0 %v7771
        %9104 = vmatmul.bf16.gmra.mxu0 %v5262
        %v9105 = vpop.f32.mrf.mxu0
        %v9106 = vadd.f32 %v9057, %v9105
        %v9107 = vpop.f32.mrf.mxu0
        %v9108 = vadd.f32 %v9059, %v9107
        %9109 = vmatmul.bf16.gmra.mxu0 %v5270
        %v9110 = vpop.f32.mrf.mxu0
        %v9111 = vadd.f32 %v9062, %v9110
        %v9112 = vpop.f32.mrf.mxu0
        %v9113 = vadd.f32 %v9064, %v9112
        %9114 = vmatmul.bf16.gmra.mxu0 %v5278
        %v9115 = vpop.f32.mrf.mxu0
        %v9116 = vadd.f32 %v9067, %v9115
        %v9117 = vpop.f32.mrf.mxu0
        %v9118 = vadd.f32 %v9069, %v9117
        %9119 = vmatmul.bf16.gmra.mxu0 %v5286
        %v9120 = vpop.f32.mrf.mxu0
        %v9121 = vadd.f32 %v9072, %v9120
        %v9122 = vpop.f32.mrf.mxu0
        %v9123 = vadd.f32 %v9074, %v9122
        %9124 = vmatmul.bf16.gmra.mxu0 %v5294
        %v9125 = vpop.f32.mrf.mxu0
        %v9126 = vadd.f32 %v9077, %v9125
        %v9127 = vpop.f32.mrf.mxu0
        %v9128 = vadd.f32 %v9079, %v9127
        %9129 = vmatmul.bf16.gmra.mxu0 %v5302
        %v9130 = vpop.f32.mrf.mxu0
        %v9131 = vadd.f32 %v9082, %v9130
        %v9132 = vpop.f32.mrf.mxu0
        %v9133 = vadd.f32 %v9084, %v9132
        %9134 = vmatmul.bf16.gmra.mxu0 %v5310
        %v9135 = vpop.f32.mrf.mxu0
        %v9136 = vadd.f32 %v9087, %v9135
        %v9137 = vpop.f32.mrf.mxu0
        %v9138 = vadd.f32 %v9089, %v9137
        %9139 = vmatmul.bf16.gmra.mxu0 %v5318
        %v9140 = vpop.f32.mrf.mxu0
        %v9141 = vadd.f32 %v9092, %v9140
        %v9142 = vpop.f32.mrf.mxu0
        %v9143 = vadd.f32 %v9094, %v9142
        %9144 = vdwg.mxu0
        %9145 = vmatpush.bf16.msra.mxu0 %v7891
        %9146 = vmatpush.bf16.msra.mxu0 %v7883
        %9147 = vmatpush.bf16.msra.mxu0 %v7875
        %9148 = vmatpush.bf16.msra.mxu0 %v7867
        %9149 = vmatpush.bf16.msra.mxu0 %v7859
        %9150 = vmatpush.bf16.msra.mxu0 %v7851
        %9151 = vmatpush.bf16.msra.mxu0 %v7843
        %9152 = vmatpush.bf16.msra.mxu0 %v7835
        %9153 = vmatmul.bf16.gmra.mxu0 %v5263
        %v9154 = vpop.f32.mrf.mxu0
        %v9155 = vadd.f32 %v9106, %v9154
        %v9156 = vpop.f32.mrf.mxu0
        %v9157 = vadd.f32 %v9108, %v9156
        %9158 = vmatmul.bf16.gmra.mxu0 %v5271
        %v9159 = vpop.f32.mrf.mxu0
        %v9160 = vadd.f32 %v9111, %v9159
        %v9161 = vpop.f32.mrf.mxu0
        %v9162 = vadd.f32 %v9113, %v9161
        %9163 = vmatmul.bf16.gmra.mxu0 %v5279
        %v9164 = vpop.f32.mrf.mxu0
        %v9165 = vadd.f32 %v9116, %v9164
        %v9166 = vpop.f32.mrf.mxu0
        %v9167 = vadd.f32 %v9118, %v9166
        %9168 = vmatmul.bf16.gmra.mxu0 %v5287
        %v9169 = vpop.f32.mrf.mxu0
        %v9170 = vadd.f32 %v9121, %v9169
        %v9171 = vpop.f32.mrf.mxu0
        %v9172 = vadd.f32 %v9123, %v9171
        %9173 = vmatmul.bf16.gmra.mxu0 %v5295
        %v9174 = vpop.f32.mrf.mxu0
        %v9175 = vadd.f32 %v9126, %v9174
        %v9176 = vpop.f32.mrf.mxu0
        %v9177 = vadd.f32 %v9128, %v9176
        %9178 = vmatmul.bf16.gmra.mxu0 %v5303
        %v9179 = vpop.f32.mrf.mxu0
        %v9180 = vadd.f32 %v9131, %v9179
        %v9181 = vpop.f32.mrf.mxu0
        %v9182 = vadd.f32 %v9133, %v9181
        %9183 = vmatmul.bf16.gmra.mxu0 %v5311
        %v9184 = vpop.f32.mrf.mxu0
        %v9185 = vadd.f32 %v9136, %v9184
        %v9186 = vpop.f32.mrf.mxu0
        %v9187 = vadd.f32 %v9138, %v9186
        %9188 = vmatmul.bf16.gmra.mxu0 %v5319
        %v9189 = vpop.f32.mrf.mxu0
        %v9190 = vadd.f32 %v9141, %v9189
        %v9191 = vpop.f32.mrf.mxu0
        %v9192 = vadd.f32 %v9143, %v9191
        %9193 = vdwg.mxu0
        %9194 = vmatpush.bf16.msra.mxu0 %v7444
        %9195 = vmatpush.bf16.msra.mxu0 %v7436
        %9196 = vmatpush.bf16.msra.mxu0 %v7428
        %9197 = vmatpush.bf16.msra.mxu0 %v7420
        %9198 = vmatpush.bf16.msra.mxu0 %v7412
        %9199 = vmatpush.bf16.msra.mxu0 %v7404
        %9200 = vmatpush.bf16.msra.mxu0 %v7396
        %9201 = vmatpush.bf16.msra.mxu0 %v7388
        %9202 = vmatmul.bf16.gmra.mxu0 %v5256
        %v9203 = vpop.f32.mrf.mxu0
        %v9204 = vadd.f32 %v5836, %v9203
        %v9205 = vpop.f32.mrf.mxu0
        %v9206 = vadd.f32 %v5836, %v9205
        %9207 = vmatmul.bf16.gmra.mxu0 %v5264
        %v9208 = vpop.f32.mrf.mxu0
        %v9209 = vadd.f32 %v5836, %v9208
        %v9210 = vpop.f32.mrf.mxu0
        %v9211 = vadd.f32 %v5836, %v9210
        %9212 = vmatmul.bf16.gmra.mxu0 %v5272
        %v9213 = vpop.f32.mrf.mxu0
        %v9214 = vadd.f32 %v5836, %v9213
        %v9215 = vpop.f32.mrf.mxu0
        %v9216 = vadd.f32 %v5836, %v9215
        %9217 = vmatmul.bf16.gmra.mxu0 %v5280
        %v9218 = vpop.f32.mrf.mxu0
        %v9219 = vadd.f32 %v5836, %v9218
        %v9220 = vpop.f32.mrf.mxu0
        %v9221 = vadd.f32 %v5836, %v9220
        %9222 = vmatmul.bf16.gmra.mxu0 %v5288
        %v9223 = vpop.f32.mrf.mxu0
        %v9224 = vadd.f32 %v5836, %v9223
        %v9225 = vpop.f32.mrf.mxu0
        %v9226 = vadd.f32 %v5836, %v9225
        %9227 = vmatmul.bf16.gmra.mxu0 %v5296
        %v9228 = vpop.f32.mrf.mxu0
        %v9229 = vadd.f32 %v5836, %v9228
        %v9230 = vpop.f32.mrf.mxu0
        %v9231 = vadd.f32 %v5836, %v9230
        %9232 = vmatmul.bf16.gmra.mxu0 %v5304
        %v9233 = vpop.f32.mrf.mxu0
        %v9234 = vadd.f32 %v5836, %v9233
        %v9235 = vpop.f32.mrf.mxu0
        %v9236 = vadd.f32 %v5836, %v9235
        %9237 = vmatmul.bf16.gmra.mxu0 %v5312
        %v9238 = vpop.f32.mrf.mxu0
        %v9239 = vadd.f32 %v5836, %v9238
        %v9240 = vpop.f32.mrf.mxu0
        %v9241 = vadd.f32 %v5836, %v9240
        %9242 = vdwg.mxu0
        %9243 = vmatpush.bf16.msra.mxu0 %v7508
        %9244 = vmatpush.bf16.msra.mxu0 %v7500
        %9245 = vmatpush.bf16.msra.mxu0 %v7492
        %9246 = vmatpush.bf16.msra.mxu0 %v7484
        %9247 = vmatpush.bf16.msra.mxu0 %v7476
        %9248 = vmatpush.bf16.msra.mxu0 %v7468
        %9249 = vmatpush.bf16.msra.mxu0 %v7460
        %9250 = vmatpush.bf16.msra.mxu0 %v7452
        %9251 = vmatmul.bf16.gmra.mxu0 %v5257
        %v9252 = vpop.f32.mrf.mxu0
        %v9253 = vadd.f32 %v9204, %v9252
        %v9254 = vpop.f32.mrf.mxu0
        %v9255 = vadd.f32 %v9206, %v9254
        %9256 = vmatmul.bf16.gmra.mxu0 %v5265
        %v9257 = vpop.f32.mrf.mxu0
        %v9258 = vadd.f32 %v9209, %v9257
        %v9259 = vpop.f32.mrf.mxu0
        %v9260 = vadd.f32 %v9211, %v9259
        %9261 = vmatmul.bf16.gmra.mxu0 %v5273
        %v9262 = vpop.f32.mrf.mxu0
        %v9263 = vadd.f32 %v9214, %v9262
        %v9264 = vpop.f32.mrf.mxu0
        %v9265 = vadd.f32 %v9216, %v9264
        %9266 = vmatmul.bf16.gmra.mxu0 %v5281
        %v9267 = vpop.f32.mrf.mxu0
        %v9268 = vadd.f32 %v9219, %v9267
        %v9269 = vpop.f32.mrf.mxu0
        %v9270 = vadd.f32 %v9221, %v9269
        %9271 = vmatmul.bf16.gmra.mxu0 %v5289
        %v9272 = vpop.f32.mrf.mxu0
        %v9273 = vadd.f32 %v9224, %v9272
        %v9274 = vpop.f32.mrf.mxu0
        %v9275 = vadd.f32 %v9226, %v9274
        %9276 = vmatmul.bf16.gmra.mxu0 %v5297
        %v9277 = vpop.f32.mrf.mxu0
        %v9278 = vadd.f32 %v9229, %v9277
        %v9279 = vpop.f32.mrf.mxu0
        %v9280 = vadd.f32 %v9231, %v9279
        %9281 = vmatmul.bf16.gmra.mxu0 %v5305
        %v9282 = vpop.f32.mrf.mxu0
        %v9283 = vadd.f32 %v9234, %v9282
        %v9284 = vpop.f32.mrf.mxu0
        %v9285 = vadd.f32 %v9236, %v9284
        %9286 = vmatmul.bf16.gmra.mxu0 %v5313
        %v9287 = vpop.f32.mrf.mxu0
        %v9288 = vadd.f32 %v9239, %v9287
        %v9289 = vpop.f32.mrf.mxu0
        %v9290 = vadd.f32 %v9241, %v9289
        %9291 = vdwg.mxu0
        %9292 = vmatpush.bf16.msra.mxu0 %v7572
        %9293 = vmatpush.bf16.msra.mxu0 %v7564
        %9294 = vmatpush.bf16.msra.mxu0 %v7556
        %9295 = vmatpush.bf16.msra.mxu0 %v7548
        %9296 = vmatpush.bf16.msra.mxu0 %v7540
        %9297 = vmatpush.bf16.msra.mxu0 %v7532
        %9298 = vmatpush.bf16.msra.mxu0 %v7524
        %9299 = vmatpush.bf16.msra.mxu0 %v7516
        %9300 = vmatmul.bf16.gmra.mxu0 %v5258
        %v9301 = vpop.f32.mrf.mxu0
        %v9302 = vadd.f32 %v9253, %v9301
        %v9303 = vpop.f32.mrf.mxu0
        %v9304 = vadd.f32 %v9255, %v9303
        %9305 = vmatmul.bf16.gmra.mxu0 %v5266
        %v9306 = vpop.f32.mrf.mxu0
        %v9307 = vadd.f32 %v9258, %v9306
        %v9308 = vpop.f32.mrf.mxu0
        %v9309 = vadd.f32 %v9260, %v9308
        %9310 = vmatmul.bf16.gmra.mxu0 %v5274
        %v9311 = vpop.f32.mrf.mxu0
        %v9312 = vadd.f32 %v9263, %v9311
        %v9313 = vpop.f32.mrf.mxu0
        %v9314 = vadd.f32 %v9265, %v9313
        %9315 = vmatmul.bf16.gmra.mxu0 %v5282
        %v9316 = vpop.f32.mrf.mxu0
        %v9317 = vadd.f32 %v9268, %v9316
        %v9318 = vpop.f32.mrf.mxu0
        %v9319 = vadd.f32 %v9270, %v9318
        %9320 = vmatmul.bf16.gmra.mxu0 %v5290
        %v9321 = vpop.f32.mrf.mxu0
        %v9322 = vadd.f32 %v9273, %v9321
        %v9323 = vpop.f32.mrf.mxu0
        %v9324 = vadd.f32 %v9275, %v9323
        %9325 = vmatmul.bf16.gmra.mxu0 %v5298
        %v9326 = vpop.f32.mrf.mxu0
        %v9327 = vadd.f32 %v9278, %v9326
        %v9328 = vpop.f32.mrf.mxu0
        %v9329 = vadd.f32 %v9280, %v9328
        %9330 = vmatmul.bf16.gmra.mxu0 %v5306
        %v9331 = vpop.f32.mrf.mxu0
        %v9332 = vadd.f32 %v9283, %v9331
        %v9333 = vpop.f32.mrf.mxu0
        %v9334 = vadd.f32 %v9285, %v9333
        %9335 = vmatmul.bf16.gmra.mxu0 %v5314
        %v9336 = vpop.f32.mrf.mxu0
        %v9337 = vadd.f32 %v9288, %v9336
        %v9338 = vpop.f32.mrf.mxu0
        %v9339 = vadd.f32 %v9290, %v9338
        %9340 = vdwg.mxu0
        %9341 = vmatpush.bf16.msra.mxu0 %v7636
        %9342 = vmatpush.bf16.msra.mxu0 %v7628
        %9343 = vmatpush.bf16.msra.mxu0 %v7620
        %9344 = vmatpush.bf16.msra.mxu0 %v7612
        %9345 = vmatpush.bf16.msra.mxu0 %v7604
        %9346 = vmatpush.bf16.msra.mxu0 %v7596
        %9347 = vmatpush.bf16.msra.mxu0 %v7588
        %9348 = vmatpush.bf16.msra.mxu0 %v7580
        %9349 = vmatmul.bf16.gmra.mxu0 %v5259
        %v9350 = vpop.f32.mrf.mxu0
        %v9351 = vadd.f32 %v9302, %v9350
        %v9352 = vpop.f32.mrf.mxu0
        %v9353 = vadd.f32 %v9304, %v9352
        %9354 = vmatmul.bf16.gmra.mxu0 %v5267
        %v9355 = vpop.f32.mrf.mxu0
        %v9356 = vadd.f32 %v9307, %v9355
        %v9357 = vpop.f32.mrf.mxu0
        %v9358 = vadd.f32 %v9309, %v9357
        %9359 = vmatmul.bf16.gmra.mxu0 %v5275
        %v9360 = vpop.f32.mrf.mxu0
        %v9361 = vadd.f32 %v9312, %v9360
        %v9362 = vpop.f32.mrf.mxu0
        %v9363 = vadd.f32 %v9314, %v9362
        %9364 = vmatmul.bf16.gmra.mxu0 %v5283
        %v9365 = vpop.f32.mrf.mxu0
        %v9366 = vadd.f32 %v9317, %v9365
        %v9367 = vpop.f32.mrf.mxu0
        %v9368 = vadd.f32 %v9319, %v9367
        %9369 = vmatmul.bf16.gmra.mxu0 %v5291
        %v9370 = vpop.f32.mrf.mxu0
        %v9371 = vadd.f32 %v9322, %v9370
        %v9372 = vpop.f32.mrf.mxu0
        %v9373 = vadd.f32 %v9324, %v9372
        %9374 = vmatmul.bf16.gmra.mxu0 %v5299
        %v9375 = vpop.f32.mrf.mxu0
        %v9376 = vadd.f32 %v9327, %v9375
        %v9377 = vpop.f32.mrf.mxu0
        %v9378 = vadd.f32 %v9329, %v9377
        %9379 = vmatmul.bf16.gmra.mxu0 %v5307
        %v9380 = vpop.f32.mrf.mxu0
        %v9381 = vadd.f32 %v9332, %v9380
        %v9382 = vpop.f32.mrf.mxu0
        %v9383 = vadd.f32 %v9334, %v9382
        %9384 = vmatmul.bf16.gmra.mxu0 %v5315
        %v9385 = vpop.f32.mrf.mxu0
        %v9386 = vadd.f32 %v9337, %v9385
        %v9387 = vpop.f32.mrf.mxu0
        %v9388 = vadd.f32 %v9339, %v9387
        %9389 = vdwg.mxu0
        %9390 = vmatpush.bf16.msra.mxu0 %v7700
        %9391 = vmatpush.bf16.msra.mxu0 %v7692
        %9392 = vmatpush.bf16.msra.mxu0 %v7684
        %9393 = vmatpush.bf16.msra.mxu0 %v7676
        %9394 = vmatpush.bf16.msra.mxu0 %v7668
        %9395 = vmatpush.bf16.msra.mxu0 %v7660
        %9396 = vmatpush.bf16.msra.mxu0 %v7652
        %9397 = vmatpush.bf16.msra.mxu0 %v7644
        %9398 = vmatmul.bf16.gmra.mxu0 %v5260
        %v9399 = vpop.f32.mrf.mxu0
        %v9400 = vadd.f32 %v9351, %v9399
        %v9401 = vpop.f32.mrf.mxu0
        %v9402 = vadd.f32 %v9353, %v9401
        %9403 = vmatmul.bf16.gmra.mxu0 %v5268
        %v9404 = vpop.f32.mrf.mxu0
        %v9405 = vadd.f32 %v9356, %v9404
        %v9406 = vpop.f32.mrf.mxu0
        %v9407 = vadd.f32 %v9358, %v9406
        %9408 = vmatmul.bf16.gmra.mxu0 %v5276
        %v9409 = vpop.f32.mrf.mxu0
        %v9410 = vadd.f32 %v9361, %v9409
        %v9411 = vpop.f32.mrf.mxu0
        %v9412 = vadd.f32 %v9363, %v9411
        %9413 = vmatmul.bf16.gmra.mxu0 %v5284
        %v9414 = vpop.f32.mrf.mxu0
        %v9415 = vadd.f32 %v9366, %v9414
        %v9416 = vpop.f32.mrf.mxu0
        %v9417 = vadd.f32 %v9368, %v9416
        %9418 = vmatmul.bf16.gmra.mxu0 %v5292
        %v9419 = vpop.f32.mrf.mxu0
        %v9420 = vadd.f32 %v9371, %v9419
        %v9421 = vpop.f32.mrf.mxu0
        %v9422 = vadd.f32 %v9373, %v9421
        %9423 = vmatmul.bf16.gmra.mxu0 %v5300
        %v9424 = vpop.f32.mrf.mxu0
        %v9425 = vadd.f32 %v9376, %v9424
        %v9426 = vpop.f32.mrf.mxu0
        %v9427 = vadd.f32 %v9378, %v9426
        %9428 = vmatmul.bf16.gmra.mxu0 %v5308
        %v9429 = vpop.f32.mrf.mxu0
        %v9430 = vadd.f32 %v9381, %v9429
        %v9431 = vpop.f32.mrf.mxu0
        %v9432 = vadd.f32 %v9383, %v9431
        %9433 = vmatmul.bf16.gmra.mxu0 %v5316
        %v9434 = vpop.f32.mrf.mxu0
        %v9435 = vadd.f32 %v9386, %v9434
        %v9436 = vpop.f32.mrf.mxu0
        %v9437 = vadd.f32 %v9388, %v9436
        %9438 = vdwg.mxu0
        %9439 = vmatpush.bf16.msra.mxu0 %v7764
        %9440 = vmatpush.bf16.msra.mxu0 %v7756
        %9441 = vmatpush.bf16.msra.mxu0 %v7748
        %9442 = vmatpush.bf16.msra.mxu0 %v7740
        %9443 = vmatpush.bf16.msra.mxu0 %v7732
        %9444 = vmatpush.bf16.msra.mxu0 %v7724
        %9445 = vmatpush.bf16.msra.mxu0 %v7716
        %9446 = vmatpush.bf16.msra.mxu0 %v7708
        %9447 = vmatmul.bf16.gmra.mxu0 %v5261
        %v9448 = vpop.f32.mrf.mxu0
        %v9449 = vadd.f32 %v9400, %v9448
        %v9450 = vpop.f32.mrf.mxu0
        %v9451 = vadd.f32 %v9402, %v9450
        %9452 = vmatmul.bf16.gmra.mxu0 %v5269
        %v9453 = vpop.f32.mrf.mxu0
        %v9454 = vadd.f32 %v9405, %v9453
        %v9455 = vpop.f32.mrf.mxu0
        %v9456 = vadd.f32 %v9407, %v9455
        %9457 = vmatmul.bf16.gmra.mxu0 %v5277
        %v9458 = vpop.f32.mrf.mxu0
        %v9459 = vadd.f32 %v9410, %v9458
        %v9460 = vpop.f32.mrf.mxu0
        %v9461 = vadd.f32 %v9412, %v9460
        %9462 = vmatmul.bf16.gmra.mxu0 %v5285
        %v9463 = vpop.f32.mrf.mxu0
        %v9464 = vadd.f32 %v9415, %v9463
        %v9465 = vpop.f32.mrf.mxu0
        %v9466 = vadd.f32 %v9417, %v9465
        %9467 = vmatmul.bf16.gmra.mxu0 %v5293
        %v9468 = vpop.f32.mrf.mxu0
        %v9469 = vadd.f32 %v9420, %v9468
        %v9470 = vpop.f32.mrf.mxu0
        %v9471 = vadd.f32 %v9422, %v9470
        %9472 = vmatmul.bf16.gmra.mxu0 %v5301
        %v9473 = vpop.f32.mrf.mxu0
        %v9474 = vadd.f32 %v9425, %v9473
        %v9475 = vpop.f32.mrf.mxu0
        %v9476 = vadd.f32 %v9427, %v9475
        %9477 = vmatmul.bf16.gmra.mxu0 %v5309
        %v9478 = vpop.f32.mrf.mxu0
        %v9479 = vadd.f32 %v9430, %v9478
        %v9480 = vpop.f32.mrf.mxu0
        %v9481 = vadd.f32 %v9432, %v9480
        %9482 = vmatmul.bf16.gmra.mxu0 %v5317
        %v9483 = vpop.f32.mrf.mxu0
        %v9484 = vadd.f32 %v9435, %v9483
        %v9485 = vpop.f32.mrf.mxu0
        %v9486 = vadd.f32 %v9437, %v9485
        %9487 = vdwg.mxu0
        %9488 = vmatpush.bf16.msra.mxu0 %v7828
        %9489 = vmatpush.bf16.msra.mxu0 %v7820
        %9490 = vmatpush.bf16.msra.mxu0 %v7812
        %9491 = vmatpush.bf16.msra.mxu0 %v7804
        %9492 = vmatpush.bf16.msra.mxu0 %v7796
        %9493 = vmatpush.bf16.msra.mxu0 %v7788
        %9494 = vmatpush.bf16.msra.mxu0 %v7780
        %9495 = vmatpush.bf16.msra.mxu0 %v7772
        %9496 = vmatmul.bf16.gmra.mxu0 %v5262
        %v9497 = vpop.f32.mrf.mxu0
        %v9498 = vadd.f32 %v9449, %v9497
        %v9499 = vpop.f32.mrf.mxu0
        %v9500 = vadd.f32 %v9451, %v9499
        %9501 = vmatmul.bf16.gmra.mxu0 %v5270
        %v9502 = vpop.f32.mrf.mxu0
        %v9503 = vadd.f32 %v9454, %v9502
        %v9504 = vpop.f32.mrf.mxu0
        %v9505 = vadd.f32 %v9456, %v9504
        %9506 = vmatmul.bf16.gmra.mxu0 %v5278
        %v9507 = vpop.f32.mrf.mxu0
        %v9508 = vadd.f32 %v9459, %v9507
        %v9509 = vpop.f32.mrf.mxu0
        %v9510 = vadd.f32 %v9461, %v9509
        %9511 = vmatmul.bf16.gmra.mxu0 %v5286
        %v9512 = vpop.f32.mrf.mxu0
        %v9513 = vadd.f32 %v9464, %v9512
        %v9514 = vpop.f32.mrf.mxu0
        %v9515 = vadd.f32 %v9466, %v9514
        %9516 = vmatmul.bf16.gmra.mxu0 %v5294
        %v9517 = vpop.f32.mrf.mxu0
        %v9518 = vadd.f32 %v9469, %v9517
        %v9519 = vpop.f32.mrf.mxu0
        %v9520 = vadd.f32 %v9471, %v9519
        %9521 = vmatmul.bf16.gmra.mxu0 %v5302
        %v9522 = vpop.f32.mrf.mxu0
        %v9523 = vadd.f32 %v9474, %v9522
        %v9524 = vpop.f32.mrf.mxu0
        %v9525 = vadd.f32 %v9476, %v9524
        %9526 = vmatmul.bf16.gmra.mxu0 %v5310
        %v9527 = vpop.f32.mrf.mxu0
        %v9528 = vadd.f32 %v9479, %v9527
        %v9529 = vpop.f32.mrf.mxu0
        %v9530 = vadd.f32 %v9481, %v9529
        %9531 = vmatmul.bf16.gmra.mxu0 %v5318
        %v9532 = vpop.f32.mrf.mxu0
        %v9533 = vadd.f32 %v9484, %v9532
        %v9534 = vpop.f32.mrf.mxu0
        %v9535 = vadd.f32 %v9486, %v9534
        %9536 = vdwg.mxu0
        %9537 = vmatpush.bf16.msra.mxu0 %v7892
        %9538 = vmatpush.bf16.msra.mxu0 %v7884
        %9539 = vmatpush.bf16.msra.mxu0 %v7876
        %9540 = vmatpush.bf16.msra.mxu0 %v7868
        %9541 = vmatpush.bf16.msra.mxu0 %v7860
        %9542 = vmatpush.bf16.msra.mxu0 %v7852
        %9543 = vmatpush.bf16.msra.mxu0 %v7844
        %9544 = vmatpush.bf16.msra.mxu0 %v7836
        %9545 = vmatmul.bf16.gmra.mxu0 %v5263
        %v9546 = vpop.f32.mrf.mxu0
        %v9547 = vadd.f32 %v9498, %v9546
        %v9548 = vpop.f32.mrf.mxu0
        %v9549 = vadd.f32 %v9500, %v9548
        %9550 = vmatmul.bf16.gmra.mxu0 %v5271
        %v9551 = vpop.f32.mrf.mxu0
        %v9552 = vadd.f32 %v9503, %v9551
        %v9553 = vpop.f32.mrf.mxu0
        %v9554 = vadd.f32 %v9505, %v9553
        %9555 = vmatmul.bf16.gmra.mxu0 %v5279
        %v9556 = vpop.f32.mrf.mxu0
        %v9557 = vadd.f32 %v9508, %v9556
        %v9558 = vpop.f32.mrf.mxu0
        %v9559 = vadd.f32 %v9510, %v9558
        %9560 = vmatmul.bf16.gmra.mxu0 %v5287
        %v9561 = vpop.f32.mrf.mxu0
        %v9562 = vadd.f32 %v9513, %v9561
        %v9563 = vpop.f32.mrf.mxu0
        %v9564 = vadd.f32 %v9515, %v9563
        %9565 = vmatmul.bf16.gmra.mxu0 %v5295
        %v9566 = vpop.f32.mrf.mxu0
        %v9567 = vadd.f32 %v9518, %v9566
        %v9568 = vpop.f32.mrf.mxu0
        %v9569 = vadd.f32 %v9520, %v9568
        %9570 = vmatmul.bf16.gmra.mxu0 %v5303
        %v9571 = vpop.f32.mrf.mxu0
        %v9572 = vadd.f32 %v9523, %v9571
        %v9573 = vpop.f32.mrf.mxu0
        %v9574 = vadd.f32 %v9525, %v9573
        %9575 = vmatmul.bf16.gmra.mxu0 %v5311
        %v9576 = vpop.f32.mrf.mxu0
        %v9577 = vadd.f32 %v9528, %v9576
        %v9578 = vpop.f32.mrf.mxu0
        %v9579 = vadd.f32 %v9530, %v9578
        %9580 = vmatmul.bf16.gmra.mxu0 %v5319
        %v9581 = vpop.f32.mrf.mxu0
        %v9582 = vadd.f32 %v9533, %v9581
        %v9583 = vpop.f32.mrf.mxu0
        %v9584 = vadd.f32 %v9535, %v9583
        %9585 = vdwg.mxu0
        %9586 = vmatpush.bf16.msra.mxu0 %v7445
        %9587 = vmatpush.bf16.msra.mxu0 %v7437
        %9588 = vmatpush.bf16.msra.mxu0 %v7429
        %9589 = vmatpush.bf16.msra.mxu0 %v7421
        %9590 = vmatpush.bf16.msra.mxu0 %v7413
        %9591 = vmatpush.bf16.msra.mxu0 %v7405
        %9592 = vmatpush.bf16.msra.mxu0 %v7397
        %9593 = vmatpush.bf16.msra.mxu0 %v7389
        %9594 = vmatmul.bf16.gmra.mxu0 %v5256
        %v9595 = vpop.f32.mrf.mxu0
        %v9596 = vadd.f32 %v5837, %v9595
        %v9597 = vpop.f32.mrf.mxu0
        %v9598 = vadd.f32 %v5837, %v9597
        %9599 = vmatmul.bf16.gmra.mxu0 %v5264
        %v9600 = vpop.f32.mrf.mxu0
        %v9601 = vadd.f32 %v5837, %v9600
        %v9602 = vpop.f32.mrf.mxu0
        %v9603 = vadd.f32 %v5837, %v9602
        %9604 = vmatmul.bf16.gmra.mxu0 %v5272
        %v9605 = vpop.f32.mrf.mxu0
        %v9606 = vadd.f32 %v5837, %v9605
        %v9607 = vpop.f32.mrf.mxu0
        %v9608 = vadd.f32 %v5837, %v9607
        %9609 = vmatmul.bf16.gmra.mxu0 %v5280
        %v9610 = vpop.f32.mrf.mxu0
        %v9611 = vadd.f32 %v5837, %v9610
        %v9612 = vpop.f32.mrf.mxu0
        %v9613 = vadd.f32 %v5837, %v9612
        %9614 = vmatmul.bf16.gmra.mxu0 %v5288
        %v9615 = vpop.f32.mrf.mxu0
        %v9616 = vadd.f32 %v5837, %v9615
        %v9617 = vpop.f32.mrf.mxu0
        %v9618 = vadd.f32 %v5837, %v9617
        %9619 = vmatmul.bf16.gmra.mxu0 %v5296
        %v9620 = vpop.f32.mrf.mxu0
        %v9621 = vadd.f32 %v5837, %v9620
        %v9622 = vpop.f32.mrf.mxu0
        %v9623 = vadd.f32 %v5837, %v9622
        %9624 = vmatmul.bf16.gmra.mxu0 %v5304
        %v9625 = vpop.f32.mrf.mxu0
        %v9626 = vadd.f32 %v5837, %v9625
        %v9627 = vpop.f32.mrf.mxu0
        %v9628 = vadd.f32 %v5837, %v9627
        %9629 = vmatmul.bf16.gmra.mxu0 %v5312
        %v9630 = vpop.f32.mrf.mxu0
        %v9631 = vadd.f32 %v5837, %v9630
        %v9632 = vpop.f32.mrf.mxu0
        %v9633 = vadd.f32 %v5837, %v9632
        %9634 = vdwg.mxu0
        %9635 = vmatpush.bf16.msra.mxu0 %v7509
        %9636 = vmatpush.bf16.msra.mxu0 %v7501
        %9637 = vmatpush.bf16.msra.mxu0 %v7493
        %9638 = vmatpush.bf16.msra.mxu0 %v7485
        %9639 = vmatpush.bf16.msra.mxu0 %v7477
        %9640 = vmatpush.bf16.msra.mxu0 %v7469
        %9641 = vmatpush.bf16.msra.mxu0 %v7461
        %9642 = vmatpush.bf16.msra.mxu0 %v7453
        %9643 = vmatmul.bf16.gmra.mxu0 %v5257
        %v9644 = vpop.f32.mrf.mxu0
        %v9645 = vadd.f32 %v9596, %v9644
        %v9646 = vpop.f32.mrf.mxu0
        %v9647 = vadd.f32 %v9598, %v9646
        %9648 = vmatmul.bf16.gmra.mxu0 %v5265
        %v9649 = vpop.f32.mrf.mxu0
        %v9650 = vadd.f32 %v9601, %v9649
        %v9651 = vpop.f32.mrf.mxu0
        %v9652 = vadd.f32 %v9603, %v9651
        %9653 = vmatmul.bf16.gmra.mxu0 %v5273
        %v9654 = vpop.f32.mrf.mxu0
        %v9655 = vadd.f32 %v9606, %v9654
        %v9656 = vpop.f32.mrf.mxu0
        %v9657 = vadd.f32 %v9608, %v9656
        %9658 = vmatmul.bf16.gmra.mxu0 %v5281
        %v9659 = vpop.f32.mrf.mxu0
        %v9660 = vadd.f32 %v9611, %v9659
        %v9661 = vpop.f32.mrf.mxu0
        %v9662 = vadd.f32 %v9613, %v9661
        %9663 = vmatmul.bf16.gmra.mxu0 %v5289
        %v9664 = vpop.f32.mrf.mxu0
        %v9665 = vadd.f32 %v9616, %v9664
        %v9666 = vpop.f32.mrf.mxu0
        %v9667 = vadd.f32 %v9618, %v9666
        %9668 = vmatmul.bf16.gmra.mxu0 %v5297
        %v9669 = vpop.f32.mrf.mxu0
        %v9670 = vadd.f32 %v9621, %v9669
        %v9671 = vpop.f32.mrf.mxu0
        %v9672 = vadd.f32 %v9623, %v9671
        %9673 = vmatmul.bf16.gmra.mxu0 %v5305
        %v9674 = vpop.f32.mrf.mxu0
        %v9675 = vadd.f32 %v9626, %v9674
        %v9676 = vpop.f32.mrf.mxu0
        %v9677 = vadd.f32 %v9628, %v9676
        %9678 = vmatmul.bf16.gmra.mxu0 %v5313
        %v9679 = vpop.f32.mrf.mxu0
        %v9680 = vadd.f32 %v9631, %v9679
        %v9681 = vpop.f32.mrf.mxu0
        %v9682 = vadd.f32 %v9633, %v9681
        %9683 = vdwg.mxu0
        %9684 = vmatpush.bf16.msra.mxu0 %v7573
        %9685 = vmatpush.bf16.msra.mxu0 %v7565
        %9686 = vmatpush.bf16.msra.mxu0 %v7557
        %9687 = vmatpush.bf16.msra.mxu0 %v7549
        %9688 = vmatpush.bf16.msra.mxu0 %v7541
        %9689 = vmatpush.bf16.msra.mxu0 %v7533
        %9690 = vmatpush.bf16.msra.mxu0 %v7525
        %9691 = vmatpush.bf16.msra.mxu0 %v7517
        %9692 = vmatmul.bf16.gmra.mxu0 %v5258
        %v9693 = vpop.f32.mrf.mxu0
        %v9694 = vadd.f32 %v9645, %v9693
        %v9695 = vpop.f32.mrf.mxu0
        %v9696 = vadd.f32 %v9647, %v9695
        %9697 = vmatmul.bf16.gmra.mxu0 %v5266
        %v9698 = vpop.f32.mrf.mxu0
        %v9699 = vadd.f32 %v9650, %v9698
        %v9700 = vpop.f32.mrf.mxu0
        %v9701 = vadd.f32 %v9652, %v9700
        %9702 = vmatmul.bf16.gmra.mxu0 %v5274
        %v9703 = vpop.f32.mrf.mxu0
        %v9704 = vadd.f32 %v9655, %v9703
        %v9705 = vpop.f32.mrf.mxu0
        %v9706 = vadd.f32 %v9657, %v9705
        %9707 = vmatmul.bf16.gmra.mxu0 %v5282
        %v9708 = vpop.f32.mrf.mxu0
        %v9709 = vadd.f32 %v9660, %v9708
        %v9710 = vpop.f32.mrf.mxu0
        %v9711 = vadd.f32 %v9662, %v9710
        %9712 = vmatmul.bf16.gmra.mxu0 %v5290
        %v9713 = vpop.f32.mrf.mxu0
        %v9714 = vadd.f32 %v9665, %v9713
        %v9715 = vpop.f32.mrf.mxu0
        %v9716 = vadd.f32 %v9667, %v9715
        %9717 = vmatmul.bf16.gmra.mxu0 %v5298
        %v9718 = vpop.f32.mrf.mxu0
        %v9719 = vadd.f32 %v9670, %v9718
        %v9720 = vpop.f32.mrf.mxu0
        %v9721 = vadd.f32 %v9672, %v9720
        %9722 = vmatmul.bf16.gmra.mxu0 %v5306
        %v9723 = vpop.f32.mrf.mxu0
        %v9724 = vadd.f32 %v9675, %v9723
        %v9725 = vpop.f32.mrf.mxu0
        %v9726 = vadd.f32 %v9677, %v9725
        %9727 = vmatmul.bf16.gmra.mxu0 %v5314
        %v9728 = vpop.f32.mrf.mxu0
        %v9729 = vadd.f32 %v9680, %v9728
        %v9730 = vpop.f32.mrf.mxu0
        %v9731 = vadd.f32 %v9682, %v9730
        %9732 = vdwg.mxu0
        %9733 = vmatpush.bf16.msra.mxu0 %v7637
        %9734 = vmatpush.bf16.msra.mxu0 %v7629
        %9735 = vmatpush.bf16.msra.mxu0 %v7621
        %9736 = vmatpush.bf16.msra.mxu0 %v7613
        %9737 = vmatpush.bf16.msra.mxu0 %v7605
        %9738 = vmatpush.bf16.msra.mxu0 %v7597
        %9739 = vmatpush.bf16.msra.mxu0 %v7589
        %9740 = vmatpush.bf16.msra.mxu0 %v7581
        %9741 = vmatmul.bf16.gmra.mxu0 %v5259
        %v9742 = vpop.f32.mrf.mxu0
        %v9743 = vadd.f32 %v9694, %v9742
        %v9744 = vpop.f32.mrf.mxu0
        %v9745 = vadd.f32 %v9696, %v9744
        %9746 = vmatmul.bf16.gmra.mxu0 %v5267
        %v9747 = vpop.f32.mrf.mxu0
        %v9748 = vadd.f32 %v9699, %v9747
        %v9749 = vpop.f32.mrf.mxu0
        %v9750 = vadd.f32 %v9701, %v9749
        %9751 = vmatmul.bf16.gmra.mxu0 %v5275
        %v9752 = vpop.f32.mrf.mxu0
        %v9753 = vadd.f32 %v9704, %v9752
        %v9754 = vpop.f32.mrf.mxu0
        %v9755 = vadd.f32 %v9706, %v9754
        %9756 = vmatmul.bf16.gmra.mxu0 %v5283
        %v9757 = vpop.f32.mrf.mxu0
        %v9758 = vadd.f32 %v9709, %v9757
        %v9759 = vpop.f32.mrf.mxu0
        %v9760 = vadd.f32 %v9711, %v9759
        %9761 = vmatmul.bf16.gmra.mxu0 %v5291
        %v9762 = vpop.f32.mrf.mxu0
        %v9763 = vadd.f32 %v9714, %v9762
        %v9764 = vpop.f32.mrf.mxu0
        %v9765 = vadd.f32 %v9716, %v9764
        %9766 = vmatmul.bf16.gmra.mxu0 %v5299
        %v9767 = vpop.f32.mrf.mxu0
        %v9768 = vadd.f32 %v9719, %v9767
        %v9769 = vpop.f32.mrf.mxu0
        %v9770 = vadd.f32 %v9721, %v9769
        %9771 = vmatmul.bf16.gmra.mxu0 %v5307
        %v9772 = vpop.f32.mrf.mxu0
        %v9773 = vadd.f32 %v9724, %v9772
        %v9774 = vpop.f32.mrf.mxu0
        %v9775 = vadd.f32 %v9726, %v9774
        %9776 = vmatmul.bf16.gmra.mxu0 %v5315
        %v9777 = vpop.f32.mrf.mxu0
        %v9778 = vadd.f32 %v9729, %v9777
        %v9779 = vpop.f32.mrf.mxu0
        %v9780 = vadd.f32 %v9731, %v9779
        %9781 = vdwg.mxu0
        %9782 = vmatpush.bf16.msra.mxu0 %v7701
        %9783 = vmatpush.bf16.msra.mxu0 %v7693
        %9784 = vmatpush.bf16.msra.mxu0 %v7685
        %9785 = vmatpush.bf16.msra.mxu0 %v7677
        %9786 = vmatpush.bf16.msra.mxu0 %v7669
        %9787 = vmatpush.bf16.msra.mxu0 %v7661
        %9788 = vmatpush.bf16.msra.mxu0 %v7653
        %9789 = vmatpush.bf16.msra.mxu0 %v7645
        %9790 = vmatmul.bf16.gmra.mxu0 %v5260
        %v9791 = vpop.f32.mrf.mxu0
        %v9792 = vadd.f32 %v9743, %v9791
        %v9793 = vpop.f32.mrf.mxu0
        %v9794 = vadd.f32 %v9745, %v9793
        %9795 = vmatmul.bf16.gmra.mxu0 %v5268
        %v9796 = vpop.f32.mrf.mxu0
        %v9797 = vadd.f32 %v9748, %v9796
        %v9798 = vpop.f32.mrf.mxu0
        %v9799 = vadd.f32 %v9750, %v9798
        %9800 = vmatmul.bf16.gmra.mxu0 %v5276
        %v9801 = vpop.f32.mrf.mxu0
        %v9802 = vadd.f32 %v9753, %v9801
        %v9803 = vpop.f32.mrf.mxu0
        %v9804 = vadd.f32 %v9755, %v9803
        %9805 = vmatmul.bf16.gmra.mxu0 %v5284
        %v9806 = vpop.f32.mrf.mxu0
        %v9807 = vadd.f32 %v9758, %v9806
        %v9808 = vpop.f32.mrf.mxu0
        %v9809 = vadd.f32 %v9760, %v9808
        %9810 = vmatmul.bf16.gmra.mxu0 %v5292
        %v9811 = vpop.f32.mrf.mxu0
        %v9812 = vadd.f32 %v9763, %v9811
        %v9813 = vpop.f32.mrf.mxu0
        %v9814 = vadd.f32 %v9765, %v9813
        %9815 = vmatmul.bf16.gmra.mxu0 %v5300
        %v9816 = vpop.f32.mrf.mxu0
        %v9817 = vadd.f32 %v9768, %v9816
        %v9818 = vpop.f32.mrf.mxu0
        %v9819 = vadd.f32 %v9770, %v9818
        %9820 = vmatmul.bf16.gmra.mxu0 %v5308
        %v9821 = vpop.f32.mrf.mxu0
        %v9822 = vadd.f32 %v9773, %v9821
        %v9823 = vpop.f32.mrf.mxu0
        %v9824 = vadd.f32 %v9775, %v9823
        %9825 = vmatmul.bf16.gmra.mxu0 %v5316
        %v9826 = vpop.f32.mrf.mxu0
        %v9827 = vadd.f32 %v9778, %v9826
        %v9828 = vpop.f32.mrf.mxu0
        %v9829 = vadd.f32 %v9780, %v9828
        %9830 = vdwg.mxu0
        %9831 = vmatpush.bf16.msra.mxu0 %v7765
        %9832 = vmatpush.bf16.msra.mxu0 %v7757
        %9833 = vmatpush.bf16.msra.mxu0 %v7749
        %9834 = vmatpush.bf16.msra.mxu0 %v7741
        %9835 = vmatpush.bf16.msra.mxu0 %v7733
        %9836 = vmatpush.bf16.msra.mxu0 %v7725
        %9837 = vmatpush.bf16.msra.mxu0 %v7717
        %9838 = vmatpush.bf16.msra.mxu0 %v7709
        %9839 = vmatmul.bf16.gmra.mxu0 %v5261
        %v9840 = vpop.f32.mrf.mxu0
        %v9841 = vadd.f32 %v9792, %v9840
        %v9842 = vpop.f32.mrf.mxu0
        %v9843 = vadd.f32 %v9794, %v9842
        %9844 = vmatmul.bf16.gmra.mxu0 %v5269
        %v9845 = vpop.f32.mrf.mxu0
        %v9846 = vadd.f32 %v9797, %v9845
        %v9847 = vpop.f32.mrf.mxu0
        %v9848 = vadd.f32 %v9799, %v9847
        %9849 = vmatmul.bf16.gmra.mxu0 %v5277
        %v9850 = vpop.f32.mrf.mxu0
        %v9851 = vadd.f32 %v9802, %v9850
        %v9852 = vpop.f32.mrf.mxu0
        %v9853 = vadd.f32 %v9804, %v9852
        %9854 = vmatmul.bf16.gmra.mxu0 %v5285
        %v9855 = vpop.f32.mrf.mxu0
        %v9856 = vadd.f32 %v9807, %v9855
        %v9857 = vpop.f32.mrf.mxu0
        %v9858 = vadd.f32 %v9809, %v9857
        %9859 = vmatmul.bf16.gmra.mxu0 %v5293
        %v9860 = vpop.f32.mrf.mxu0
        %v9861 = vadd.f32 %v9812, %v9860
        %v9862 = vpop.f32.mrf.mxu0
        %v9863 = vadd.f32 %v9814, %v9862
        %9864 = vmatmul.bf16.gmra.mxu0 %v5301
        %v9865 = vpop.f32.mrf.mxu0
        %v9866 = vadd.f32 %v9817, %v9865
        %v9867 = vpop.f32.mrf.mxu0
        %v9868 = vadd.f32 %v9819, %v9867
        %9869 = vmatmul.bf16.gmra.mxu0 %v5309
        %v9870 = vpop.f32.mrf.mxu0
        %v9871 = vadd.f32 %v9822, %v9870
        %v9872 = vpop.f32.mrf.mxu0
        %v9873 = vadd.f32 %v9824, %v9872
        %9874 = vmatmul.bf16.gmra.mxu0 %v5317
        %v9875 = vpop.f32.mrf.mxu0
        %v9876 = vadd.f32 %v9827, %v9875
        %v9877 = vpop.f32.mrf.mxu0
        %v9878 = vadd.f32 %v9829, %v9877
        %9879 = vdwg.mxu0
        %9880 = vmatpush.bf16.msra.mxu0 %v7829
        %9881 = vmatpush.bf16.msra.mxu0 %v7821
        %9882 = vmatpush.bf16.msra.mxu0 %v7813
        %9883 = vmatpush.bf16.msra.mxu0 %v7805
        %9884 = vmatpush.bf16.msra.mxu0 %v7797
        %9885 = vmatpush.bf16.msra.mxu0 %v7789
        %9886 = vmatpush.bf16.msra.mxu0 %v7781
        %9887 = vmatpush.bf16.msra.mxu0 %v7773
        %9888 = vmatmul.bf16.gmra.mxu0 %v5262
        %v9889 = vpop.f32.mrf.mxu0
        %v9890 = vadd.f32 %v9841, %v9889
        %v9891 = vpop.f32.mrf.mxu0
        %v9892 = vadd.f32 %v9843, %v9891
        %9893 = vmatmul.bf16.gmra.mxu0 %v5270
        %v9894 = vpop.f32.mrf.mxu0
        %v9895 = vadd.f32 %v9846, %v9894
        %v9896 = vpop.f32.mrf.mxu0
        %v9897 = vadd.f32 %v9848, %v9896
        %9898 = vmatmul.bf16.gmra.mxu0 %v5278
        %v9899 = vpop.f32.mrf.mxu0
        %v9900 = vadd.f32 %v9851, %v9899
        %v9901 = vpop.f32.mrf.mxu0
        %v9902 = vadd.f32 %v9853, %v9901
        %9903 = vmatmul.bf16.gmra.mxu0 %v5286
        %v9904 = vpop.f32.mrf.mxu0
        %v9905 = vadd.f32 %v9856, %v9904
        %v9906 = vpop.f32.mrf.mxu0
        %v9907 = vadd.f32 %v9858, %v9906
        %9908 = vmatmul.bf16.gmra.mxu0 %v5294
        %v9909 = vpop.f32.mrf.mxu0
        %v9910 = vadd.f32 %v9861, %v9909
        %v9911 = vpop.f32.mrf.mxu0
        %v9912 = vadd.f32 %v9863, %v9911
        %9913 = vmatmul.bf16.gmra.mxu0 %v5302
        %v9914 = vpop.f32.mrf.mxu0
        %v9915 = vadd.f32 %v9866, %v9914
        %v9916 = vpop.f32.mrf.mxu0
        %v9917 = vadd.f32 %v9868, %v9916
        %9918 = vmatmul.bf16.gmra.mxu0 %v5310
        %v9919 = vpop.f32.mrf.mxu0
        %v9920 = vadd.f32 %v9871, %v9919
        %v9921 = vpop.f32.mrf.mxu0
        %v9922 = vadd.f32 %v9873, %v9921
        %9923 = vmatmul.bf16.gmra.mxu0 %v5318
        %v9924 = vpop.f32.mrf.mxu0
        %v9925 = vadd.f32 %v9876, %v9924
        %v9926 = vpop.f32.mrf.mxu0
        %v9927 = vadd.f32 %v9878, %v9926
        %9928 = vdwg.mxu0
        %9929 = vmatpush.bf16.msra.mxu0 %v7893
        %9930 = vmatpush.bf16.msra.mxu0 %v7885
        %9931 = vmatpush.bf16.msra.mxu0 %v7877
        %9932 = vmatpush.bf16.msra.mxu0 %v7869
        %9933 = vmatpush.bf16.msra.mxu0 %v7861
        %9934 = vmatpush.bf16.msra.mxu0 %v7853
        %9935 = vmatpush.bf16.msra.mxu0 %v7845
        %9936 = vmatpush.bf16.msra.mxu0 %v7837
        %9937 = vmatmul.bf16.gmra.mxu0 %v5263
        %v9938 = vpop.f32.mrf.mxu0
        %v9939 = vadd.f32 %v9890, %v9938
        %v9940 = vpop.f32.mrf.mxu0
        %v9941 = vadd.f32 %v9892, %v9940
        %9942 = vmatmul.bf16.gmra.mxu0 %v5271
        %v9943 = vpop.f32.mrf.mxu0
        %v9944 = vadd.f32 %v9895, %v9943
        %v9945 = vpop.f32.mrf.mxu0
        %v9946 = vadd.f32 %v9897, %v9945
        %9947 = vmatmul.bf16.gmra.mxu0 %v5279
        %v9948 = vpop.f32.mrf.mxu0
        %v9949 = vadd.f32 %v9900, %v9948
        %v9950 = vpop.f32.mrf.mxu0
        %v9951 = vadd.f32 %v9902, %v9950
        %9952 = vmatmul.bf16.gmra.mxu0 %v5287
        %v9953 = vpop.f32.mrf.mxu0
        %v9954 = vadd.f32 %v9905, %v9953
        %v9955 = vpop.f32.mrf.mxu0
        %v9956 = vadd.f32 %v9907, %v9955
        %9957 = vmatmul.bf16.gmra.mxu0 %v5295
        %v9958 = vpop.f32.mrf.mxu0
        %v9959 = vadd.f32 %v9910, %v9958
        %v9960 = vpop.f32.mrf.mxu0
        %v9961 = vadd.f32 %v9912, %v9960
        %9962 = vmatmul.bf16.gmra.mxu0 %v5303
        %v9963 = vpop.f32.mrf.mxu0
        %v9964 = vadd.f32 %v9915, %v9963
        %v9965 = vpop.f32.mrf.mxu0
        %v9966 = vadd.f32 %v9917, %v9965
        %9967 = vmatmul.bf16.gmra.mxu0 %v5311
        %v9968 = vpop.f32.mrf.mxu0
        %v9969 = vadd.f32 %v9920, %v9968
        %v9970 = vpop.f32.mrf.mxu0
        %v9971 = vadd.f32 %v9922, %v9970
        %9972 = vmatmul.bf16.gmra.mxu0 %v5319
        %v9973 = vpop.f32.mrf.mxu0
        %v9974 = vadd.f32 %v9925, %v9973
        %v9975 = vpop.f32.mrf.mxu0
        %v9976 = vadd.f32 %v9927, %v9975
        %9977 = vdwg.mxu0
        %9978 = vmatpush.bf16.msra.mxu0 %v7446
        %9979 = vmatpush.bf16.msra.mxu0 %v7438
        %9980 = vmatpush.bf16.msra.mxu0 %v7430
        %9981 = vmatpush.bf16.msra.mxu0 %v7422
        %9982 = vmatpush.bf16.msra.mxu0 %v7414
        %9983 = vmatpush.bf16.msra.mxu0 %v7406
        %9984 = vmatpush.bf16.msra.mxu0 %v7398
        %9985 = vmatpush.bf16.msra.mxu0 %v7390
        %9986 = vmatmul.bf16.gmra.mxu0 %v5256
        %v9987 = vpop.f32.mrf.mxu0
        %v9988 = vadd.f32 %v5838, %v9987
        %v9989 = vpop.f32.mrf.mxu0
        %v9990 = vadd.f32 %v5838, %v9989
        %9991 = vmatmul.bf16.gmra.mxu0 %v5264
        %v9992 = vpop.f32.mrf.mxu0
        %v9993 = vadd.f32 %v5838, %v9992
        %v9994 = vpop.f32.mrf.mxu0
        %v9995 = vadd.f32 %v5838, %v9994
        %9996 = vmatmul.bf16.gmra.mxu0 %v5272
        %v9997 = vpop.f32.mrf.mxu0
        %v9998 = vadd.f32 %v5838, %v9997
        %v9999 = vpop.f32.mrf.mxu0
        %v10000 = vadd.f32 %v5838, %v9999
        %10001 = vmatmul.bf16.gmra.mxu0 %v5280
        %v10002 = vpop.f32.mrf.mxu0
        %v10003 = vadd.f32 %v5838, %v10002
        %v10004 = vpop.f32.mrf.mxu0
        %v10005 = vadd.f32 %v5838, %v10004
        %10006 = vmatmul.bf16.gmra.mxu0 %v5288
        %v10007 = vpop.f32.mrf.mxu0
        %v10008 = vadd.f32 %v5838, %v10007
        %v10009 = vpop.f32.mrf.mxu0
        %v10010 = vadd.f32 %v5838, %v10009
        %10011 = vmatmul.bf16.gmra.mxu0 %v5296
        %v10012 = vpop.f32.mrf.mxu0
        %v10013 = vadd.f32 %v5838, %v10012
        %v10014 = vpop.f32.mrf.mxu0
        %v10015 = vadd.f32 %v5838, %v10014
        %10016 = vmatmul.bf16.gmra.mxu0 %v5304
        %v10017 = vpop.f32.mrf.mxu0
        %v10018 = vadd.f32 %v5838, %v10017
        %v10019 = vpop.f32.mrf.mxu0
        %v10020 = vadd.f32 %v5838, %v10019
        %10021 = vmatmul.bf16.gmra.mxu0 %v5312
        %v10022 = vpop.f32.mrf.mxu0
        %v10023 = vadd.f32 %v5838, %v10022
        %v10024 = vpop.f32.mrf.mxu0
        %v10025 = vadd.f32 %v5838, %v10024
        %10026 = vdwg.mxu0
        %10027 = vmatpush.bf16.msra.mxu0 %v7510
        %10028 = vmatpush.bf16.msra.mxu0 %v7502
        %10029 = vmatpush.bf16.msra.mxu0 %v7494
        %10030 = vmatpush.bf16.msra.mxu0 %v7486
        %10031 = vmatpush.bf16.msra.mxu0 %v7478
        %10032 = vmatpush.bf16.msra.mxu0 %v7470
        %10033 = vmatpush.bf16.msra.mxu0 %v7462
        %10034 = vmatpush.bf16.msra.mxu0 %v7454
        %10035 = vmatmul.bf16.gmra.mxu0 %v5257
        %v10036 = vpop.f32.mrf.mxu0
        %v10037 = vadd.f32 %v9988, %v10036
        %v10038 = vpop.f32.mrf.mxu0
        %v10039 = vadd.f32 %v9990, %v10038
        %10040 = vmatmul.bf16.gmra.mxu0 %v5265
        %v10041 = vpop.f32.mrf.mxu0
        %v10042 = vadd.f32 %v9993, %v10041
        %v10043 = vpop.f32.mrf.mxu0
        %v10044 = vadd.f32 %v9995, %v10043
        %10045 = vmatmul.bf16.gmra.mxu0 %v5273
        %v10046 = vpop.f32.mrf.mxu0
        %v10047 = vadd.f32 %v9998, %v10046
        %v10048 = vpop.f32.mrf.mxu0
        %v10049 = vadd.f32 %v10000, %v10048
        %10050 = vmatmul.bf16.gmra.mxu0 %v5281
        %v10051 = vpop.f32.mrf.mxu0
        %v10052 = vadd.f32 %v10003, %v10051
        %v10053 = vpop.f32.mrf.mxu0
        %v10054 = vadd.f32 %v10005, %v10053
        %10055 = vmatmul.bf16.gmra.mxu0 %v5289
        %v10056 = vpop.f32.mrf.mxu0
        %v10057 = vadd.f32 %v10008, %v10056
        %v10058 = vpop.f32.mrf.mxu0
        %v10059 = vadd.f32 %v10010, %v10058
        %10060 = vmatmul.bf16.gmra.mxu0 %v5297
        %v10061 = vpop.f32.mrf.mxu0
        %v10062 = vadd.f32 %v10013, %v10061
        %v10063 = vpop.f32.mrf.mxu0
        %v10064 = vadd.f32 %v10015, %v10063
        %10065 = vmatmul.bf16.gmra.mxu0 %v5305
        %v10066 = vpop.f32.mrf.mxu0
        %v10067 = vadd.f32 %v10018, %v10066
        %v10068 = vpop.f32.mrf.mxu0
        %v10069 = vadd.f32 %v10020, %v10068
        %10070 = vmatmul.bf16.gmra.mxu0 %v5313
        %v10071 = vpop.f32.mrf.mxu0
        %v10072 = vadd.f32 %v10023, %v10071
        %v10073 = vpop.f32.mrf.mxu0
        %v10074 = vadd.f32 %v10025, %v10073
        %10075 = vdwg.mxu0
        %10076 = vmatpush.bf16.msra.mxu0 %v7574
        %10077 = vmatpush.bf16.msra.mxu0 %v7566
        %10078 = vmatpush.bf16.msra.mxu0 %v7558
        %10079 = vmatpush.bf16.msra.mxu0 %v7550
        %10080 = vmatpush.bf16.msra.mxu0 %v7542
        %10081 = vmatpush.bf16.msra.mxu0 %v7534
        %10082 = vmatpush.bf16.msra.mxu0 %v7526
        %10083 = vmatpush.bf16.msra.mxu0 %v7518
        %10084 = vmatmul.bf16.gmra.mxu0 %v5258
        %v10085 = vpop.f32.mrf.mxu0
        %v10086 = vadd.f32 %v10037, %v10085
        %v10087 = vpop.f32.mrf.mxu0
        %v10088 = vadd.f32 %v10039, %v10087
        %10089 = vmatmul.bf16.gmra.mxu0 %v5266
        %v10090 = vpop.f32.mrf.mxu0
        %v10091 = vadd.f32 %v10042, %v10090
        %v10092 = vpop.f32.mrf.mxu0
        %v10093 = vadd.f32 %v10044, %v10092
        %10094 = vmatmul.bf16.gmra.mxu0 %v5274
        %v10095 = vpop.f32.mrf.mxu0
        %v10096 = vadd.f32 %v10047, %v10095
        %v10097 = vpop.f32.mrf.mxu0
        %v10098 = vadd.f32 %v10049, %v10097
        %10099 = vmatmul.bf16.gmra.mxu0 %v5282
        %v10100 = vpop.f32.mrf.mxu0
        %v10101 = vadd.f32 %v10052, %v10100
        %v10102 = vpop.f32.mrf.mxu0
        %v10103 = vadd.f32 %v10054, %v10102
        %10104 = vmatmul.bf16.gmra.mxu0 %v5290
        %v10105 = vpop.f32.mrf.mxu0
        %v10106 = vadd.f32 %v10057, %v10105
        %v10107 = vpop.f32.mrf.mxu0
        %v10108 = vadd.f32 %v10059, %v10107
        %10109 = vmatmul.bf16.gmra.mxu0 %v5298
        %v10110 = vpop.f32.mrf.mxu0
        %v10111 = vadd.f32 %v10062, %v10110
        %v10112 = vpop.f32.mrf.mxu0
        %v10113 = vadd.f32 %v10064, %v10112
        %10114 = vmatmul.bf16.gmra.mxu0 %v5306
        %v10115 = vpop.f32.mrf.mxu0
        %v10116 = vadd.f32 %v10067, %v10115
        %v10117 = vpop.f32.mrf.mxu0
        %v10118 = vadd.f32 %v10069, %v10117
        %10119 = vmatmul.bf16.gmra.mxu0 %v5314
        %v10120 = vpop.f32.mrf.mxu0
        %v10121 = vadd.f32 %v10072, %v10120
        %v10122 = vpop.f32.mrf.mxu0
        %v10123 = vadd.f32 %v10074, %v10122
        %10124 = vdwg.mxu0
        %10125 = vmatpush.bf16.msra.mxu0 %v7638
        %10126 = vmatpush.bf16.msra.mxu0 %v7630
        %10127 = vmatpush.bf16.msra.mxu0 %v7622
        %10128 = vmatpush.bf16.msra.mxu0 %v7614
        %10129 = vmatpush.bf16.msra.mxu0 %v7606
        %10130 = vmatpush.bf16.msra.mxu0 %v7598
        %10131 = vmatpush.bf16.msra.mxu0 %v7590
        %10132 = vmatpush.bf16.msra.mxu0 %v7582
        %10133 = vmatmul.bf16.gmra.mxu0 %v5259
        %v10134 = vpop.f32.mrf.mxu0
        %v10135 = vadd.f32 %v10086, %v10134
        %v10136 = vpop.f32.mrf.mxu0
        %v10137 = vadd.f32 %v10088, %v10136
        %10138 = vmatmul.bf16.gmra.mxu0 %v5267
        %v10139 = vpop.f32.mrf.mxu0
        %v10140 = vadd.f32 %v10091, %v10139
        %v10141 = vpop.f32.mrf.mxu0
        %v10142 = vadd.f32 %v10093, %v10141
        %10143 = vmatmul.bf16.gmra.mxu0 %v5275
        %v10144 = vpop.f32.mrf.mxu0
        %v10145 = vadd.f32 %v10096, %v10144
        %v10146 = vpop.f32.mrf.mxu0
        %v10147 = vadd.f32 %v10098, %v10146
        %10148 = vmatmul.bf16.gmra.mxu0 %v5283
        %v10149 = vpop.f32.mrf.mxu0
        %v10150 = vadd.f32 %v10101, %v10149
        %v10151 = vpop.f32.mrf.mxu0
        %v10152 = vadd.f32 %v10103, %v10151
        %10153 = vmatmul.bf16.gmra.mxu0 %v5291
        %v10154 = vpop.f32.mrf.mxu0
        %v10155 = vadd.f32 %v10106, %v10154
        %v10156 = vpop.f32.mrf.mxu0
        %v10157 = vadd.f32 %v10108, %v10156
        %10158 = vmatmul.bf16.gmra.mxu0 %v5299
        %v10159 = vpop.f32.mrf.mxu0
        %v10160 = vadd.f32 %v10111, %v10159
        %v10161 = vpop.f32.mrf.mxu0
        %v10162 = vadd.f32 %v10113, %v10161
        %10163 = vmatmul.bf16.gmra.mxu0 %v5307
        %v10164 = vpop.f32.mrf.mxu0
        %v10165 = vadd.f32 %v10116, %v10164
        %v10166 = vpop.f32.mrf.mxu0
        %v10167 = vadd.f32 %v10118, %v10166
        %10168 = vmatmul.bf16.gmra.mxu0 %v5315
        %v10169 = vpop.f32.mrf.mxu0
        %v10170 = vadd.f32 %v10121, %v10169
        %v10171 = vpop.f32.mrf.mxu0
        %v10172 = vadd.f32 %v10123, %v10171
        %10173 = vdwg.mxu0
        %10174 = vmatpush.bf16.msra.mxu0 %v7702
        %10175 = vmatpush.bf16.msra.mxu0 %v7694
        %10176 = vmatpush.bf16.msra.mxu0 %v7686
        %10177 = vmatpush.bf16.msra.mxu0 %v7678
        %10178 = vmatpush.bf16.msra.mxu0 %v7670
        %10179 = vmatpush.bf16.msra.mxu0 %v7662
        %10180 = vmatpush.bf16.msra.mxu0 %v7654
        %10181 = vmatpush.bf16.msra.mxu0 %v7646
        %10182 = vmatmul.bf16.gmra.mxu0 %v5260
        %v10183 = vpop.f32.mrf.mxu0
        %v10184 = vadd.f32 %v10135, %v10183
        %v10185 = vpop.f32.mrf.mxu0
        %v10186 = vadd.f32 %v10137, %v10185
        %10187 = vmatmul.bf16.gmra.mxu0 %v5268
        %v10188 = vpop.f32.mrf.mxu0
        %v10189 = vadd.f32 %v10140, %v10188
        %v10190 = vpop.f32.mrf.mxu0
        %v10191 = vadd.f32 %v10142, %v10190
        %10192 = vmatmul.bf16.gmra.mxu0 %v5276
        %v10193 = vpop.f32.mrf.mxu0
        %v10194 = vadd.f32 %v10145, %v10193
        %v10195 = vpop.f32.mrf.mxu0
        %v10196 = vadd.f32 %v10147, %v10195
        %10197 = vmatmul.bf16.gmra.mxu0 %v5284
        %v10198 = vpop.f32.mrf.mxu0
        %v10199 = vadd.f32 %v10150, %v10198
        %v10200 = vpop.f32.mrf.mxu0
        %v10201 = vadd.f32 %v10152, %v10200
        %10202 = vmatmul.bf16.gmra.mxu0 %v5292
        %v10203 = vpop.f32.mrf.mxu0
        %v10204 = vadd.f32 %v10155, %v10203
        %v10205 = vpop.f32.mrf.mxu0
        %v10206 = vadd.f32 %v10157, %v10205
        %10207 = vmatmul.bf16.gmra.mxu0 %v5300
        %v10208 = vpop.f32.mrf.mxu0
        %v10209 = vadd.f32 %v10160, %v10208
        %v10210 = vpop.f32.mrf.mxu0
        %v10211 = vadd.f32 %v10162, %v10210
        %10212 = vmatmul.bf16.gmra.mxu0 %v5308
        %v10213 = vpop.f32.mrf.mxu0
        %v10214 = vadd.f32 %v10165, %v10213
        %v10215 = vpop.f32.mrf.mxu0
        %v10216 = vadd.f32 %v10167, %v10215
        %10217 = vmatmul.bf16.gmra.mxu0 %v5316
        %v10218 = vpop.f32.mrf.mxu0
        %v10219 = vadd.f32 %v10170, %v10218
        %v10220 = vpop.f32.mrf.mxu0
        %v10221 = vadd.f32 %v10172, %v10220
        %10222 = vdwg.mxu0
        %10223 = vmatpush.bf16.msra.mxu0 %v7766
        %10224 = vmatpush.bf16.msra.mxu0 %v7758
        %10225 = vmatpush.bf16.msra.mxu0 %v7750
        %10226 = vmatpush.bf16.msra.mxu0 %v7742
        %10227 = vmatpush.bf16.msra.mxu0 %v7734
        %10228 = vmatpush.bf16.msra.mxu0 %v7726
        %10229 = vmatpush.bf16.msra.mxu0 %v7718
        %10230 = vmatpush.bf16.msra.mxu0 %v7710
        %10231 = vmatmul.bf16.gmra.mxu0 %v5261
        %v10232 = vpop.f32.mrf.mxu0
        %v10233 = vadd.f32 %v10184, %v10232
        %v10234 = vpop.f32.mrf.mxu0
        %v10235 = vadd.f32 %v10186, %v10234
        %10236 = vmatmul.bf16.gmra.mxu0 %v5269
        %v10237 = vpop.f32.mrf.mxu0
        %v10238 = vadd.f32 %v10189, %v10237
        %v10239 = vpop.f32.mrf.mxu0
        %v10240 = vadd.f32 %v10191, %v10239
        %10241 = vmatmul.bf16.gmra.mxu0 %v5277
        %v10242 = vpop.f32.mrf.mxu0
        %v10243 = vadd.f32 %v10194, %v10242
        %v10244 = vpop.f32.mrf.mxu0
        %v10245 = vadd.f32 %v10196, %v10244
        %10246 = vmatmul.bf16.gmra.mxu0 %v5285
        %v10247 = vpop.f32.mrf.mxu0
        %v10248 = vadd.f32 %v10199, %v10247
        %v10249 = vpop.f32.mrf.mxu0
        %v10250 = vadd.f32 %v10201, %v10249
        %10251 = vmatmul.bf16.gmra.mxu0 %v5293
        %v10252 = vpop.f32.mrf.mxu0
        %v10253 = vadd.f32 %v10204, %v10252
        %v10254 = vpop.f32.mrf.mxu0
        %v10255 = vadd.f32 %v10206, %v10254
        %10256 = vmatmul.bf16.gmra.mxu0 %v5301
        %v10257 = vpop.f32.mrf.mxu0
        %v10258 = vadd.f32 %v10209, %v10257
        %v10259 = vpop.f32.mrf.mxu0
        %v10260 = vadd.f32 %v10211, %v10259
        %10261 = vmatmul.bf16.gmra.mxu0 %v5309
        %v10262 = vpop.f32.mrf.mxu0
        %v10263 = vadd.f32 %v10214, %v10262
        %v10264 = vpop.f32.mrf.mxu0
        %v10265 = vadd.f32 %v10216, %v10264
        %10266 = vmatmul.bf16.gmra.mxu0 %v5317
        %v10267 = vpop.f32.mrf.mxu0
        %v10268 = vadd.f32 %v10219, %v10267
        %v10269 = vpop.f32.mrf.mxu0
        %v10270 = vadd.f32 %v10221, %v10269
        %10271 = vdwg.mxu0
        %10272 = vmatpush.bf16.msra.mxu0 %v7830
        %10273 = vmatpush.bf16.msra.mxu0 %v7822
        %10274 = vmatpush.bf16.msra.mxu0 %v7814
        %10275 = vmatpush.bf16.msra.mxu0 %v7806
        %10276 = vmatpush.bf16.msra.mxu0 %v7798
        %10277 = vmatpush.bf16.msra.mxu0 %v7790
        %10278 = vmatpush.bf16.msra.mxu0 %v7782
        %10279 = vmatpush.bf16.msra.mxu0 %v7774
        %10280 = vmatmul.bf16.gmra.mxu0 %v5262
        %v10281 = vpop.f32.mrf.mxu0
        %v10282 = vadd.f32 %v10233, %v10281
        %v10283 = vpop.f32.mrf.mxu0
        %v10284 = vadd.f32 %v10235, %v10283
        %10285 = vmatmul.bf16.gmra.mxu0 %v5270
        %v10286 = vpop.f32.mrf.mxu0
        %v10287 = vadd.f32 %v10238, %v10286
        %v10288 = vpop.f32.mrf.mxu0
        %v10289 = vadd.f32 %v10240, %v10288
        %10290 = vmatmul.bf16.gmra.mxu0 %v5278
        %v10291 = vpop.f32.mrf.mxu0
        %v10292 = vadd.f32 %v10243, %v10291
        %v10293 = vpop.f32.mrf.mxu0
        %v10294 = vadd.f32 %v10245, %v10293
        %10295 = vmatmul.bf16.gmra.mxu0 %v5286
        %v10296 = vpop.f32.mrf.mxu0
        %v10297 = vadd.f32 %v10248, %v10296
        %v10298 = vpop.f32.mrf.mxu0
        %v10299 = vadd.f32 %v10250, %v10298
        %10300 = vmatmul.bf16.gmra.mxu0 %v5294
        %v10301 = vpop.f32.mrf.mxu0
        %v10302 = vadd.f32 %v10253, %v10301
        %v10303 = vpop.f32.mrf.mxu0
        %v10304 = vadd.f32 %v10255, %v10303
        %10305 = vmatmul.bf16.gmra.mxu0 %v5302
        %v10306 = vpop.f32.mrf.mxu0
        %v10307 = vadd.f32 %v10258, %v10306
        %v10308 = vpop.f32.mrf.mxu0
        %v10309 = vadd.f32 %v10260, %v10308
        %10310 = vmatmul.bf16.gmra.mxu0 %v5310
        %v10311 = vpop.f32.mrf.mxu0
        %v10312 = vadd.f32 %v10263, %v10311
        %v10313 = vpop.f32.mrf.mxu0
        %v10314 = vadd.f32 %v10265, %v10313
        %10315 = vmatmul.bf16.gmra.mxu0 %v5318
        %v10316 = vpop.f32.mrf.mxu0
        %v10317 = vadd.f32 %v10268, %v10316
        %v10318 = vpop.f32.mrf.mxu0
        %v10319 = vadd.f32 %v10270, %v10318
        %10320 = vdwg.mxu0
        %10321 = vmatpush.bf16.msra.mxu0 %v7894
        %10322 = vmatpush.bf16.msra.mxu0 %v7886
        %10323 = vmatpush.bf16.msra.mxu0 %v7878
        %10324 = vmatpush.bf16.msra.mxu0 %v7870
        %10325 = vmatpush.bf16.msra.mxu0 %v7862
        %10326 = vmatpush.bf16.msra.mxu0 %v7854
        %10327 = vmatpush.bf16.msra.mxu0 %v7846
        %10328 = vmatpush.bf16.msra.mxu0 %v7838
        %10329 = vmatmul.bf16.gmra.mxu0 %v5263
        %v10330 = vpop.f32.mrf.mxu0
        %v10331 = vadd.f32 %v10282, %v10330
        %v10332 = vpop.f32.mrf.mxu0
        %v10333 = vadd.f32 %v10284, %v10332
        %10334 = vmatmul.bf16.gmra.mxu0 %v5271
        %v10335 = vpop.f32.mrf.mxu0
        %v10336 = vadd.f32 %v10287, %v10335
        %v10337 = vpop.f32.mrf.mxu0
        %v10338 = vadd.f32 %v10289, %v10337
        %10339 = vmatmul.bf16.gmra.mxu0 %v5279
        %v10340 = vpop.f32.mrf.mxu0
        %v10341 = vadd.f32 %v10292, %v10340
        %v10342 = vpop.f32.mrf.mxu0
        %v10343 = vadd.f32 %v10294, %v10342
        %10344 = vmatmul.bf16.gmra.mxu0 %v5287
        %v10345 = vpop.f32.mrf.mxu0
        %v10346 = vadd.f32 %v10297, %v10345
        %v10347 = vpop.f32.mrf.mxu0
        %v10348 = vadd.f32 %v10299, %v10347
        %10349 = vmatmul.bf16.gmra.mxu0 %v5295
        %v10350 = vpop.f32.mrf.mxu0
        %v10351 = vadd.f32 %v10302, %v10350
        %v10352 = vpop.f32.mrf.mxu0
        %v10353 = vadd.f32 %v10304, %v10352
        %10354 = vmatmul.bf16.gmra.mxu0 %v5303
        %v10355 = vpop.f32.mrf.mxu0
        %v10356 = vadd.f32 %v10307, %v10355
        %v10357 = vpop.f32.mrf.mxu0
        %v10358 = vadd.f32 %v10309, %v10357
        %10359 = vmatmul.bf16.gmra.mxu0 %v5311
        %v10360 = vpop.f32.mrf.mxu0
        %v10361 = vadd.f32 %v10312, %v10360
        %v10362 = vpop.f32.mrf.mxu0
        %v10363 = vadd.f32 %v10314, %v10362
        %10364 = vmatmul.bf16.gmra.mxu0 %v5319
        %v10365 = vpop.f32.mrf.mxu0
        %v10366 = vadd.f32 %v10317, %v10365
        %v10367 = vpop.f32.mrf.mxu0
        %v10368 = vadd.f32 %v10319, %v10367
        %10369 = vdwg.mxu0
        %10370 = vmatpush.bf16.msra.mxu0 %v7447
        %10371 = vmatpush.bf16.msra.mxu0 %v7439
        %10372 = vmatpush.bf16.msra.mxu0 %v7431
        %10373 = vmatpush.bf16.msra.mxu0 %v7423
        %10374 = vmatpush.bf16.msra.mxu0 %v7415
        %10375 = vmatpush.bf16.msra.mxu0 %v7407
        %10376 = vmatpush.bf16.msra.mxu0 %v7399
        %10377 = vmatpush.bf16.msra.mxu0 %v7391
        %10378 = vmatmul.bf16.gmra.mxu0 %v5256
        %v10379 = vpop.f32.mrf.mxu0
        %v10380 = vadd.f32 %v5839, %v10379
        %v10381 = vpop.f32.mrf.mxu0
        %v10382 = vadd.f32 %v5839, %v10381
        %10383 = vmatmul.bf16.gmra.mxu0 %v5264
        %v10384 = vpop.f32.mrf.mxu0
        %v10385 = vadd.f32 %v5839, %v10384
        %v10386 = vpop.f32.mrf.mxu0
        %v10387 = vadd.f32 %v5839, %v10386
        %10388 = vmatmul.bf16.gmra.mxu0 %v5272
        %v10389 = vpop.f32.mrf.mxu0
        %v10390 = vadd.f32 %v5839, %v10389
        %v10391 = vpop.f32.mrf.mxu0
        %v10392 = vadd.f32 %v5839, %v10391
        %10393 = vmatmul.bf16.gmra.mxu0 %v5280
        %v10394 = vpop.f32.mrf.mxu0
        %v10395 = vadd.f32 %v5839, %v10394
        %v10396 = vpop.f32.mrf.mxu0
        %v10397 = vadd.f32 %v5839, %v10396
        %10398 = vmatmul.bf16.gmra.mxu0 %v5288
        %v10399 = vpop.f32.mrf.mxu0
        %v10400 = vadd.f32 %v5839, %v10399
        %v10401 = vpop.f32.mrf.mxu0
        %v10402 = vadd.f32 %v5839, %v10401
        %10403 = vmatmul.bf16.gmra.mxu0 %v5296
        %v10404 = vpop.f32.mrf.mxu0
        %v10405 = vadd.f32 %v5839, %v10404
        %v10406 = vpop.f32.mrf.mxu0
        %v10407 = vadd.f32 %v5839, %v10406
        %10408 = vmatmul.bf16.gmra.mxu0 %v5304
        %v10409 = vpop.f32.mrf.mxu0
        %v10410 = vadd.f32 %v5839, %v10409
        %v10411 = vpop.f32.mrf.mxu0
        %v10412 = vadd.f32 %v5839, %v10411
        %10413 = vmatmul.bf16.gmra.mxu0 %v5312
        %v10414 = vpop.f32.mrf.mxu0
        %v10415 = vadd.f32 %v5839, %v10414
        %v10416 = vpop.f32.mrf.mxu0
        %v10417 = vadd.f32 %v5839, %v10416
        %10418 = vdwg.mxu0
        %10419 = vmatpush.bf16.msra.mxu0 %v7511
        %10420 = vmatpush.bf16.msra.mxu0 %v7503
        %10421 = vmatpush.bf16.msra.mxu0 %v7495
        %10422 = vmatpush.bf16.msra.mxu0 %v7487
        %10423 = vmatpush.bf16.msra.mxu0 %v7479
        %10424 = vmatpush.bf16.msra.mxu0 %v7471
        %10425 = vmatpush.bf16.msra.mxu0 %v7463
        %10426 = vmatpush.bf16.msra.mxu0 %v7455
        %10427 = vmatmul.bf16.gmra.mxu0 %v5257
        %v10428 = vpop.f32.mrf.mxu0
        %v10429 = vadd.f32 %v10380, %v10428
        %v10430 = vpop.f32.mrf.mxu0
        %v10431 = vadd.f32 %v10382, %v10430
        %10432 = vmatmul.bf16.gmra.mxu0 %v5265
        %v10433 = vpop.f32.mrf.mxu0
        %v10434 = vadd.f32 %v10385, %v10433
        %v10435 = vpop.f32.mrf.mxu0
        %v10436 = vadd.f32 %v10387, %v10435
        %10437 = vmatmul.bf16.gmra.mxu0 %v5273
        %v10438 = vpop.f32.mrf.mxu0
        %v10439 = vadd.f32 %v10390, %v10438
        %v10440 = vpop.f32.mrf.mxu0
        %v10441 = vadd.f32 %v10392, %v10440
        %10442 = vmatmul.bf16.gmra.mxu0 %v5281
        %v10443 = vpop.f32.mrf.mxu0
        %v10444 = vadd.f32 %v10395, %v10443
        %v10445 = vpop.f32.mrf.mxu0
        %v10446 = vadd.f32 %v10397, %v10445
        %10447 = vmatmul.bf16.gmra.mxu0 %v5289
        %v10448 = vpop.f32.mrf.mxu0
        %v10449 = vadd.f32 %v10400, %v10448
        %v10450 = vpop.f32.mrf.mxu0
        %v10451 = vadd.f32 %v10402, %v10450
        %10452 = vmatmul.bf16.gmra.mxu0 %v5297
        %v10453 = vpop.f32.mrf.mxu0
        %v10454 = vadd.f32 %v10405, %v10453
        %v10455 = vpop.f32.mrf.mxu0
        %v10456 = vadd.f32 %v10407, %v10455
        %10457 = vmatmul.bf16.gmra.mxu0 %v5305
        %v10458 = vpop.f32.mrf.mxu0
        %v10459 = vadd.f32 %v10410, %v10458
        %v10460 = vpop.f32.mrf.mxu0
        %v10461 = vadd.f32 %v10412, %v10460
        %10462 = vmatmul.bf16.gmra.mxu0 %v5313
        %v10463 = vpop.f32.mrf.mxu0
        %v10464 = vadd.f32 %v10415, %v10463
        %v10465 = vpop.f32.mrf.mxu0
        %v10466 = vadd.f32 %v10417, %v10465
        %10467 = vdwg.mxu0
        %10468 = vmatpush.bf16.msra.mxu0 %v7575
        %10469 = vmatpush.bf16.msra.mxu0 %v7567
        %10470 = vmatpush.bf16.msra.mxu0 %v7559
        %10471 = vmatpush.bf16.msra.mxu0 %v7551
        %10472 = vmatpush.bf16.msra.mxu0 %v7543
        %10473 = vmatpush.bf16.msra.mxu0 %v7535
        %10474 = vmatpush.bf16.msra.mxu0 %v7527
        %10475 = vmatpush.bf16.msra.mxu0 %v7519
        %10476 = vmatmul.bf16.gmra.mxu0 %v5258
        %v10477 = vpop.f32.mrf.mxu0
        %v10478 = vadd.f32 %v10429, %v10477
        %v10479 = vpop.f32.mrf.mxu0
        %v10480 = vadd.f32 %v10431, %v10479
        %10481 = vmatmul.bf16.gmra.mxu0 %v5266
        %v10482 = vpop.f32.mrf.mxu0
        %v10483 = vadd.f32 %v10434, %v10482
        %v10484 = vpop.f32.mrf.mxu0
        %v10485 = vadd.f32 %v10436, %v10484
        %10486 = vmatmul.bf16.gmra.mxu0 %v5274
        %v10487 = vpop.f32.mrf.mxu0
        %v10488 = vadd.f32 %v10439, %v10487
        %v10489 = vpop.f32.mrf.mxu0
        %v10490 = vadd.f32 %v10441, %v10489
        %10491 = vmatmul.bf16.gmra.mxu0 %v5282
        %v10492 = vpop.f32.mrf.mxu0
        %v10493 = vadd.f32 %v10444, %v10492
        %v10494 = vpop.f32.mrf.mxu0
        %v10495 = vadd.f32 %v10446, %v10494
        %10496 = vmatmul.bf16.gmra.mxu0 %v5290
        %v10497 = vpop.f32.mrf.mxu0
        %v10498 = vadd.f32 %v10449, %v10497
        %v10499 = vpop.f32.mrf.mxu0
        %v10500 = vadd.f32 %v10451, %v10499
        %10501 = vmatmul.bf16.gmra.mxu0 %v5298
        %v10502 = vpop.f32.mrf.mxu0
        %v10503 = vadd.f32 %v10454, %v10502
        %v10504 = vpop.f32.mrf.mxu0
        %v10505 = vadd.f32 %v10456, %v10504
        %10506 = vmatmul.bf16.gmra.mxu0 %v5306
        %v10507 = vpop.f32.mrf.mxu0
        %v10508 = vadd.f32 %v10459, %v10507
        %v10509 = vpop.f32.mrf.mxu0
        %v10510 = vadd.f32 %v10461, %v10509
        %10511 = vmatmul.bf16.gmra.mxu0 %v5314
        %v10512 = vpop.f32.mrf.mxu0
        %v10513 = vadd.f32 %v10464, %v10512
        %v10514 = vpop.f32.mrf.mxu0
        %v10515 = vadd.f32 %v10466, %v10514
        %10516 = vdwg.mxu0
        %10517 = vmatpush.bf16.msra.mxu0 %v7639
        %10518 = vmatpush.bf16.msra.mxu0 %v7631
        %10519 = vmatpush.bf16.msra.mxu0 %v7623
        %10520 = vmatpush.bf16.msra.mxu0 %v7615
        %10521 = vmatpush.bf16.msra.mxu0 %v7607
        %10522 = vmatpush.bf16.msra.mxu0 %v7599
        %10523 = vmatpush.bf16.msra.mxu0 %v7591
        %10524 = vmatpush.bf16.msra.mxu0 %v7583
        %10525 = vmatmul.bf16.gmra.mxu0 %v5259
        %v10526 = vpop.f32.mrf.mxu0
        %v10527 = vadd.f32 %v10478, %v10526
        %v10528 = vpop.f32.mrf.mxu0
        %v10529 = vadd.f32 %v10480, %v10528
        %10530 = vmatmul.bf16.gmra.mxu0 %v5267
        %v10531 = vpop.f32.mrf.mxu0
        %v10532 = vadd.f32 %v10483, %v10531
        %v10533 = vpop.f32.mrf.mxu0
        %v10534 = vadd.f32 %v10485, %v10533
        %10535 = vmatmul.bf16.gmra.mxu0 %v5275
        %v10536 = vpop.f32.mrf.mxu0
        %v10537 = vadd.f32 %v10488, %v10536
        %v10538 = vpop.f32.mrf.mxu0
        %v10539 = vadd.f32 %v10490, %v10538
        %10540 = vmatmul.bf16.gmra.mxu0 %v5283
        %v10541 = vpop.f32.mrf.mxu0
        %v10542 = vadd.f32 %v10493, %v10541
        %v10543 = vpop.f32.mrf.mxu0
        %v10544 = vadd.f32 %v10495, %v10543
        %10545 = vmatmul.bf16.gmra.mxu0 %v5291
        %v10546 = vpop.f32.mrf.mxu0
        %v10547 = vadd.f32 %v10498, %v10546
        %v10548 = vpop.f32.mrf.mxu0
        %v10549 = vadd.f32 %v10500, %v10548
        %10550 = vmatmul.bf16.gmra.mxu0 %v5299
        %v10551 = vpop.f32.mrf.mxu0
        %v10552 = vadd.f32 %v10503, %v10551
        %v10553 = vpop.f32.mrf.mxu0
        %v10554 = vadd.f32 %v10505, %v10553
        %10555 = vmatmul.bf16.gmra.mxu0 %v5307
        %v10556 = vpop.f32.mrf.mxu0
        %v10557 = vadd.f32 %v10508, %v10556
        %v10558 = vpop.f32.mrf.mxu0
        %v10559 = vadd.f32 %v10510, %v10558
        %10560 = vmatmul.bf16.gmra.mxu0 %v5315
        %v10561 = vpop.f32.mrf.mxu0
        %v10562 = vadd.f32 %v10513, %v10561
        %v10563 = vpop.f32.mrf.mxu0
        %v10564 = vadd.f32 %v10515, %v10563
        %10565 = vdwg.mxu0
        %10566 = vmatpush.bf16.msra.mxu0 %v7703
        %10567 = vmatpush.bf16.msra.mxu0 %v7695
        %10568 = vmatpush.bf16.msra.mxu0 %v7687
        %10569 = vmatpush.bf16.msra.mxu0 %v7679
        %10570 = vmatpush.bf16.msra.mxu0 %v7671
        %10571 = vmatpush.bf16.msra.mxu0 %v7663
        %10572 = vmatpush.bf16.msra.mxu0 %v7655
        %10573 = vmatpush.bf16.msra.mxu0 %v7647
        %10574 = vmatmul.bf16.gmra.mxu0 %v5260
        %v10575 = vpop.f32.mrf.mxu0
        %v10576 = vadd.f32 %v10527, %v10575
        %v10577 = vpop.f32.mrf.mxu0
        %v10578 = vadd.f32 %v10529, %v10577
        %10579 = vmatmul.bf16.gmra.mxu0 %v5268
        %v10580 = vpop.f32.mrf.mxu0
        %v10581 = vadd.f32 %v10532, %v10580
        %v10582 = vpop.f32.mrf.mxu0
        %v10583 = vadd.f32 %v10534, %v10582
        %10584 = vmatmul.bf16.gmra.mxu0 %v5276
        %v10585 = vpop.f32.mrf.mxu0
        %v10586 = vadd.f32 %v10537, %v10585
        %v10587 = vpop.f32.mrf.mxu0
        %v10588 = vadd.f32 %v10539, %v10587
        %10589 = vmatmul.bf16.gmra.mxu0 %v5284
        %v10590 = vpop.f32.mrf.mxu0
        %v10591 = vadd.f32 %v10542, %v10590
        %v10592 = vpop.f32.mrf.mxu0
        %v10593 = vadd.f32 %v10544, %v10592
        %10594 = vmatmul.bf16.gmra.mxu0 %v5292
        %v10595 = vpop.f32.mrf.mxu0
        %v10596 = vadd.f32 %v10547, %v10595
        %v10597 = vpop.f32.mrf.mxu0
        %v10598 = vadd.f32 %v10549, %v10597
        %10599 = vmatmul.bf16.gmra.mxu0 %v5300
        %v10600 = vpop.f32.mrf.mxu0
        %v10601 = vadd.f32 %v10552, %v10600
        %v10602 = vpop.f32.mrf.mxu0
        %v10603 = vadd.f32 %v10554, %v10602
        %10604 = vmatmul.bf16.gmra.mxu0 %v5308
        %v10605 = vpop.f32.mrf.mxu0
        %v10606 = vadd.f32 %v10557, %v10605
        %v10607 = vpop.f32.mrf.mxu0
        %v10608 = vadd.f32 %v10559, %v10607
        %10609 = vmatmul.bf16.gmra.mxu0 %v5316
        %v10610 = vpop.f32.mrf.mxu0
        %v10611 = vadd.f32 %v10562, %v10610
        %v10612 = vpop.f32.mrf.mxu0
        %v10613 = vadd.f32 %v10564, %v10612
        %10614 = vdwg.mxu0
        %10615 = vmatpush.bf16.msra.mxu0 %v7767
        %10616 = vmatpush.bf16.msra.mxu0 %v7759
        %10617 = vmatpush.bf16.msra.mxu0 %v7751
        %10618 = vmatpush.bf16.msra.mxu0 %v7743
        %10619 = vmatpush.bf16.msra.mxu0 %v7735
        %10620 = vmatpush.bf16.msra.mxu0 %v7727
        %10621 = vmatpush.bf16.msra.mxu0 %v7719
        %10622 = vmatpush.bf16.msra.mxu0 %v7711
        %10623 = vmatmul.bf16.gmra.mxu0 %v5261
        %v10624 = vpop.f32.mrf.mxu0
        %v10625 = vadd.f32 %v10576, %v10624
        %v10626 = vpop.f32.mrf.mxu0
        %v10627 = vadd.f32 %v10578, %v10626
        %10628 = vmatmul.bf16.gmra.mxu0 %v5269
        %v10629 = vpop.f32.mrf.mxu0
        %v10630 = vadd.f32 %v10581, %v10629
        %v10631 = vpop.f32.mrf.mxu0
        %v10632 = vadd.f32 %v10583, %v10631
        %10633 = vmatmul.bf16.gmra.mxu0 %v5277
        %v10634 = vpop.f32.mrf.mxu0
        %v10635 = vadd.f32 %v10586, %v10634
        %v10636 = vpop.f32.mrf.mxu0
        %v10637 = vadd.f32 %v10588, %v10636
        %10638 = vmatmul.bf16.gmra.mxu0 %v5285
        %v10639 = vpop.f32.mrf.mxu0
        %v10640 = vadd.f32 %v10591, %v10639
        %v10641 = vpop.f32.mrf.mxu0
        %v10642 = vadd.f32 %v10593, %v10641
        %10643 = vmatmul.bf16.gmra.mxu0 %v5293
        %v10644 = vpop.f32.mrf.mxu0
        %v10645 = vadd.f32 %v10596, %v10644
        %v10646 = vpop.f32.mrf.mxu0
        %v10647 = vadd.f32 %v10598, %v10646
        %10648 = vmatmul.bf16.gmra.mxu0 %v5301
        %v10649 = vpop.f32.mrf.mxu0
        %v10650 = vadd.f32 %v10601, %v10649
        %v10651 = vpop.f32.mrf.mxu0
        %v10652 = vadd.f32 %v10603, %v10651
        %10653 = vmatmul.bf16.gmra.mxu0 %v5309
        %v10654 = vpop.f32.mrf.mxu0
        %v10655 = vadd.f32 %v10606, %v10654
        %v10656 = vpop.f32.mrf.mxu0
        %v10657 = vadd.f32 %v10608, %v10656
        %10658 = vmatmul.bf16.gmra.mxu0 %v5317
        %v10659 = vpop.f32.mrf.mxu0
        %v10660 = vadd.f32 %v10611, %v10659
        %v10661 = vpop.f32.mrf.mxu0
        %v10662 = vadd.f32 %v10613, %v10661
        %10663 = vdwg.mxu0
        %10664 = vmatpush.bf16.msra.mxu0 %v7831
        %10665 = vmatpush.bf16.msra.mxu0 %v7823
        %10666 = vmatpush.bf16.msra.mxu0 %v7815
        %10667 = vmatpush.bf16.msra.mxu0 %v7807
        %10668 = vmatpush.bf16.msra.mxu0 %v7799
        %10669 = vmatpush.bf16.msra.mxu0 %v7791
        %10670 = vmatpush.bf16.msra.mxu0 %v7783
        %10671 = vmatpush.bf16.msra.mxu0 %v7775
        %10672 = vmatmul.bf16.gmra.mxu0 %v5262
        %v10673 = vpop.f32.mrf.mxu0
        %v10674 = vadd.f32 %v10625, %v10673
        %v10675 = vpop.f32.mrf.mxu0
        %v10676 = vadd.f32 %v10627, %v10675
        %10677 = vmatmul.bf16.gmra.mxu0 %v5270
        %v10678 = vpop.f32.mrf.mxu0
        %v10679 = vadd.f32 %v10630, %v10678
        %v10680 = vpop.f32.mrf.mxu0
        %v10681 = vadd.f32 %v10632, %v10680
        %10682 = vmatmul.bf16.gmra.mxu0 %v5278
        %v10683 = vpop.f32.mrf.mxu0
        %v10684 = vadd.f32 %v10635, %v10683
        %v10685 = vpop.f32.mrf.mxu0
        %v10686 = vadd.f32 %v10637, %v10685
        %10687 = vmatmul.bf16.gmra.mxu0 %v5286
        %v10688 = vpop.f32.mrf.mxu0
        %v10689 = vadd.f32 %v10640, %v10688
        %v10690 = vpop.f32.mrf.mxu0
        %v10691 = vadd.f32 %v10642, %v10690
        %10692 = vmatmul.bf16.gmra.mxu0 %v5294
        %v10693 = vpop.f32.mrf.mxu0
        %v10694 = vadd.f32 %v10645, %v10693
        %v10695 = vpop.f32.mrf.mxu0
        %v10696 = vadd.f32 %v10647, %v10695
        %10697 = vmatmul.bf16.gmra.mxu0 %v5302
        %v10698 = vpop.f32.mrf.mxu0
        %v10699 = vadd.f32 %v10650, %v10698
        %v10700 = vpop.f32.mrf.mxu0
        %v10701 = vadd.f32 %v10652, %v10700
        %10702 = vmatmul.bf16.gmra.mxu0 %v5310
        %v10703 = vpop.f32.mrf.mxu0
        %v10704 = vadd.f32 %v10655, %v10703
        %v10705 = vpop.f32.mrf.mxu0
        %v10706 = vadd.f32 %v10657, %v10705
        %10707 = vmatmul.bf16.gmra.mxu0 %v5318
        %v10708 = vpop.f32.mrf.mxu0
        %v10709 = vadd.f32 %v10660, %v10708
        %v10710 = vpop.f32.mrf.mxu0
        %v10711 = vadd.f32 %v10662, %v10710
        %10712 = vdwg.mxu0
        %10713 = vmatpush.bf16.msra.mxu0 %v7895
        %10714 = vmatpush.bf16.msra.mxu0 %v7887
        %10715 = vmatpush.bf16.msra.mxu0 %v7879
        %10716 = vmatpush.bf16.msra.mxu0 %v7871
        %10717 = vmatpush.bf16.msra.mxu0 %v7863
        %10718 = vmatpush.bf16.msra.mxu0 %v7855
        %10719 = vmatpush.bf16.msra.mxu0 %v7847
        %10720 = vmatpush.bf16.msra.mxu0 %v7839
        %10721 = vmatmul.bf16.gmra.mxu0 %v5263
        %v10722 = vpop.f32.mrf.mxu0
        %v10723 = vadd.f32 %v10674, %v10722
        %v10724 = vpop.f32.mrf.mxu0
        %v10725 = vadd.f32 %v10676, %v10724
        %10726 = vmatmul.bf16.gmra.mxu0 %v5271
        %v10727 = vpop.f32.mrf.mxu0
        %v10728 = vadd.f32 %v10679, %v10727
        %v10729 = vpop.f32.mrf.mxu0
        %v10730 = vadd.f32 %v10681, %v10729
        %10731 = vmatmul.bf16.gmra.mxu0 %v5279
        %v10732 = vpop.f32.mrf.mxu0
        %v10733 = vadd.f32 %v10684, %v10732
        %v10734 = vpop.f32.mrf.mxu0
        %v10735 = vadd.f32 %v10686, %v10734
        %10736 = vmatmul.bf16.gmra.mxu0 %v5287
        %v10737 = vpop.f32.mrf.mxu0
        %v10738 = vadd.f32 %v10689, %v10737
        %v10739 = vpop.f32.mrf.mxu0
        %v10740 = vadd.f32 %v10691, %v10739
        %10741 = vmatmul.bf16.gmra.mxu0 %v5295
        %v10742 = vpop.f32.mrf.mxu0
        %v10743 = vadd.f32 %v10694, %v10742
        %v10744 = vpop.f32.mrf.mxu0
        %v10745 = vadd.f32 %v10696, %v10744
        %10746 = vmatmul.bf16.gmra.mxu0 %v5303
        %v10747 = vpop.f32.mrf.mxu0
        %v10748 = vadd.f32 %v10699, %v10747
        %v10749 = vpop.f32.mrf.mxu0
        %v10750 = vadd.f32 %v10701, %v10749
        %10751 = vmatmul.bf16.gmra.mxu0 %v5311
        %v10752 = vpop.f32.mrf.mxu0
        %v10753 = vadd.f32 %v10704, %v10752
        %v10754 = vpop.f32.mrf.mxu0
        %v10755 = vadd.f32 %v10706, %v10754
        %10756 = vmatmul.bf16.gmra.mxu0 %v5319
        %v10757 = vpop.f32.mrf.mxu0
        %v10758 = vadd.f32 %v10709, %v10757
        %v10759 = vpop.f32.mrf.mxu0
        %v10760 = vadd.f32 %v10711, %v10759
        %10761 = vdwg.mxu0
        %10762 = vmatpush.bf16.msra.mxu0 %v7448
        %10763 = vmatpush.bf16.msra.mxu0 %v7440
        %10764 = vmatpush.bf16.msra.mxu0 %v7432
        %10765 = vmatpush.bf16.msra.mxu0 %v7424
        %10766 = vmatpush.bf16.msra.mxu0 %v7416
        %10767 = vmatpush.bf16.msra.mxu0 %v7408
        %10768 = vmatpush.bf16.msra.mxu0 %v7400
        %10769 = vmatpush.bf16.msra.mxu0 %v7392
        %10770 = vmatmul.bf16.gmra.mxu0 %v5256
        %v10771 = vpop.f32.mrf.mxu0
        %v10772 = vadd.f32 %v5840, %v10771
        %v10773 = vpop.f32.mrf.mxu0
        %v10774 = vadd.f32 %v5840, %v10773
        %10775 = vmatmul.bf16.gmra.mxu0 %v5264
        %v10776 = vpop.f32.mrf.mxu0
        %v10777 = vadd.f32 %v5840, %v10776
        %v10778 = vpop.f32.mrf.mxu0
        %v10779 = vadd.f32 %v5840, %v10778
        %10780 = vmatmul.bf16.gmra.mxu0 %v5272
        %v10781 = vpop.f32.mrf.mxu0
        %v10782 = vadd.f32 %v5840, %v10781
        %v10783 = vpop.f32.mrf.mxu0
        %v10784 = vadd.f32 %v5840, %v10783
        %10785 = vmatmul.bf16.gmra.mxu0 %v5280
        %v10786 = vpop.f32.mrf.mxu0
        %v10787 = vadd.f32 %v5840, %v10786
        %v10788 = vpop.f32.mrf.mxu0
        %v10789 = vadd.f32 %v5840, %v10788
        %10790 = vmatmul.bf16.gmra.mxu0 %v5288
        %v10791 = vpop.f32.mrf.mxu0
        %v10792 = vadd.f32 %v5840, %v10791
        %v10793 = vpop.f32.mrf.mxu0
        %v10794 = vadd.f32 %v5840, %v10793
        %10795 = vmatmul.bf16.gmra.mxu0 %v5296
        %v10796 = vpop.f32.mrf.mxu0
        %v10797 = vadd.f32 %v5840, %v10796
        %v10798 = vpop.f32.mrf.mxu0
        %v10799 = vadd.f32 %v5840, %v10798
        %10800 = vmatmul.bf16.gmra.mxu0 %v5304
        %v10801 = vpop.f32.mrf.mxu0
        %v10802 = vadd.f32 %v5840, %v10801
        %v10803 = vpop.f32.mrf.mxu0
        %v10804 = vadd.f32 %v5840, %v10803
        %10805 = vmatmul.bf16.gmra.mxu0 %v5312
        %v10806 = vpop.f32.mrf.mxu0
        %v10807 = vadd.f32 %v5840, %v10806
        %v10808 = vpop.f32.mrf.mxu0
        %v10809 = vadd.f32 %v5840, %v10808
        %10810 = vdwg.mxu0
        %10811 = vmatpush.bf16.msra.mxu0 %v7512
        %10812 = vmatpush.bf16.msra.mxu0 %v7504
        %10813 = vmatpush.bf16.msra.mxu0 %v7496
        %10814 = vmatpush.bf16.msra.mxu0 %v7488
        %10815 = vmatpush.bf16.msra.mxu0 %v7480
        %10816 = vmatpush.bf16.msra.mxu0 %v7472
        %10817 = vmatpush.bf16.msra.mxu0 %v7464
        %10818 = vmatpush.bf16.msra.mxu0 %v7456
        %10819 = vmatmul.bf16.gmra.mxu0 %v5257
        %v10820 = vpop.f32.mrf.mxu0
        %v10821 = vadd.f32 %v10772, %v10820
        %v10822 = vpop.f32.mrf.mxu0
        %v10823 = vadd.f32 %v10774, %v10822
        %10824 = vmatmul.bf16.gmra.mxu0 %v5265
        %v10825 = vpop.f32.mrf.mxu0
        %v10826 = vadd.f32 %v10777, %v10825
        %v10827 = vpop.f32.mrf.mxu0
        %v10828 = vadd.f32 %v10779, %v10827
        %10829 = vmatmul.bf16.gmra.mxu0 %v5273
        %v10830 = vpop.f32.mrf.mxu0
        %v10831 = vadd.f32 %v10782, %v10830
        %v10832 = vpop.f32.mrf.mxu0
        %v10833 = vadd.f32 %v10784, %v10832
        %10834 = vmatmul.bf16.gmra.mxu0 %v5281
        %v10835 = vpop.f32.mrf.mxu0
        %v10836 = vadd.f32 %v10787, %v10835
        %v10837 = vpop.f32.mrf.mxu0
        %v10838 = vadd.f32 %v10789, %v10837
        %10839 = vmatmul.bf16.gmra.mxu0 %v5289
        %v10840 = vpop.f32.mrf.mxu0
        %v10841 = vadd.f32 %v10792, %v10840
        %v10842 = vpop.f32.mrf.mxu0
        %v10843 = vadd.f32 %v10794, %v10842
        %10844 = vmatmul.bf16.gmra.mxu0 %v5297
        %v10845 = vpop.f32.mrf.mxu0
        %v10846 = vadd.f32 %v10797, %v10845
        %v10847 = vpop.f32.mrf.mxu0
        %v10848 = vadd.f32 %v10799, %v10847
        %10849 = vmatmul.bf16.gmra.mxu0 %v5305
        %v10850 = vpop.f32.mrf.mxu0
        %v10851 = vadd.f32 %v10802, %v10850
        %v10852 = vpop.f32.mrf.mxu0
        %v10853 = vadd.f32 %v10804, %v10852
        %10854 = vmatmul.bf16.gmra.mxu0 %v5313
        %v10855 = vpop.f32.mrf.mxu0
        %v10856 = vadd.f32 %v10807, %v10855
        %v10857 = vpop.f32.mrf.mxu0
        %v10858 = vadd.f32 %v10809, %v10857
        %10859 = vdwg.mxu0
        %10860 = vmatpush.bf16.msra.mxu0 %v7576
        %10861 = vmatpush.bf16.msra.mxu0 %v7568
        %10862 = vmatpush.bf16.msra.mxu0 %v7560
        %10863 = vmatpush.bf16.msra.mxu0 %v7552
        %10864 = vmatpush.bf16.msra.mxu0 %v7544
        %10865 = vmatpush.bf16.msra.mxu0 %v7536
        %10866 = vmatpush.bf16.msra.mxu0 %v7528
        %10867 = vmatpush.bf16.msra.mxu0 %v7520
        %10868 = vmatmul.bf16.gmra.mxu0 %v5258
        %v10869 = vpop.f32.mrf.mxu0
        %v10870 = vadd.f32 %v10821, %v10869
        %v10871 = vpop.f32.mrf.mxu0
        %v10872 = vadd.f32 %v10823, %v10871
        %10873 = vmatmul.bf16.gmra.mxu0 %v5266
        %v10874 = vpop.f32.mrf.mxu0
        %v10875 = vadd.f32 %v10826, %v10874
        %v10876 = vpop.f32.mrf.mxu0
        %v10877 = vadd.f32 %v10828, %v10876
        %10878 = vmatmul.bf16.gmra.mxu0 %v5274
        %v10879 = vpop.f32.mrf.mxu0
        %v10880 = vadd.f32 %v10831, %v10879
        %v10881 = vpop.f32.mrf.mxu0
        %v10882 = vadd.f32 %v10833, %v10881
        %10883 = vmatmul.bf16.gmra.mxu0 %v5282
        %v10884 = vpop.f32.mrf.mxu0
        %v10885 = vadd.f32 %v10836, %v10884
        %v10886 = vpop.f32.mrf.mxu0
        %v10887 = vadd.f32 %v10838, %v10886
        %10888 = vmatmul.bf16.gmra.mxu0 %v5290
        %v10889 = vpop.f32.mrf.mxu0
        %v10890 = vadd.f32 %v10841, %v10889
        %v10891 = vpop.f32.mrf.mxu0
        %v10892 = vadd.f32 %v10843, %v10891
        %10893 = vmatmul.bf16.gmra.mxu0 %v5298
        %v10894 = vpop.f32.mrf.mxu0
        %v10895 = vadd.f32 %v10846, %v10894
        %v10896 = vpop.f32.mrf.mxu0
        %v10897 = vadd.f32 %v10848, %v10896
        %10898 = vmatmul.bf16.gmra.mxu0 %v5306
        %v10899 = vpop.f32.mrf.mxu0
        %v10900 = vadd.f32 %v10851, %v10899
        %v10901 = vpop.f32.mrf.mxu0
        %v10902 = vadd.f32 %v10853, %v10901
        %10903 = vmatmul.bf16.gmra.mxu0 %v5314
        %v10904 = vpop.f32.mrf.mxu0
        %v10905 = vadd.f32 %v10856, %v10904
        %v10906 = vpop.f32.mrf.mxu0
        %v10907 = vadd.f32 %v10858, %v10906
        %10908 = vdwg.mxu0
        %10909 = vmatpush.bf16.msra.mxu0 %v7640
        %10910 = vmatpush.bf16.msra.mxu0 %v7632
        %10911 = vmatpush.bf16.msra.mxu0 %v7624
        %10912 = vmatpush.bf16.msra.mxu0 %v7616
        %10913 = vmatpush.bf16.msra.mxu0 %v7608
        %10914 = vmatpush.bf16.msra.mxu0 %v7600
        %10915 = vmatpush.bf16.msra.mxu0 %v7592
        %10916 = vmatpush.bf16.msra.mxu0 %v7584
        %10917 = vmatmul.bf16.gmra.mxu0 %v5259
        %v10918 = vpop.f32.mrf.mxu0
        %v10919 = vadd.f32 %v10870, %v10918
        %v10920 = vpop.f32.mrf.mxu0
        %v10921 = vadd.f32 %v10872, %v10920
        %10922 = vmatmul.bf16.gmra.mxu0 %v5267
        %v10923 = vpop.f32.mrf.mxu0
        %v10924 = vadd.f32 %v10875, %v10923
        %v10925 = vpop.f32.mrf.mxu0
        %v10926 = vadd.f32 %v10877, %v10925
        %10927 = vmatmul.bf16.gmra.mxu0 %v5275
        %v10928 = vpop.f32.mrf.mxu0
        %v10929 = vadd.f32 %v10880, %v10928
        %v10930 = vpop.f32.mrf.mxu0
        %v10931 = vadd.f32 %v10882, %v10930
        %10932 = vmatmul.bf16.gmra.mxu0 %v5283
        %v10933 = vpop.f32.mrf.mxu0
        %v10934 = vadd.f32 %v10885, %v10933
        %v10935 = vpop.f32.mrf.mxu0
        %v10936 = vadd.f32 %v10887, %v10935
        %10937 = vmatmul.bf16.gmra.mxu0 %v5291
        %v10938 = vpop.f32.mrf.mxu0
        %v10939 = vadd.f32 %v10890, %v10938
        %v10940 = vpop.f32.mrf.mxu0
        %v10941 = vadd.f32 %v10892, %v10940
        %10942 = vmatmul.bf16.gmra.mxu0 %v5299
        %v10943 = vpop.f32.mrf.mxu0
        %v10944 = vadd.f32 %v10895, %v10943
        %v10945 = vpop.f32.mrf.mxu0
        %v10946 = vadd.f32 %v10897, %v10945
        %10947 = vmatmul.bf16.gmra.mxu0 %v5307
        %v10948 = vpop.f32.mrf.mxu0
        %v10949 = vadd.f32 %v10900, %v10948
        %v10950 = vpop.f32.mrf.mxu0
        %v10951 = vadd.f32 %v10902, %v10950
        %10952 = vmatmul.bf16.gmra.mxu0 %v5315
        %v10953 = vpop.f32.mrf.mxu0
        %v10954 = vadd.f32 %v10905, %v10953
        %v10955 = vpop.f32.mrf.mxu0
        %v10956 = vadd.f32 %v10907, %v10955
        %10957 = vdwg.mxu0
        %10958 = vmatpush.bf16.msra.mxu0 %v7704
        %10959 = vmatpush.bf16.msra.mxu0 %v7696
        %10960 = vmatpush.bf16.msra.mxu0 %v7688
        %10961 = vmatpush.bf16.msra.mxu0 %v7680
        %10962 = vmatpush.bf16.msra.mxu0 %v7672
        %10963 = vmatpush.bf16.msra.mxu0 %v7664
        %10964 = vmatpush.bf16.msra.mxu0 %v7656
        %10965 = vmatpush.bf16.msra.mxu0 %v7648
        %10966 = vmatmul.bf16.gmra.mxu0 %v5260
        %v10967 = vpop.f32.mrf.mxu0
        %v10968 = vadd.f32 %v10919, %v10967
        %v10969 = vpop.f32.mrf.mxu0
        %v10970 = vadd.f32 %v10921, %v10969
        %10971 = vmatmul.bf16.gmra.mxu0 %v5268
        %v10972 = vpop.f32.mrf.mxu0
        %v10973 = vadd.f32 %v10924, %v10972
        %v10974 = vpop.f32.mrf.mxu0
        %v10975 = vadd.f32 %v10926, %v10974
        %10976 = vmatmul.bf16.gmra.mxu0 %v5276
        %v10977 = vpop.f32.mrf.mxu0
        %v10978 = vadd.f32 %v10929, %v10977
        %v10979 = vpop.f32.mrf.mxu0
        %v10980 = vadd.f32 %v10931, %v10979
        %10981 = vmatmul.bf16.gmra.mxu0 %v5284
        %v10982 = vpop.f32.mrf.mxu0
        %v10983 = vadd.f32 %v10934, %v10982
        %v10984 = vpop.f32.mrf.mxu0
        %v10985 = vadd.f32 %v10936, %v10984
        %10986 = vmatmul.bf16.gmra.mxu0 %v5292
        %v10987 = vpop.f32.mrf.mxu0
        %v10988 = vadd.f32 %v10939, %v10987
        %v10989 = vpop.f32.mrf.mxu0
        %v10990 = vadd.f32 %v10941, %v10989
        %10991 = vmatmul.bf16.gmra.mxu0 %v5300
        %v10992 = vpop.f32.mrf.mxu0
        %v10993 = vadd.f32 %v10944, %v10992
        %v10994 = vpop.f32.mrf.mxu0
        %v10995 = vadd.f32 %v10946, %v10994
        %10996 = vmatmul.bf16.gmra.mxu0 %v5308
        %v10997 = vpop.f32.mrf.mxu0
        %v10998 = vadd.f32 %v10949, %v10997
        %v10999 = vpop.f32.mrf.mxu0
        %v11000 = vadd.f32 %v10951, %v10999
        %11001 = vmatmul.bf16.gmra.mxu0 %v5316
        %v11002 = vpop.f32.mrf.mxu0
        %v11003 = vadd.f32 %v10954, %v11002
        %v11004 = vpop.f32.mrf.mxu0
        %v11005 = vadd.f32 %v10956, %v11004
        %11006 = vdwg.mxu0
        %11007 = vmatpush.bf16.msra.mxu0 %v7768
        %11008 = vmatpush.bf16.msra.mxu0 %v7760
        %11009 = vmatpush.bf16.msra.mxu0 %v7752
        %11010 = vmatpush.bf16.msra.mxu0 %v7744
        %11011 = vmatpush.bf16.msra.mxu0 %v7736
        %11012 = vmatpush.bf16.msra.mxu0 %v7728
        %11013 = vmatpush.bf16.msra.mxu0 %v7720
        %11014 = vmatpush.bf16.msra.mxu0 %v7712
        %11015 = vmatmul.bf16.gmra.mxu0 %v5261
        %v11016 = vpop.f32.mrf.mxu0
        %v11017 = vadd.f32 %v10968, %v11016
        %v11018 = vpop.f32.mrf.mxu0
        %v11019 = vadd.f32 %v10970, %v11018
        %11020 = vmatmul.bf16.gmra.mxu0 %v5269
        %v11021 = vpop.f32.mrf.mxu0
        %v11022 = vadd.f32 %v10973, %v11021
        %v11023 = vpop.f32.mrf.mxu0
        %v11024 = vadd.f32 %v10975, %v11023
        %11025 = vmatmul.bf16.gmra.mxu0 %v5277
        %v11026 = vpop.f32.mrf.mxu0
        %v11027 = vadd.f32 %v10978, %v11026
        %v11028 = vpop.f32.mrf.mxu0
        %v11029 = vadd.f32 %v10980, %v11028
        %11030 = vmatmul.bf16.gmra.mxu0 %v5285
        %v11031 = vpop.f32.mrf.mxu0
        %v11032 = vadd.f32 %v10983, %v11031
        %v11033 = vpop.f32.mrf.mxu0
        %v11034 = vadd.f32 %v10985, %v11033
        %11035 = vmatmul.bf16.gmra.mxu0 %v5293
        %v11036 = vpop.f32.mrf.mxu0
        %v11037 = vadd.f32 %v10988, %v11036
        %v11038 = vpop.f32.mrf.mxu0
        %v11039 = vadd.f32 %v10990, %v11038
        %11040 = vmatmul.bf16.gmra.mxu0 %v5301
        %v11041 = vpop.f32.mrf.mxu0
        %v11042 = vadd.f32 %v10993, %v11041
        %v11043 = vpop.f32.mrf.mxu0
        %v11044 = vadd.f32 %v10995, %v11043
        %11045 = vmatmul.bf16.gmra.mxu0 %v5309
        %v11046 = vpop.f32.mrf.mxu0
        %v11047 = vadd.f32 %v10998, %v11046
        %v11048 = vpop.f32.mrf.mxu0
        %v11049 = vadd.f32 %v11000, %v11048
        %11050 = vmatmul.bf16.gmra.mxu0 %v5317
        %v11051 = vpop.f32.mrf.mxu0
        %v11052 = vadd.f32 %v11003, %v11051
        %v11053 = vpop.f32.mrf.mxu0
        %v11054 = vadd.f32 %v11005, %v11053
        %11055 = vdwg.mxu0
        %11056 = vmatpush.bf16.msra.mxu0 %v7832
        %11057 = vmatpush.bf16.msra.mxu0 %v7824
        %11058 = vmatpush.bf16.msra.mxu0 %v7816
        %11059 = vmatpush.bf16.msra.mxu0 %v7808
        %11060 = vmatpush.bf16.msra.mxu0 %v7800
        %11061 = vmatpush.bf16.msra.mxu0 %v7792
        %11062 = vmatpush.bf16.msra.mxu0 %v7784
        %11063 = vmatpush.bf16.msra.mxu0 %v7776
        %11064 = vmatmul.bf16.gmra.mxu0 %v5262
        %v11065 = vpop.f32.mrf.mxu0
        %v11066 = vadd.f32 %v11017, %v11065
        %v11067 = vpop.f32.mrf.mxu0
        %v11068 = vadd.f32 %v11019, %v11067
        %11069 = vmatmul.bf16.gmra.mxu0 %v5270
        %v11070 = vpop.f32.mrf.mxu0
        %v11071 = vadd.f32 %v11022, %v11070
        %v11072 = vpop.f32.mrf.mxu0
        %v11073 = vadd.f32 %v11024, %v11072
        %11074 = vmatmul.bf16.gmra.mxu0 %v5278
        %v11075 = vpop.f32.mrf.mxu0
        %v11076 = vadd.f32 %v11027, %v11075
        %v11077 = vpop.f32.mrf.mxu0
        %v11078 = vadd.f32 %v11029, %v11077
        %11079 = vmatmul.bf16.gmra.mxu0 %v5286
        %v11080 = vpop.f32.mrf.mxu0
        %v11081 = vadd.f32 %v11032, %v11080
        %v11082 = vpop.f32.mrf.mxu0
        %v11083 = vadd.f32 %v11034, %v11082
        %11084 = vmatmul.bf16.gmra.mxu0 %v5294
        %v11085 = vpop.f32.mrf.mxu0
        %v11086 = vadd.f32 %v11037, %v11085
        %v11087 = vpop.f32.mrf.mxu0
        %v11088 = vadd.f32 %v11039, %v11087
        %11089 = vmatmul.bf16.gmra.mxu0 %v5302
        %v11090 = vpop.f32.mrf.mxu0
        %v11091 = vadd.f32 %v11042, %v11090
        %v11092 = vpop.f32.mrf.mxu0
        %v11093 = vadd.f32 %v11044, %v11092
        %11094 = vmatmul.bf16.gmra.mxu0 %v5310
        %v11095 = vpop.f32.mrf.mxu0
        %v11096 = vadd.f32 %v11047, %v11095
        %v11097 = vpop.f32.mrf.mxu0
        %v11098 = vadd.f32 %v11049, %v11097
        %11099 = vmatmul.bf16.gmra.mxu0 %v5318
        %v11100 = vpop.f32.mrf.mxu0
        %v11101 = vadd.f32 %v11052, %v11100
        %v11102 = vpop.f32.mrf.mxu0
        %v11103 = vadd.f32 %v11054, %v11102
        %11104 = vdwg.mxu0
        %11105 = vmatpush.bf16.msra.mxu0 %v7896
        %11106 = vmatpush.bf16.msra.mxu0 %v7888
        %11107 = vmatpush.bf16.msra.mxu0 %v7880
        %11108 = vmatpush.bf16.msra.mxu0 %v7872
        %11109 = vmatpush.bf16.msra.mxu0 %v7864
        %11110 = vmatpush.bf16.msra.mxu0 %v7856
        %11111 = vmatpush.bf16.msra.mxu0 %v7848
        %11112 = vmatpush.bf16.msra.mxu0 %v7840
        %11113 = vmatmul.bf16.gmra.mxu0 %v5263
        %v11114 = vpop.f32.mrf.mxu0
        %v11115 = vadd.f32 %v11066, %v11114
        %v11116 = vpop.f32.mrf.mxu0
        %v11117 = vadd.f32 %v11068, %v11116
        %11118 = vmatmul.bf16.gmra.mxu0 %v5271
        %v11119 = vpop.f32.mrf.mxu0
        %v11120 = vadd.f32 %v11071, %v11119
        %v11121 = vpop.f32.mrf.mxu0
        %v11122 = vadd.f32 %v11073, %v11121
        %11123 = vmatmul.bf16.gmra.mxu0 %v5279
        %v11124 = vpop.f32.mrf.mxu0
        %v11125 = vadd.f32 %v11076, %v11124
        %v11126 = vpop.f32.mrf.mxu0
        %v11127 = vadd.f32 %v11078, %v11126
        %11128 = vmatmul.bf16.gmra.mxu0 %v5287
        %v11129 = vpop.f32.mrf.mxu0
        %v11130 = vadd.f32 %v11081, %v11129
        %v11131 = vpop.f32.mrf.mxu0
        %v11132 = vadd.f32 %v11083, %v11131
        %11133 = vmatmul.bf16.gmra.mxu0 %v5295
        %v11134 = vpop.f32.mrf.mxu0
        %v11135 = vadd.f32 %v11086, %v11134
        %v11136 = vpop.f32.mrf.mxu0
        %v11137 = vadd.f32 %v11088, %v11136
        %11138 = vmatmul.bf16.gmra.mxu0 %v5303
        %v11139 = vpop.f32.mrf.mxu0
        %v11140 = vadd.f32 %v11091, %v11139
        %v11141 = vpop.f32.mrf.mxu0
        %v11142 = vadd.f32 %v11093, %v11141
        %11143 = vmatmul.bf16.gmra.mxu0 %v5311
        %v11144 = vpop.f32.mrf.mxu0
        %v11145 = vadd.f32 %v11096, %v11144
        %v11146 = vpop.f32.mrf.mxu0
        %v11147 = vadd.f32 %v11098, %v11146
        %11148 = vmatmul.bf16.gmra.mxu0 %v5319
        %v11149 = vpop.f32.mrf.mxu0
        %v11150 = vadd.f32 %v11101, %v11149
        %v11151 = vpop.f32.mrf.mxu0
        %v11152 = vadd.f32 %v11103, %v11151
        %11153 = vdwg.mxu0
        %11154 = vmatpush.bf16.msra.mxu0 %v7449
        %11155 = vmatpush.bf16.msra.mxu0 %v7441
        %11156 = vmatpush.bf16.msra.mxu0 %v7433
        %11157 = vmatpush.bf16.msra.mxu0 %v7425
        %11158 = vmatpush.bf16.msra.mxu0 %v7417
        %11159 = vmatpush.bf16.msra.mxu0 %v7409
        %11160 = vmatpush.bf16.msra.mxu0 %v7401
        %11161 = vmatpush.bf16.msra.mxu0 %v7393
        %11162 = vmatmul.bf16.gmra.mxu0 %v5256
        %v11163 = vpop.f32.mrf.mxu0
        %v11164 = vadd.f32 %v5841, %v11163
        %v11165 = vpop.f32.mrf.mxu0
        %v11166 = vadd.f32 %v5841, %v11165
        %11167 = vmatmul.bf16.gmra.mxu0 %v5264
        %v11168 = vpop.f32.mrf.mxu0
        %v11169 = vadd.f32 %v5841, %v11168
        %v11170 = vpop.f32.mrf.mxu0
        %v11171 = vadd.f32 %v5841, %v11170
        %11172 = vmatmul.bf16.gmra.mxu0 %v5272
        %v11173 = vpop.f32.mrf.mxu0
        %v11174 = vadd.f32 %v5841, %v11173
        %v11175 = vpop.f32.mrf.mxu0
        %v11176 = vadd.f32 %v5841, %v11175
        %11177 = vmatmul.bf16.gmra.mxu0 %v5280
        %v11178 = vpop.f32.mrf.mxu0
        %v11179 = vadd.f32 %v5841, %v11178
        %v11180 = vpop.f32.mrf.mxu0
        %v11181 = vadd.f32 %v5841, %v11180
        %11182 = vmatmul.bf16.gmra.mxu0 %v5288
        %v11183 = vpop.f32.mrf.mxu0
        %v11184 = vadd.f32 %v5841, %v11183
        %v11185 = vpop.f32.mrf.mxu0
        %v11186 = vadd.f32 %v5841, %v11185
        %11187 = vmatmul.bf16.gmra.mxu0 %v5296
        %v11188 = vpop.f32.mrf.mxu0
        %v11189 = vadd.f32 %v5841, %v11188
        %v11190 = vpop.f32.mrf.mxu0
        %v11191 = vadd.f32 %v5841, %v11190
        %11192 = vmatmul.bf16.gmra.mxu0 %v5304
        %v11193 = vpop.f32.mrf.mxu0
        %v11194 = vadd.f32 %v5841, %v11193
        %v11195 = vpop.f32.mrf.mxu0
        %v11196 = vadd.f32 %v5841, %v11195
        %11197 = vmatmul.bf16.gmra.mxu0 %v5312
        %v11198 = vpop.f32.mrf.mxu0
        %v11199 = vadd.f32 %v5841, %v11198
        %v11200 = vpop.f32.mrf.mxu0
        %v11201 = vadd.f32 %v5841, %v11200
        %11202 = vdwg.mxu0
        %11203 = vmatpush.bf16.msra.mxu0 %v7513
        %11204 = vmatpush.bf16.msra.mxu0 %v7505
        %11205 = vmatpush.bf16.msra.mxu0 %v7497
        %11206 = vmatpush.bf16.msra.mxu0 %v7489
        %11207 = vmatpush.bf16.msra.mxu0 %v7481
        %11208 = vmatpush.bf16.msra.mxu0 %v7473
        %11209 = vmatpush.bf16.msra.mxu0 %v7465
        %11210 = vmatpush.bf16.msra.mxu0 %v7457
        %11211 = vmatmul.bf16.gmra.mxu0 %v5257
        %v11212 = vpop.f32.mrf.mxu0
        %v11213 = vadd.f32 %v11164, %v11212
        %v11214 = vpop.f32.mrf.mxu0
        %v11215 = vadd.f32 %v11166, %v11214
        %11216 = vmatmul.bf16.gmra.mxu0 %v5265
        %v11217 = vpop.f32.mrf.mxu0
        %v11218 = vadd.f32 %v11169, %v11217
        %v11219 = vpop.f32.mrf.mxu0
        %v11220 = vadd.f32 %v11171, %v11219
        %11221 = vmatmul.bf16.gmra.mxu0 %v5273
        %v11222 = vpop.f32.mrf.mxu0
        %v11223 = vadd.f32 %v11174, %v11222
        %v11224 = vpop.f32.mrf.mxu0
        %v11225 = vadd.f32 %v11176, %v11224
        %11226 = vmatmul.bf16.gmra.mxu0 %v5281
        %v11227 = vpop.f32.mrf.mxu0
        %v11228 = vadd.f32 %v11179, %v11227
        %v11229 = vpop.f32.mrf.mxu0
        %v11230 = vadd.f32 %v11181, %v11229
        %11231 = vmatmul.bf16.gmra.mxu0 %v5289
        %v11232 = vpop.f32.mrf.mxu0
        %v11233 = vadd.f32 %v11184, %v11232
        %v11234 = vpop.f32.mrf.mxu0
        %v11235 = vadd.f32 %v11186, %v11234
        %11236 = vmatmul.bf16.gmra.mxu0 %v5297
        %v11237 = vpop.f32.mrf.mxu0
        %v11238 = vadd.f32 %v11189, %v11237
        %v11239 = vpop.f32.mrf.mxu0
        %v11240 = vadd.f32 %v11191, %v11239
        %11241 = vmatmul.bf16.gmra.mxu0 %v5305
        %v11242 = vpop.f32.mrf.mxu0
        %v11243 = vadd.f32 %v11194, %v11242
        %v11244 = vpop.f32.mrf.mxu0
        %v11245 = vadd.f32 %v11196, %v11244
        %11246 = vmatmul.bf16.gmra.mxu0 %v5313
        %v11247 = vpop.f32.mrf.mxu0
        %v11248 = vadd.f32 %v11199, %v11247
        %v11249 = vpop.f32.mrf.mxu0
        %v11250 = vadd.f32 %v11201, %v11249
        %11251 = vdwg.mxu0
        %11252 = vmatpush.bf16.msra.mxu0 %v7577
        %11253 = vmatpush.bf16.msra.mxu0 %v7569
        %11254 = vmatpush.bf16.msra.mxu0 %v7561
        %11255 = vmatpush.bf16.msra.mxu0 %v7553
        %11256 = vmatpush.bf16.msra.mxu0 %v7545
        %11257 = vmatpush.bf16.msra.mxu0 %v7537
        %11258 = vmatpush.bf16.msra.mxu0 %v7529
        %11259 = vmatpush.bf16.msra.mxu0 %v7521
        %11260 = vmatmul.bf16.gmra.mxu0 %v5258
        %v11261 = vpop.f32.mrf.mxu0
        %v11262 = vadd.f32 %v11213, %v11261
        %v11263 = vpop.f32.mrf.mxu0
        %v11264 = vadd.f32 %v11215, %v11263
        %11265 = vmatmul.bf16.gmra.mxu0 %v5266
        %v11266 = vpop.f32.mrf.mxu0
        %v11267 = vadd.f32 %v11218, %v11266
        %v11268 = vpop.f32.mrf.mxu0
        %v11269 = vadd.f32 %v11220, %v11268
        %11270 = vmatmul.bf16.gmra.mxu0 %v5274
        %v11271 = vpop.f32.mrf.mxu0
        %v11272 = vadd.f32 %v11223, %v11271
        %v11273 = vpop.f32.mrf.mxu0
        %v11274 = vadd.f32 %v11225, %v11273
        %11275 = vmatmul.bf16.gmra.mxu0 %v5282
        %v11276 = vpop.f32.mrf.mxu0
        %v11277 = vadd.f32 %v11228, %v11276
        %v11278 = vpop.f32.mrf.mxu0
        %v11279 = vadd.f32 %v11230, %v11278
        %11280 = vmatmul.bf16.gmra.mxu0 %v5290
        %v11281 = vpop.f32.mrf.mxu0
        %v11282 = vadd.f32 %v11233, %v11281
        %v11283 = vpop.f32.mrf.mxu0
        %v11284 = vadd.f32 %v11235, %v11283
        %11285 = vmatmul.bf16.gmra.mxu0 %v5298
        %v11286 = vpop.f32.mrf.mxu0
        %v11287 = vadd.f32 %v11238, %v11286
        %v11288 = vpop.f32.mrf.mxu0
        %v11289 = vadd.f32 %v11240, %v11288
        %11290 = vmatmul.bf16.gmra.mxu0 %v5306
        %v11291 = vpop.f32.mrf.mxu0
        %v11292 = vadd.f32 %v11243, %v11291
        %v11293 = vpop.f32.mrf.mxu0
        %v11294 = vadd.f32 %v11245, %v11293
        %11295 = vmatmul.bf16.gmra.mxu0 %v5314
        %v11296 = vpop.f32.mrf.mxu0
        %v11297 = vadd.f32 %v11248, %v11296
        %v11298 = vpop.f32.mrf.mxu0
        %v11299 = vadd.f32 %v11250, %v11298
        %11300 = vdwg.mxu0
        %11301 = vmatpush.bf16.msra.mxu0 %v7641
        %11302 = vmatpush.bf16.msra.mxu0 %v7633
        %11303 = vmatpush.bf16.msra.mxu0 %v7625
        %11304 = vmatpush.bf16.msra.mxu0 %v7617
        %11305 = vmatpush.bf16.msra.mxu0 %v7609
        %11306 = vmatpush.bf16.msra.mxu0 %v7601
        %11307 = vmatpush.bf16.msra.mxu0 %v7593
        %11308 = vmatpush.bf16.msra.mxu0 %v7585
        %11309 = vmatmul.bf16.gmra.mxu0 %v5259
        %v11310 = vpop.f32.mrf.mxu0
        %v11311 = vadd.f32 %v11262, %v11310
        %v11312 = vpop.f32.mrf.mxu0
        %v11313 = vadd.f32 %v11264, %v11312
        %11314 = vmatmul.bf16.gmra.mxu0 %v5267
        %v11315 = vpop.f32.mrf.mxu0
        %v11316 = vadd.f32 %v11267, %v11315
        %v11317 = vpop.f32.mrf.mxu0
        %v11318 = vadd.f32 %v11269, %v11317
        %11319 = vmatmul.bf16.gmra.mxu0 %v5275
        %v11320 = vpop.f32.mrf.mxu0
        %v11321 = vadd.f32 %v11272, %v11320
        %v11322 = vpop.f32.mrf.mxu0
        %v11323 = vadd.f32 %v11274, %v11322
        %11324 = vmatmul.bf16.gmra.mxu0 %v5283
        %v11325 = vpop.f32.mrf.mxu0
        %v11326 = vadd.f32 %v11277, %v11325
        %v11327 = vpop.f32.mrf.mxu0
        %v11328 = vadd.f32 %v11279, %v11327
        %11329 = vmatmul.bf16.gmra.mxu0 %v5291
        %v11330 = vpop.f32.mrf.mxu0
        %v11331 = vadd.f32 %v11282, %v11330
        %v11332 = vpop.f32.mrf.mxu0
        %v11333 = vadd.f32 %v11284, %v11332
        %11334 = vmatmul.bf16.gmra.mxu0 %v5299
        %v11335 = vpop.f32.mrf.mxu0
        %v11336 = vadd.f32 %v11287, %v11335
        %v11337 = vpop.f32.mrf.mxu0
        %v11338 = vadd.f32 %v11289, %v11337
        %11339 = vmatmul.bf16.gmra.mxu0 %v5307
        %v11340 = vpop.f32.mrf.mxu0
        %v11341 = vadd.f32 %v11292, %v11340
        %v11342 = vpop.f32.mrf.mxu0
        %v11343 = vadd.f32 %v11294, %v11342
        %11344 = vmatmul.bf16.gmra.mxu0 %v5315
        %v11345 = vpop.f32.mrf.mxu0
        %v11346 = vadd.f32 %v11297, %v11345
        %v11347 = vpop.f32.mrf.mxu0
        %v11348 = vadd.f32 %v11299, %v11347
        %11349 = vdwg.mxu0
        %11350 = vmatpush.bf16.msra.mxu0 %v7705
        %11351 = vmatpush.bf16.msra.mxu0 %v7697
        %11352 = vmatpush.bf16.msra.mxu0 %v7689
        %11353 = vmatpush.bf16.msra.mxu0 %v7681
        %11354 = vmatpush.bf16.msra.mxu0 %v7673
        %11355 = vmatpush.bf16.msra.mxu0 %v7665
        %11356 = vmatpush.bf16.msra.mxu0 %v7657
        %11357 = vmatpush.bf16.msra.mxu0 %v7649
        %11358 = vmatmul.bf16.gmra.mxu0 %v5260
        %v11359 = vpop.f32.mrf.mxu0
        %v11360 = vadd.f32 %v11311, %v11359
        %v11361 = vpop.f32.mrf.mxu0
        %v11362 = vadd.f32 %v11313, %v11361
        %11363 = vmatmul.bf16.gmra.mxu0 %v5268
        %v11364 = vpop.f32.mrf.mxu0
        %v11365 = vadd.f32 %v11316, %v11364
        %v11366 = vpop.f32.mrf.mxu0
        %v11367 = vadd.f32 %v11318, %v11366
        %11368 = vmatmul.bf16.gmra.mxu0 %v5276
        %v11369 = vpop.f32.mrf.mxu0
        %v11370 = vadd.f32 %v11321, %v11369
        %v11371 = vpop.f32.mrf.mxu0
        %v11372 = vadd.f32 %v11323, %v11371
        %11373 = vmatmul.bf16.gmra.mxu0 %v5284
        %v11374 = vpop.f32.mrf.mxu0
        %v11375 = vadd.f32 %v11326, %v11374
        %v11376 = vpop.f32.mrf.mxu0
        %v11377 = vadd.f32 %v11328, %v11376
        %11378 = vmatmul.bf16.gmra.mxu0 %v5292
        %v11379 = vpop.f32.mrf.mxu0
        %v11380 = vadd.f32 %v11331, %v11379
        %v11381 = vpop.f32.mrf.mxu0
        %v11382 = vadd.f32 %v11333, %v11381
        %11383 = vmatmul.bf16.gmra.mxu0 %v5300
        %v11384 = vpop.f32.mrf.mxu0
        %v11385 = vadd.f32 %v11336, %v11384
        %v11386 = vpop.f32.mrf.mxu0
        %v11387 = vadd.f32 %v11338, %v11386
        %11388 = vmatmul.bf16.gmra.mxu0 %v5308
        %v11389 = vpop.f32.mrf.mxu0
        %v11390 = vadd.f32 %v11341, %v11389
        %v11391 = vpop.f32.mrf.mxu0
        %v11392 = vadd.f32 %v11343, %v11391
        %11393 = vmatmul.bf16.gmra.mxu0 %v5316
        %v11394 = vpop.f32.mrf.mxu0
        %v11395 = vadd.f32 %v11346, %v11394
        %v11396 = vpop.f32.mrf.mxu0
        %v11397 = vadd.f32 %v11348, %v11396
        %11398 = vdwg.mxu0
        %11399 = vmatpush.bf16.msra.mxu0 %v7769
        %11400 = vmatpush.bf16.msra.mxu0 %v7761
        %11401 = vmatpush.bf16.msra.mxu0 %v7753
        %11402 = vmatpush.bf16.msra.mxu0 %v7745
        %11403 = vmatpush.bf16.msra.mxu0 %v7737
        %11404 = vmatpush.bf16.msra.mxu0 %v7729
        %11405 = vmatpush.bf16.msra.mxu0 %v7721
        %11406 = vmatpush.bf16.msra.mxu0 %v7713
        %11407 = vmatmul.bf16.gmra.mxu0 %v5261
        %v11408 = vpop.f32.mrf.mxu0
        %v11409 = vadd.f32 %v11360, %v11408
        %v11410 = vpop.f32.mrf.mxu0
        %v11411 = vadd.f32 %v11362, %v11410
        %11412 = vmatmul.bf16.gmra.mxu0 %v5269
        %v11413 = vpop.f32.mrf.mxu0
        %v11414 = vadd.f32 %v11365, %v11413
        %v11415 = vpop.f32.mrf.mxu0
        %v11416 = vadd.f32 %v11367, %v11415
        %11417 = vmatmul.bf16.gmra.mxu0 %v5277
        %v11418 = vpop.f32.mrf.mxu0
        %v11419 = vadd.f32 %v11370, %v11418
        %v11420 = vpop.f32.mrf.mxu0
        %v11421 = vadd.f32 %v11372, %v11420
        %11422 = vmatmul.bf16.gmra.mxu0 %v5285
        %v11423 = vpop.f32.mrf.mxu0
        %v11424 = vadd.f32 %v11375, %v11423
        %v11425 = vpop.f32.mrf.mxu0
        %v11426 = vadd.f32 %v11377, %v11425
        %11427 = vmatmul.bf16.gmra.mxu0 %v5293
        %v11428 = vpop.f32.mrf.mxu0
        %v11429 = vadd.f32 %v11380, %v11428
        %v11430 = vpop.f32.mrf.mxu0
        %v11431 = vadd.f32 %v11382, %v11430
        %11432 = vmatmul.bf16.gmra.mxu0 %v5301
        %v11433 = vpop.f32.mrf.mxu0
        %v11434 = vadd.f32 %v11385, %v11433
        %v11435 = vpop.f32.mrf.mxu0
        %v11436 = vadd.f32 %v11387, %v11435
        %11437 = vmatmul.bf16.gmra.mxu0 %v5309
        %v11438 = vpop.f32.mrf.mxu0
        %v11439 = vadd.f32 %v11390, %v11438
        %v11440 = vpop.f32.mrf.mxu0
        %v11441 = vadd.f32 %v11392, %v11440
        %11442 = vmatmul.bf16.gmra.mxu0 %v5317
        %v11443 = vpop.f32.mrf.mxu0
        %v11444 = vadd.f32 %v11395, %v11443
        %v11445 = vpop.f32.mrf.mxu0
        %v11446 = vadd.f32 %v11397, %v11445
        %11447 = vdwg.mxu0
        %11448 = vmatpush.bf16.msra.mxu0 %v7833
        %11449 = vmatpush.bf16.msra.mxu0 %v7825
        %11450 = vmatpush.bf16.msra.mxu0 %v7817
        %11451 = vmatpush.bf16.msra.mxu0 %v7809
        %11452 = vmatpush.bf16.msra.mxu0 %v7801
        %11453 = vmatpush.bf16.msra.mxu0 %v7793
        %11454 = vmatpush.bf16.msra.mxu0 %v7785
        %11455 = vmatpush.bf16.msra.mxu0 %v7777
        %11456 = vmatmul.bf16.gmra.mxu0 %v5262
        %v11457 = vpop.f32.mrf.mxu0
        %v11458 = vadd.f32 %v11409, %v11457
        %v11459 = vpop.f32.mrf.mxu0
        %v11460 = vadd.f32 %v11411, %v11459
        %11461 = vmatmul.bf16.gmra.mxu0 %v5270
        %v11462 = vpop.f32.mrf.mxu0
        %v11463 = vadd.f32 %v11414, %v11462
        %v11464 = vpop.f32.mrf.mxu0
        %v11465 = vadd.f32 %v11416, %v11464
        %11466 = vmatmul.bf16.gmra.mxu0 %v5278
        %v11467 = vpop.f32.mrf.mxu0
        %v11468 = vadd.f32 %v11419, %v11467
        %v11469 = vpop.f32.mrf.mxu0
        %v11470 = vadd.f32 %v11421, %v11469
        %11471 = vmatmul.bf16.gmra.mxu0 %v5286
        %v11472 = vpop.f32.mrf.mxu0
        %v11473 = vadd.f32 %v11424, %v11472
        %v11474 = vpop.f32.mrf.mxu0
        %v11475 = vadd.f32 %v11426, %v11474
        %11476 = vmatmul.bf16.gmra.mxu0 %v5294
        %v11477 = vpop.f32.mrf.mxu0
        %v11478 = vadd.f32 %v11429, %v11477
        %v11479 = vpop.f32.mrf.mxu0
        %v11480 = vadd.f32 %v11431, %v11479
        %11481 = vmatmul.bf16.gmra.mxu0 %v5302
        %v11482 = vpop.f32.mrf.mxu0
        %v11483 = vadd.f32 %v11434, %v11482
        %v11484 = vpop.f32.mrf.mxu0
        %v11485 = vadd.f32 %v11436, %v11484
        %11486 = vmatmul.bf16.gmra.mxu0 %v5310
        %v11487 = vpop.f32.mrf.mxu0
        %v11488 = vadd.f32 %v11439, %v11487
        %v11489 = vpop.f32.mrf.mxu0
        %v11490 = vadd.f32 %v11441, %v11489
        %11491 = vmatmul.bf16.gmra.mxu0 %v5318
        %v11492 = vpop.f32.mrf.mxu0
        %v11493 = vadd.f32 %v11444, %v11492
        %v11494 = vpop.f32.mrf.mxu0
        %v11495 = vadd.f32 %v11446, %v11494
        %11496 = vdwg.mxu0
        %11497 = vmatpush.bf16.msra.mxu0 %v7897
        %11498 = vmatpush.bf16.msra.mxu0 %v7889
        %11499 = vmatpush.bf16.msra.mxu0 %v7881
        %11500 = vmatpush.bf16.msra.mxu0 %v7873
        %11501 = vmatpush.bf16.msra.mxu0 %v7865
        %11502 = vmatpush.bf16.msra.mxu0 %v7857
        %11503 = vmatpush.bf16.msra.mxu0 %v7849
        %11504 = vmatpush.bf16.msra.mxu0 %v7841
        %11505 = vmatmul.bf16.gmra.mxu0 %v5263
        %v11506 = vpop.f32.mrf.mxu0
        %v11507 = vadd.f32 %v11458, %v11506
        %v11508 = vpop.f32.mrf.mxu0
        %v11509 = vadd.f32 %v11460, %v11508
        %11510 = vmatmul.bf16.gmra.mxu0 %v5271
        %v11511 = vpop.f32.mrf.mxu0
        %v11512 = vadd.f32 %v11463, %v11511
        %v11513 = vpop.f32.mrf.mxu0
        %v11514 = vadd.f32 %v11465, %v11513
        %11515 = vmatmul.bf16.gmra.mxu0 %v5279
        %v11516 = vpop.f32.mrf.mxu0
        %v11517 = vadd.f32 %v11468, %v11516
        %v11518 = vpop.f32.mrf.mxu0
        %v11519 = vadd.f32 %v11470, %v11518
        %11520 = vmatmul.bf16.gmra.mxu0 %v5287
        %v11521 = vpop.f32.mrf.mxu0
        %v11522 = vadd.f32 %v11473, %v11521
        %v11523 = vpop.f32.mrf.mxu0
        %v11524 = vadd.f32 %v11475, %v11523
        %11525 = vmatmul.bf16.gmra.mxu0 %v5295
        %v11526 = vpop.f32.mrf.mxu0
        %v11527 = vadd.f32 %v11478, %v11526
        %v11528 = vpop.f32.mrf.mxu0
        %v11529 = vadd.f32 %v11480, %v11528
        %11530 = vmatmul.bf16.gmra.mxu0 %v5303
        %v11531 = vpop.f32.mrf.mxu0
        %v11532 = vadd.f32 %v11483, %v11531
        %v11533 = vpop.f32.mrf.mxu0
        %v11534 = vadd.f32 %v11485, %v11533
        %11535 = vmatmul.bf16.gmra.mxu0 %v5311
        %v11536 = vpop.f32.mrf.mxu0
        %v11537 = vadd.f32 %v11488, %v11536
        %v11538 = vpop.f32.mrf.mxu0
        %v11539 = vadd.f32 %v11490, %v11538
        %11540 = vmatmul.bf16.gmra.mxu0 %v5319
        %v11541 = vpop.f32.mrf.mxu0
        %v11542 = vadd.f32 %v11493, %v11541
        %v11543 = vpop.f32.mrf.mxu0
        %v11544 = vadd.f32 %v11495, %v11543
        %11545 = vdwg.mxu0
        %11546 = vst [vmem:[%s307] sm:$0xff] %v8763
        %11547 = vst [vmem:[%s307 + $0x8] sm:$0xff] %v9155
        %11548 = vst [vmem:[%s307 + $0x10] sm:$0xff] %v9547
        %11549 = vst [vmem:[%s307 + $0x18] sm:$0xff] %v9939
        %11550 = vst [vmem:[%s307 + $0x20] sm:$0xff] %v10331
        %11551 = vst [vmem:[%s307 + $0x28] sm:$0xff] %v10723
        %11552 = vst [vmem:[%s307 + $0x30] sm:$0xff] %v11115
        %11553 = vst [vmem:[%s307 + $0x38] sm:$0xff] %v11507
        %11554 = vst [vmem:[%s307 + $0x40] sm:$0xff] %v8765
        %11555 = vst [vmem:[%s307 + $0x48] sm:$0xff] %v9157
        %11556 = vst [vmem:[%s307 + $0x50] sm:$0xff] %v9549
        %11557 = vst [vmem:[%s307 + $0x58] sm:$0xff] %v9941
        %11558 = vst [vmem:[%s307 + $0x60] sm:$0xff] %v10333
        %11559 = vst [vmem:[%s307 + $0x68] sm:$0xff] %v10725
        %11560 = vst [vmem:[%s307 + $0x70] sm:$0xff] %v11117
        %11561 = vst [vmem:[%s307 + $0x78] sm:$0xff] %v11509
        %11562 = vst [vmem:[%s307 + $0x80] sm:$0xff] %v8768
        %11563 = vst [vmem:[%s307 + $0x88] sm:$0xff] %v9160
        %11564 = vst [vmem:[%s307 + $0x90] sm:$0xff] %v9552
        %11565 = vst [vmem:[%s307 + $0x98] sm:$0xff] %v9944
        %11566 = vst [vmem:[%s307 + $0xa0] sm:$0xff] %v10336
        %11567 = vst [vmem:[%s307 + $0xa8] sm:$0xff] %v10728
        %11568 = vst [vmem:[%s307 + $0xb0] sm:$0xff] %v11120
        %11569 = vst [vmem:[%s307 + $0xb8] sm:$0xff] %v11512
        %11570 = vst [vmem:[%s307 + $0xc0] sm:$0xff] %v8770
        %11571 = vst [vmem:[%s307 + $0xc8] sm:$0xff] %v9162
        %11572 = vst [vmem:[%s307 + $0xd0] sm:$0xff] %v9554
        %11573 = vst [vmem:[%s307 + $0xd8] sm:$0xff] %v9946
        %11574 = vst [vmem:[%s307 + $0xe0] sm:$0xff] %v10338
        %11575 = vst [vmem:[%s307 + $0xe8] sm:$0xff] %v10730
        %11576 = vst [vmem:[%s307 + $0xf0] sm:$0xff] %v11122
        %11577 = vst [vmem:[%s307 + $0xf8] sm:$0xff] %v11514
        %11578 = vst [vmem:[%s307 + $0x100] sm:$0xff] %v8773
        %11579 = vst [vmem:[%s307 + $0x108] sm:$0xff] %v9165
        %11580 = vst [vmem:[%s307 + $0x110] sm:$0xff] %v9557
        %11581 = vst [vmem:[%s307 + $0x118] sm:$0xff] %v9949
        %11582 = vst [vmem:[%s307 + $0x120] sm:$0xff] %v10341
        %11583 = vst [vmem:[%s307 + $0x128] sm:$0xff] %v10733
        %11584 = vst [vmem:[%s307 + $0x130] sm:$0xff] %v11125
        %11585 = vst [vmem:[%s307 + $0x138] sm:$0xff] %v11517
        %11586 = vst [vmem:[%s307 + $0x140] sm:$0xff] %v8775
        %11587 = vst [vmem:[%s307 + $0x148] sm:$0xff] %v9167
        %11588 = vst [vmem:[%s307 + $0x150] sm:$0xff] %v9559
        %11589 = vst [vmem:[%s307 + $0x158] sm:$0xff] %v9951
        %11590 = vst [vmem:[%s307 + $0x160] sm:$0xff] %v10343
        %11591 = vst [vmem:[%s307 + $0x168] sm:$0xff] %v10735
        %11592 = vst [vmem:[%s307 + $0x170] sm:$0xff] %v11127
        %11593 = vst [vmem:[%s307 + $0x178] sm:$0xff] %v11519
        %11594 = vst [vmem:[%s307 + $0x180] sm:$0xff] %v8778
        %11595 = vst [vmem:[%s307 + $0x188] sm:$0xff] %v9170
        %11596 = vst [vmem:[%s307 + $0x190] sm:$0xff] %v9562
        %11597 = vst [vmem:[%s307 + $0x198] sm:$0xff] %v9954
        %11598 = vst [vmem:[%s307 + $0x1a0] sm:$0xff] %v10346
        %11599 = vst [vmem:[%s307 + $0x1a8] sm:$0xff] %v10738
        %11600 = vst [vmem:[%s307 + $0x1b0] sm:$0xff] %v11130
        %11601 = vst [vmem:[%s307 + $0x1b8] sm:$0xff] %v11522
        %11602 = vst [vmem:[%s307 + $0x1c0] sm:$0xff] %v8780
        %11603 = vst [vmem:[%s307 + $0x1c8] sm:$0xff] %v9172
        %11604 = vst [vmem:[%s307 + $0x1d0] sm:$0xff] %v9564
        %11605 = vst [vmem:[%s307 + $0x1d8] sm:$0xff] %v9956
        %11606 = vst [vmem:[%s307 + $0x1e0] sm:$0xff] %v10348
        %11607 = vst [vmem:[%s307 + $0x1e8] sm:$0xff] %v10740
        %11608 = vst [vmem:[%s307 + $0x1f0] sm:$0xff] %v11132
        %11609 = vst [vmem:[%s307 + $0x1f8] sm:$0xff] %v11524
        %11610 = vst [vmem:[%s307 + $0x200] sm:$0xff] %v8783
        %11611 = vst [vmem:[%s307 + $0x208] sm:$0xff] %v9175
        %11612 = vst [vmem:[%s307 + $0x210] sm:$0xff] %v9567
        %11613 = vst [vmem:[%s307 + $0x218] sm:$0xff] %v9959
        %11614 = vst [vmem:[%s307 + $0x220] sm:$0xff] %v10351
        %11615 = vst [vmem:[%s307 + $0x228] sm:$0xff] %v10743
        %11616 = vst [vmem:[%s307 + $0x230] sm:$0xff] %v11135
        %11617 = vst [vmem:[%s307 + $0x238] sm:$0xff] %v11527
        %11618 = vst [vmem:[%s307 + $0x240] sm:$0xff] %v8785
        %11619 = vst [vmem:[%s307 + $0x248] sm:$0xff] %v9177
        %11620 = vst [vmem:[%s307 + $0x250] sm:$0xff] %v9569
        %11621 = vst [vmem:[%s307 + $0x258] sm:$0xff] %v9961
        %11622 = vst [vmem:[%s307 + $0x260] sm:$0xff] %v10353
        %11623 = vst [vmem:[%s307 + $0x268] sm:$0xff] %v10745
        %11624 = vst [vmem:[%s307 + $0x270] sm:$0xff] %v11137
        %11625 = vst [vmem:[%s307 + $0x278] sm:$0xff] %v11529
        %11626 = vst [vmem:[%s307 + $0x280] sm:$0xff] %v8788
        %11627 = vst [vmem:[%s307 + $0x288] sm:$0xff] %v9180
        %11628 = vst [vmem:[%s307 + $0x290] sm:$0xff] %v9572
        %11629 = vst [vmem:[%s307 + $0x298] sm:$0xff] %v9964
        %11630 = vst [vmem:[%s307 + $0x2a0] sm:$0xff] %v10356
        %11631 = vst [vmem:[%s307 + $0x2a8] sm:$0xff] %v10748
        %11632 = vst [vmem:[%s307 + $0x2b0] sm:$0xff] %v11140
        %11633 = vst [vmem:[%s307 + $0x2b8] sm:$0xff] %v11532
        %11634 = vst [vmem:[%s307 + $0x2c0] sm:$0xff] %v8790
        %11635 = vst [vmem:[%s307 + $0x2c8] sm:$0xff] %v9182
        %11636 = vst [vmem:[%s307 + $0x2d0] sm:$0xff] %v9574
        %11637 = vst [vmem:[%s307 + $0x2d8] sm:$0xff] %v9966
        %11638 = vst [vmem:[%s307 + $0x2e0] sm:$0xff] %v10358
        %11639 = vst [vmem:[%s307 + $0x2e8] sm:$0xff] %v10750
        %11640 = vst [vmem:[%s307 + $0x2f0] sm:$0xff] %v11142
        %11641 = vst [vmem:[%s307 + $0x2f8] sm:$0xff] %v11534
        %11642 = vst [vmem:[%s307 + $0x300] sm:$0xff] %v8793
        %11643 = vst [vmem:[%s307 + $0x308] sm:$0xff] %v9185
        %11644 = vst [vmem:[%s307 + $0x310] sm:$0xff] %v9577
        %11645 = vst [vmem:[%s307 + $0x318] sm:$0xff] %v9969
        %11646 = vst [vmem:[%s307 + $0x320] sm:$0xff] %v10361
        %11647 = vst [vmem:[%s307 + $0x328] sm:$0xff] %v10753
        %11648 = vst [vmem:[%s307 + $0x330] sm:$0xff] %v11145
        %11649 = vst [vmem:[%s307 + $0x338] sm:$0xff] %v11537
        %11650 = vst [vmem:[%s307 + $0x340] sm:$0xff] %v8795
        %11651 = vst [vmem:[%s307 + $0x348] sm:$0xff] %v9187
        %11652 = vst [vmem:[%s307 + $0x350] sm:$0xff] %v9579
        %11653 = vst [vmem:[%s307 + $0x358] sm:$0xff] %v9971
        %11654 = vst [vmem:[%s307 + $0x360] sm:$0xff] %v10363
        %11655 = vst [vmem:[%s307 + $0x368] sm:$0xff] %v10755
        %11656 = vst [vmem:[%s307 + $0x370] sm:$0xff] %v11147
        %11657 = vst [vmem:[%s307 + $0x378] sm:$0xff] %v11539
        %11658 = vst [vmem:[%s307 + $0x380] sm:$0xff] %v8798
        %11659 = vst [vmem:[%s307 + $0x388] sm:$0xff] %v9190
        %11660 = vst [vmem:[%s307 + $0x390] sm:$0xff] %v9582
        %11661 = vst [vmem:[%s307 + $0x398] sm:$0xff] %v9974
        %11662 = vst [vmem:[%s307 + $0x3a0] sm:$0xff] %v10366
        %11663 = vst [vmem:[%s307 + $0x3a8] sm:$0xff] %v10758
        %11664 = vst [vmem:[%s307 + $0x3b0] sm:$0xff] %v11150
        %11665 = vst [vmem:[%s307 + $0x3b8] sm:$0xff] %v11542
        %11666 = vst [vmem:[%s307 + $0x3c0] sm:$0xff] %v8800
        %11667 = vst [vmem:[%s307 + $0x3c8] sm:$0xff] %v9192
        %11668 = vst [vmem:[%s307 + $0x3d0] sm:$0xff] %v9584
        %11669 = vst [vmem:[%s307 + $0x3d8] sm:$0xff] %v9976
        %11670 = vst [vmem:[%s307 + $0x3e0] sm:$0xff] %v10368
        %11671 = vst [vmem:[%s307 + $0x3e8] sm:$0xff] %v10760
        %11672 = vst [vmem:[%s307 + $0x3f0] sm:$0xff] %v11152
        %11673 = vst [vmem:[%s307 + $0x3f8] sm:$0xff] %v11544
        %s11674 = sand.u32 %s142, 1
        %s11675 = scalar_lea.sflag [#allocation4], %s11674
        %s11676 = sand.u32 %s142, 1
        %s11677 = smul.addr %s11676, 1024
        %s11678 = scalar_lea.vmem [#allocation11], %s11677
        // Predicated region
        $region61: #{tpu_custom_call.1} parent=39 // pred_check
          %p11679 = pneg %p152
        $region62: #{tpu_custom_call.1} parent=39 // pred_check_branch
          %11681 = sbr.rel (%p11679) target = $region64
        $region63: #{tpu_custom_call.1} parent=39 // pred_region
          %s11682 = smul.u32 16, %s24
          %11684 = vsyncadd %s11675, 0
          %s11685 = smul.addr %s11682, 8
          %s11686 = smul.addr %s11685, 8
          %s11687 = scalar_lea.hbm %s5, %s11686
          %s11688 = sshll.u32 %s11678, 4
          %s11689 = int_to_ptr.vmem [resolvable:$true] %s11688
          %s11690 = sshll.u32 %s11687, 4
          %s11691 = int_to_ptr.hbm [resolvable:$true] %s11690
          %11696 = dma.vmem_to_hbm [thread:$0]  %s11689, 16384, %s11691, %s11675, 1024, 1024, 64
        $region64: #{tpu_custom_call.1} parent=39 // pred_fallthru
          _
      $region40: #{tpu_custom_call.1} parent=5 // pred_fallthru
        _
      %p11697 = scmp.le.s32.totalorder 2, %s19
      // Predicated region
      $region65: #{tpu_custom_call.1} parent=5 // pred_check
        %p11698 = pneg %p11697
      $region66: #{tpu_custom_call.1} parent=5 // pred_check_branch
        %11700 = sbr.rel (%p11698) target = $region68
      $region67: #{tpu_custom_call.1} parent=5 // pred_region
        %s11701 = ssub.s32 %s19, 2
        // Predicated region
        $region69: #{tpu_custom_call.1} parent=67 // pred_check
          %p11702 = pneg %p158
        $region70: #{tpu_custom_call.1} parent=67 // pred_check_branch
          %11704 = sbr.rel (%p11702) target = $region72
        $region71: #{tpu_custom_call.1} parent=67 // pred_region
          %s11705 = sand.u32 %s143, 1
          %s11706 = scalar_lea.sflag [#allocation4], %s11705
          %s11707 = sand.u32 %s143, 1
          %s11708 = smul.addr %s11707, 1024
          %s11709 = scalar_lea.vmem [#allocation11], %s11708
          %11711 = dma.done %s11706, 16384
        $region72: #{tpu_custom_call.1} parent=67 // pred_fallthru
          _
      $region68: #{tpu_custom_call.1} parent=5 // pred_fallthru
        _
    $region6: #{tpu_custom_call.1} parent=1 // loop_footer
      %s23 = sadd.s32 1, %s19
    $region7: #{tpu_custom_call.1} parent=1 // loop_footer_branch
      %18 = sbr.rel target = $region3
    $region8: #{tpu_custom_call.1} parent=1 // loop_exit
      _
    %11712 = vsyncpa [#allocation3], 1
    %s11713 = scalar_lea.sflag [#allocation3], 1
    %11714 = vsyncpa %s11713, 1
    %11715 = vsyncpa [#allocation6], 1
    %11716 = vsyncpa [#allocation9], 1
    %11717 = vsyncpa [#allocation4], 1
    %s11718 = scalar_lea.sflag [#allocation4], 1
    %11719 = vsyncpa %s11718, 1

</llo_original>
